<compile_context>
chip_gen: v7x
topology: tpu7x:2x2x1
jax: 0.10.0
libtpu: 0.0.40
codegen_flags: <defaults>
</compile_context>

<pallas_src>
import functools

import jax
import jax.numpy as jnp
from jax.experimental import pallas as pl
from jax.experimental.pallas import tpu as pltpu


def _round_up(v, m):
    return ((v + m - 1) // m) * m


def _mish(v):
    # mish(v) = v*tanh(softplus(v)) = v*(e^2+2e)/(e^2+2e+2), e = exp(v).
    # Single EUP transcendental; clamp at 20 is exact in f32 (ratio rounds to 1.0).
    e = jnp.exp(jnp.minimum(v, 20.0))
    num = e * (e + 2.0)
    return v * (num / (num + 2.0))


# ---------------------------------------------------------------------------
# Fused kernel: conv1(5x5)+IN+Mish -> conv2(5x5)+IN+Mish -> down(2x2,s2)+BN+Mish
# One grid step == NB batch samples.
# ---------------------------------------------------------------------------
def _fused_encoder_kernel(x_ref, masks_ref, w1_ref, g1_ref, b1_ref,
                          w2_ref, g2_ref, b2_ref, wd_ref, bns_ref, sel_ref,
                          skip_ref, down_ref, xpad_ref, patch_ref,
                          *, Cout, CB1, CB2, NB, H, W, PAD):
    """Fused MoDEEncoderBlock forward for NB samples.

    x_ref:    (1, NB*CB1, HW)      inputs, channels zero-padded to CB1 per sample
    masks_ref:(25, HW)             host-built 5x5 'same' border masks (f32)
    w1_ref:   (Cout, 25*CB1)       routed conv1 weight (MXU dtype)
    g1/b1:    (Cout, 1)            InstanceNorm1 gamma/beta (f32)
    w2_ref:   (Cout, 25*CB2)       routed conv2 weight
    g2/b2:    (Cout, 1)            InstanceNorm2 gamma/beta
    wd_ref:   (4, Cout, Cout)      2x2 down-conv taps, BN scale folded (MXU dtype)
    bns_ref:  (Cout, 1)            BatchNorm shift (beta - mean*scale)
    sel_ref:  (HW, 4*HWo)          host-built stride-2 0/1 selection matrix
    skip_ref: (1, Cout, NB*HW)     x_skip (sample-major columns)
    down_ref: (1, Cout, NB*HWo)    x_down (sample-major columns)
    xpad_ref: (NB*CBmax, HW+2*PAD) zero-padded flat staging buffer (f32 scratch)
    patch_ref:(25*CBmax, NB*HW)    im2col patch matrix (MXU-dtype scratch)
    """
    HW = H * W
    HWo = (H // 2) * (W // 2)
    f32 = jnp.float32
    mxu = patch_ref.dtype

    # Zero only the pad-column ranges; the valid columns are fully rewritten below.
    # Unconditional on purpose (no program_id gate): safe under core-parallel grids.
    nrows = xpad_ref.shape[0]
    xpad_ref[:, 0:PAD] = jnp.zeros((nrows, PAD), f32)
    xpad_ref[:, PAD + HW:PAD + HW + PAD] = jnp.zeros((nrows, PAD), f32)

    def conv5x5_in_mish(cb, w_ref_, gamma_ref_, beta_ref_):
        rows = NB * cb
        # In-VMEM im2col: 25 static shifted windows of the padded staging buffer,
        # masked with host-built constants, stored sample-major along lanes.
        for kh in range(5):
            for kw in range(5):
                tap = kh * 5 + kw
                start = PAD + (kh - 2) * W + (kw - 2)
                win = xpad_ref[0:rows, start:start + HW]            # (rows, HW) f32
                if kw != 2:  # pure vertical shifts are already covered by zero pad
                    win = win * masks_ref[tap:tap + 1, :]
                for n in range(NB):
                    patch_ref[tap * cb:(tap + 1) * cb, n * HW:(n + 1) * HW] = (
                        win[n * cb:(n + 1) * cb, :].astype(mxu))
        # One MXU matmul covers all NB samples of this 5x5 'same' conv.
        y = jnp.dot(w_ref_[...], patch_ref[0:25 * cb, :],
                    preferred_element_type=f32)                     # (Cout, NB*HW)
        outs = []
        for n in range(NB):
            # InstanceNorm2d: per-sample/per-channel biased stats, eps=1e-5; the
            # affine folds into one FMA on the centered activations.  Lane slices
            # are HW-aligned (multiples of 128), so no relayout is needed.
            yn = y[:, n * HW:(n + 1) * HW]
            mean = jnp.mean(yn, axis=-1, keepdims=True)
            cent = yn - mean
            var = jnp.mean(cent * cent, axis=-1, keepdims=True)
            a = gamma_ref_[...] * jax.lax.rsqrt(var + 1e-5)
            outs.append(_mish(cent * a + beta_ref_[...]))           # (Cout, HW) f32
        return outs

    # ---- conv1 (MoDESubNet2Conv.conv1) ----
    xpad_ref[0:NB * CB1, PAD:PAD + HW] = x_ref[0]
    h = conv5x5_in_mish(CB1, w1_ref, g1_ref, b1_ref)

    # ---- conv2 (MoDESubNet2Conv.conv2): h stays VMEM/vreg resident ----
    for n in range(NB):
        xpad_ref[n * CB2:n * CB2 + Cout, PAD:PAD + HW] = h[n]
        if CB2 > Cout:  # explicitly zero channel-padding rows (no stale data)
            xpad_ref[n * CB2 + Cout:(n + 1) * CB2, PAD:PAD + HW] = (
                jnp.zeros((CB2 - Cout, HW), f32))
    xs = conv5x5_in_mish(CB2, w2_ref, g2_ref, b2_ref)

    # ---- skip output: one lane-dense (Cout, NB*HW) store ----
    skip_ref[0] = jnp.concatenate(xs, axis=-1)

    # ---- conv_down: 2x2 stride-2 conv + BN(eval) + Mish ----
    # One K=HW selection matmul per sample, then 4 tiny K=Cout tap matmuls.
    downs = []
    for n in range(NB):
        p = jnp.dot(xs[n].astype(mxu), sel_ref[...],
                    preferred_element_type=f32)                     # (Cout, 4*HWo)
        acc = jnp.zeros((Cout, HWo), f32)
        for tap in range(4):
            acc = acc + jnp.dot(
                wd_ref[tap], p[:, tap * HWo:(tap + 1) * HWo].astype(mxu),
                preferred_element_type=f32)
        downs.append(_mish(acc + bns_ref[...]))                     # (Cout, HWo)
    down_ref[0] = jnp.concatenate(downs, axis=-1)                   # lane-dense store


# ---------------------------------------------------------------------------
# Plain-JAX glue: gating, expert mixing, host-built constants, wrapper.
# ---------------------------------------------------------------------------
def _routed_weight(t, p, num_experts):
    """MoDEConv gating + routing; the PyTorch eval path applies w[0] to the batch."""
    Cout = p["conv5x5"].shape[0]
    N = t.shape[0]
    g = t @ p["gate_w"].T + p["gate_b"]                              # (N, E*Cout)
    g = jax.nn.softmax(g.reshape(N, num_experts, Cout), axis=1)

    k5 = p["conv5x5"]
    k3 = jnp.pad(p["conv3x3"], ((0, 0), (0, 0), (1, 1), (1, 1)))
    k1 = jnp.pad(p["conv1x1"], ((0, 0), (0, 0), (2, 2), (2, 2)))
    avg3 = jnp.pad(p["avg3x3_conv"] * (jnp.ones((3, 3), jnp.float32) / 9.0),
                   ((0, 0), (0, 0), (1, 1), (1, 1)))
    avg5 = p["avg5x5_conv"] * (jnp.ones((5, 5), jnp.float32) / 25.0)
    experts = jnp.stack([k5, k3, k1, avg3, avg5], axis=0)            # (5,Co,Ci,5,5)
    return jnp.einsum("eoihw,eo->oihw", experts, g[0])               # (Co,Ci,5,5)


def _flatten5x5(w, CB, dtype):
    """(Co, Ci, 5, 5) -> (Co, 25*CB); column index tap*CB + c, zero-padded to CB."""
    Co, Ci, K, _ = w.shape
    w = jnp.transpose(w, (0, 2, 3, 1)).reshape(Co, K * K, Ci)
    w = jnp.pad(w, ((0, 0), (0, 0), (0, CB - Ci)))
    return w.reshape(Co, K * K * CB).astype(dtype)


def _make_masks(H, W):
    """Host-built (25, H*W) f32 border masks for a 5x5 'same' conv."""
    ph = jnp.arange(H)[:, None]
    pw = jnp.arange(W)[None, :]
    rows = []
    for kh in range(5):
        for kw in range(5):
            dh, dw = kh - 2, kw - 2
            valid = ((ph + dh >= 0) & (ph + dh < H) &
                     (pw + dw >= 0) & (pw + dw < W))
            rows.append(valid.reshape(H * W))
    return jnp.stack(rows).astype(jnp.float32)


def _make_sel(H, W, dtype):
    """Host-built (H*W, 4*Ho*Wo) 0/1 stride-2 selection matrix, tap-major columns."""
    Ho, Wo = H // 2, W // 2
    HW, HWo = H * W, Ho * Wo
    qh = jnp.arange(Ho)[:, None]
    qw = jnp.arange(Wo)[None, :]
    cols = []
    for kh in range(2):
        for kw in range(2):
            src = ((2 * qh + kh) * W + (2 * qw + kw)).reshape(HWo)
            cols.append(jax.nn.one_hot(src, HW, dtype=jnp.float32).T)  # (HW, HWo)
    return jnp.concatenate(cols, axis=1).astype(dtype)


def _pick_nb(N, HW, cb_max, itemsize):
    """Samples per grid step: fatten the MXU RHS lane dim while bounding VMEM."""
    best = 1
    for nb in range(1, N + 1):
        if N % nb:
            continue
        if nb * HW > 2048:                                   # enough lane width
            break
        if 25 * cb_max * nb * HW * itemsize > 8 * 1024 * 1024:  # patch budget
            break
        best = nb
    return best


def mode_encoder_block(x, t, params, *, num_experts, mxu_dtype=jnp.bfloat16):
    """MoDEEncoderBlock.forward (eval mode): returns (x_down, x_skip)."""
    assert num_experts == 5, "MoDEConv routing hard-codes 5 expert kernel types"
    N, Cin, H, W = x.shape
    assert H % 2 == 0 and W % 2 == 0
    Cout = params["conv1"]["conv5x5"].shape[0]
    HW, Ho, Wo = H * W, H // 2, W // 2
    HWo = Ho * Wo

    itm = jnp.dtype(mxu_dtype).itemsize
    align = max(8, 32 // itm)                 # 8 rows for f32, 16 for packed bf16
    CB1 = _round_up(Cin, align)               # per-conv channel padding
    CB2 = _round_up(Cout, align)
    CBmax = max(CB1, CB2)
    PAD = _round_up(max(2 * W + 2, 128), 128)  # lane-aligned staging offset
    assert PAD >= 2 * W + 2
    NB = _pick_nb(N, HW, CBmax, itm)
    G = N // NB

    # --- routed conv weights (tiny parameter math, plain JAX) ---
    w1_mat = _flatten5x5(_routed_weight(t, params["conv1"], num_experts), CB1, mxu_dtype)
    w2_mat = _flatten5x5(_routed_weight(t, params["conv2"], num_experts), CB2, mxu_dtype)

    # --- conv_down weight with eval-mode BatchNorm scale folded in ---
    dp = params["down"]
    scale = dp["bn_gamma"] * jax.lax.rsqrt(dp["bn_var"] + 1e-5)
    bn_shift = (dp["bn_beta"] - dp["bn_mean"] * scale).reshape(Cout, 1)
    wd = dp["w"] * scale[:, None, None, None]                        # (Co,Co,2,2)
    wd_k = jnp.transpose(wd, (2, 3, 0, 1)).reshape(4, Cout, Cout).astype(mxu_dtype)

    masks = _make_masks(H, W)                                        # (25, HW) f32
    sel = _make_sel(H, W, mxu_dtype)                                 # (HW, 4*HWo)

    # --- input: NCHW -> (G, NB*CB1, HW), channels zero-padded to CB1 ---
    x_flat = jnp.pad(x.reshape(N, Cin, HW).astype(jnp.float32),
                     ((0, 0), (0, CB1 - Cin), (0, 0)))
    x_blk = x_flat.reshape(G, NB * CB1, HW)

    g1 = params["conv1"]["in_gamma"].reshape(Cout, 1)
    b1 = params["conv1"]["in_beta"].reshape(Cout, 1)
    g2 = params["conv2"]["in_gamma"].reshape(Cout, 1)
    b2 = params["conv2"]["in_beta"].reshape(Cout, 1)

    kernel = functools.partial(_fused_encoder_kernel, Cout=Cout, CB1=CB1, CB2=CB2,
                               NB=NB, H=H, W=W, PAD=PAD)

    # VMEM budget: scratch + (double-buffered) blocks + constants, with headroom.
    est = (NB * CBmax * (HW + 2 * PAD) * 4           # staging scratch
           + 25 * CBmax * NB * HW * itm              # patch scratch
           + 2 * NB * CB1 * HW * 4                   # input block (double buffered)
           + 2 * Cout * NB * (HW + HWo) * 4          # output blocks
           + 25 * HW * 4 + HW * 4 * HWo * itm        # masks + selection matrix
           + 25 * (CB1 + CB2) * Cout * itm + 4 * Cout * Cout * itm)
    vmem_limit = int(min(64 * 2**20, max(32 * 2**20, 2 * est)))

    skip_blk, down_blk = pl.pallas_call(
        kernel,
        out_shape=(jax.ShapeDtypeStruct((G, Cout, NB * HW), jnp.float32),
                   jax.ShapeDtypeStruct((G, Cout, NB * HWo), jnp.float32)),
        grid_spec=pltpu.PrefetchScalarGridSpec(
            num_scalar_prefetch=0,
            grid=(G,),
            in_specs=[
                pl.BlockSpec((1, NB * CB1, HW), lambda g: (g, 0, 0)),
                pl.BlockSpec((25, HW), lambda g: (0, 0)),            # masks
                pl.BlockSpec((Cout, 25 * CB1), lambda g: (0, 0)),     # w1
                pl.BlockSpec((Cout, 1), lambda g: (0, 0)),            # g1
                pl.BlockSpec((Cout, 1), lambda g: (0, 0)),            # b1
                pl.BlockSpec((Cout, 25 * CB2), lambda g: (0, 0)),     # w2
                pl.BlockSpec((Cout, 1), lambda g: (0, 0)),            # g2
                pl.BlockSpec((Cout, 1), lambda g: (0, 0)),            # b2
                pl.BlockSpec((4, Cout, Cout), lambda g: (0, 0, 0)),   # wd
                pl.BlockSpec((Cout, 1), lambda g: (0, 0)),            # bn shift
                pl.BlockSpec((HW, 4 * HWo), lambda g: (0, 0)),        # selection
            ],
            out_specs=[
                pl.BlockSpec((1, Cout, NB * HW), lambda g: (g, 0, 0)),
                pl.BlockSpec((1, Cout, NB * HWo), lambda g: (g, 0, 0)),
            ],
            scratch_shapes=[
                pltpu.VMEM((NB * CBmax, HW + 2 * PAD), jnp.float32),  # staging
                pltpu.VMEM((25 * CBmax, NB * HW), mxu_dtype),         # im2col patch
            ],
        ),
        # Sample groups are independent -> "parallel" lets v7x shard the grid across
        # its 2 TensorCores (no-op on single-TC v5e/v6e).  vmem_limit_bytes is sized
        # from the real footprint instead of relying on the scoped default.
        compiler_params=pltpu.CompilerParams(
            dimension_semantics=("parallel",),
            vmem_limit_bytes=vmem_limit),
    )(x_blk, masks, w1_mat, g1, b1, w2_mat, g2, b2, wd_k, bn_shift, sel)

    # Layout plumbing back to NCHW (tiny wrapper-side reshapes).
    x_skip = (skip_blk.reshape(G, Cout, NB, HW).transpose(0, 2, 1, 3)
              .reshape(N, Cout, H, W))
    x_down = (down_blk.reshape(G, Cout, NB, HWo).transpose(0, 2, 1, 3)
              .reshape(N, Cout, Ho, Wo))
    return x_down, x_skip


# ---------------------------------------------------------------------------
# Deterministic parameter initialization (synthetic, mirrors __init__ shapes)
# ---------------------------------------------------------------------------
def init_params(key, num_experts, num_tasks, in_chan, out_chan):
    keys = iter(jax.random.split(key, 32))

    def conv_w(Co, Ci, K):
        fan_out = Co * K * K                  # kaiming_uniform(a=sqrt(5), fan_out)
        bound = (1.0 / fan_out) ** 0.5
        return jax.random.uniform(next(keys), (Co, Ci, K, K), jnp.float32, -bound, bound)

    def mode_conv_p(Ci, Co):
        return {
            "conv5x5": conv_w(Co, Ci, 5),
            "conv3x3": conv_w(Co, Ci, 3),
            "conv1x1": conv_w(Co, Ci, 1),
            "avg3x3_conv": conv_w(Co, Ci, 1),
            "avg5x5_conv": conv_w(Co, Ci, 1),
            "gate_w": jax.random.uniform(next(keys), (num_experts * Co, num_tasks),
                                         jnp.float32, -0.3, 0.3),
            "gate_b": jax.random.uniform(next(keys), (num_experts * Co,),
                                         jnp.float32, -0.1, 0.1),
            "in_gamma": jax.random.uniform(next(keys), (Co,), jnp.float32, 0.8, 1.2),
            "in_beta": jax.random.uniform(next(keys), (Co,), jnp.float32, -0.1, 0.1),
        }

    return {
        "conv1": mode_conv_p(in_chan, out_chan),
        "conv2": mode_conv_p(out_chan, out_chan),
        "down": {
            "w": jax.random.uniform(next(keys), (out_chan, out_chan, 2, 2),
                                    jnp.float32, -0.25, 0.25),
            "bn_gamma": jax.random.uniform(next(keys), (out_chan,), jnp.float32, 0.8, 1.2),
            "bn_beta": jax.random.uniform(next(keys), (out_chan,), jnp.float32, -0.1, 0.1),
            "bn_mean": jnp.zeros((out_chan,), jnp.float32),   # fresh running stats
            "bn_var": jnp.ones((out_chan,), jnp.float32),
        },
    }


# ---------------------------------------------------------------------------
if __name__ == "__main__":
    NUM_EXPERTS, NUM_TASKS = 5, 8
    N, CIN, COUT, H, W = 2, 4, 8, 16, 16

    key = jax.random.PRNGKey(0)
    kx, kt, kp = jax.random.split(key, 3)
    x = jax.random.normal(kx, (N, CIN, H, W), jnp.float32)
    t = jax.random.normal(kt, (N, NUM_TASKS), jnp.float32)
    params = init_params(kp, NUM_EXPERTS, NUM_TASKS, CIN, COUT)

    fwd = jax.jit(functools.partial(mode_encoder_block, num_experts=NUM_EXPERTS))
    x_down, x_skip = fwd(x, t, params)
    jax.block_until_ready((x_down, x_skip))

    assert x_skip.shape == (N, COUT, H, W)
    assert x_down.shape == (N, COUT, H // 2, W // 2)
    assert bool(jnp.all(jnp.isfinite(x_skip))) and bool(jnp.all(jnp.isfinite(x_down)))
    print("KERNEL_OK")
</pallas_src>

<mosaic_0001>
module attributes {stable_mosaic.version = 11 : i64} {
  func.func @_fused_encoder_kernel(%arg0: i32, %arg1: memref<1x32x256xf32, #tpu.memory_space<vmem>>, %arg2: memref<25x256xf32, #tpu.memory_space<vmem>>, %arg3: memref<8x400xbf16, #tpu.memory_space<vmem>>, %arg4: memref<8x1xf32, #tpu.memory_space<vmem>>, %arg5: memref<8x1xf32, #tpu.memory_space<vmem>>, %arg6: memref<8x400xbf16, #tpu.memory_space<vmem>>, %arg7: memref<8x1xf32, #tpu.memory_space<vmem>>, %arg8: memref<8x1xf32, #tpu.memory_space<vmem>>, %arg9: memref<4x8x8xbf16, #tpu.memory_space<vmem>>, %arg10: memref<8x1xf32, #tpu.memory_space<vmem>>, %arg11: memref<256x256xbf16, #tpu.memory_space<vmem>>, %arg12: memref<1x8x512xf32, #tpu.memory_space<vmem>>, %arg13: memref<1x8x128xf32, #tpu.memory_space<vmem>>, %arg14: memref<32x512xf32, #tpu.memory_space<vmem>>, %arg15: memref<400x512xbf16, #tpu.memory_space<vmem>>) attributes {dimension_semantics = [#tpu.dimension_semantics<parallel>], iteration_bounds = array<i64: 1>, scalar_prefetch = 0 : i64, scratch_operands = 2 : i64, tpu.core_type = #tpu.core_type<tc>, window_params = [{transform_indices = @transform_0, window_bounds = array<i64: 1, 32, 256>}, {pipeline_mode = #tpu.pipeline_mode<synchronous>, transform_indices = @transform_1, window_bounds = array<i64: 25, 256>}, {pipeline_mode = #tpu.pipeline_mode<synchronous>, transform_indices = @transform_2, window_bounds = array<i64: 8, 400>}, {pipeline_mode = #tpu.pipeline_mode<synchronous>, transform_indices = @transform_3, window_bounds = array<i64: 8, 1>}, {pipeline_mode = #tpu.pipeline_mode<synchronous>, transform_indices = @transform_4, window_bounds = array<i64: 8, 1>}, {pipeline_mode = #tpu.pipeline_mode<synchronous>, transform_indices = @transform_5, window_bounds = array<i64: 8, 400>}, {pipeline_mode = #tpu.pipeline_mode<synchronous>, transform_indices = @transform_6, window_bounds = array<i64: 8, 1>}, {pipeline_mode = #tpu.pipeline_mode<synchronous>, transform_indices = @transform_7, window_bounds = array<i64: 8, 1>}, {pipeline_mode = #tpu.pipeline_mode<synchronous>, transform_indices = @transform_8, window_bounds = array<i64: 4, 8, 8>}, {pipeline_mode = #tpu.pipeline_mode<synchronous>, transform_indices = @transform_9, window_bounds = array<i64: 8, 1>}, {pipeline_mode = #tpu.pipeline_mode<synchronous>, transform_indices = @transform_10, window_bounds = array<i64: 256, 256>}, {transform_indices = @transform_11, window_bounds = array<i64: 1, 8, 512>}, {transform_indices = @transform_12, window_bounds = array<i64: 1, 8, 128>}]} {
    %cst = arith.constant 0.000000e+00 : f32
    %0 = vector.broadcast %cst : f32 to vector<32x128xf32>
    %c0 = arith.constant 0 : index
    %c0_0 = arith.constant 0 : index
    %1 = vector.load %arg14[%c0, %c0_0] : memref<32x512xf32, #tpu.memory_space<vmem>>, vector<32x128xf32>
    tpu.vector_store %arg14[%c0, %c0_0], %0 {strides = array<i32>} : memref<32x512xf32, #tpu.memory_space<vmem>>, vector<32x128xf32>,
    %cst_1 = arith.constant 0.000000e+00 : f32
    %2 = vector.broadcast %cst_1 : f32 to vector<32x128xf32>
    %c0_2 = arith.constant 0 : index
    %c384 = arith.constant 384 : index
    %3 = vector.load %arg14[%c0_2, %c384] : memref<32x512xf32, #tpu.memory_space<vmem>>, vector<32x128xf32>
    tpu.vector_store %arg14[%c0_2, %c384], %2 {strides = array<i32>} : memref<32x512xf32, #tpu.memory_space<vmem>>, vector<32x128xf32>,
    %c0_3 = arith.constant 0 : index
    %c0_4 = arith.constant 0 : index
    %c0_5 = arith.constant 0 : index
    %4 = vector.load %arg1[%c0_3, %c0_4, %c0_5] : memref<1x32x256xf32, #tpu.memory_space<vmem>>, vector<1x32x256xf32>
    %5 = vector.shape_cast %4 : vector<1x32x256xf32> to vector<32x256xf32>
    %c0_6 = arith.constant 0 : index
    %c128 = arith.constant 128 : index
    %6 = vector.load %arg14[%c0_6, %c128] : memref<32x512xf32, #tpu.memory_space<vmem>>, vector<32x256xf32>
    tpu.vector_store %arg14[%c0_6, %c128], %5 {strides = array<i32>} : memref<32x512xf32, #tpu.memory_space<vmem>>, vector<32x256xf32>,
    %c0_7 = arith.constant 0 : index
    %c94 = arith.constant 94 : index
    %7 = vector.load %arg14[%c0_7, %c94] : memref<32x512xf32, #tpu.memory_space<vmem>>, vector<32x256xf32>
    %c0_8 = arith.constant 0 : index
    %c0_9 = arith.constant 0 : index
    %8 = vector.load %arg2[%c0_8, %c0_9] : memref<25x256xf32, #tpu.memory_space<vmem>>, vector<1x256xf32>
    %9 = vector.broadcast %8 : vector<1x256xf32> to vector<32x256xf32>
    %10 = arith.mulf %7, %9 : vector<32x256xf32>
    %11 = vector.extract_strided_slice %10 {offsets = [0, 0], sizes = [16, 256], strides = [1, 1]} : vector<32x256xf32> to vector<16x256xf32>
    %12 = arith.truncf %11 : vector<16x256xf32> to vector<16x256xbf16>
    %c0_10 = arith.constant 0 : index
    %c0_11 = arith.constant 0 : index
    %13 = vector.load %arg15[%c0_10, %c0_11] : memref<400x512xbf16, #tpu.memory_space<vmem>>, vector<16x256xbf16>
    tpu.vector_store %arg15[%c0_10, %c0_11], %12 {strides = array<i32>} : memref<400x512xbf16, #tpu.memory_space<vmem>>, vector<16x256xbf16>,
    %14 = vector.extract_strided_slice %10 {offsets = [16, 0], sizes = [16, 256], strides = [1, 1]} : vector<32x256xf32> to vector<16x256xf32>
    %15 = arith.truncf %14 : vector<16x256xf32> to vector<16x256xbf16>
    %c0_12 = arith.constant 0 : index
    %c256 = arith.constant 256 : index
    %16 = vector.load %arg15[%c0_12, %c256] : memref<400x512xbf16, #tpu.memory_space<vmem>>, vector<16x256xbf16>
    tpu.vector_store %arg15[%c0_12, %c256], %15 {strides = array<i32>} : memref<400x512xbf16, #tpu.memory_space<vmem>>, vector<16x256xbf16>,
    %c0_13 = arith.constant 0 : index
    %c95 = arith.constant 95 : index
    %17 = vector.load %arg14[%c0_13, %c95] : memref<32x512xf32, #tpu.memory_space<vmem>>, vector<32x256xf32>
    %c1 = arith.constant 1 : index
    %c0_14 = arith.constant 0 : index
    %18 = vector.load %arg2[%c1, %c0_14] : memref<25x256xf32, #tpu.memory_space<vmem>>, vector<1x256xf32>
    %19 = vector.broadcast %18 : vector<1x256xf32> to vector<32x256xf32>
    %20 = arith.mulf %17, %19 : vector<32x256xf32>
    %21 = vector.extract_strided_slice %20 {offsets = [0, 0], sizes = [16, 256], strides = [1, 1]} : vector<32x256xf32> to vector<16x256xf32>
    %22 = arith.truncf %21 : vector<16x256xf32> to vector<16x256xbf16>
    %c16 = arith.constant 16 : index
    %c0_15 = arith.constant 0 : index
    %23 = vector.load %arg15[%c16, %c0_15] : memref<400x512xbf16, #tpu.memory_space<vmem>>, vector<16x256xbf16>
    tpu.vector_store %arg15[%c16, %c0_15], %22 {strides = array<i32>} : memref<400x512xbf16, #tpu.memory_space<vmem>>, vector<16x256xbf16>,
    %24 = vector.extract_strided_slice %20 {offsets = [16, 0], sizes = [16, 256], strides = [1, 1]} : vector<32x256xf32> to vector<16x256xf32>
    %25 = arith.truncf %24 : vector<16x256xf32> to vector<16x256xbf16>
    %c16_16 = arith.constant 16 : index
    %c256_17 = arith.constant 256 : index
    %26 = vector.load %arg15[%c16_16, %c256_17] : memref<400x512xbf16, #tpu.memory_space<vmem>>, vector<16x256xbf16>
    tpu.vector_store %arg15[%c16_16, %c256_17], %25 {strides = array<i32>} : memref<400x512xbf16, #tpu.memory_space<vmem>>, vector<16x256xbf16>,
    %c0_18 = arith.constant 0 : index
    %c96 = arith.constant 96 : index
    %27 = vector.load %arg14[%c0_18, %c96] : memref<32x512xf32, #tpu.memory_space<vmem>>, vector<32x256xf32>
    %28 = vector.extract_strided_slice %27 {offsets = [0, 0], sizes = [16, 256], strides = [1, 1]} : vector<32x256xf32> to vector<16x256xf32>
    %29 = arith.truncf %28 : vector<16x256xf32> to vector<16x256xbf16>
    %c32 = arith.constant 32 : index
    %c0_19 = arith.constant 0 : index
    %30 = vector.load %arg15[%c32, %c0_19] : memref<400x512xbf16, #tpu.memory_space<vmem>>, vector<16x256xbf16>
    tpu.vector_store %arg15[%c32, %c0_19], %29 {strides = array<i32>} : memref<400x512xbf16, #tpu.memory_space<vmem>>, vector<16x256xbf16>,
    %31 = vector.extract_strided_slice %27 {offsets = [16, 0], sizes = [16, 256], strides = [1, 1]} : vector<32x256xf32> to vector<16x256xf32>
    %32 = arith.truncf %31 : vector<16x256xf32> to vector<16x256xbf16>
    %c32_20 = arith.constant 32 : index
    %c256_21 = arith.constant 256 : index
    %33 = vector.load %arg15[%c32_20, %c256_21] : memref<400x512xbf16, #tpu.memory_space<vmem>>, vector<16x256xbf16>
    tpu.vector_store %arg15[%c32_20, %c256_21], %32 {strides = array<i32>} : memref<400x512xbf16, #tpu.memory_space<vmem>>, vector<16x256xbf16>,
    %c0_22 = arith.constant 0 : index
    %c97 = arith.constant 97 : index
    %34 = vector.load %arg14[%c0_22, %c97] : memref<32x512xf32, #tpu.memory_space<vmem>>, vector<32x256xf32>
    %c3 = arith.constant 3 : index
    %c0_23 = arith.constant 0 : index
    %35 = vector.load %arg2[%c3, %c0_23] : memref<25x256xf32, #tpu.memory_space<vmem>>, vector<1x256xf32>
    %36 = vector.broadcast %35 : vector<1x256xf32> to vector<32x256xf32>
    %37 = arith.mulf %34, %36 : vector<32x256xf32>
    %38 = vector.extract_strided_slice %37 {offsets = [0, 0], sizes = [16, 256], strides = [1, 1]} : vector<32x256xf32> to vector<16x256xf32>
    %39 = arith.truncf %38 : vector<16x256xf32> to vector<16x256xbf16>
    %c48 = arith.constant 48 : index
    %c0_24 = arith.constant 0 : index
    %40 = vector.load %arg15[%c48, %c0_24] : memref<400x512xbf16, #tpu.memory_space<vmem>>, vector<16x256xbf16>
    tpu.vector_store %arg15[%c48, %c0_24], %39 {strides = array<i32>} : memref<400x512xbf16, #tpu.memory_space<vmem>>, vector<16x256xbf16>,
    %41 = vector.extract_strided_slice %37 {offsets = [16, 0], sizes = [16, 256], strides = [1, 1]} : vector<32x256xf32> to vector<16x256xf32>
    %42 = arith.truncf %41 : vector<16x256xf32> to vector<16x256xbf16>
    %c48_25 = arith.constant 48 : index
    %c256_26 = arith.constant 256 : index
    %43 = vector.load %arg15[%c48_25, %c256_26] : memref<400x512xbf16, #tpu.memory_space<vmem>>, vector<16x256xbf16>
    tpu.vector_store %arg15[%c48_25, %c256_26], %42 {strides = array<i32>} : memref<400x512xbf16, #tpu.memory_space<vmem>>, vector<16x256xbf16>,
    %c0_27 = arith.constant 0 : index
    %c98 = arith.constant 98 : index
    %44 = vector.load %arg14[%c0_27, %c98] : memref<32x512xf32, #tpu.memory_space<vmem>>, vector<32x256xf32>
    %c4 = arith.constant 4 : index
    %c0_28 = arith.constant 0 : index
    %45 = vector.load %arg2[%c4, %c0_28] : memref<25x256xf32, #tpu.memory_space<vmem>>, vector<1x256xf32>
    %46 = vector.broadcast %45 : vector<1x256xf32> to vector<32x256xf32>
    %47 = arith.mulf %44, %46 : vector<32x256xf32>
    %48 = vector.extract_strided_slice %47 {offsets = [0, 0], sizes = [16, 256], strides = [1, 1]} : vector<32x256xf32> to vector<16x256xf32>
    %49 = arith.truncf %48 : vector<16x256xf32> to vector<16x256xbf16>
    %c64 = arith.constant 64 : index
    %c0_29 = arith.constant 0 : index
    %50 = vector.load %arg15[%c64, %c0_29] : memref<400x512xbf16, #tpu.memory_space<vmem>>, vector<16x256xbf16>
    tpu.vector_store %arg15[%c64, %c0_29], %49 {strides = array<i32>} : memref<400x512xbf16, #tpu.memory_space<vmem>>, vector<16x256xbf16>,
    %51 = vector.extract_strided_slice %47 {offsets = [16, 0], sizes = [16, 256], strides = [1, 1]} : vector<32x256xf32> to vector<16x256xf32>
    %52 = arith.truncf %51 : vector<16x256xf32> to vector<16x256xbf16>
    %c64_30 = arith.constant 64 : index
    %c256_31 = arith.constant 256 : index
    %53 = vector.load %arg15[%c64_30, %c256_31] : memref<400x512xbf16, #tpu.memory_space<vmem>>, vector<16x256xbf16>
    tpu.vector_store %arg15[%c64_30, %c256_31], %52 {strides = array<i32>} : memref<400x512xbf16, #tpu.memory_space<vmem>>, vector<16x256xbf16>,
    %c0_32 = arith.constant 0 : index
    %c110 = arith.constant 110 : index
    %54 = vector.load %arg14[%c0_32, %c110] : memref<32x512xf32, #tpu.memory_space<vmem>>, vector<32x256xf32>
    %c5 = arith.constant 5 : index
    %c0_33 = arith.constant 0 : index
    %55 = vector.load %arg2[%c5, %c0_33] : memref<25x256xf32, #tpu.memory_space<vmem>>, vector<1x256xf32>
    %56 = vector.broadcast %55 : vector<1x256xf32> to vector<32x256xf32>
    %57 = arith.mulf %54, %56 : vector<32x256xf32>
    %58 = vector.extract_strided_slice %57 {offsets = [0, 0], sizes = [16, 256], strides = [1, 1]} : vector<32x256xf32> to vector<16x256xf32>
    %59 = arith.truncf %58 : vector<16x256xf32> to vector<16x256xbf16>
    %c80 = arith.constant 80 : index
    %c0_34 = arith.constant 0 : index
    %60 = vector.load %arg15[%c80, %c0_34] : memref<400x512xbf16, #tpu.memory_space<vmem>>, vector<16x256xbf16>
    tpu.vector_store %arg15[%c80, %c0_34], %59 {strides = array<i32>} : memref<400x512xbf16, #tpu.memory_space<vmem>>, vector<16x256xbf16>,
    %61 = vector.extract_strided_slice %57 {offsets = [16, 0], sizes = [16, 256], strides = [1, 1]} : vector<32x256xf32> to vector<16x256xf32>
    %62 = arith.truncf %61 : vector<16x256xf32> to vector<16x256xbf16>
    %c80_35 = arith.constant 80 : index
    %c256_36 = arith.constant 256 : index
    %63 = vector.load %arg15[%c80_35, %c256_36] : memref<400x512xbf16, #tpu.memory_space<vmem>>, vector<16x256xbf16>
    tpu.vector_store %arg15[%c80_35, %c256_36], %62 {strides = array<i32>} : memref<400x512xbf16, #tpu.memory_space<vmem>>, vector<16x256xbf16>,
    %c0_37 = arith.constant 0 : index
    %c111 = arith.constant 111 : index
    %64 = vector.load %arg14[%c0_37, %c111] : memref<32x512xf32, #tpu.memory_space<vmem>>, vector<32x256xf32>
    %c6 = arith.constant 6 : index
    %c0_38 = arith.constant 0 : index
    %65 = vector.load %arg2[%c6, %c0_38] : memref<25x256xf32, #tpu.memory_space<vmem>>, vector<1x256xf32>
    %66 = vector.broadcast %65 : vector<1x256xf32> to vector<32x256xf32>
    %67 = arith.mulf %64, %66 : vector<32x256xf32>
    %68 = vector.extract_strided_slice %67 {offsets = [0, 0], sizes = [16, 256], strides = [1, 1]} : vector<32x256xf32> to vector<16x256xf32>
    %69 = arith.truncf %68 : vector<16x256xf32> to vector<16x256xbf16>
    %c96_39 = arith.constant 96 : index
    %c0_40 = arith.constant 0 : index
    %70 = vector.load %arg15[%c96_39, %c0_40] : memref<400x512xbf16, #tpu.memory_space<vmem>>, vector<16x256xbf16>
    tpu.vector_store %arg15[%c96_39, %c0_40], %69 {strides = array<i32>} : memref<400x512xbf16, #tpu.memory_space<vmem>>, vector<16x256xbf16>,
    %71 = vector.extract_strided_slice %67 {offsets = [16, 0], sizes = [16, 256], strides = [1, 1]} : vector<32x256xf32> to vector<16x256xf32>
    %72 = arith.truncf %71 : vector<16x256xf32> to vector<16x256xbf16>
    %c96_41 = arith.constant 96 : index
    %c256_42 = arith.constant 256 : index
    %73 = vector.load %arg15[%c96_41, %c256_42] : memref<400x512xbf16, #tpu.memory_space<vmem>>, vector<16x256xbf16>
    tpu.vector_store %arg15[%c96_41, %c256_42], %72 {strides = array<i32>} : memref<400x512xbf16, #tpu.memory_space<vmem>>, vector<16x256xbf16>,
    %c0_43 = arith.constant 0 : index
    %c112 = arith.constant 112 : index
    %74 = vector.load %arg14[%c0_43, %c112] : memref<32x512xf32, #tpu.memory_space<vmem>>, vector<32x256xf32>
    %75 = vector.extract_strided_slice %74 {offsets = [0, 0], sizes = [16, 256], strides = [1, 1]} : vector<32x256xf32> to vector<16x256xf32>
    %76 = arith.truncf %75 : vector<16x256xf32> to vector<16x256xbf16>
    %c112_44 = arith.constant 112 : index
    %c0_45 = arith.constant 0 : index
    %77 = vector.load %arg15[%c112_44, %c0_45] : memref<400x512xbf16, #tpu.memory_space<vmem>>, vector<16x256xbf16>
    tpu.vector_store %arg15[%c112_44, %c0_45], %76 {strides = array<i32>} : memref<400x512xbf16, #tpu.memory_space<vmem>>, vector<16x256xbf16>,
    %78 = vector.extract_strided_slice %74 {offsets = [16, 0], sizes = [16, 256], strides = [1, 1]} : vector<32x256xf32> to vector<16x256xf32>
    %79 = arith.truncf %78 : vector<16x256xf32> to vector<16x256xbf16>
    %c112_46 = arith.constant 112 : index
    %c256_47 = arith.constant 256 : index
    %80 = vector.load %arg15[%c112_46, %c256_47] : memref<400x512xbf16, #tpu.memory_space<vmem>>, vector<16x256xbf16>
    tpu.vector_store %arg15[%c112_46, %c256_47], %79 {strides = array<i32>} : memref<400x512xbf16, #tpu.memory_space<vmem>>, vector<16x256xbf16>,
    %c0_48 = arith.constant 0 : index
    %c113 = arith.constant 113 : index
    %81 = vector.load %arg14[%c0_48, %c113] : memref<32x512xf32, #tpu.memory_space<vmem>>, vector<32x256xf32>
    %c8 = arith.constant 8 : index
    %c0_49 = arith.constant 0 : index
    %82 = vector.load %arg2[%c8, %c0_49] : memref<25x256xf32, #tpu.memory_space<vmem>>, vector<1x256xf32>
    %83 = vector.broadcast %82 : vector<1x256xf32> to vector<32x256xf32>
    %84 = arith.mulf %81, %83 : vector<32x256xf32>
    %85 = vector.extract_strided_slice %84 {offsets = [0, 0], sizes = [16, 256], strides = [1, 1]} : vector<32x256xf32> to vector<16x256xf32>
    %86 = arith.truncf %85 : vector<16x256xf32> to vector<16x256xbf16>
    %c128_50 = arith.constant 128 : index
    %c0_51 = arith.constant 0 : index
    %87 = vector.load %arg15[%c128_50, %c0_51] : memref<400x512xbf16, #tpu.memory_space<vmem>>, vector<16x256xbf16>
    tpu.vector_store %arg15[%c128_50, %c0_51], %86 {strides = array<i32>} : memref<400x512xbf16, #tpu.memory_space<vmem>>, vector<16x256xbf16>,
    %88 = vector.extract_strided_slice %84 {offsets = [16, 0], sizes = [16, 256], strides = [1, 1]} : vector<32x256xf32> to vector<16x256xf32>
    %89 = arith.truncf %88 : vector<16x256xf32> to vector<16x256xbf16>
    %c128_52 = arith.constant 128 : index
    %c256_53 = arith.constant 256 : index
    %90 = vector.load %arg15[%c128_52, %c256_53] : memref<400x512xbf16, #tpu.memory_space<vmem>>, vector<16x256xbf16>
    tpu.vector_store %arg15[%c128_52, %c256_53], %89 {strides = array<i32>} : memref<400x512xbf16, #tpu.memory_space<vmem>>, vector<16x256xbf16>,
    %c0_54 = arith.constant 0 : index
    %c114 = arith.constant 114 : index
    %91 = vector.load %arg14[%c0_54, %c114] : memref<32x512xf32, #tpu.memory_space<vmem>>, vector<32x256xf32>
    %c9 = arith.constant 9 : index
    %c0_55 = arith.constant 0 : index
    %92 = vector.load %arg2[%c9, %c0_55] : memref<25x256xf32, #tpu.memory_space<vmem>>, vector<1x256xf32>
    %93 = vector.broadcast %92 : vector<1x256xf32> to vector<32x256xf32>
    %94 = arith.mulf %91, %93 : vector<32x256xf32>
    %95 = vector.extract_strided_slice %94 {offsets = [0, 0], sizes = [16, 256], strides = [1, 1]} : vector<32x256xf32> to vector<16x256xf32>
    %96 = arith.truncf %95 : vector<16x256xf32> to vector<16x256xbf16>
    %c144 = arith.constant 144 : index
    %c0_56 = arith.constant 0 : index
    %97 = vector.load %arg15[%c144, %c0_56] : memref<400x512xbf16, #tpu.memory_space<vmem>>, vector<16x256xbf16>
    tpu.vector_store %arg15[%c144, %c0_56], %96 {strides = array<i32>} : memref<400x512xbf16, #tpu.memory_space<vmem>>, vector<16x256xbf16>,
    %98 = vector.extract_strided_slice %94 {offsets = [16, 0], sizes = [16, 256], strides = [1, 1]} : vector<32x256xf32> to vector<16x256xf32>
    %99 = arith.truncf %98 : vector<16x256xf32> to vector<16x256xbf16>
    %c144_57 = arith.constant 144 : index
    %c256_58 = arith.constant 256 : index
    %100 = vector.load %arg15[%c144_57, %c256_58] : memref<400x512xbf16, #tpu.memory_space<vmem>>, vector<16x256xbf16>
    tpu.vector_store %arg15[%c144_57, %c256_58], %99 {strides = array<i32>} : memref<400x512xbf16, #tpu.memory_space<vmem>>, vector<16x256xbf16>,
    %c0_59 = arith.constant 0 : index
    %c126 = arith.constant 126 : index
    %101 = vector.load %arg14[%c0_59, %c126] : memref<32x512xf32, #tpu.memory_space<vmem>>, vector<32x256xf32>
    %c10 = arith.constant 10 : index
    %c0_60 = arith.constant 0 : index
    %102 = vector.load %arg2[%c10, %c0_60] : memref<25x256xf32, #tpu.memory_space<vmem>>, vector<1x256xf32>
    %103 = vector.broadcast %102 : vector<1x256xf32> to vector<32x256xf32>
    %104 = arith.mulf %101, %103 : vector<32x256xf32>
    %105 = vector.extract_strided_slice %104 {offsets = [0, 0], sizes = [16, 256], strides = [1, 1]} : vector<32x256xf32> to vector<16x256xf32>
    %106 = arith.truncf %105 : vector<16x256xf32> to vector<16x256xbf16>
    %c160 = arith.constant 160 : index
    %c0_61 = arith.constant 0 : index
    %107 = vector.load %arg15[%c160, %c0_61] : memref<400x512xbf16, #tpu.memory_space<vmem>>, vector<16x256xbf16>
    tpu.vector_store %arg15[%c160, %c0_61], %106 {strides = array<i32>} : memref<400x512xbf16, #tpu.memory_space<vmem>>, vector<16x256xbf16>,
    %108 = vector.extract_strided_slice %104 {offsets = [16, 0], sizes = [16, 256], strides = [1, 1]} : vector<32x256xf32> to vector<16x256xf32>
    %109 = arith.truncf %108 : vector<16x256xf32> to vector<16x256xbf16>
    %c160_62 = arith.constant 160 : index
    %c256_63 = arith.constant 256 : index
    %110 = vector.load %arg15[%c160_62, %c256_63] : memref<400x512xbf16, #tpu.memory_space<vmem>>, vector<16x256xbf16>
    tpu.vector_store %arg15[%c160_62, %c256_63], %109 {strides = array<i32>} : memref<400x512xbf16, #tpu.memory_space<vmem>>, vector<16x256xbf16>,
    %c0_64 = arith.constant 0 : index
    %c127 = arith.constant 127 : index
    %111 = vector.load %arg14[%c0_64, %c127] : memref<32x512xf32, #tpu.memory_space<vmem>>, vector<32x256xf32>
    %c11 = arith.constant 11 : index
    %c0_65 = arith.constant 0 : index
    %112 = vector.load %arg2[%c11, %c0_65] : memref<25x256xf32, #tpu.memory_space<vmem>>, vector<1x256xf32>
    %113 = vector.broadcast %112 : vector<1x256xf32> to vector<32x256xf32>
    %114 = arith.mulf %111, %113 : vector<32x256xf32>
    %115 = vector.extract_strided_slice %114 {offsets = [0, 0], sizes = [16, 256], strides = [1, 1]} : vector<32x256xf32> to vector<16x256xf32>
    %116 = arith.truncf %115 : vector<16x256xf32> to vector<16x256xbf16>
    %c176 = arith.constant 176 : index
    %c0_66 = arith.constant 0 : index
    %117 = vector.load %arg15[%c176, %c0_66] : memref<400x512xbf16, #tpu.memory_space<vmem>>, vector<16x256xbf16>
    tpu.vector_store %arg15[%c176, %c0_66], %116 {strides = array<i32>} : memref<400x512xbf16, #tpu.memory_space<vmem>>, vector<16x256xbf16>,
    %118 = vector.extract_strided_slice %114 {offsets = [16, 0], sizes = [16, 256], strides = [1, 1]} : vector<32x256xf32> to vector<16x256xf32>
    %119 = arith.truncf %118 : vector<16x256xf32> to vector<16x256xbf16>
    %c176_67 = arith.constant 176 : index
    %c256_68 = arith.constant 256 : index
    %120 = vector.load %arg15[%c176_67, %c256_68] : memref<400x512xbf16, #tpu.memory_space<vmem>>, vector<16x256xbf16>
    tpu.vector_store %arg15[%c176_67, %c256_68], %119 {strides = array<i32>} : memref<400x512xbf16, #tpu.memory_space<vmem>>, vector<16x256xbf16>,
    %c0_69 = arith.constant 0 : index
    %c128_70 = arith.constant 128 : index
    %121 = vector.load %arg14[%c0_69, %c128_70] : memref<32x512xf32, #tpu.memory_space<vmem>>, vector<32x256xf32>
    %122 = vector.extract_strided_slice %121 {offsets = [0, 0], sizes = [16, 256], strides = [1, 1]} : vector<32x256xf32> to vector<16x256xf32>
    %123 = arith.truncf %122 : vector<16x256xf32> to vector<16x256xbf16>
    %c192 = arith.constant 192 : index
    %c0_71 = arith.constant 0 : index
    %124 = vector.load %arg15[%c192, %c0_71] : memref<400x512xbf16, #tpu.memory_space<vmem>>, vector<16x256xbf16>
    tpu.vector_store %arg15[%c192, %c0_71], %123 {strides = array<i32>} : memref<400x512xbf16, #tpu.memory_space<vmem>>, vector<16x256xbf16>,
    %125 = vector.extract_strided_slice %121 {offsets = [16, 0], sizes = [16, 256], strides = [1, 1]} : vector<32x256xf32> to vector<16x256xf32>
    %126 = arith.truncf %125 : vector<16x256xf32> to vector<16x256xbf16>
    %c192_72 = arith.constant 192 : index
    %c256_73 = arith.constant 256 : index
    %127 = vector.load %arg15[%c192_72, %c256_73] : memref<400x512xbf16, #tpu.memory_space<vmem>>, vector<16x256xbf16>
    tpu.vector_store %arg15[%c192_72, %c256_73], %126 {strides = array<i32>} : memref<400x512xbf16, #tpu.memory_space<vmem>>, vector<16x256xbf16>,
    %c0_74 = arith.constant 0 : index
    %c129 = arith.constant 129 : index
    %128 = vector.load %arg14[%c0_74, %c129] : memref<32x512xf32, #tpu.memory_space<vmem>>, vector<32x256xf32>
    %c13 = arith.constant 13 : index
    %c0_75 = arith.constant 0 : index
    %129 = vector.load %arg2[%c13, %c0_75] : memref<25x256xf32, #tpu.memory_space<vmem>>, vector<1x256xf32>
    %130 = vector.broadcast %129 : vector<1x256xf32> to vector<32x256xf32>
    %131 = arith.mulf %128, %130 : vector<32x256xf32>
    %132 = vector.extract_strided_slice %131 {offsets = [0, 0], sizes = [16, 256], strides = [1, 1]} : vector<32x256xf32> to vector<16x256xf32>
    %133 = arith.truncf %132 : vector<16x256xf32> to vector<16x256xbf16>
    %c208 = arith.constant 208 : index
    %c0_76 = arith.constant 0 : index
    %134 = vector.load %arg15[%c208, %c0_76] : memref<400x512xbf16, #tpu.memory_space<vmem>>, vector<16x256xbf16>
    tpu.vector_store %arg15[%c208, %c0_76], %133 {strides = array<i32>} : memref<400x512xbf16, #tpu.memory_space<vmem>>, vector<16x256xbf16>,
    %135 = vector.extract_strided_slice %131 {offsets = [16, 0], sizes = [16, 256], strides = [1, 1]} : vector<32x256xf32> to vector<16x256xf32>
    %136 = arith.truncf %135 : vector<16x256xf32> to vector<16x256xbf16>
    %c208_77 = arith.constant 208 : index
    %c256_78 = arith.constant 256 : index
    %137 = vector.load %arg15[%c208_77, %c256_78] : memref<400x512xbf16, #tpu.memory_space<vmem>>, vector<16x256xbf16>
    tpu.vector_store %arg15[%c208_77, %c256_78], %136 {strides = array<i32>} : memref<400x512xbf16, #tpu.memory_space<vmem>>, vector<16x256xbf16>,
    %c0_79 = arith.constant 0 : index
    %c130 = arith.constant 130 : index
    %138 = vector.load %arg14[%c0_79, %c130] : memref<32x512xf32, #tpu.memory_space<vmem>>, vector<32x256xf32>
    %c14 = arith.constant 14 : index
    %c0_80 = arith.constant 0 : index
    %139 = vector.load %arg2[%c14, %c0_80] : memref<25x256xf32, #tpu.memory_space<vmem>>, vector<1x256xf32>
    %140 = vector.broadcast %139 : vector<1x256xf32> to vector<32x256xf32>
    %141 = arith.mulf %138, %140 : vector<32x256xf32>
    %142 = vector.extract_strided_slice %141 {offsets = [0, 0], sizes = [16, 256], strides = [1, 1]} : vector<32x256xf32> to vector<16x256xf32>
    %143 = arith.truncf %142 : vector<16x256xf32> to vector<16x256xbf16>
    %c224 = arith.constant 224 : index
    %c0_81 = arith.constant 0 : index
    %144 = vector.load %arg15[%c224, %c0_81] : memref<400x512xbf16, #tpu.memory_space<vmem>>, vector<16x256xbf16>
    tpu.vector_store %arg15[%c224, %c0_81], %143 {strides = array<i32>} : memref<400x512xbf16, #tpu.memory_space<vmem>>, vector<16x256xbf16>,
    %145 = vector.extract_strided_slice %141 {offsets = [16, 0], sizes = [16, 256], strides = [1, 1]} : vector<32x256xf32> to vector<16x256xf32>
    %146 = arith.truncf %145 : vector<16x256xf32> to vector<16x256xbf16>
    %c224_82 = arith.constant 224 : index
    %c256_83 = arith.constant 256 : index
    %147 = vector.load %arg15[%c224_82, %c256_83] : memref<400x512xbf16, #tpu.memory_space<vmem>>, vector<16x256xbf16>
    tpu.vector_store %arg15[%c224_82, %c256_83], %146 {strides = array<i32>} : memref<400x512xbf16, #tpu.memory_space<vmem>>, vector<16x256xbf16>,
    %c0_84 = arith.constant 0 : index
    %c142 = arith.constant 142 : index
    %148 = vector.load %arg14[%c0_84, %c142] : memref<32x512xf32, #tpu.memory_space<vmem>>, vector<32x256xf32>
    %c15 = arith.constant 15 : index
    %c0_85 = arith.constant 0 : index
    %149 = vector.load %arg2[%c15, %c0_85] : memref<25x256xf32, #tpu.memory_space<vmem>>, vector<1x256xf32>
    %150 = vector.broadcast %149 : vector<1x256xf32> to vector<32x256xf32>
    %151 = arith.mulf %148, %150 : vector<32x256xf32>
    %152 = vector.extract_strided_slice %151 {offsets = [0, 0], sizes = [16, 256], strides = [1, 1]} : vector<32x256xf32> to vector<16x256xf32>
    %153 = arith.truncf %152 : vector<16x256xf32> to vector<16x256xbf16>
    %c240 = arith.constant 240 : index
    %c0_86 = arith.constant 0 : index
    %154 = vector.load %arg15[%c240, %c0_86] : memref<400x512xbf16, #tpu.memory_space<vmem>>, vector<16x256xbf16>
    tpu.vector_store %arg15[%c240, %c0_86], %153 {strides = array<i32>} : memref<400x512xbf16, #tpu.memory_space<vmem>>, vector<16x256xbf16>,
    %155 = vector.extract_strided_slice %151 {offsets = [16, 0], sizes = [16, 256], strides = [1, 1]} : vector<32x256xf32> to vector<16x256xf32>
    %156 = arith.truncf %155 : vector<16x256xf32> to vector<16x256xbf16>
    %c240_87 = arith.constant 240 : index
    %c256_88 = arith.constant 256 : index
    %157 = vector.load %arg15[%c240_87, %c256_88] : memref<400x512xbf16, #tpu.memory_space<vmem>>, vector<16x256xbf16>
    tpu.vector_store %arg15[%c240_87, %c256_88], %156 {strides = array<i32>} : memref<400x512xbf16, #tpu.memory_space<vmem>>, vector<16x256xbf16>,
    %c0_89 = arith.constant 0 : index
    %c143 = arith.constant 143 : index
    %158 = vector.load %arg14[%c0_89, %c143] : memref<32x512xf32, #tpu.memory_space<vmem>>, vector<32x256xf32>
    %c16_90 = arith.constant 16 : index
    %c0_91 = arith.constant 0 : index
    %159 = vector.load %arg2[%c16_90, %c0_91] : memref<25x256xf32, #tpu.memory_space<vmem>>, vector<1x256xf32>
    %160 = vector.broadcast %159 : vector<1x256xf32> to vector<32x256xf32>
    %161 = arith.mulf %158, %160 : vector<32x256xf32>
    %162 = vector.extract_strided_slice %161 {offsets = [0, 0], sizes = [16, 256], strides = [1, 1]} : vector<32x256xf32> to vector<16x256xf32>
    %163 = arith.truncf %162 : vector<16x256xf32> to vector<16x256xbf16>
    %c256_92 = arith.constant 256 : index
    %c0_93 = arith.constant 0 : index
    %164 = vector.load %arg15[%c256_92, %c0_93] : memref<400x512xbf16, #tpu.memory_space<vmem>>, vector<16x256xbf16>
    tpu.vector_store %arg15[%c256_92, %c0_93], %163 {strides = array<i32>} : memref<400x512xbf16, #tpu.memory_space<vmem>>, vector<16x256xbf16>,
    %165 = vector.extract_strided_slice %161 {offsets = [16, 0], sizes = [16, 256], strides = [1, 1]} : vector<32x256xf32> to vector<16x256xf32>
    %166 = arith.truncf %165 : vector<16x256xf32> to vector<16x256xbf16>
    %c256_94 = arith.constant 256 : index
    %c256_95 = arith.constant 256 : index
    %167 = vector.load %arg15[%c256_94, %c256_95] : memref<400x512xbf16, #tpu.memory_space<vmem>>, vector<16x256xbf16>
    tpu.vector_store %arg15[%c256_94, %c256_95], %166 {strides = array<i32>} : memref<400x512xbf16, #tpu.memory_space<vmem>>, vector<16x256xbf16>,
    %c0_96 = arith.constant 0 : index
    %c144_97 = arith.constant 144 : index
    %168 = vector.load %arg14[%c0_96, %c144_97] : memref<32x512xf32, #tpu.memory_space<vmem>>, vector<32x256xf32>
    %169 = vector.extract_strided_slice %168 {offsets = [0, 0], sizes = [16, 256], strides = [1, 1]} : vector<32x256xf32> to vector<16x256xf32>
    %170 = arith.truncf %169 : vector<16x256xf32> to vector<16x256xbf16>
    %c272 = arith.constant 272 : index
    %c0_98 = arith.constant 0 : index
    %171 = vector.load %arg15[%c272, %c0_98] : memref<400x512xbf16, #tpu.memory_space<vmem>>, vector<16x256xbf16>
    tpu.vector_store %arg15[%c272, %c0_98], %170 {strides = array<i32>} : memref<400x512xbf16, #tpu.memory_space<vmem>>, vector<16x256xbf16>,
    %172 = vector.extract_strided_slice %168 {offsets = [16, 0], sizes = [16, 256], strides = [1, 1]} : vector<32x256xf32> to vector<16x256xf32>
    %173 = arith.truncf %172 : vector<16x256xf32> to vector<16x256xbf16>
    %c272_99 = arith.constant 272 : index
    %c256_100 = arith.constant 256 : index
    %174 = vector.load %arg15[%c272_99, %c256_100] : memref<400x512xbf16, #tpu.memory_space<vmem>>, vector<16x256xbf16>
    tpu.vector_store %arg15[%c272_99, %c256_100], %173 {strides = array<i32>} : memref<400x512xbf16, #tpu.memory_space<vmem>>, vector<16x256xbf16>,
    %c0_101 = arith.constant 0 : index
    %c145 = arith.constant 145 : index
    %175 = vector.load %arg14[%c0_101, %c145] : memref<32x512xf32, #tpu.memory_space<vmem>>, vector<32x256xf32>
    %c18 = arith.constant 18 : index
    %c0_102 = arith.constant 0 : index
    %176 = vector.load %arg2[%c18, %c0_102] : memref<25x256xf32, #tpu.memory_space<vmem>>, vector<1x256xf32>
    %177 = vector.broadcast %176 : vector<1x256xf32> to vector<32x256xf32>
    %178 = arith.mulf %175, %177 : vector<32x256xf32>
    %179 = vector.extract_strided_slice %178 {offsets = [0, 0], sizes = [16, 256], strides = [1, 1]} : vector<32x256xf32> to vector<16x256xf32>
    %180 = arith.truncf %179 : vector<16x256xf32> to vector<16x256xbf16>
    %c288 = arith.constant 288 : index
    %c0_103 = arith.constant 0 : index
    %181 = vector.load %arg15[%c288, %c0_103] : memref<400x512xbf16, #tpu.memory_space<vmem>>, vector<16x256xbf16>
    tpu.vector_store %arg15[%c288, %c0_103], %180 {strides = array<i32>} : memref<400x512xbf16, #tpu.memory_space<vmem>>, vector<16x256xbf16>,
    %182 = vector.extract_strided_slice %178 {offsets = [16, 0], sizes = [16, 256], strides = [1, 1]} : vector<32x256xf32> to vector<16x256xf32>
    %183 = arith.truncf %182 : vector<16x256xf32> to vector<16x256xbf16>
    %c288_104 = arith.constant 288 : index
    %c256_105 = arith.constant 256 : index
    %184 = vector.load %arg15[%c288_104, %c256_105] : memref<400x512xbf16, #tpu.memory_space<vmem>>, vector<16x256xbf16>
    tpu.vector_store %arg15[%c288_104, %c256_105], %183 {strides = array<i32>} : memref<400x512xbf16, #tpu.memory_space<vmem>>, vector<16x256xbf16>,
    %c0_106 = arith.constant 0 : index
    %c146 = arith.constant 146 : index
    %185 = vector.load %arg14[%c0_106, %c146] : memref<32x512xf32, #tpu.memory_space<vmem>>, vector<32x256xf32>
    %c19 = arith.constant 19 : index
    %c0_107 = arith.constant 0 : index
    %186 = vector.load %arg2[%c19, %c0_107] : memref<25x256xf32, #tpu.memory_space<vmem>>, vector<1x256xf32>
    %187 = vector.broadcast %186 : vector<1x256xf32> to vector<32x256xf32>
    %188 = arith.mulf %185, %187 : vector<32x256xf32>
    %189 = vector.extract_strided_slice %188 {offsets = [0, 0], sizes = [16, 256], strides = [1, 1]} : vector<32x256xf32> to vector<16x256xf32>
    %190 = arith.truncf %189 : vector<16x256xf32> to vector<16x256xbf16>
    %c304 = arith.constant 304 : index
    %c0_108 = arith.constant 0 : index
    %191 = vector.load %arg15[%c304, %c0_108] : memref<400x512xbf16, #tpu.memory_space<vmem>>, vector<16x256xbf16>
    tpu.vector_store %arg15[%c304, %c0_108], %190 {strides = array<i32>} : memref<400x512xbf16, #tpu.memory_space<vmem>>, vector<16x256xbf16>,
    %192 = vector.extract_strided_slice %188 {offsets = [16, 0], sizes = [16, 256], strides = [1, 1]} : vector<32x256xf32> to vector<16x256xf32>
    %193 = arith.truncf %192 : vector<16x256xf32> to vector<16x256xbf16>
    %c304_109 = arith.constant 304 : index
    %c256_110 = arith.constant 256 : index
    %194 = vector.load %arg15[%c304_109, %c256_110] : memref<400x512xbf16, #tpu.memory_space<vmem>>, vector<16x256xbf16>
    tpu.vector_store %arg15[%c304_109, %c256_110], %193 {strides = array<i32>} : memref<400x512xbf16, #tpu.memory_space<vmem>>, vector<16x256xbf16>,
    %c0_111 = arith.constant 0 : index
    %c158 = arith.constant 158 : index
    %195 = vector.load %arg14[%c0_111, %c158] : memref<32x512xf32, #tpu.memory_space<vmem>>, vector<32x256xf32>
    %c20 = arith.constant 20 : index
    %c0_112 = arith.constant 0 : index
    %196 = vector.load %arg2[%c20, %c0_112] : memref<25x256xf32, #tpu.memory_space<vmem>>, vector<1x256xf32>
    %197 = vector.broadcast %196 : vector<1x256xf32> to vector<32x256xf32>
    %198 = arith.mulf %195, %197 : vector<32x256xf32>
    %199 = vector.extract_strided_slice %198 {offsets = [0, 0], sizes = [16, 256], strides = [1, 1]} : vector<32x256xf32> to vector<16x256xf32>
    %200 = arith.truncf %199 : vector<16x256xf32> to vector<16x256xbf16>
    %c320 = arith.constant 320 : index
    %c0_113 = arith.constant 0 : index
    %201 = vector.load %arg15[%c320, %c0_113] : memref<400x512xbf16, #tpu.memory_space<vmem>>, vector<16x256xbf16>
    tpu.vector_store %arg15[%c320, %c0_113], %200 {strides = array<i32>} : memref<400x512xbf16, #tpu.memory_space<vmem>>, vector<16x256xbf16>,
    %202 = vector.extract_strided_slice %198 {offsets = [16, 0], sizes = [16, 256], strides = [1, 1]} : vector<32x256xf32> to vector<16x256xf32>
    %203 = arith.truncf %202 : vector<16x256xf32> to vector<16x256xbf16>
    %c320_114 = arith.constant 320 : index
    %c256_115 = arith.constant 256 : index
    %204 = vector.load %arg15[%c320_114, %c256_115] : memref<400x512xbf16, #tpu.memory_space<vmem>>, vector<16x256xbf16>
    tpu.vector_store %arg15[%c320_114, %c256_115], %203 {strides = array<i32>} : memref<400x512xbf16, #tpu.memory_space<vmem>>, vector<16x256xbf16>,
    %c0_116 = arith.constant 0 : index
    %c159 = arith.constant 159 : index
    %205 = vector.load %arg14[%c0_116, %c159] : memref<32x512xf32, #tpu.memory_space<vmem>>, vector<32x256xf32>
    %c21 = arith.constant 21 : index
    %c0_117 = arith.constant 0 : index
    %206 = vector.load %arg2[%c21, %c0_117] : memref<25x256xf32, #tpu.memory_space<vmem>>, vector<1x256xf32>
    %207 = vector.broadcast %206 : vector<1x256xf32> to vector<32x256xf32>
    %208 = arith.mulf %205, %207 : vector<32x256xf32>
    %209 = vector.extract_strided_slice %208 {offsets = [0, 0], sizes = [16, 256], strides = [1, 1]} : vector<32x256xf32> to vector<16x256xf32>
    %210 = arith.truncf %209 : vector<16x256xf32> to vector<16x256xbf16>
    %c336 = arith.constant 336 : index
    %c0_118 = arith.constant 0 : index
    %211 = vector.load %arg15[%c336, %c0_118] : memref<400x512xbf16, #tpu.memory_space<vmem>>, vector<16x256xbf16>
    tpu.vector_store %arg15[%c336, %c0_118], %210 {strides = array<i32>} : memref<400x512xbf16, #tpu.memory_space<vmem>>, vector<16x256xbf16>,
    %212 = vector.extract_strided_slice %208 {offsets = [16, 0], sizes = [16, 256], strides = [1, 1]} : vector<32x256xf32> to vector<16x256xf32>
    %213 = arith.truncf %212 : vector<16x256xf32> to vector<16x256xbf16>
    %c336_119 = arith.constant 336 : index
    %c256_120 = arith.constant 256 : index
    %214 = vector.load %arg15[%c336_119, %c256_120] : memref<400x512xbf16, #tpu.memory_space<vmem>>, vector<16x256xbf16>
    tpu.vector_store %arg15[%c336_119, %c256_120], %213 {strides = array<i32>} : memref<400x512xbf16, #tpu.memory_space<vmem>>, vector<16x256xbf16>,
    %c0_121 = arith.constant 0 : index
    %c160_122 = arith.constant 160 : index
    %215 = vector.load %arg14[%c0_121, %c160_122] : memref<32x512xf32, #tpu.memory_space<vmem>>, vector<32x256xf32>
    %216 = vector.extract_strided_slice %215 {offsets = [0, 0], sizes = [16, 256], strides = [1, 1]} : vector<32x256xf32> to vector<16x256xf32>
    %217 = arith.truncf %216 : vector<16x256xf32> to vector<16x256xbf16>
    %c352 = arith.constant 352 : index
    %c0_123 = arith.constant 0 : index
    %218 = vector.load %arg15[%c352, %c0_123] : memref<400x512xbf16, #tpu.memory_space<vmem>>, vector<16x256xbf16>
    tpu.vector_store %arg15[%c352, %c0_123], %217 {strides = array<i32>} : memref<400x512xbf16, #tpu.memory_space<vmem>>, vector<16x256xbf16>,
    %219 = vector.extract_strided_slice %215 {offsets = [16, 0], sizes = [16, 256], strides = [1, 1]} : vector<32x256xf32> to vector<16x256xf32>
    %220 = arith.truncf %219 : vector<16x256xf32> to vector<16x256xbf16>
    %c352_124 = arith.constant 352 : index
    %c256_125 = arith.constant 256 : index
    %221 = vector.load %arg15[%c352_124, %c256_125] : memref<400x512xbf16, #tpu.memory_space<vmem>>, vector<16x256xbf16>
    tpu.vector_store %arg15[%c352_124, %c256_125], %220 {strides = array<i32>} : memref<400x512xbf16, #tpu.memory_space<vmem>>, vector<16x256xbf16>,
    %c0_126 = arith.constant 0 : index
    %c161 = arith.constant 161 : index
    %222 = vector.load %arg14[%c0_126, %c161] : memref<32x512xf32, #tpu.memory_space<vmem>>, vector<32x256xf32>
    %c23 = arith.constant 23 : index
    %c0_127 = arith.constant 0 : index
    %223 = vector.load %arg2[%c23, %c0_127] : memref<25x256xf32, #tpu.memory_space<vmem>>, vector<1x256xf32>
    %224 = vector.broadcast %223 : vector<1x256xf32> to vector<32x256xf32>
    %225 = arith.mulf %222, %224 : vector<32x256xf32>
    %226 = vector.extract_strided_slice %225 {offsets = [0, 0], sizes = [16, 256], strides = [1, 1]} : vector<32x256xf32> to vector<16x256xf32>
    %227 = arith.truncf %226 : vector<16x256xf32> to vector<16x256xbf16>
    %c368 = arith.constant 368 : index
    %c0_128 = arith.constant 0 : index
    %228 = vector.load %arg15[%c368, %c0_128] : memref<400x512xbf16, #tpu.memory_space<vmem>>, vector<16x256xbf16>
    tpu.vector_store %arg15[%c368, %c0_128], %227 {strides = array<i32>} : memref<400x512xbf16, #tpu.memory_space<vmem>>, vector<16x256xbf16>,
    %229 = vector.extract_strided_slice %225 {offsets = [16, 0], sizes = [16, 256], strides = [1, 1]} : vector<32x256xf32> to vector<16x256xf32>
    %230 = arith.truncf %229 : vector<16x256xf32> to vector<16x256xbf16>
    %c368_129 = arith.constant 368 : index
    %c256_130 = arith.constant 256 : index
    %231 = vector.load %arg15[%c368_129, %c256_130] : memref<400x512xbf16, #tpu.memory_space<vmem>>, vector<16x256xbf16>
    tpu.vector_store %arg15[%c368_129, %c256_130], %230 {strides = array<i32>} : memref<400x512xbf16, #tpu.memory_space<vmem>>, vector<16x256xbf16>,
    %c0_131 = arith.constant 0 : index
    %c162 = arith.constant 162 : index
    %232 = vector.load %arg14[%c0_131, %c162] : memref<32x512xf32, #tpu.memory_space<vmem>>, vector<32x256xf32>
    %c24 = arith.constant 24 : index
    %c0_132 = arith.constant 0 : index
    %233 = vector.load %arg2[%c24, %c0_132] : memref<25x256xf32, #tpu.memory_space<vmem>>, vector<1x256xf32>
    %234 = vector.broadcast %233 : vector<1x256xf32> to vector<32x256xf32>
    %235 = arith.mulf %232, %234 : vector<32x256xf32>
    %236 = vector.extract_strided_slice %235 {offsets = [0, 0], sizes = [16, 256], strides = [1, 1]} : vector<32x256xf32> to vector<16x256xf32>
    %237 = arith.truncf %236 : vector<16x256xf32> to vector<16x256xbf16>
    %c384_133 = arith.constant 384 : index
    %c0_134 = arith.constant 0 : index
    %238 = vector.load %arg15[%c384_133, %c0_134] : memref<400x512xbf16, #tpu.memory_space<vmem>>, vector<16x256xbf16>
    tpu.vector_store %arg15[%c384_133, %c0_134], %237 {strides = array<i32>} : memref<400x512xbf16, #tpu.memory_space<vmem>>, vector<16x256xbf16>,
    %239 = vector.extract_strided_slice %235 {offsets = [16, 0], sizes = [16, 256], strides = [1, 1]} : vector<32x256xf32> to vector<16x256xf32>
    %240 = arith.truncf %239 : vector<16x256xf32> to vector<16x256xbf16>
    %c384_135 = arith.constant 384 : index
    %c256_136 = arith.constant 256 : index
    %241 = vector.load %arg15[%c384_135, %c256_136] : memref<400x512xbf16, #tpu.memory_space<vmem>>, vector<16x256xbf16>
    tpu.vector_store %arg15[%c384_135, %c256_136], %240 {strides = array<i32>} : memref<400x512xbf16, #tpu.memory_space<vmem>>, vector<16x256xbf16>,
    %c0_137 = arith.constant 0 : index
    %c0_138 = arith.constant 0 : index
    %242 = vector.load %arg3[%c0_137, %c0_138] : memref<8x400xbf16, #tpu.memory_space<vmem>>, vector<8x400xbf16>
    %c0_139 = arith.constant 0 : index
    %c0_140 = arith.constant 0 : index
    %243 = vector.load %arg15[%c0_139, %c0_140] : memref<400x512xbf16, #tpu.memory_space<vmem>>, vector<400x512xbf16>
    %cst_141 = arith.constant dense<0.000000e+00> : vector<8x512xf32>
    %244 = tpu.matmul %242, %243, %cst_141 {dimension_numbers = #tpu.dot_dimension_numbers<[1], [0], [0], [1], [0, 0, 1, 1], [], []>} : vector<8x400xbf16>, vector<400x512xbf16>, vector<8x512xf32> -> vector<8x512xf32>
    %245 = vector.extract_strided_slice %244 {offsets = [0, 0], sizes = [8, 256], strides = [1, 1]} : vector<8x512xf32> to vector<8x256xf32>
    %cst_142 = arith.constant dense<0.000000e+00> : vector<8xf32>
    %246 = vector.multi_reduction <add>, %245, %cst_142 [1] : vector<8x256xf32> to vector<8xf32>
    %247 = vector.shape_cast %246 : vector<8xf32> to vector<8x1xf32>
    %cst_143 = arith.constant 2.560000e+02 : f32
    %248 = vector.broadcast %cst_143 : f32 to vector<8x1xf32>
    %249 = arith.divf %247, %248 : vector<8x1xf32>
    %250 = vector.broadcast %249 : vector<8x1xf32> to vector<8x256xf32>
    %251 = arith.subf %245, %250 : vector<8x256xf32>
    %252 = arith.mulf %251, %251 : vector<8x256xf32>
    %cst_144 = arith.constant dense<0.000000e+00> : vector<8xf32>
    %253 = vector.multi_reduction <add>, %252, %cst_144 [1] : vector<8x256xf32> to vector<8xf32>
    %254 = vector.shape_cast %253 : vector<8xf32> to vector<8x1xf32>
    %cst_145 = arith.constant 2.560000e+02 : f32
    %255 = vector.broadcast %cst_145 : f32 to vector<8x1xf32>
    %256 = arith.divf %254, %255 : vector<8x1xf32>
    %c0_146 = arith.constant 0 : index
    %c0_147 = arith.constant 0 : index
    %257 = vector.load %arg4[%c0_146, %c0_147] : memref<8x1xf32, #tpu.memory_space<vmem>>, vector<8x1xf32>
    %cst_148 = arith.constant 9.99999974E-6 : f32
    %258 = vector.broadcast %cst_148 : f32 to vector<8x1xf32>
    %259 = arith.addf %256, %258 : vector<8x1xf32>
    %260 = math.rsqrt %259 : vector<8x1xf32>
    %261 = arith.mulf %257, %260 : vector<8x1xf32>
    %262 = vector.broadcast %261 : vector<8x1xf32> to vector<8x256xf32>
    %263 = arith.mulf %251, %262 : vector<8x256xf32>
    %c0_149 = arith.constant 0 : index
    %c0_150 = arith.constant 0 : index
    %264 = vector.load %arg5[%c0_149, %c0_150] : memref<8x1xf32, #tpu.memory_space<vmem>>, vector<8x1xf32>
    %265 = vector.broadcast %264 : vector<8x1xf32> to vector<8x256xf32>
    %266 = arith.addf %263, %265 : vector<8x256xf32>
    %cst_151 = arith.constant 2.000000e+01 : f32
    %267 = vector.broadcast %cst_151 : f32 to vector<8x256xf32>
    %268 = arith.minimumf %266, %267 : vector<8x256xf32>
    %269 = math.exp %268 : vector<8x256xf32>
    %cst_152 = arith.constant 2.000000e+00 : f32
    %270 = vector.broadcast %cst_152 : f32 to vector<8x256xf32>
    %271 = arith.addf %269, %270 : vector<8x256xf32>
    %272 = arith.mulf %269, %271 : vector<8x256xf32>
    %cst_153 = arith.constant 2.000000e+00 : f32
    %273 = vector.broadcast %cst_153 : f32 to vector<8x256xf32>
    %274 = arith.addf %272, %273 : vector<8x256xf32>
    %275 = arith.divf %272, %274 : vector<8x256xf32>
    %276 = arith.mulf %266, %275 : vector<8x256xf32>
    %277 = vector.extract_strided_slice %244 {offsets = [0, 256], sizes = [8, 256], strides = [1, 1]} : vector<8x512xf32> to vector<8x256xf32>
    %cst_154 = arith.constant dense<0.000000e+00> : vector<8xf32>
    %278 = vector.multi_reduction <add>, %277, %cst_154 [1] : vector<8x256xf32> to vector<8xf32>
    %279 = vector.shape_cast %278 : vector<8xf32> to vector<8x1xf32>
    %cst_155 = arith.constant 2.560000e+02 : f32
    %280 = vector.broadcast %cst_155 : f32 to vector<8x1xf32>
    %281 = arith.divf %279, %280 : vector<8x1xf32>
    %282 = vector.broadcast %281 : vector<8x1xf32> to vector<8x256xf32>
    %283 = arith.subf %277, %282 : vector<8x256xf32>
    %284 = arith.mulf %283, %283 : vector<8x256xf32>
    %cst_156 = arith.constant dense<0.000000e+00> : vector<8xf32>
    %285 = vector.multi_reduction <add>, %284, %cst_156 [1] : vector<8x256xf32> to vector<8xf32>
    %286 = vector.shape_cast %285 : vector<8xf32> to vector<8x1xf32>
    %cst_157 = arith.constant 2.560000e+02 : f32
    %287 = vector.broadcast %cst_157 : f32 to vector<8x1xf32>
    %288 = arith.divf %286, %287 : vector<8x1xf32>
    %c0_158 = arith.constant 0 : index
    %c0_159 = arith.constant 0 : index
    %289 = vector.load %arg4[%c0_158, %c0_159] : memref<8x1xf32, #tpu.memory_space<vmem>>, vector<8x1xf32>
    %cst_160 = arith.constant 9.99999974E-6 : f32
    %290 = vector.broadcast %cst_160 : f32 to vector<8x1xf32>
    %291 = arith.addf %288, %290 : vector<8x1xf32>
    %292 = math.rsqrt %291 : vector<8x1xf32>
    %293 = arith.mulf %289, %292 : vector<8x1xf32>
    %294 = vector.broadcast %293 : vector<8x1xf32> to vector<8x256xf32>
    %295 = arith.mulf %283, %294 : vector<8x256xf32>
    %c0_161 = arith.constant 0 : index
    %c0_162 = arith.constant 0 : index
    %296 = vector.load %arg5[%c0_161, %c0_162] : memref<8x1xf32, #tpu.memory_space<vmem>>, vector<8x1xf32>
    %297 = vector.broadcast %296 : vector<8x1xf32> to vector<8x256xf32>
    %298 = arith.addf %295, %297 : vector<8x256xf32>
    %cst_163 = arith.constant 2.000000e+01 : f32
    %299 = vector.broadcast %cst_163 : f32 to vector<8x256xf32>
    %300 = arith.minimumf %298, %299 : vector<8x256xf32>
    %301 = math.exp %300 : vector<8x256xf32>
    %cst_164 = arith.constant 2.000000e+00 : f32
    %302 = vector.broadcast %cst_164 : f32 to vector<8x256xf32>
    %303 = arith.addf %301, %302 : vector<8x256xf32>
    %304 = arith.mulf %301, %303 : vector<8x256xf32>
    %cst_165 = arith.constant 2.000000e+00 : f32
    %305 = vector.broadcast %cst_165 : f32 to vector<8x256xf32>
    %306 = arith.addf %304, %305 : vector<8x256xf32>
    %307 = arith.divf %304, %306 : vector<8x256xf32>
    %308 = arith.mulf %298, %307 : vector<8x256xf32>
    %c0_166 = arith.constant 0 : index
    %c128_167 = arith.constant 128 : index
    %309 = vector.load %arg14[%c0_166, %c128_167] : memref<32x512xf32, #tpu.memory_space<vmem>>, vector<8x256xf32>
    tpu.vector_store %arg14[%c0_166, %c128_167], %276 {strides = array<i32>} : memref<32x512xf32, #tpu.memory_space<vmem>>, vector<8x256xf32>,
    %cst_168 = arith.constant 0.000000e+00 : f32
    %310 = vector.broadcast %cst_168 : f32 to vector<8x256xf32>
    %c8_169 = arith.constant 8 : index
    %c128_170 = arith.constant 128 : index
    %311 = vector.load %arg14[%c8_169, %c128_170] : memref<32x512xf32, #tpu.memory_space<vmem>>, vector<8x256xf32>
    tpu.vector_store %arg14[%c8_169, %c128_170], %310 {strides = array<i32>} : memref<32x512xf32, #tpu.memory_space<vmem>>, vector<8x256xf32>,
    %c16_171 = arith.constant 16 : index
    %c128_172 = arith.constant 128 : index
    %312 = vector.load %arg14[%c16_171, %c128_172] : memref<32x512xf32, #tpu.memory_space<vmem>>, vector<8x256xf32>
    tpu.vector_store %arg14[%c16_171, %c128_172], %308 {strides = array<i32>} : memref<32x512xf32, #tpu.memory_space<vmem>>, vector<8x256xf32>,
    %cst_173 = arith.constant 0.000000e+00 : f32
    %313 = vector.broadcast %cst_173 : f32 to vector<8x256xf32>
    %c24_174 = arith.constant 24 : index
    %c128_175 = arith.constant 128 : index
    %314 = vector.load %arg14[%c24_174, %c128_175] : memref<32x512xf32, #tpu.memory_space<vmem>>, vector<8x256xf32>
    tpu.vector_store %arg14[%c24_174, %c128_175], %313 {strides = array<i32>} : memref<32x512xf32, #tpu.memory_space<vmem>>, vector<8x256xf32>,
    %c0_176 = arith.constant 0 : index
    %c94_177 = arith.constant 94 : index
    %315 = vector.load %arg14[%c0_176, %c94_177] : memref<32x512xf32, #tpu.memory_space<vmem>>, vector<32x256xf32>
    %c0_178 = arith.constant 0 : index
    %c0_179 = arith.constant 0 : index
    %316 = vector.load %arg2[%c0_178, %c0_179] : memref<25x256xf32, #tpu.memory_space<vmem>>, vector<1x256xf32>
    %317 = vector.broadcast %316 : vector<1x256xf32> to vector<32x256xf32>
    %318 = arith.mulf %315, %317 : vector<32x256xf32>
    %319 = vector.extract_strided_slice %318 {offsets = [0, 0], sizes = [16, 256], strides = [1, 1]} : vector<32x256xf32> to vector<16x256xf32>
    %320 = arith.truncf %319 : vector<16x256xf32> to vector<16x256xbf16>
    %c0_180 = arith.constant 0 : index
    %c0_181 = arith.constant 0 : index
    %321 = vector.load %arg15[%c0_180, %c0_181] : memref<400x512xbf16, #tpu.memory_space<vmem>>, vector<16x256xbf16>
    tpu.vector_store %arg15[%c0_180, %c0_181], %320 {strides = array<i32>} : memref<400x512xbf16, #tpu.memory_space<vmem>>, vector<16x256xbf16>,
    %322 = vector.extract_strided_slice %318 {offsets = [16, 0], sizes = [16, 256], strides = [1, 1]} : vector<32x256xf32> to vector<16x256xf32>
    %323 = arith.truncf %322 : vector<16x256xf32> to vector<16x256xbf16>
    %c0_182 = arith.constant 0 : index
    %c256_183 = arith.constant 256 : index
    %324 = vector.load %arg15[%c0_182, %c256_183] : memref<400x512xbf16, #tpu.memory_space<vmem>>, vector<16x256xbf16>
    tpu.vector_store %arg15[%c0_182, %c256_183], %323 {strides = array<i32>} : memref<400x512xbf16, #tpu.memory_space<vmem>>, vector<16x256xbf16>,
    %c0_184 = arith.constant 0 : index
    %c95_185 = arith.constant 95 : index
    %325 = vector.load %arg14[%c0_184, %c95_185] : memref<32x512xf32, #tpu.memory_space<vmem>>, vector<32x256xf32>
    %c1_186 = arith.constant 1 : index
    %c0_187 = arith.constant 0 : index
    %326 = vector.load %arg2[%c1_186, %c0_187] : memref<25x256xf32, #tpu.memory_space<vmem>>, vector<1x256xf32>
    %327 = vector.broadcast %326 : vector<1x256xf32> to vector<32x256xf32>
    %328 = arith.mulf %325, %327 : vector<32x256xf32>
    %329 = vector.extract_strided_slice %328 {offsets = [0, 0], sizes = [16, 256], strides = [1, 1]} : vector<32x256xf32> to vector<16x256xf32>
    %330 = arith.truncf %329 : vector<16x256xf32> to vector<16x256xbf16>
    %c16_188 = arith.constant 16 : index
    %c0_189 = arith.constant 0 : index
    %331 = vector.load %arg15[%c16_188, %c0_189] : memref<400x512xbf16, #tpu.memory_space<vmem>>, vector<16x256xbf16>
    tpu.vector_store %arg15[%c16_188, %c0_189], %330 {strides = array<i32>} : memref<400x512xbf16, #tpu.memory_space<vmem>>, vector<16x256xbf16>,
    %332 = vector.extract_strided_slice %328 {offsets = [16, 0], sizes = [16, 256], strides = [1, 1]} : vector<32x256xf32> to vector<16x256xf32>
    %333 = arith.truncf %332 : vector<16x256xf32> to vector<16x256xbf16>
    %c16_190 = arith.constant 16 : index
    %c256_191 = arith.constant 256 : index
    %334 = vector.load %arg15[%c16_190, %c256_191] : memref<400x512xbf16, #tpu.memory_space<vmem>>, vector<16x256xbf16>
    tpu.vector_store %arg15[%c16_190, %c256_191], %333 {strides = array<i32>} : memref<400x512xbf16, #tpu.memory_space<vmem>>, vector<16x256xbf16>,
    %c0_192 = arith.constant 0 : index
    %c96_193 = arith.constant 96 : index
    %335 = vector.load %arg14[%c0_192, %c96_193] : memref<32x512xf32, #tpu.memory_space<vmem>>, vector<32x256xf32>
    %336 = vector.extract_strided_slice %335 {offsets = [0, 0], sizes = [16, 256], strides = [1, 1]} : vector<32x256xf32> to vector<16x256xf32>
    %337 = arith.truncf %336 : vector<16x256xf32> to vector<16x256xbf16>
    %c32_194 = arith.constant 32 : index
    %c0_195 = arith.constant 0 : index
    %338 = vector.load %arg15[%c32_194, %c0_195] : memref<400x512xbf16, #tpu.memory_space<vmem>>, vector<16x256xbf16>
    tpu.vector_store %arg15[%c32_194, %c0_195], %337 {strides = array<i32>} : memref<400x512xbf16, #tpu.memory_space<vmem>>, vector<16x256xbf16>,
    %339 = vector.extract_strided_slice %335 {offsets = [16, 0], sizes = [16, 256], strides = [1, 1]} : vector<32x256xf32> to vector<16x256xf32>
    %340 = arith.truncf %339 : vector<16x256xf32> to vector<16x256xbf16>
    %c32_196 = arith.constant 32 : index
    %c256_197 = arith.constant 256 : index
    %341 = vector.load %arg15[%c32_196, %c256_197] : memref<400x512xbf16, #tpu.memory_space<vmem>>, vector<16x256xbf16>
    tpu.vector_store %arg15[%c32_196, %c256_197], %340 {strides = array<i32>} : memref<400x512xbf16, #tpu.memory_space<vmem>>, vector<16x256xbf16>,
    %c0_198 = arith.constant 0 : index
    %c97_199 = arith.constant 97 : index
    %342 = vector.load %arg14[%c0_198, %c97_199] : memref<32x512xf32, #tpu.memory_space<vmem>>, vector<32x256xf32>
    %c3_200 = arith.constant 3 : index
    %c0_201 = arith.constant 0 : index
    %343 = vector.load %arg2[%c3_200, %c0_201] : memref<25x256xf32, #tpu.memory_space<vmem>>, vector<1x256xf32>
    %344 = vector.broadcast %343 : vector<1x256xf32> to vector<32x256xf32>
    %345 = arith.mulf %342, %344 : vector<32x256xf32>
    %346 = vector.extract_strided_slice %345 {offsets = [0, 0], sizes = [16, 256], strides = [1, 1]} : vector<32x256xf32> to vector<16x256xf32>
    %347 = arith.truncf %346 : vector<16x256xf32> to vector<16x256xbf16>
    %c48_202 = arith.constant 48 : index
    %c0_203 = arith.constant 0 : index
    %348 = vector.load %arg15[%c48_202, %c0_203] : memref<400x512xbf16, #tpu.memory_space<vmem>>, vector<16x256xbf16>
    tpu.vector_store %arg15[%c48_202, %c0_203], %347 {strides = array<i32>} : memref<400x512xbf16, #tpu.memory_space<vmem>>, vector<16x256xbf16>,
    %349 = vector.extract_strided_slice %345 {offsets = [16, 0], sizes = [16, 256], strides = [1, 1]} : vector<32x256xf32> to vector<16x256xf32>
    %350 = arith.truncf %349 : vector<16x256xf32> to vector<16x256xbf16>
    %c48_204 = arith.constant 48 : index
    %c256_205 = arith.constant 256 : index
    %351 = vector.load %arg15[%c48_204, %c256_205] : memref<400x512xbf16, #tpu.memory_space<vmem>>, vector<16x256xbf16>
    tpu.vector_store %arg15[%c48_204, %c256_205], %350 {strides = array<i32>} : memref<400x512xbf16, #tpu.memory_space<vmem>>, vector<16x256xbf16>,
    %c0_206 = arith.constant 0 : index
    %c98_207 = arith.constant 98 : index
    %352 = vector.load %arg14[%c0_206, %c98_207] : memref<32x512xf32, #tpu.memory_space<vmem>>, vector<32x256xf32>
    %c4_208 = arith.constant 4 : index
    %c0_209 = arith.constant 0 : index
    %353 = vector.load %arg2[%c4_208, %c0_209] : memref<25x256xf32, #tpu.memory_space<vmem>>, vector<1x256xf32>
    %354 = vector.broadcast %353 : vector<1x256xf32> to vector<32x256xf32>
    %355 = arith.mulf %352, %354 : vector<32x256xf32>
    %356 = vector.extract_strided_slice %355 {offsets = [0, 0], sizes = [16, 256], strides = [1, 1]} : vector<32x256xf32> to vector<16x256xf32>
    %357 = arith.truncf %356 : vector<16x256xf32> to vector<16x256xbf16>
    %c64_210 = arith.constant 64 : index
    %c0_211 = arith.constant 0 : index
    %358 = vector.load %arg15[%c64_210, %c0_211] : memref<400x512xbf16, #tpu.memory_space<vmem>>, vector<16x256xbf16>
    tpu.vector_store %arg15[%c64_210, %c0_211], %357 {strides = array<i32>} : memref<400x512xbf16, #tpu.memory_space<vmem>>, vector<16x256xbf16>,
    %359 = vector.extract_strided_slice %355 {offsets = [16, 0], sizes = [16, 256], strides = [1, 1]} : vector<32x256xf32> to vector<16x256xf32>
    %360 = arith.truncf %359 : vector<16x256xf32> to vector<16x256xbf16>
    %c64_212 = arith.constant 64 : index
    %c256_213 = arith.constant 256 : index
    %361 = vector.load %arg15[%c64_212, %c256_213] : memref<400x512xbf16, #tpu.memory_space<vmem>>, vector<16x256xbf16>
    tpu.vector_store %arg15[%c64_212, %c256_213], %360 {strides = array<i32>} : memref<400x512xbf16, #tpu.memory_space<vmem>>, vector<16x256xbf16>,
    %c0_214 = arith.constant 0 : index
    %c110_215 = arith.constant 110 : index
    %362 = vector.load %arg14[%c0_214, %c110_215] : memref<32x512xf32, #tpu.memory_space<vmem>>, vector<32x256xf32>
    %c5_216 = arith.constant 5 : index
    %c0_217 = arith.constant 0 : index
    %363 = vector.load %arg2[%c5_216, %c0_217] : memref<25x256xf32, #tpu.memory_space<vmem>>, vector<1x256xf32>
    %364 = vector.broadcast %363 : vector<1x256xf32> to vector<32x256xf32>
    %365 = arith.mulf %362, %364 : vector<32x256xf32>
    %366 = vector.extract_strided_slice %365 {offsets = [0, 0], sizes = [16, 256], strides = [1, 1]} : vector<32x256xf32> to vector<16x256xf32>
    %367 = arith.truncf %366 : vector<16x256xf32> to vector<16x256xbf16>
    %c80_218 = arith.constant 80 : index
    %c0_219 = arith.constant 0 : index
    %368 = vector.load %arg15[%c80_218, %c0_219] : memref<400x512xbf16, #tpu.memory_space<vmem>>, vector<16x256xbf16>
    tpu.vector_store %arg15[%c80_218, %c0_219], %367 {strides = array<i32>} : memref<400x512xbf16, #tpu.memory_space<vmem>>, vector<16x256xbf16>,
    %369 = vector.extract_strided_slice %365 {offsets = [16, 0], sizes = [16, 256], strides = [1, 1]} : vector<32x256xf32> to vector<16x256xf32>
    %370 = arith.truncf %369 : vector<16x256xf32> to vector<16x256xbf16>
    %c80_220 = arith.constant 80 : index
    %c256_221 = arith.constant 256 : index
    %371 = vector.load %arg15[%c80_220, %c256_221] : memref<400x512xbf16, #tpu.memory_space<vmem>>, vector<16x256xbf16>
    tpu.vector_store %arg15[%c80_220, %c256_221], %370 {strides = array<i32>} : memref<400x512xbf16, #tpu.memory_space<vmem>>, vector<16x256xbf16>,
    %c0_222 = arith.constant 0 : index
    %c111_223 = arith.constant 111 : index
    %372 = vector.load %arg14[%c0_222, %c111_223] : memref<32x512xf32, #tpu.memory_space<vmem>>, vector<32x256xf32>
    %c6_224 = arith.constant 6 : index
    %c0_225 = arith.constant 0 : index
    %373 = vector.load %arg2[%c6_224, %c0_225] : memref<25x256xf32, #tpu.memory_space<vmem>>, vector<1x256xf32>
    %374 = vector.broadcast %373 : vector<1x256xf32> to vector<32x256xf32>
    %375 = arith.mulf %372, %374 : vector<32x256xf32>
    %376 = vector.extract_strided_slice %375 {offsets = [0, 0], sizes = [16, 256], strides = [1, 1]} : vector<32x256xf32> to vector<16x256xf32>
    %377 = arith.truncf %376 : vector<16x256xf32> to vector<16x256xbf16>
    %c96_226 = arith.constant 96 : index
    %c0_227 = arith.constant 0 : index
    %378 = vector.load %arg15[%c96_226, %c0_227] : memref<400x512xbf16, #tpu.memory_space<vmem>>, vector<16x256xbf16>
    tpu.vector_store %arg15[%c96_226, %c0_227], %377 {strides = array<i32>} : memref<400x512xbf16, #tpu.memory_space<vmem>>, vector<16x256xbf16>,
    %379 = vector.extract_strided_slice %375 {offsets = [16, 0], sizes = [16, 256], strides = [1, 1]} : vector<32x256xf32> to vector<16x256xf32>
    %380 = arith.truncf %379 : vector<16x256xf32> to vector<16x256xbf16>
    %c96_228 = arith.constant 96 : index
    %c256_229 = arith.constant 256 : index
    %381 = vector.load %arg15[%c96_228, %c256_229] : memref<400x512xbf16, #tpu.memory_space<vmem>>, vector<16x256xbf16>
    tpu.vector_store %arg15[%c96_228, %c256_229], %380 {strides = array<i32>} : memref<400x512xbf16, #tpu.memory_space<vmem>>, vector<16x256xbf16>,
    %c0_230 = arith.constant 0 : index
    %c112_231 = arith.constant 112 : index
    %382 = vector.load %arg14[%c0_230, %c112_231] : memref<32x512xf32, #tpu.memory_space<vmem>>, vector<32x256xf32>
    %383 = vector.extract_strided_slice %382 {offsets = [0, 0], sizes = [16, 256], strides = [1, 1]} : vector<32x256xf32> to vector<16x256xf32>
    %384 = arith.truncf %383 : vector<16x256xf32> to vector<16x256xbf16>
    %c112_232 = arith.constant 112 : index
    %c0_233 = arith.constant 0 : index
    %385 = vector.load %arg15[%c112_232, %c0_233] : memref<400x512xbf16, #tpu.memory_space<vmem>>, vector<16x256xbf16>
    tpu.vector_store %arg15[%c112_232, %c0_233], %384 {strides = array<i32>} : memref<400x512xbf16, #tpu.memory_space<vmem>>, vector<16x256xbf16>,
    %386 = vector.extract_strided_slice %382 {offsets = [16, 0], sizes = [16, 256], strides = [1, 1]} : vector<32x256xf32> to vector<16x256xf32>
    %387 = arith.truncf %386 : vector<16x256xf32> to vector<16x256xbf16>
    %c112_234 = arith.constant 112 : index
    %c256_235 = arith.constant 256 : index
    %388 = vector.load %arg15[%c112_234, %c256_235] : memref<400x512xbf16, #tpu.memory_space<vmem>>, vector<16x256xbf16>
    tpu.vector_store %arg15[%c112_234, %c256_235], %387 {strides = array<i32>} : memref<400x512xbf16, #tpu.memory_space<vmem>>, vector<16x256xbf16>,
    %c0_236 = arith.constant 0 : index
    %c113_237 = arith.constant 113 : index
    %389 = vector.load %arg14[%c0_236, %c113_237] : memref<32x512xf32, #tpu.memory_space<vmem>>, vector<32x256xf32>
    %c8_238 = arith.constant 8 : index
    %c0_239 = arith.constant 0 : index
    %390 = vector.load %arg2[%c8_238, %c0_239] : memref<25x256xf32, #tpu.memory_space<vmem>>, vector<1x256xf32>
    %391 = vector.broadcast %390 : vector<1x256xf32> to vector<32x256xf32>
    %392 = arith.mulf %389, %391 : vector<32x256xf32>
    %393 = vector.extract_strided_slice %392 {offsets = [0, 0], sizes = [16, 256], strides = [1, 1]} : vector<32x256xf32> to vector<16x256xf32>
    %394 = arith.truncf %393 : vector<16x256xf32> to vector<16x256xbf16>
    %c128_240 = arith.constant 128 : index
    %c0_241 = arith.constant 0 : index
    %395 = vector.load %arg15[%c128_240, %c0_241] : memref<400x512xbf16, #tpu.memory_space<vmem>>, vector<16x256xbf16>
    tpu.vector_store %arg15[%c128_240, %c0_241], %394 {strides = array<i32>} : memref<400x512xbf16, #tpu.memory_space<vmem>>, vector<16x256xbf16>,
    %396 = vector.extract_strided_slice %392 {offsets = [16, 0], sizes = [16, 256], strides = [1, 1]} : vector<32x256xf32> to vector<16x256xf32>
    %397 = arith.truncf %396 : vector<16x256xf32> to vector<16x256xbf16>
    %c128_242 = arith.constant 128 : index
    %c256_243 = arith.constant 256 : index
    %398 = vector.load %arg15[%c128_242, %c256_243] : memref<400x512xbf16, #tpu.memory_space<vmem>>, vector<16x256xbf16>
    tpu.vector_store %arg15[%c128_242, %c256_243], %397 {strides = array<i32>} : memref<400x512xbf16, #tpu.memory_space<vmem>>, vector<16x256xbf16>,
    %c0_244 = arith.constant 0 : index
    %c114_245 = arith.constant 114 : index
    %399 = vector.load %arg14[%c0_244, %c114_245] : memref<32x512xf32, #tpu.memory_space<vmem>>, vector<32x256xf32>
    %c9_246 = arith.constant 9 : index
    %c0_247 = arith.constant 0 : index
    %400 = vector.load %arg2[%c9_246, %c0_247] : memref<25x256xf32, #tpu.memory_space<vmem>>, vector<1x256xf32>
    %401 = vector.broadcast %400 : vector<1x256xf32> to vector<32x256xf32>
    %402 = arith.mulf %399, %401 : vector<32x256xf32>
    %403 = vector.extract_strided_slice %402 {offsets = [0, 0], sizes = [16, 256], strides = [1, 1]} : vector<32x256xf32> to vector<16x256xf32>
    %404 = arith.truncf %403 : vector<16x256xf32> to vector<16x256xbf16>
    %c144_248 = arith.constant 144 : index
    %c0_249 = arith.constant 0 : index
    %405 = vector.load %arg15[%c144_248, %c0_249] : memref<400x512xbf16, #tpu.memory_space<vmem>>, vector<16x256xbf16>
    tpu.vector_store %arg15[%c144_248, %c0_249], %404 {strides = array<i32>} : memref<400x512xbf16, #tpu.memory_space<vmem>>, vector<16x256xbf16>,
    %406 = vector.extract_strided_slice %402 {offsets = [16, 0], sizes = [16, 256], strides = [1, 1]} : vector<32x256xf32> to vector<16x256xf32>
    %407 = arith.truncf %406 : vector<16x256xf32> to vector<16x256xbf16>
    %c144_250 = arith.constant 144 : index
    %c256_251 = arith.constant 256 : index
    %408 = vector.load %arg15[%c144_250, %c256_251] : memref<400x512xbf16, #tpu.memory_space<vmem>>, vector<16x256xbf16>
    tpu.vector_store %arg15[%c144_250, %c256_251], %407 {strides = array<i32>} : memref<400x512xbf16, #tpu.memory_space<vmem>>, vector<16x256xbf16>,
    %c0_252 = arith.constant 0 : index
    %c126_253 = arith.constant 126 : index
    %409 = vector.load %arg14[%c0_252, %c126_253] : memref<32x512xf32, #tpu.memory_space<vmem>>, vector<32x256xf32>
    %c10_254 = arith.constant 10 : index
    %c0_255 = arith.constant 0 : index
    %410 = vector.load %arg2[%c10_254, %c0_255] : memref<25x256xf32, #tpu.memory_space<vmem>>, vector<1x256xf32>
    %411 = vector.broadcast %410 : vector<1x256xf32> to vector<32x256xf32>
    %412 = arith.mulf %409, %411 : vector<32x256xf32>
    %413 = vector.extract_strided_slice %412 {offsets = [0, 0], sizes = [16, 256], strides = [1, 1]} : vector<32x256xf32> to vector<16x256xf32>
    %414 = arith.truncf %413 : vector<16x256xf32> to vector<16x256xbf16>
    %c160_256 = arith.constant 160 : index
    %c0_257 = arith.constant 0 : index
    %415 = vector.load %arg15[%c160_256, %c0_257] : memref<400x512xbf16, #tpu.memory_space<vmem>>, vector<16x256xbf16>
    tpu.vector_store %arg15[%c160_256, %c0_257], %414 {strides = array<i32>} : memref<400x512xbf16, #tpu.memory_space<vmem>>, vector<16x256xbf16>,
    %416 = vector.extract_strided_slice %412 {offsets = [16, 0], sizes = [16, 256], strides = [1, 1]} : vector<32x256xf32> to vector<16x256xf32>
    %417 = arith.truncf %416 : vector<16x256xf32> to vector<16x256xbf16>
    %c160_258 = arith.constant 160 : index
    %c256_259 = arith.constant 256 : index
    %418 = vector.load %arg15[%c160_258, %c256_259] : memref<400x512xbf16, #tpu.memory_space<vmem>>, vector<16x256xbf16>
    tpu.vector_store %arg15[%c160_258, %c256_259], %417 {strides = array<i32>} : memref<400x512xbf16, #tpu.memory_space<vmem>>, vector<16x256xbf16>,
    %c0_260 = arith.constant 0 : index
    %c127_261 = arith.constant 127 : index
    %419 = vector.load %arg14[%c0_260, %c127_261] : memref<32x512xf32, #tpu.memory_space<vmem>>, vector<32x256xf32>
    %c11_262 = arith.constant 11 : index
    %c0_263 = arith.constant 0 : index
    %420 = vector.load %arg2[%c11_262, %c0_263] : memref<25x256xf32, #tpu.memory_space<vmem>>, vector<1x256xf32>
    %421 = vector.broadcast %420 : vector<1x256xf32> to vector<32x256xf32>
    %422 = arith.mulf %419, %421 : vector<32x256xf32>
    %423 = vector.extract_strided_slice %422 {offsets = [0, 0], sizes = [16, 256], strides = [1, 1]} : vector<32x256xf32> to vector<16x256xf32>
    %424 = arith.truncf %423 : vector<16x256xf32> to vector<16x256xbf16>
    %c176_264 = arith.constant 176 : index
    %c0_265 = arith.constant 0 : index
    %425 = vector.load %arg15[%c176_264, %c0_265] : memref<400x512xbf16, #tpu.memory_space<vmem>>, vector<16x256xbf16>
    tpu.vector_store %arg15[%c176_264, %c0_265], %424 {strides = array<i32>} : memref<400x512xbf16, #tpu.memory_space<vmem>>, vector<16x256xbf16>,
    %426 = vector.extract_strided_slice %422 {offsets = [16, 0], sizes = [16, 256], strides = [1, 1]} : vector<32x256xf32> to vector<16x256xf32>
    %427 = arith.truncf %426 : vector<16x256xf32> to vector<16x256xbf16>
    %c176_266 = arith.constant 176 : index
    %c256_267 = arith.constant 256 : index
    %428 = vector.load %arg15[%c176_266, %c256_267] : memref<400x512xbf16, #tpu.memory_space<vmem>>, vector<16x256xbf16>
    tpu.vector_store %arg15[%c176_266, %c256_267], %427 {strides = array<i32>} : memref<400x512xbf16, #tpu.memory_space<vmem>>, vector<16x256xbf16>,
    %c0_268 = arith.constant 0 : index
    %c128_269 = arith.constant 128 : index
    %429 = vector.load %arg14[%c0_268, %c128_269] : memref<32x512xf32, #tpu.memory_space<vmem>>, vector<32x256xf32>
    %430 = vector.extract_strided_slice %429 {offsets = [0, 0], sizes = [16, 256], strides = [1, 1]} : vector<32x256xf32> to vector<16x256xf32>
    %431 = arith.truncf %430 : vector<16x256xf32> to vector<16x256xbf16>
    %c192_270 = arith.constant 192 : index
    %c0_271 = arith.constant 0 : index
    %432 = vector.load %arg15[%c192_270, %c0_271] : memref<400x512xbf16, #tpu.memory_space<vmem>>, vector<16x256xbf16>
    tpu.vector_store %arg15[%c192_270, %c0_271], %431 {strides = array<i32>} : memref<400x512xbf16, #tpu.memory_space<vmem>>, vector<16x256xbf16>,
    %433 = vector.extract_strided_slice %429 {offsets = [16, 0], sizes = [16, 256], strides = [1, 1]} : vector<32x256xf32> to vector<16x256xf32>
    %434 = arith.truncf %433 : vector<16x256xf32> to vector<16x256xbf16>
    %c192_272 = arith.constant 192 : index
    %c256_273 = arith.constant 256 : index
    %435 = vector.load %arg15[%c192_272, %c256_273] : memref<400x512xbf16, #tpu.memory_space<vmem>>, vector<16x256xbf16>
    tpu.vector_store %arg15[%c192_272, %c256_273], %434 {strides = array<i32>} : memref<400x512xbf16, #tpu.memory_space<vmem>>, vector<16x256xbf16>,
    %c0_274 = arith.constant 0 : index
    %c129_275 = arith.constant 129 : index
    %436 = vector.load %arg14[%c0_274, %c129_275] : memref<32x512xf32, #tpu.memory_space<vmem>>, vector<32x256xf32>
    %c13_276 = arith.constant 13 : index
    %c0_277 = arith.constant 0 : index
    %437 = vector.load %arg2[%c13_276, %c0_277] : memref<25x256xf32, #tpu.memory_space<vmem>>, vector<1x256xf32>
    %438 = vector.broadcast %437 : vector<1x256xf32> to vector<32x256xf32>
    %439 = arith.mulf %436, %438 : vector<32x256xf32>
    %440 = vector.extract_strided_slice %439 {offsets = [0, 0], sizes = [16, 256], strides = [1, 1]} : vector<32x256xf32> to vector<16x256xf32>
    %441 = arith.truncf %440 : vector<16x256xf32> to vector<16x256xbf16>
    %c208_278 = arith.constant 208 : index
    %c0_279 = arith.constant 0 : index
    %442 = vector.load %arg15[%c208_278, %c0_279] : memref<400x512xbf16, #tpu.memory_space<vmem>>, vector<16x256xbf16>
    tpu.vector_store %arg15[%c208_278, %c0_279], %441 {strides = array<i32>} : memref<400x512xbf16, #tpu.memory_space<vmem>>, vector<16x256xbf16>,
    %443 = vector.extract_strided_slice %439 {offsets = [16, 0], sizes = [16, 256], strides = [1, 1]} : vector<32x256xf32> to vector<16x256xf32>
    %444 = arith.truncf %443 : vector<16x256xf32> to vector<16x256xbf16>
    %c208_280 = arith.constant 208 : index
    %c256_281 = arith.constant 256 : index
    %445 = vector.load %arg15[%c208_280, %c256_281] : memref<400x512xbf16, #tpu.memory_space<vmem>>, vector<16x256xbf16>
    tpu.vector_store %arg15[%c208_280, %c256_281], %444 {strides = array<i32>} : memref<400x512xbf16, #tpu.memory_space<vmem>>, vector<16x256xbf16>,
    %c0_282 = arith.constant 0 : index
    %c130_283 = arith.constant 130 : index
    %446 = vector.load %arg14[%c0_282, %c130_283] : memref<32x512xf32, #tpu.memory_space<vmem>>, vector<32x256xf32>
    %c14_284 = arith.constant 14 : index
    %c0_285 = arith.constant 0 : index
    %447 = vector.load %arg2[%c14_284, %c0_285] : memref<25x256xf32, #tpu.memory_space<vmem>>, vector<1x256xf32>
    %448 = vector.broadcast %447 : vector<1x256xf32> to vector<32x256xf32>
    %449 = arith.mulf %446, %448 : vector<32x256xf32>
    %450 = vector.extract_strided_slice %449 {offsets = [0, 0], sizes = [16, 256], strides = [1, 1]} : vector<32x256xf32> to vector<16x256xf32>
    %451 = arith.truncf %450 : vector<16x256xf32> to vector<16x256xbf16>
    %c224_286 = arith.constant 224 : index
    %c0_287 = arith.constant 0 : index
    %452 = vector.load %arg15[%c224_286, %c0_287] : memref<400x512xbf16, #tpu.memory_space<vmem>>, vector<16x256xbf16>
    tpu.vector_store %arg15[%c224_286, %c0_287], %451 {strides = array<i32>} : memref<400x512xbf16, #tpu.memory_space<vmem>>, vector<16x256xbf16>,
    %453 = vector.extract_strided_slice %449 {offsets = [16, 0], sizes = [16, 256], strides = [1, 1]} : vector<32x256xf32> to vector<16x256xf32>
    %454 = arith.truncf %453 : vector<16x256xf32> to vector<16x256xbf16>
    %c224_288 = arith.constant 224 : index
    %c256_289 = arith.constant 256 : index
    %455 = vector.load %arg15[%c224_288, %c256_289] : memref<400x512xbf16, #tpu.memory_space<vmem>>, vector<16x256xbf16>
    tpu.vector_store %arg15[%c224_288, %c256_289], %454 {strides = array<i32>} : memref<400x512xbf16, #tpu.memory_space<vmem>>, vector<16x256xbf16>,
    %c0_290 = arith.constant 0 : index
    %c142_291 = arith.constant 142 : index
    %456 = vector.load %arg14[%c0_290, %c142_291] : memref<32x512xf32, #tpu.memory_space<vmem>>, vector<32x256xf32>
    %c15_292 = arith.constant 15 : index
    %c0_293 = arith.constant 0 : index
    %457 = vector.load %arg2[%c15_292, %c0_293] : memref<25x256xf32, #tpu.memory_space<vmem>>, vector<1x256xf32>
    %458 = vector.broadcast %457 : vector<1x256xf32> to vector<32x256xf32>
    %459 = arith.mulf %456, %458 : vector<32x256xf32>
    %460 = vector.extract_strided_slice %459 {offsets = [0, 0], sizes = [16, 256], strides = [1, 1]} : vector<32x256xf32> to vector<16x256xf32>
    %461 = arith.truncf %460 : vector<16x256xf32> to vector<16x256xbf16>
    %c240_294 = arith.constant 240 : index
    %c0_295 = arith.constant 0 : index
    %462 = vector.load %arg15[%c240_294, %c0_295] : memref<400x512xbf16, #tpu.memory_space<vmem>>, vector<16x256xbf16>
    tpu.vector_store %arg15[%c240_294, %c0_295], %461 {strides = array<i32>} : memref<400x512xbf16, #tpu.memory_space<vmem>>, vector<16x256xbf16>,
    %463 = vector.extract_strided_slice %459 {offsets = [16, 0], sizes = [16, 256], strides = [1, 1]} : vector<32x256xf32> to vector<16x256xf32>
    %464 = arith.truncf %463 : vector<16x256xf32> to vector<16x256xbf16>
    %c240_296 = arith.constant 240 : index
    %c256_297 = arith.constant 256 : index
    %465 = vector.load %arg15[%c240_296, %c256_297] : memref<400x512xbf16, #tpu.memory_space<vmem>>, vector<16x256xbf16>
    tpu.vector_store %arg15[%c240_296, %c256_297], %464 {strides = array<i32>} : memref<400x512xbf16, #tpu.memory_space<vmem>>, vector<16x256xbf16>,
    %c0_298 = arith.constant 0 : index
    %c143_299 = arith.constant 143 : index
    %466 = vector.load %arg14[%c0_298, %c143_299] : memref<32x512xf32, #tpu.memory_space<vmem>>, vector<32x256xf32>
    %c16_300 = arith.constant 16 : index
    %c0_301 = arith.constant 0 : index
    %467 = vector.load %arg2[%c16_300, %c0_301] : memref<25x256xf32, #tpu.memory_space<vmem>>, vector<1x256xf32>
    %468 = vector.broadcast %467 : vector<1x256xf32> to vector<32x256xf32>
    %469 = arith.mulf %466, %468 : vector<32x256xf32>
    %470 = vector.extract_strided_slice %469 {offsets = [0, 0], sizes = [16, 256], strides = [1, 1]} : vector<32x256xf32> to vector<16x256xf32>
    %471 = arith.truncf %470 : vector<16x256xf32> to vector<16x256xbf16>
    %c256_302 = arith.constant 256 : index
    %c0_303 = arith.constant 0 : index
    %472 = vector.load %arg15[%c256_302, %c0_303] : memref<400x512xbf16, #tpu.memory_space<vmem>>, vector<16x256xbf16>
    tpu.vector_store %arg15[%c256_302, %c0_303], %471 {strides = array<i32>} : memref<400x512xbf16, #tpu.memory_space<vmem>>, vector<16x256xbf16>,
    %473 = vector.extract_strided_slice %469 {offsets = [16, 0], sizes = [16, 256], strides = [1, 1]} : vector<32x256xf32> to vector<16x256xf32>
    %474 = arith.truncf %473 : vector<16x256xf32> to vector<16x256xbf16>
    %c256_304 = arith.constant 256 : index
    %c256_305 = arith.constant 256 : index
    %475 = vector.load %arg15[%c256_304, %c256_305] : memref<400x512xbf16, #tpu.memory_space<vmem>>, vector<16x256xbf16>
    tpu.vector_store %arg15[%c256_304, %c256_305], %474 {strides = array<i32>} : memref<400x512xbf16, #tpu.memory_space<vmem>>, vector<16x256xbf16>,
    %c0_306 = arith.constant 0 : index
    %c144_307 = arith.constant 144 : index
    %476 = vector.load %arg14[%c0_306, %c144_307] : memref<32x512xf32, #tpu.memory_space<vmem>>, vector<32x256xf32>
    %477 = vector.extract_strided_slice %476 {offsets = [0, 0], sizes = [16, 256], strides = [1, 1]} : vector<32x256xf32> to vector<16x256xf32>
    %478 = arith.truncf %477 : vector<16x256xf32> to vector<16x256xbf16>
    %c272_308 = arith.constant 272 : index
    %c0_309 = arith.constant 0 : index
    %479 = vector.load %arg15[%c272_308, %c0_309] : memref<400x512xbf16, #tpu.memory_space<vmem>>, vector<16x256xbf16>
    tpu.vector_store %arg15[%c272_308, %c0_309], %478 {strides = array<i32>} : memref<400x512xbf16, #tpu.memory_space<vmem>>, vector<16x256xbf16>,
    %480 = vector.extract_strided_slice %476 {offsets = [16, 0], sizes = [16, 256], strides = [1, 1]} : vector<32x256xf32> to vector<16x256xf32>
    %481 = arith.truncf %480 : vector<16x256xf32> to vector<16x256xbf16>
    %c272_310 = arith.constant 272 : index
    %c256_311 = arith.constant 256 : index
    %482 = vector.load %arg15[%c272_310, %c256_311] : memref<400x512xbf16, #tpu.memory_space<vmem>>, vector<16x256xbf16>
    tpu.vector_store %arg15[%c272_310, %c256_311], %481 {strides = array<i32>} : memref<400x512xbf16, #tpu.memory_space<vmem>>, vector<16x256xbf16>,
    %c0_312 = arith.constant 0 : index
    %c145_313 = arith.constant 145 : index
    %483 = vector.load %arg14[%c0_312, %c145_313] : memref<32x512xf32, #tpu.memory_space<vmem>>, vector<32x256xf32>
    %c18_314 = arith.constant 18 : index
    %c0_315 = arith.constant 0 : index
    %484 = vector.load %arg2[%c18_314, %c0_315] : memref<25x256xf32, #tpu.memory_space<vmem>>, vector<1x256xf32>
    %485 = vector.broadcast %484 : vector<1x256xf32> to vector<32x256xf32>
    %486 = arith.mulf %483, %485 : vector<32x256xf32>
    %487 = vector.extract_strided_slice %486 {offsets = [0, 0], sizes = [16, 256], strides = [1, 1]} : vector<32x256xf32> to vector<16x256xf32>
    %488 = arith.truncf %487 : vector<16x256xf32> to vector<16x256xbf16>
    %c288_316 = arith.constant 288 : index
    %c0_317 = arith.constant 0 : index
    %489 = vector.load %arg15[%c288_316, %c0_317] : memref<400x512xbf16, #tpu.memory_space<vmem>>, vector<16x256xbf16>
    tpu.vector_store %arg15[%c288_316, %c0_317], %488 {strides = array<i32>} : memref<400x512xbf16, #tpu.memory_space<vmem>>, vector<16x256xbf16>,
    %490 = vector.extract_strided_slice %486 {offsets = [16, 0], sizes = [16, 256], strides = [1, 1]} : vector<32x256xf32> to vector<16x256xf32>
    %491 = arith.truncf %490 : vector<16x256xf32> to vector<16x256xbf16>
    %c288_318 = arith.constant 288 : index
    %c256_319 = arith.constant 256 : index
    %492 = vector.load %arg15[%c288_318, %c256_319] : memref<400x512xbf16, #tpu.memory_space<vmem>>, vector<16x256xbf16>
    tpu.vector_store %arg15[%c288_318, %c256_319], %491 {strides = array<i32>} : memref<400x512xbf16, #tpu.memory_space<vmem>>, vector<16x256xbf16>,
    %c0_320 = arith.constant 0 : index
    %c146_321 = arith.constant 146 : index
    %493 = vector.load %arg14[%c0_320, %c146_321] : memref<32x512xf32, #tpu.memory_space<vmem>>, vector<32x256xf32>
    %c19_322 = arith.constant 19 : index
    %c0_323 = arith.constant 0 : index
    %494 = vector.load %arg2[%c19_322, %c0_323] : memref<25x256xf32, #tpu.memory_space<vmem>>, vector<1x256xf32>
    %495 = vector.broadcast %494 : vector<1x256xf32> to vector<32x256xf32>
    %496 = arith.mulf %493, %495 : vector<32x256xf32>
    %497 = vector.extract_strided_slice %496 {offsets = [0, 0], sizes = [16, 256], strides = [1, 1]} : vector<32x256xf32> to vector<16x256xf32>
    %498 = arith.truncf %497 : vector<16x256xf32> to vector<16x256xbf16>
    %c304_324 = arith.constant 304 : index
    %c0_325 = arith.constant 0 : index
    %499 = vector.load %arg15[%c304_324, %c0_325] : memref<400x512xbf16, #tpu.memory_space<vmem>>, vector<16x256xbf16>
    tpu.vector_store %arg15[%c304_324, %c0_325], %498 {strides = array<i32>} : memref<400x512xbf16, #tpu.memory_space<vmem>>, vector<16x256xbf16>,
    %500 = vector.extract_strided_slice %496 {offsets = [16, 0], sizes = [16, 256], strides = [1, 1]} : vector<32x256xf32> to vector<16x256xf32>
    %501 = arith.truncf %500 : vector<16x256xf32> to vector<16x256xbf16>
    %c304_326 = arith.constant 304 : index
    %c256_327 = arith.constant 256 : index
    %502 = vector.load %arg15[%c304_326, %c256_327] : memref<400x512xbf16, #tpu.memory_space<vmem>>, vector<16x256xbf16>
    tpu.vector_store %arg15[%c304_326, %c256_327], %501 {strides = array<i32>} : memref<400x512xbf16, #tpu.memory_space<vmem>>, vector<16x256xbf16>,
    %c0_328 = arith.constant 0 : index
    %c158_329 = arith.constant 158 : index
    %503 = vector.load %arg14[%c0_328, %c158_329] : memref<32x512xf32, #tpu.memory_space<vmem>>, vector<32x256xf32>
    %c20_330 = arith.constant 20 : index
    %c0_331 = arith.constant 0 : index
    %504 = vector.load %arg2[%c20_330, %c0_331] : memref<25x256xf32, #tpu.memory_space<vmem>>, vector<1x256xf32>
    %505 = vector.broadcast %504 : vector<1x256xf32> to vector<32x256xf32>
    %506 = arith.mulf %503, %505 : vector<32x256xf32>
    %507 = vector.extract_strided_slice %506 {offsets = [0, 0], sizes = [16, 256], strides = [1, 1]} : vector<32x256xf32> to vector<16x256xf32>
    %508 = arith.truncf %507 : vector<16x256xf32> to vector<16x256xbf16>
    %c320_332 = arith.constant 320 : index
    %c0_333 = arith.constant 0 : index
    %509 = vector.load %arg15[%c320_332, %c0_333] : memref<400x512xbf16, #tpu.memory_space<vmem>>, vector<16x256xbf16>
    tpu.vector_store %arg15[%c320_332, %c0_333], %508 {strides = array<i32>} : memref<400x512xbf16, #tpu.memory_space<vmem>>, vector<16x256xbf16>,
    %510 = vector.extract_strided_slice %506 {offsets = [16, 0], sizes = [16, 256], strides = [1, 1]} : vector<32x256xf32> to vector<16x256xf32>
    %511 = arith.truncf %510 : vector<16x256xf32> to vector<16x256xbf16>
    %c320_334 = arith.constant 320 : index
    %c256_335 = arith.constant 256 : index
    %512 = vector.load %arg15[%c320_334, %c256_335] : memref<400x512xbf16, #tpu.memory_space<vmem>>, vector<16x256xbf16>
    tpu.vector_store %arg15[%c320_334, %c256_335], %511 {strides = array<i32>} : memref<400x512xbf16, #tpu.memory_space<vmem>>, vector<16x256xbf16>,
    %c0_336 = arith.constant 0 : index
    %c159_337 = arith.constant 159 : index
    %513 = vector.load %arg14[%c0_336, %c159_337] : memref<32x512xf32, #tpu.memory_space<vmem>>, vector<32x256xf32>
    %c21_338 = arith.constant 21 : index
    %c0_339 = arith.constant 0 : index
    %514 = vector.load %arg2[%c21_338, %c0_339] : memref<25x256xf32, #tpu.memory_space<vmem>>, vector<1x256xf32>
    %515 = vector.broadcast %514 : vector<1x256xf32> to vector<32x256xf32>
    %516 = arith.mulf %513, %515 : vector<32x256xf32>
    %517 = vector.extract_strided_slice %516 {offsets = [0, 0], sizes = [16, 256], strides = [1, 1]} : vector<32x256xf32> to vector<16x256xf32>
    %518 = arith.truncf %517 : vector<16x256xf32> to vector<16x256xbf16>
    %c336_340 = arith.constant 336 : index
    %c0_341 = arith.constant 0 : index
    %519 = vector.load %arg15[%c336_340, %c0_341] : memref<400x512xbf16, #tpu.memory_space<vmem>>, vector<16x256xbf16>
    tpu.vector_store %arg15[%c336_340, %c0_341], %518 {strides = array<i32>} : memref<400x512xbf16, #tpu.memory_space<vmem>>, vector<16x256xbf16>,
    %520 = vector.extract_strided_slice %516 {offsets = [16, 0], sizes = [16, 256], strides = [1, 1]} : vector<32x256xf32> to vector<16x256xf32>
    %521 = arith.truncf %520 : vector<16x256xf32> to vector<16x256xbf16>
    %c336_342 = arith.constant 336 : index
    %c256_343 = arith.constant 256 : index
    %522 = vector.load %arg15[%c336_342, %c256_343] : memref<400x512xbf16, #tpu.memory_space<vmem>>, vector<16x256xbf16>
    tpu.vector_store %arg15[%c336_342, %c256_343], %521 {strides = array<i32>} : memref<400x512xbf16, #tpu.memory_space<vmem>>, vector<16x256xbf16>,
    %c0_344 = arith.constant 0 : index
    %c160_345 = arith.constant 160 : index
    %523 = vector.load %arg14[%c0_344, %c160_345] : memref<32x512xf32, #tpu.memory_space<vmem>>, vector<32x256xf32>
    %524 = vector.extract_strided_slice %523 {offsets = [0, 0], sizes = [16, 256], strides = [1, 1]} : vector<32x256xf32> to vector<16x256xf32>
    %525 = arith.truncf %524 : vector<16x256xf32> to vector<16x256xbf16>
    %c352_346 = arith.constant 352 : index
    %c0_347 = arith.constant 0 : index
    %526 = vector.load %arg15[%c352_346, %c0_347] : memref<400x512xbf16, #tpu.memory_space<vmem>>, vector<16x256xbf16>
    tpu.vector_store %arg15[%c352_346, %c0_347], %525 {strides = array<i32>} : memref<400x512xbf16, #tpu.memory_space<vmem>>, vector<16x256xbf16>,
    %527 = vector.extract_strided_slice %523 {offsets = [16, 0], sizes = [16, 256], strides = [1, 1]} : vector<32x256xf32> to vector<16x256xf32>
    %528 = arith.truncf %527 : vector<16x256xf32> to vector<16x256xbf16>
    %c352_348 = arith.constant 352 : index
    %c256_349 = arith.constant 256 : index
    %529 = vector.load %arg15[%c352_348, %c256_349] : memref<400x512xbf16, #tpu.memory_space<vmem>>, vector<16x256xbf16>
    tpu.vector_store %arg15[%c352_348, %c256_349], %528 {strides = array<i32>} : memref<400x512xbf16, #tpu.memory_space<vmem>>, vector<16x256xbf16>,
    %c0_350 = arith.constant 0 : index
    %c161_351 = arith.constant 161 : index
    %530 = vector.load %arg14[%c0_350, %c161_351] : memref<32x512xf32, #tpu.memory_space<vmem>>, vector<32x256xf32>
    %c23_352 = arith.constant 23 : index
    %c0_353 = arith.constant 0 : index
    %531 = vector.load %arg2[%c23_352, %c0_353] : memref<25x256xf32, #tpu.memory_space<vmem>>, vector<1x256xf32>
    %532 = vector.broadcast %531 : vector<1x256xf32> to vector<32x256xf32>
    %533 = arith.mulf %530, %532 : vector<32x256xf32>
    %534 = vector.extract_strided_slice %533 {offsets = [0, 0], sizes = [16, 256], strides = [1, 1]} : vector<32x256xf32> to vector<16x256xf32>
    %535 = arith.truncf %534 : vector<16x256xf32> to vector<16x256xbf16>
    %c368_354 = arith.constant 368 : index
    %c0_355 = arith.constant 0 : index
    %536 = vector.load %arg15[%c368_354, %c0_355] : memref<400x512xbf16, #tpu.memory_space<vmem>>, vector<16x256xbf16>
    tpu.vector_store %arg15[%c368_354, %c0_355], %535 {strides = array<i32>} : memref<400x512xbf16, #tpu.memory_space<vmem>>, vector<16x256xbf16>,
    %537 = vector.extract_strided_slice %533 {offsets = [16, 0], sizes = [16, 256], strides = [1, 1]} : vector<32x256xf32> to vector<16x256xf32>
    %538 = arith.truncf %537 : vector<16x256xf32> to vector<16x256xbf16>
    %c368_356 = arith.constant 368 : index
    %c256_357 = arith.constant 256 : index
    %539 = vector.load %arg15[%c368_356, %c256_357] : memref<400x512xbf16, #tpu.memory_space<vmem>>, vector<16x256xbf16>
    tpu.vector_store %arg15[%c368_356, %c256_357], %538 {strides = array<i32>} : memref<400x512xbf16, #tpu.memory_space<vmem>>, vector<16x256xbf16>,
    %c0_358 = arith.constant 0 : index
    %c162_359 = arith.constant 162 : index
    %540 = vector.load %arg14[%c0_358, %c162_359] : memref<32x512xf32, #tpu.memory_space<vmem>>, vector<32x256xf32>
    %c24_360 = arith.constant 24 : index
    %c0_361 = arith.constant 0 : index
    %541 = vector.load %arg2[%c24_360, %c0_361] : memref<25x256xf32, #tpu.memory_space<vmem>>, vector<1x256xf32>
    %542 = vector.broadcast %541 : vector<1x256xf32> to vector<32x256xf32>
    %543 = arith.mulf %540, %542 : vector<32x256xf32>
    %544 = vector.extract_strided_slice %543 {offsets = [0, 0], sizes = [16, 256], strides = [1, 1]} : vector<32x256xf32> to vector<16x256xf32>
    %545 = arith.truncf %544 : vector<16x256xf32> to vector<16x256xbf16>
    %c384_362 = arith.constant 384 : index
    %c0_363 = arith.constant 0 : index
    %546 = vector.load %arg15[%c384_362, %c0_363] : memref<400x512xbf16, #tpu.memory_space<vmem>>, vector<16x256xbf16>
    tpu.vector_store %arg15[%c384_362, %c0_363], %545 {strides = array<i32>} : memref<400x512xbf16, #tpu.memory_space<vmem>>, vector<16x256xbf16>,
    %547 = vector.extract_strided_slice %543 {offsets = [16, 0], sizes = [16, 256], strides = [1, 1]} : vector<32x256xf32> to vector<16x256xf32>
    %548 = arith.truncf %547 : vector<16x256xf32> to vector<16x256xbf16>
    %c384_364 = arith.constant 384 : index
    %c256_365 = arith.constant 256 : index
    %549 = vector.load %arg15[%c384_364, %c256_365] : memref<400x512xbf16, #tpu.memory_space<vmem>>, vector<16x256xbf16>
    tpu.vector_store %arg15[%c384_364, %c256_365], %548 {strides = array<i32>} : memref<400x512xbf16, #tpu.memory_space<vmem>>, vector<16x256xbf16>,
    %c0_366 = arith.constant 0 : index
    %c0_367 = arith.constant 0 : index
    %550 = vector.load %arg6[%c0_366, %c0_367] : memref<8x400xbf16, #tpu.memory_space<vmem>>, vector<8x400xbf16>
    %c0_368 = arith.constant 0 : index
    %c0_369 = arith.constant 0 : index
    %551 = vector.load %arg15[%c0_368, %c0_369] : memref<400x512xbf16, #tpu.memory_space<vmem>>, vector<400x512xbf16>
    %cst_370 = arith.constant dense<0.000000e+00> : vector<8x512xf32>
    %552 = tpu.matmul %550, %551, %cst_370 {dimension_numbers = #tpu.dot_dimension_numbers<[1], [0], [0], [1], [0, 0, 1, 1], [], []>} : vector<8x400xbf16>, vector<400x512xbf16>, vector<8x512xf32> -> vector<8x512xf32>
    %553 = vector.extract_strided_slice %552 {offsets = [0, 0], sizes = [8, 256], strides = [1, 1]} : vector<8x512xf32> to vector<8x256xf32>
    %cst_371 = arith.constant dense<0.000000e+00> : vector<8xf32>
    %554 = vector.multi_reduction <add>, %553, %cst_371 [1] : vector<8x256xf32> to vector<8xf32>
    %555 = vector.shape_cast %554 : vector<8xf32> to vector<8x1xf32>
    %cst_372 = arith.constant 2.560000e+02 : f32
    %556 = vector.broadcast %cst_372 : f32 to vector<8x1xf32>
    %557 = arith.divf %555, %556 : vector<8x1xf32>
    %558 = vector.broadcast %557 : vector<8x1xf32> to vector<8x256xf32>
    %559 = arith.subf %553, %558 : vector<8x256xf32>
    %560 = arith.mulf %559, %559 : vector<8x256xf32>
    %cst_373 = arith.constant dense<0.000000e+00> : vector<8xf32>
    %561 = vector.multi_reduction <add>, %560, %cst_373 [1] : vector<8x256xf32> to vector<8xf32>
    %562 = vector.shape_cast %561 : vector<8xf32> to vector<8x1xf32>
    %cst_374 = arith.constant 2.560000e+02 : f32
    %563 = vector.broadcast %cst_374 : f32 to vector<8x1xf32>
    %564 = arith.divf %562, %563 : vector<8x1xf32>
    %c0_375 = arith.constant 0 : index
    %c0_376 = arith.constant 0 : index
    %565 = vector.load %arg7[%c0_375, %c0_376] : memref<8x1xf32, #tpu.memory_space<vmem>>, vector<8x1xf32>
    %cst_377 = arith.constant 9.99999974E-6 : f32
    %566 = vector.broadcast %cst_377 : f32 to vector<8x1xf32>
    %567 = arith.addf %564, %566 : vector<8x1xf32>
    %568 = math.rsqrt %567 : vector<8x1xf32>
    %569 = arith.mulf %565, %568 : vector<8x1xf32>
    %570 = vector.broadcast %569 : vector<8x1xf32> to vector<8x256xf32>
    %571 = arith.mulf %559, %570 : vector<8x256xf32>
    %c0_378 = arith.constant 0 : index
    %c0_379 = arith.constant 0 : index
    %572 = vector.load %arg8[%c0_378, %c0_379] : memref<8x1xf32, #tpu.memory_space<vmem>>, vector<8x1xf32>
    %573 = vector.broadcast %572 : vector<8x1xf32> to vector<8x256xf32>
    %574 = arith.addf %571, %573 : vector<8x256xf32>
    %cst_380 = arith.constant 2.000000e+01 : f32
    %575 = vector.broadcast %cst_380 : f32 to vector<8x256xf32>
    %576 = arith.minimumf %574, %575 : vector<8x256xf32>
    %577 = math.exp %576 : vector<8x256xf32>
    %cst_381 = arith.constant 2.000000e+00 : f32
    %578 = vector.broadcast %cst_381 : f32 to vector<8x256xf32>
    %579 = arith.addf %577, %578 : vector<8x256xf32>
    %580 = arith.mulf %577, %579 : vector<8x256xf32>
    %cst_382 = arith.constant 2.000000e+00 : f32
    %581 = vector.broadcast %cst_382 : f32 to vector<8x256xf32>
    %582 = arith.addf %580, %581 : vector<8x256xf32>
    %583 = arith.divf %580, %582 : vector<8x256xf32>
    %584 = arith.mulf %574, %583 : vector<8x256xf32>
    %585 = vector.extract_strided_slice %552 {offsets = [0, 256], sizes = [8, 256], strides = [1, 1]} : vector<8x512xf32> to vector<8x256xf32>
    %cst_383 = arith.constant dense<0.000000e+00> : vector<8xf32>
    %586 = vector.multi_reduction <add>, %585, %cst_383 [1] : vector<8x256xf32> to vector<8xf32>
    %587 = vector.shape_cast %586 : vector<8xf32> to vector<8x1xf32>
    %cst_384 = arith.constant 2.560000e+02 : f32
    %588 = vector.broadcast %cst_384 : f32 to vector<8x1xf32>
    %589 = arith.divf %587, %588 : vector<8x1xf32>
    %590 = vector.broadcast %589 : vector<8x1xf32> to vector<8x256xf32>
    %591 = arith.subf %585, %590 : vector<8x256xf32>
    %592 = arith.mulf %591, %591 : vector<8x256xf32>
    %cst_385 = arith.constant dense<0.000000e+00> : vector<8xf32>
    %593 = vector.multi_reduction <add>, %592, %cst_385 [1] : vector<8x256xf32> to vector<8xf32>
    %594 = vector.shape_cast %593 : vector<8xf32> to vector<8x1xf32>
    %cst_386 = arith.constant 2.560000e+02 : f32
    %595 = vector.broadcast %cst_386 : f32 to vector<8x1xf32>
    %596 = arith.divf %594, %595 : vector<8x1xf32>
    %c0_387 = arith.constant 0 : index
    %c0_388 = arith.constant 0 : index
    %597 = vector.load %arg7[%c0_387, %c0_388] : memref<8x1xf32, #tpu.memory_space<vmem>>, vector<8x1xf32>
    %cst_389 = arith.constant 9.99999974E-6 : f32
    %598 = vector.broadcast %cst_389 : f32 to vector<8x1xf32>
    %599 = arith.addf %596, %598 : vector<8x1xf32>
    %600 = math.rsqrt %599 : vector<8x1xf32>
    %601 = arith.mulf %597, %600 : vector<8x1xf32>
    %602 = vector.broadcast %601 : vector<8x1xf32> to vector<8x256xf32>
    %603 = arith.mulf %591, %602 : vector<8x256xf32>
    %c0_390 = arith.constant 0 : index
    %c0_391 = arith.constant 0 : index
    %604 = vector.load %arg8[%c0_390, %c0_391] : memref<8x1xf32, #tpu.memory_space<vmem>>, vector<8x1xf32>
    %605 = vector.broadcast %604 : vector<8x1xf32> to vector<8x256xf32>
    %606 = arith.addf %603, %605 : vector<8x256xf32>
    %cst_392 = arith.constant 2.000000e+01 : f32
    %607 = vector.broadcast %cst_392 : f32 to vector<8x256xf32>
    %608 = arith.minimumf %606, %607 : vector<8x256xf32>
    %609 = math.exp %608 : vector<8x256xf32>
    %cst_393 = arith.constant 2.000000e+00 : f32
    %610 = vector.broadcast %cst_393 : f32 to vector<8x256xf32>
    %611 = arith.addf %609, %610 : vector<8x256xf32>
    %612 = arith.mulf %609, %611 : vector<8x256xf32>
    %cst_394 = arith.constant 2.000000e+00 : f32
    %613 = vector.broadcast %cst_394 : f32 to vector<8x256xf32>
    %614 = arith.addf %612, %613 : vector<8x256xf32>
    %615 = arith.divf %612, %614 : vector<8x256xf32>
    %616 = arith.mulf %606, %615 : vector<8x256xf32>
    %617 = tpu.concatenate %584, %616 in 1 : vector<8x256xf32>, vector<8x256xf32> -> vector<8x512xf32>
    %c0_395 = arith.constant 0 : index
    %c0_396 = arith.constant 0 : index
    %c0_397 = arith.constant 0 : index
    %618 = vector.load %arg12[%c0_395, %c0_396, %c0_397] : memref<1x8x512xf32, #tpu.memory_space<vmem>>, vector<1x8x512xf32>
    %619 = vector.shape_cast %618 : vector<1x8x512xf32> to vector<8x512xf32>
    %620 = vector.shape_cast %617 : vector<8x512xf32> to vector<1x8x512xf32>
    tpu.vector_store %arg12[%c0_395, %c0_396, %c0_397], %620 {strides = array<i32>} : memref<1x8x512xf32, #tpu.memory_space<vmem>>, vector<1x8x512xf32>,
    %621 = arith.truncf %584 : vector<8x256xf32> to vector<8x256xbf16>
    %c0_398 = arith.constant 0 : index
    %c0_399 = arith.constant 0 : index
    %622 = vector.load %arg11[%c0_398, %c0_399] : memref<256x256xbf16, #tpu.memory_space<vmem>>, vector<256x256xbf16>
    %cst_400 = arith.constant dense<0.000000e+00> : vector<8x256xf32>
    %623 = tpu.matmul %621, %622, %cst_400 {dimension_numbers = #tpu.dot_dimension_numbers<[1], [0], [0], [1], [0, 0, 1, 1], [], []>} : vector<8x256xbf16>, vector<256x256xbf16>, vector<8x256xf32> -> vector<8x256xf32>
    %cst_401 = arith.constant 0.000000e+00 : f32
    %624 = vector.broadcast %cst_401 : f32 to vector<8x64xf32>
    %c0_402 = arith.constant 0 : index
    %c0_403 = arith.constant 0 : index
    %c0_404 = arith.constant 0 : index
    %625 = vector.load %arg9[%c0_402, %c0_403, %c0_404] : memref<4x8x8xbf16, #tpu.memory_space<vmem>>, vector<1x8x8xbf16>
    %626 = vector.shape_cast %625 : vector<1x8x8xbf16> to vector<8x8xbf16>
    %627 = vector.extract_strided_slice %623 {offsets = [0, 0], sizes = [8, 64], strides = [1, 1]} : vector<8x256xf32> to vector<8x64xf32>
    %628 = arith.truncf %627 : vector<8x64xf32> to vector<8x64xbf16>
    %cst_405 = arith.constant dense<0.000000e+00> : vector<8x64xf32>
    %629 = tpu.matmul %626, %628, %cst_405 {dimension_numbers = #tpu.dot_dimension_numbers<[1], [0], [0], [1], [0, 0, 1, 1], [], []>} : vector<8x8xbf16>, vector<8x64xbf16>, vector<8x64xf32> -> vector<8x64xf32>
    %630 = arith.addf %624, %629 : vector<8x64xf32>
    %c1_406 = arith.constant 1 : index
    %c0_407 = arith.constant 0 : index
    %c0_408 = arith.constant 0 : index
    %631 = vector.load %arg9[%c1_406, %c0_407, %c0_408] : memref<4x8x8xbf16, #tpu.memory_space<vmem>>, vector<1x8x8xbf16>
    %632 = vector.shape_cast %631 : vector<1x8x8xbf16> to vector<8x8xbf16>
    %633 = vector.extract_strided_slice %623 {offsets = [0, 64], sizes = [8, 64], strides = [1, 1]} : vector<8x256xf32> to vector<8x64xf32>
    %634 = arith.truncf %633 : vector<8x64xf32> to vector<8x64xbf16>
    %cst_409 = arith.constant dense<0.000000e+00> : vector<8x64xf32>
    %635 = tpu.matmul %632, %634, %cst_409 {dimension_numbers = #tpu.dot_dimension_numbers<[1], [0], [0], [1], [0, 0, 1, 1], [], []>} : vector<8x8xbf16>, vector<8x64xbf16>, vector<8x64xf32> -> vector<8x64xf32>
    %636 = arith.addf %630, %635 : vector<8x64xf32>
    %c2 = arith.constant 2 : index
    %c0_410 = arith.constant 0 : index
    %c0_411 = arith.constant 0 : index
    %637 = vector.load %arg9[%c2, %c0_410, %c0_411] : memref<4x8x8xbf16, #tpu.memory_space<vmem>>, vector<1x8x8xbf16>
    %638 = vector.shape_cast %637 : vector<1x8x8xbf16> to vector<8x8xbf16>
    %639 = vector.extract_strided_slice %623 {offsets = [0, 128], sizes = [8, 64], strides = [1, 1]} : vector<8x256xf32> to vector<8x64xf32>
    %640 = arith.truncf %639 : vector<8x64xf32> to vector<8x64xbf16>
    %cst_412 = arith.constant dense<0.000000e+00> : vector<8x64xf32>
    %641 = tpu.matmul %638, %640, %cst_412 {dimension_numbers = #tpu.dot_dimension_numbers<[1], [0], [0], [1], [0, 0, 1, 1], [], []>} : vector<8x8xbf16>, vector<8x64xbf16>, vector<8x64xf32> -> vector<8x64xf32>
    %642 = arith.addf %636, %641 : vector<8x64xf32>
    %c3_413 = arith.constant 3 : index
    %c0_414 = arith.constant 0 : index
    %c0_415 = arith.constant 0 : index
    %643 = vector.load %arg9[%c3_413, %c0_414, %c0_415] : memref<4x8x8xbf16, #tpu.memory_space<vmem>>, vector<1x8x8xbf16>
    %644 = vector.shape_cast %643 : vector<1x8x8xbf16> to vector<8x8xbf16>
    %645 = vector.extract_strided_slice %623 {offsets = [0, 192], sizes = [8, 64], strides = [1, 1]} : vector<8x256xf32> to vector<8x64xf32>
    %646 = arith.truncf %645 : vector<8x64xf32> to vector<8x64xbf16>
    %cst_416 = arith.constant dense<0.000000e+00> : vector<8x64xf32>
    %647 = tpu.matmul %644, %646, %cst_416 {dimension_numbers = #tpu.dot_dimension_numbers<[1], [0], [0], [1], [0, 0, 1, 1], [], []>} : vector<8x8xbf16>, vector<8x64xbf16>, vector<8x64xf32> -> vector<8x64xf32>
    %648 = arith.addf %642, %647 : vector<8x64xf32>
    %c0_417 = arith.constant 0 : index
    %c0_418 = arith.constant 0 : index
    %649 = vector.load %arg10[%c0_417, %c0_418] : memref<8x1xf32, #tpu.memory_space<vmem>>, vector<8x1xf32>
    %650 = vector.broadcast %649 : vector<8x1xf32> to vector<8x64xf32>
    %651 = arith.addf %648, %650 : vector<8x64xf32>
    %cst_419 = arith.constant 2.000000e+01 : f32
    %652 = vector.broadcast %cst_419 : f32 to vector<8x64xf32>
    %653 = arith.minimumf %651, %652 : vector<8x64xf32>
    %654 = math.exp %653 : vector<8x64xf32>
    %cst_420 = arith.constant 2.000000e+00 : f32
    %655 = vector.broadcast %cst_420 : f32 to vector<8x64xf32>
    %656 = arith.addf %654, %655 : vector<8x64xf32>
    %657 = arith.mulf %654, %656 : vector<8x64xf32>
    %cst_421 = arith.constant 2.000000e+00 : f32
    %658 = vector.broadcast %cst_421 : f32 to vector<8x64xf32>
    %659 = arith.addf %657, %658 : vector<8x64xf32>
    %660 = arith.divf %657, %659 : vector<8x64xf32>
    %661 = arith.mulf %651, %660 : vector<8x64xf32>
    %662 = arith.truncf %616 : vector<8x256xf32> to vector<8x256xbf16>
    %c0_422 = arith.constant 0 : index
    %c0_423 = arith.constant 0 : index
    %663 = vector.load %arg11[%c0_422, %c0_423] : memref<256x256xbf16, #tpu.memory_space<vmem>>, vector<256x256xbf16>
    %cst_424 = arith.constant dense<0.000000e+00> : vector<8x256xf32>
    %664 = tpu.matmul %662, %663, %cst_424 {dimension_numbers = #tpu.dot_dimension_numbers<[1], [0], [0], [1], [0, 0, 1, 1], [], []>} : vector<8x256xbf16>, vector<256x256xbf16>, vector<8x256xf32> -> vector<8x256xf32>
    %cst_425 = arith.constant 0.000000e+00 : f32
    %665 = vector.broadcast %cst_425 : f32 to vector<8x64xf32>
    %c0_426 = arith.constant 0 : index
    %c0_427 = arith.constant 0 : index
    %c0_428 = arith.constant 0 : index
    %666 = vector.load %arg9[%c0_426, %c0_427, %c0_428] : memref<4x8x8xbf16, #tpu.memory_space<vmem>>, vector<1x8x8xbf16>
    %667 = vector.shape_cast %666 : vector<1x8x8xbf16> to vector<8x8xbf16>
    %668 = vector.extract_strided_slice %664 {offsets = [0, 0], sizes = [8, 64], strides = [1, 1]} : vector<8x256xf32> to vector<8x64xf32>
    %669 = arith.truncf %668 : vector<8x64xf32> to vector<8x64xbf16>
    %cst_429 = arith.constant dense<0.000000e+00> : vector<8x64xf32>
    %670 = tpu.matmul %667, %669, %cst_429 {dimension_numbers = #tpu.dot_dimension_numbers<[1], [0], [0], [1], [0, 0, 1, 1], [], []>} : vector<8x8xbf16>, vector<8x64xbf16>, vector<8x64xf32> -> vector<8x64xf32>
    %671 = arith.addf %665, %670 : vector<8x64xf32>
    %c1_430 = arith.constant 1 : index
    %c0_431 = arith.constant 0 : index
    %c0_432 = arith.constant 0 : index
    %672 = vector.load %arg9[%c1_430, %c0_431, %c0_432] : memref<4x8x8xbf16, #tpu.memory_space<vmem>>, vector<1x8x8xbf16>
    %673 = vector.shape_cast %672 : vector<1x8x8xbf16> to vector<8x8xbf16>
    %674 = vector.extract_strided_slice %664 {offsets = [0, 64], sizes = [8, 64], strides = [1, 1]} : vector<8x256xf32> to vector<8x64xf32>
    %675 = arith.truncf %674 : vector<8x64xf32> to vector<8x64xbf16>
    %cst_433 = arith.constant dense<0.000000e+00> : vector<8x64xf32>
    %676 = tpu.matmul %673, %675, %cst_433 {dimension_numbers = #tpu.dot_dimension_numbers<[1], [0], [0], [1], [0, 0, 1, 1], [], []>} : vector<8x8xbf16>, vector<8x64xbf16>, vector<8x64xf32> -> vector<8x64xf32>
    %677 = arith.addf %671, %676 : vector<8x64xf32>
    %c2_434 = arith.constant 2 : index
    %c0_435 = arith.constant 0 : index
    %c0_436 = arith.constant 0 : index
    %678 = vector.load %arg9[%c2_434, %c0_435, %c0_436] : memref<4x8x8xbf16, #tpu.memory_space<vmem>>, vector<1x8x8xbf16>
    %679 = vector.shape_cast %678 : vector<1x8x8xbf16> to vector<8x8xbf16>
    %680 = vector.extract_strided_slice %664 {offsets = [0, 128], sizes = [8, 64], strides = [1, 1]} : vector<8x256xf32> to vector<8x64xf32>
    %681 = arith.truncf %680 : vector<8x64xf32> to vector<8x64xbf16>
    %cst_437 = arith.constant dense<0.000000e+00> : vector<8x64xf32>
    %682 = tpu.matmul %679, %681, %cst_437 {dimension_numbers = #tpu.dot_dimension_numbers<[1], [0], [0], [1], [0, 0, 1, 1], [], []>} : vector<8x8xbf16>, vector<8x64xbf16>, vector<8x64xf32> -> vector<8x64xf32>
    %683 = arith.addf %677, %682 : vector<8x64xf32>
    %c3_438 = arith.constant 3 : index
    %c0_439 = arith.constant 0 : index
    %c0_440 = arith.constant 0 : index
    %684 = vector.load %arg9[%c3_438, %c0_439, %c0_440] : memref<4x8x8xbf16, #tpu.memory_space<vmem>>, vector<1x8x8xbf16>
    %685 = vector.shape_cast %684 : vector<1x8x8xbf16> to vector<8x8xbf16>
    %686 = vector.extract_strided_slice %664 {offsets = [0, 192], sizes = [8, 64], strides = [1, 1]} : vector<8x256xf32> to vector<8x64xf32>
    %687 = arith.truncf %686 : vector<8x64xf32> to vector<8x64xbf16>
    %cst_441 = arith.constant dense<0.000000e+00> : vector<8x64xf32>
    %688 = tpu.matmul %685, %687, %cst_441 {dimension_numbers = #tpu.dot_dimension_numbers<[1], [0], [0], [1], [0, 0, 1, 1], [], []>} : vector<8x8xbf16>, vector<8x64xbf16>, vector<8x64xf32> -> vector<8x64xf32>
    %689 = arith.addf %683, %688 : vector<8x64xf32>
    %c0_442 = arith.constant 0 : index
    %c0_443 = arith.constant 0 : index
    %690 = vector.load %arg10[%c0_442, %c0_443] : memref<8x1xf32, #tpu.memory_space<vmem>>, vector<8x1xf32>
    %691 = vector.broadcast %690 : vector<8x1xf32> to vector<8x64xf32>
    %692 = arith.addf %689, %691 : vector<8x64xf32>
    %cst_444 = arith.constant 2.000000e+01 : f32
    %693 = vector.broadcast %cst_444 : f32 to vector<8x64xf32>
    %694 = arith.minimumf %692, %693 : vector<8x64xf32>
    %695 = math.exp %694 : vector<8x64xf32>
    %cst_445 = arith.constant 2.000000e+00 : f32
    %696 = vector.broadcast %cst_445 : f32 to vector<8x64xf32>
    %697 = arith.addf %695, %696 : vector<8x64xf32>
    %698 = arith.mulf %695, %697 : vector<8x64xf32>
    %cst_446 = arith.constant 2.000000e+00 : f32
    %699 = vector.broadcast %cst_446 : f32 to vector<8x64xf32>
    %700 = arith.addf %698, %699 : vector<8x64xf32>
    %701 = arith.divf %698, %700 : vector<8x64xf32>
    %702 = arith.mulf %692, %701 : vector<8x64xf32>
    %703 = tpu.concatenate %661, %702 in 1 : vector<8x64xf32>, vector<8x64xf32> -> vector<8x128xf32>
    %c0_447 = arith.constant 0 : index
    %c0_448 = arith.constant 0 : index
    %c0_449 = arith.constant 0 : index
    %704 = vector.load %arg13[%c0_447, %c0_448, %c0_449] : memref<1x8x128xf32, #tpu.memory_space<vmem>>, vector<1x8x128xf32>
    %705 = vector.shape_cast %704 : vector<1x8x128xf32> to vector<8x128xf32>
    %706 = vector.shape_cast %703 : vector<8x128xf32> to vector<1x8x128xf32>
    tpu.vector_store %arg13[%c0_447, %c0_448, %c0_449], %706 {strides = array<i32>} : memref<1x8x128xf32, #tpu.memory_space<vmem>>, vector<1x8x128xf32>,
    return
  }
  func.func @transform_0(%arg0: i32) -> (i32, i32, i32) {
    %c0_i32 = arith.constant 0 : i32
    %c0_i32_0 = arith.constant 0 : i32
    %c0_i32_1 = arith.constant 0 : i32
    return %arg0, %c0_i32, %c0_i32_0 : i32, i32, i32
  }
  func.func @transform_1(%arg0: i32) -> (i32, i32) {
    %c0_i32 = arith.constant 0 : i32
    %c0_i32_0 = arith.constant 0 : i32
    %c0_i32_1 = arith.constant 0 : i32
    return %c0_i32, %c0_i32_0 : i32, i32
  }
  func.func @transform_2(%arg0: i32) -> (i32, i32) {
    %c0_i32 = arith.constant 0 : i32
    %c0_i32_0 = arith.constant 0 : i32
    %c0_i32_1 = arith.constant 0 : i32
    return %c0_i32, %c0_i32_0 : i32, i32
  }
  func.func @transform_3(%arg0: i32) -> (i32, i32) {
    %c0_i32 = arith.constant 0 : i32
    %c0_i32_0 = arith.constant 0 : i32
    %c0_i32_1 = arith.constant 0 : i32
    return %c0_i32, %c0_i32_0 : i32, i32
  }
  func.func @transform_4(%arg0: i32) -> (i32, i32) {
    %c0_i32 = arith.constant 0 : i32
    %c0_i32_0 = arith.constant 0 : i32
    %c0_i32_1 = arith.constant 0 : i32
    return %c0_i32, %c0_i32_0 : i32, i32
  }
  func.func @transform_5(%arg0: i32) -> (i32, i32) {
    %c0_i32 = arith.constant 0 : i32
    %c0_i32_0 = arith.constant 0 : i32
    %c0_i32_1 = arith.constant 0 : i32
    return %c0_i32, %c0_i32_0 : i32, i32
  }
  func.func @transform_6(%arg0: i32) -> (i32, i32) {
    %c0_i32 = arith.constant 0 : i32
    %c0_i32_0 = arith.constant 0 : i32
    %c0_i32_1 = arith.constant 0 : i32
    return %c0_i32, %c0_i32_0 : i32, i32
  }
  func.func @transform_7(%arg0: i32) -> (i32, i32) {
    %c0_i32 = arith.constant 0 : i32
    %c0_i32_0 = arith.constant 0 : i32
    %c0_i32_1 = arith.constant 0 : i32
    return %c0_i32, %c0_i32_0 : i32, i32
  }
  func.func @transform_8(%arg0: i32) -> (i32, i32, i32) {
    %c0_i32 = arith.constant 0 : i32
    %c0_i32_0 = arith.constant 0 : i32
    %c0_i32_1 = arith.constant 0 : i32
    %c0_i32_2 = arith.constant 0 : i32
    return %c0_i32, %c0_i32_0, %c0_i32_1 : i32, i32, i32
  }
  func.func @transform_9(%arg0: i32) -> (i32, i32) {
    %c0_i32 = arith.constant 0 : i32
    %c0_i32_0 = arith.constant 0 : i32
    %c0_i32_1 = arith.constant 0 : i32
    return %c0_i32, %c0_i32_0 : i32, i32
  }
  func.func @transform_10(%arg0: i32) -> (i32, i32) {
    %c0_i32 = arith.constant 0 : i32
    %c0_i32_0 = arith.constant 0 : i32
    %c0_i32_1 = arith.constant 0 : i32
    return %c0_i32, %c0_i32_0 : i32, i32
  }
  func.func @transform_11(%arg0: i32) -> (i32, i32, i32) {
    %c0_i32 = arith.constant 0 : i32
    %c0_i32_0 = arith.constant 0 : i32
    %c0_i32_1 = arith.constant 0 : i32
    return %arg0, %c0_i32, %c0_i32_0 : i32, i32, i32
  }
  func.func @transform_12(%arg0: i32) -> (i32, i32, i32) {
    %c0_i32 = arith.constant 0 : i32
    %c0_i32_0 = arith.constant 0 : i32
    %c0_i32_1 = arith.constant 0 : i32
    return %arg0, %c0_i32, %c0_i32_0 : i32, i32, i32
  }
}

</mosaic_0001>

<llo_original>
// kernel: mode_encoder_block.1
$region0: #{mode_encoder_block.1}
  #allocation0 [shape = 'u32[]', space=smem, size = 0x4, offset = 0x4, fixed_abs, tag = 'smem constant byte address 0x4 - core index']
  #allocation1 [shape = 'u32[144,128]{1,0:T(1,128)}', space=vmem, size = 0x12000, scoped, tag = 'internal scratch']
  #allocation2 [shape = 'f32[32,512]{1,0:T(8,128)}', space=vmem, size = 0x10000, scoped, tag = 'scratch operand']
  #allocation3 [shape = 'bf16[400,512]{1,0:T(16,128)(2,1)}', space=vmem, size = 0x64000, scoped, tag = 'scratch operand']
  %s0 = inlined_call_operand.vmem [shape: f32[1,32,256], index: 0, kind: input, shape index: {}]
  %s1 = inlined_call_operand.vmem [shape: f32[25,256], index: 1, kind: input, shape index: {}]
  %s2 = inlined_call_operand.vmem [shape: bf16[8,400], index: 2, kind: input, shape index: {}]
  %s3 = inlined_call_operand.vmem [shape: f32[8,1], index: 3, kind: input, shape index: {}]
  %s4 = inlined_call_operand.vmem [shape: f32[8,1], index: 4, kind: input, shape index: {}]
  %s5 = inlined_call_operand.vmem [shape: bf16[8,400], index: 5, kind: input, shape index: {}]
  %s6 = inlined_call_operand.vmem [shape: f32[8,1], index: 6, kind: input, shape index: {}]
  %s7 = inlined_call_operand.vmem [shape: f32[8,1], index: 7, kind: input, shape index: {}]
  %s8 = inlined_call_operand.vmem [shape: bf16[4,8,8], index: 8, kind: input, shape index: {}]
  %s9 = inlined_call_operand.vmem [shape: f32[8,1], index: 9, kind: input, shape index: {}]
  %s10 = inlined_call_operand.vmem [shape: bf16[256,256], index: 10, kind: input, shape index: {}]
  %s11 = inlined_call_operand.vmem [shape: f32[1,8,512], index: 11, kind: output, shape index: {0}]
  %s12 = inlined_call_operand.vmem [shape: f32[1,8,128], index: 12, kind: output, shape index: {1}]
  %13 = xla_tuple %s11, %s12
  %s14 = sld [smem:[#allocation0]]
  $region62: #{mode_encoder_block.1} parent=0
    _
  %s16 = ssub.s32 1, %s14
  %s17 = scalar_select 0, %s16, %s14
  // Predicated region
  $region2: #{mode_encoder_block.1} parent=0 // pred_check
    _
  $region3: #{mode_encoder_block.1} parent=0 // pred_check_branch
    %19 = sbr.rel (0) target = $region5
  $region4: #{mode_encoder_block.1} parent=0 // pred_region
    _
  $region5: #{mode_encoder_block.1} parent=0 // pred_fallthru
    _
  // Predicated region
  $region6: #{mode_encoder_block.1} parent=0 // pred_check
    _
  $region7: #{mode_encoder_block.1} parent=0 // pred_check_branch
    %21 = sbr.rel (0) target = $region9
  $region8: #{mode_encoder_block.1} parent=0 // pred_region
    _
  $region9: #{mode_encoder_block.1} parent=0 // pred_fallthru
    _
  // Predicated region
  $region10: #{mode_encoder_block.1} parent=0 // pred_check
    _
  $region11: #{mode_encoder_block.1} parent=0 // pred_check_branch
    %23 = sbr.rel (0) target = $region13
  $region12: #{mode_encoder_block.1} parent=0 // pred_region
    _
  $region13: #{mode_encoder_block.1} parent=0 // pred_fallthru
    _
  // Predicated region
  $region14: #{mode_encoder_block.1} parent=0 // pred_check
    _
  $region15: #{mode_encoder_block.1} parent=0 // pred_check_branch
    %25 = sbr.rel (0) target = $region17
  $region16: #{mode_encoder_block.1} parent=0 // pred_region
    _
  $region17: #{mode_encoder_block.1} parent=0 // pred_fallthru
    _
  // Predicated region
  $region18: #{mode_encoder_block.1} parent=0 // pred_check
    _
  $region19: #{mode_encoder_block.1} parent=0 // pred_check_branch
    %27 = sbr.rel (0) target = $region21
  $region20: #{mode_encoder_block.1} parent=0 // pred_region
    _
  $region21: #{mode_encoder_block.1} parent=0 // pred_fallthru
    _
  // Predicated region
  $region22: #{mode_encoder_block.1} parent=0 // pred_check
    _
  $region23: #{mode_encoder_block.1} parent=0 // pred_check_branch
    %29 = sbr.rel (0) target = $region25
  $region24: #{mode_encoder_block.1} parent=0 // pred_region
    _
  $region25: #{mode_encoder_block.1} parent=0 // pred_fallthru
    _
  // Predicated region
  $region26: #{mode_encoder_block.1} parent=0 // pred_check
    _
  $region27: #{mode_encoder_block.1} parent=0 // pred_check_branch
    %31 = sbr.rel (0) target = $region29
  $region28: #{mode_encoder_block.1} parent=0 // pred_region
    _
  $region29: #{mode_encoder_block.1} parent=0 // pred_fallthru
    _
  // Predicated region
  $region30: #{mode_encoder_block.1} parent=0 // pred_check
    _
  $region31: #{mode_encoder_block.1} parent=0 // pred_check_branch
    %33 = sbr.rel (0) target = $region33
  $region32: #{mode_encoder_block.1} parent=0 // pred_region
    _
  $region33: #{mode_encoder_block.1} parent=0 // pred_fallthru
    _
  // Predicated region
  $region34: #{mode_encoder_block.1} parent=0 // pred_check
    _
  $region35: #{mode_encoder_block.1} parent=0 // pred_check_branch
    %35 = sbr.rel (0) target = $region37
  $region36: #{mode_encoder_block.1} parent=0 // pred_region
    _
  $region37: #{mode_encoder_block.1} parent=0 // pred_fallthru
    _
  // Predicated region
  $region38: #{mode_encoder_block.1} parent=0 // pred_check
    _
  $region39: #{mode_encoder_block.1} parent=0 // pred_check_branch
    %37 = sbr.rel (0) target = $region41
  $region40: #{mode_encoder_block.1} parent=0 // pred_region
    _
  $region41: #{mode_encoder_block.1} parent=0 // pred_fallthru
    _
  // Predicated region
  $region42: #{mode_encoder_block.1} parent=0 // pred_check
    _
  $region43: #{mode_encoder_block.1} parent=0 // pred_check_branch
    %39 = sbr.rel (0) target = $region45
  $region44: #{mode_encoder_block.1} parent=0 // pred_region
    _
  $region45: #{mode_encoder_block.1} parent=0 // pred_fallthru
    _
  %41 = vst [vmem:[#allocation2] sm:$0xff] 0.0
  %42 = vst [vmem:[#allocation2 + $0x20] sm:$0xff] 0.0
  %43 = vst [vmem:[#allocation2 + $0x40] sm:$0xff] 0.0
  %44 = vst [vmem:[#allocation2 + $0x60] sm:$0xff] 0.0
  %45 = vst [vmem:[#allocation2 + $0x18] sm:$0xff] 0.0
  %46 = vst [vmem:[#allocation2 + $0x38] sm:$0xff] 0.0
  %47 = vst [vmem:[#allocation2 + $0x58] sm:$0xff] 0.0
  %48 = vst [vmem:[#allocation2 + $0x78] sm:$0xff] 0.0
  %v49 = vld [vmem:[%s0] sm:$0xff]
  %v50 = vld [vmem:[%s0 + $0x8] sm:$0xff]
  %v51 = vld [vmem:[%s0 + $0x10] sm:$0xff]
  %v52 = vld [vmem:[%s0 + $0x18] sm:$0xff]
  %v53 = vld [vmem:[%s0 + $0x20] sm:$0xff]
  %v54 = vld [vmem:[%s0 + $0x28] sm:$0xff]
  %v55 = vld [vmem:[%s0 + $0x30] sm:$0xff]
  %v56 = vld [vmem:[%s0 + $0x38] sm:$0xff]
  %57 = vst [vmem:[#allocation2 + $0x8] sm:$0xff] %v49
  %58 = vst [vmem:[#allocation2 + $0x10] sm:$0xff] %v50
  %59 = vst [vmem:[#allocation2 + $0x28] sm:$0xff] %v51
  %60 = vst [vmem:[#allocation2 + $0x30] sm:$0xff] %v52
  %61 = vst [vmem:[#allocation2 + $0x48] sm:$0xff] %v53
  %62 = vst [vmem:[#allocation2 + $0x50] sm:$0xff] %v54
  %63 = vst [vmem:[#allocation2 + $0x68] sm:$0xff] %v55
  %64 = vst [vmem:[#allocation2 + $0x70] sm:$0xff] %v56
  %v65 = vld [vmem:[#allocation2] sm:$0xff]
  %v66 = vld [vmem:[#allocation2 + $0x8] sm:$0xff]
  %v67 = vld [vmem:[#allocation2 + $0x10] sm:$0xff]
  %v68 = vld [vmem:[#allocation2 + $0x20] sm:$0xff]
  %v69 = vld [vmem:[#allocation2 + $0x28] sm:$0xff]
  %v70 = vld [vmem:[#allocation2 + $0x30] sm:$0xff]
  %v71 = vld [vmem:[#allocation2 + $0x40] sm:$0xff]
  %v72 = vld [vmem:[#allocation2 + $0x48] sm:$0xff]
  %v73 = vld [vmem:[#allocation2 + $0x50] sm:$0xff]
  %v74 = vld [vmem:[#allocation2 + $0x60] sm:$0xff]
  %v75 = vld [vmem:[#allocation2 + $0x68] sm:$0xff]
  %v76 = vld [vmem:[#allocation2 + $0x70] sm:$0xff]
  %v77 = vld [vmem:[%s1] ss:$8 sm:$0x3]
  %v79 = vlaneseq
  %v80 = vshrl.u32 %v79, 7
  %v81 = vsub.s32 0, %v80
  %v82 = vrot.slane %v77, %v81
  %v83 = vlaneseq
  %v84 = vshrl.u32 %v83, 7
  %v85 = vsub.s32 1, %v84
  %v86 = vrot.slane %v77, %v85
  %87 = vrot.lane.b32.xlu0 %v82, 94
  %v88 = vpop.permute.xlu0 %87
  %89 = vrot.lane.b32.xlu0 %v86, 94
  %v90 = vpop.permute.xlu0 %89
  %vm91 = vcmask 769024
  %v92 = vsel %vm91, %v88, %v90
  %v96 = vmul.f32 %v65, %v88
  %v97 = vmul.f32 %v66, %v92
  %v98 = vmul.f32 %v67, %v90
  %v99 = vmul.f32 %v68, %v88
  %v100 = vmul.f32 %v69, %v92
  %v101 = vmul.f32 %v70, %v90
  %v102 = vmul.f32 %v71, %v88
  %v103 = vmul.f32 %v72, %v92
  %v104 = vmul.f32 %v73, %v90
  %v105 = vmul.f32 %v74, %v88
  %v106 = vmul.f32 %v75, %v92
  %v107 = vmul.f32 %v76, %v90
  %v108 = vpack.c.bf16 %v99, %v96
  %v109 = vpack.c.bf16 %v100, %v97
  %v110 = vpack.c.bf16 %v101, %v98
  %114 = vrot.lane.b32.xlu0 %v108, 34
  %v115 = vpop.permute.xlu0 %114
  %116 = vrot.lane.b32.xlu0 %v109, 34
  %v117 = vpop.permute.xlu0 %116
  %118 = vrot.lane.b32.xlu0 %v110, 34
  %v119 = vpop.permute.xlu0 %118
  %vm120 = vcmask 277504
  %v121 = vsel %vm120, %v115, %v117
  %v122 = vsel %vm120, %v117, %v119
  %125 = vst [vmem:[#allocation3] sm:$0xff] %v121
  %126 = vst [vmem:[#allocation3 + $0x8] sm:$0xff] %v122
  %v127 = vpack.c.bf16 %v105, %v102
  %v128 = vpack.c.bf16 %v106, %v103
  %v129 = vpack.c.bf16 %v107, %v104
  %133 = vrot.lane.b32.xlu0 %v127, 34
  %v134 = vpop.permute.xlu0 %133
  %135 = vrot.lane.b32.xlu0 %v128, 34
  %v136 = vpop.permute.xlu0 %135
  %137 = vrot.lane.b32.xlu0 %v129, 34
  %v138 = vpop.permute.xlu0 %137
  %v139 = vsel %vm120, %v134, %v136
  %v140 = vsel %vm120, %v136, %v138
  %143 = vst [vmem:[#allocation3 + $0x10] sm:$0xff] %v139
  %144 = vst [vmem:[#allocation3 + $0x18] sm:$0xff] %v140
  %v145 = vld [vmem:[#allocation2] sm:$0xff]
  %v146 = vld [vmem:[#allocation2 + $0x8] sm:$0xff]
  %v147 = vld [vmem:[#allocation2 + $0x10] sm:$0xff]
  %v148 = vld [vmem:[#allocation2 + $0x20] sm:$0xff]
  %v149 = vld [vmem:[#allocation2 + $0x28] sm:$0xff]
  %v150 = vld [vmem:[#allocation2 + $0x30] sm:$0xff]
  %v151 = vld [vmem:[#allocation2 + $0x40] sm:$0xff]
  %v152 = vld [vmem:[#allocation2 + $0x48] sm:$0xff]
  %v153 = vld [vmem:[#allocation2 + $0x50] sm:$0xff]
  %v154 = vld [vmem:[#allocation2 + $0x60] sm:$0xff]
  %v155 = vld [vmem:[#allocation2 + $0x68] sm:$0xff]
  %v156 = vld [vmem:[#allocation2 + $0x70] sm:$0xff]
  %s157 = scalar_lea.vmem %s1, 1
  %v158 = vld [vmem:[%s157] ss:$8 sm:$0x3]
  %v160 = vlaneseq
  %v161 = vshrl.u32 %v160, 7
  %v162 = vsub.s32 0, %v161
  %v163 = vrot.slane %v158, %v162
  %v164 = vlaneseq
  %v165 = vshrl.u32 %v164, 7
  %v166 = vsub.s32 1, %v165
  %v167 = vrot.slane %v158, %v166
  %168 = vrot.lane.b32.xlu0 %v163, 95
  %v169 = vpop.permute.xlu0 %168
  %170 = vrot.lane.b32.xlu0 %v167, 95
  %v171 = vpop.permute.xlu0 %170
  %vm172 = vcmask 777216
  %v173 = vsel %vm172, %v169, %v171
  %v177 = vmul.f32 %v145, %v169
  %v178 = vmul.f32 %v146, %v173
  %v179 = vmul.f32 %v147, %v171
  %v180 = vmul.f32 %v148, %v169
  %v181 = vmul.f32 %v149, %v173
  %v182 = vmul.f32 %v150, %v171
  %v183 = vmul.f32 %v151, %v169
  %v184 = vmul.f32 %v152, %v173
  %v185 = vmul.f32 %v153, %v171
  %v186 = vmul.f32 %v154, %v169
  %v187 = vmul.f32 %v155, %v173
  %v188 = vmul.f32 %v156, %v171
  %v189 = vpack.c.bf16 %v180, %v177
  %v190 = vpack.c.bf16 %v181, %v178
  %v191 = vpack.c.bf16 %v182, %v179
  %195 = vrot.lane.b32.xlu0 %v189, 33
  %v196 = vpop.permute.xlu0 %195
  %197 = vrot.lane.b32.xlu0 %v190, 33
  %v198 = vpop.permute.xlu0 %197
  %199 = vrot.lane.b32.xlu0 %v191, 33
  %v200 = vpop.permute.xlu0 %199
  %vm201 = vcmask 269312
  %v202 = vsel %vm201, %v196, %v198
  %v203 = vsel %vm201, %v198, %v200
  %206 = vst [vmem:[#allocation3 + $0x20] sm:$0xff] %v202
  %207 = vst [vmem:[#allocation3 + $0x28] sm:$0xff] %v203
  %v208 = vpack.c.bf16 %v186, %v183
  %v209 = vpack.c.bf16 %v187, %v184
  %v210 = vpack.c.bf16 %v188, %v185
  %214 = vrot.lane.b32.xlu0 %v208, 33
  %v215 = vpop.permute.xlu0 %214
  %216 = vrot.lane.b32.xlu0 %v209, 33
  %v217 = vpop.permute.xlu0 %216
  %218 = vrot.lane.b32.xlu0 %v210, 33
  %v219 = vpop.permute.xlu0 %218
  %v220 = vsel %vm201, %v215, %v217
  %v221 = vsel %vm201, %v217, %v219
  %224 = vst [vmem:[#allocation3 + $0x30] sm:$0xff] %v220
  %225 = vst [vmem:[#allocation3 + $0x38] sm:$0xff] %v221
  %v226 = vld [vmem:[#allocation2] sm:$0xff]
  %v227 = vld [vmem:[#allocation2 + $0x8] sm:$0xff]
  %v228 = vld [vmem:[#allocation2 + $0x10] sm:$0xff]
  %v229 = vld [vmem:[#allocation2 + $0x20] sm:$0xff]
  %v230 = vld [vmem:[#allocation2 + $0x28] sm:$0xff]
  %v231 = vld [vmem:[#allocation2 + $0x30] sm:$0xff]
  %v232 = vld [vmem:[#allocation2 + $0x40] sm:$0xff]
  %v233 = vld [vmem:[#allocation2 + $0x48] sm:$0xff]
  %v234 = vld [vmem:[#allocation2 + $0x50] sm:$0xff]
  %v235 = vld [vmem:[#allocation2 + $0x60] sm:$0xff]
  %v236 = vld [vmem:[#allocation2 + $0x68] sm:$0xff]
  %v237 = vld [vmem:[#allocation2 + $0x70] sm:$0xff]
  %v238 = vpack.c.bf16 %v229, %v226
  %v239 = vpack.c.bf16 %v230, %v227
  %v240 = vpack.c.bf16 %v231, %v228
  %244 = vrot.lane.b32.xlu0 %v238, 32
  %v245 = vpop.permute.xlu0 %244
  %246 = vrot.lane.b32.xlu0 %v239, 32
  %v247 = vpop.permute.xlu0 %246
  %248 = vrot.lane.b32.xlu0 %v240, 32
  %v249 = vpop.permute.xlu0 %248
  %vm250 = vcmask 261120
  %v251 = vsel %vm250, %v245, %v247
  %v252 = vsel %vm250, %v247, %v249
  %255 = vst [vmem:[#allocation3 + $0x40] sm:$0xff] %v251
  %256 = vst [vmem:[#allocation3 + $0x48] sm:$0xff] %v252
  %v257 = vpack.c.bf16 %v235, %v232
  %v258 = vpack.c.bf16 %v236, %v233
  %v259 = vpack.c.bf16 %v237, %v234
  %263 = vrot.lane.b32.xlu0 %v257, 32
  %v264 = vpop.permute.xlu0 %263
  %265 = vrot.lane.b32.xlu0 %v258, 32
  %v266 = vpop.permute.xlu0 %265
  %267 = vrot.lane.b32.xlu0 %v259, 32
  %v268 = vpop.permute.xlu0 %267
  %v269 = vsel %vm250, %v264, %v266
  %v270 = vsel %vm250, %v266, %v268
  %273 = vst [vmem:[#allocation3 + $0x50] sm:$0xff] %v269
  %274 = vst [vmem:[#allocation3 + $0x58] sm:$0xff] %v270
  %v275 = vld [vmem:[#allocation2] sm:$0xff]
  %v276 = vld [vmem:[#allocation2 + $0x8] sm:$0xff]
  %v277 = vld [vmem:[#allocation2 + $0x10] sm:$0xff]
  %v278 = vld [vmem:[#allocation2 + $0x20] sm:$0xff]
  %v279 = vld [vmem:[#allocation2 + $0x28] sm:$0xff]
  %v280 = vld [vmem:[#allocation2 + $0x30] sm:$0xff]
  %v281 = vld [vmem:[#allocation2 + $0x40] sm:$0xff]
  %v282 = vld [vmem:[#allocation2 + $0x48] sm:$0xff]
  %v283 = vld [vmem:[#allocation2 + $0x50] sm:$0xff]
  %v284 = vld [vmem:[#allocation2 + $0x60] sm:$0xff]
  %v285 = vld [vmem:[#allocation2 + $0x68] sm:$0xff]
  %v286 = vld [vmem:[#allocation2 + $0x70] sm:$0xff]
  %s287 = scalar_lea.vmem %s1, 3
  %v288 = vld [vmem:[%s287] ss:$8 sm:$0x3]
  %v290 = vlaneseq
  %v291 = vshrl.u32 %v290, 7
  %v292 = vsub.s32 0, %v291
  %v293 = vrot.slane %v288, %v292
  %v294 = vlaneseq
  %v295 = vshrl.u32 %v294, 7
  %v296 = vsub.s32 1, %v295
  %v297 = vrot.slane %v288, %v296
  %298 = vrot.lane.b32.xlu0 %v293, 97
  %v299 = vpop.permute.xlu0 %298
  %300 = vrot.lane.b32.xlu0 %v297, 97
  %v301 = vpop.permute.xlu0 %300
  %vm302 = vcmask 793600
  %v303 = vsel %vm302, %v299, %v301
  %v307 = vmul.f32 %v275, %v299
  %v308 = vmul.f32 %v276, %v303
  %v309 = vmul.f32 %v277, %v301
  %v310 = vmul.f32 %v278, %v299
  %v311 = vmul.f32 %v279, %v303
  %v312 = vmul.f32 %v280, %v301
  %v313 = vmul.f32 %v281, %v299
  %v314 = vmul.f32 %v282, %v303
  %v315 = vmul.f32 %v283, %v301
  %v316 = vmul.f32 %v284, %v299
  %v317 = vmul.f32 %v285, %v303
  %v318 = vmul.f32 %v286, %v301
  %v319 = vpack.c.bf16 %v310, %v307
  %v320 = vpack.c.bf16 %v311, %v308
  %v321 = vpack.c.bf16 %v312, %v309
  %325 = vrot.lane.b32.xlu0 %v319, 31
  %v326 = vpop.permute.xlu0 %325
  %327 = vrot.lane.b32.xlu0 %v320, 31
  %v328 = vpop.permute.xlu0 %327
  %329 = vrot.lane.b32.xlu0 %v321, 31
  %v330 = vpop.permute.xlu0 %329
  %vm331 = vcmask 252928
  %v332 = vsel %vm331, %v326, %v328
  %v333 = vsel %vm331, %v328, %v330
  %336 = vst [vmem:[#allocation3 + $0x60] sm:$0xff] %v332
  %337 = vst [vmem:[#allocation3 + $0x68] sm:$0xff] %v333
  %v338 = vpack.c.bf16 %v316, %v313
  %v339 = vpack.c.bf16 %v317, %v314
  %v340 = vpack.c.bf16 %v318, %v315
  %344 = vrot.lane.b32.xlu0 %v338, 31
  %v345 = vpop.permute.xlu0 %344
  %346 = vrot.lane.b32.xlu0 %v339, 31
  %v347 = vpop.permute.xlu0 %346
  %348 = vrot.lane.b32.xlu0 %v340, 31
  %v349 = vpop.permute.xlu0 %348
  %v350 = vsel %vm331, %v345, %v347
  %v351 = vsel %vm331, %v347, %v349
  %354 = vst [vmem:[#allocation3 + $0x70] sm:$0xff] %v350
  %355 = vst [vmem:[#allocation3 + $0x78] sm:$0xff] %v351
  %v356 = vld [vmem:[#allocation2] sm:$0xff]
  %v357 = vld [vmem:[#allocation2 + $0x8] sm:$0xff]
  %v358 = vld [vmem:[#allocation2 + $0x10] sm:$0xff]
  %v359 = vld [vmem:[#allocation2 + $0x20] sm:$0xff]
  %v360 = vld [vmem:[#allocation2 + $0x28] sm:$0xff]
  %v361 = vld [vmem:[#allocation2 + $0x30] sm:$0xff]
  %v362 = vld [vmem:[#allocation2 + $0x40] sm:$0xff]
  %v363 = vld [vmem:[#allocation2 + $0x48] sm:$0xff]
  %v364 = vld [vmem:[#allocation2 + $0x50] sm:$0xff]
  %v365 = vld [vmem:[#allocation2 + $0x60] sm:$0xff]
  %v366 = vld [vmem:[#allocation2 + $0x68] sm:$0xff]
  %v367 = vld [vmem:[#allocation2 + $0x70] sm:$0xff]
  %s368 = scalar_lea.vmem %s1, 4
  %v369 = vld [vmem:[%s368] ss:$8 sm:$0x3]
  %v371 = vlaneseq
  %v372 = vshrl.u32 %v371, 7
  %v373 = vsub.s32 0, %v372
  %v374 = vrot.slane %v369, %v373
  %v375 = vlaneseq
  %v376 = vshrl.u32 %v375, 7
  %v377 = vsub.s32 1, %v376
  %v378 = vrot.slane %v369, %v377
  %379 = vrot.lane.b32.xlu0 %v374, 98
  %v380 = vpop.permute.xlu0 %379
  %381 = vrot.lane.b32.xlu0 %v378, 98
  %v382 = vpop.permute.xlu0 %381
  %vm383 = vcmask 801792
  %v384 = vsel %vm383, %v380, %v382
  %v388 = vmul.f32 %v356, %v380
  %v389 = vmul.f32 %v357, %v384
  %v390 = vmul.f32 %v358, %v382
  %v391 = vmul.f32 %v359, %v380
  %v392 = vmul.f32 %v360, %v384
  %v393 = vmul.f32 %v361, %v382
  %v394 = vmul.f32 %v362, %v380
  %v395 = vmul.f32 %v363, %v384
  %v396 = vmul.f32 %v364, %v382
  %v397 = vmul.f32 %v365, %v380
  %v398 = vmul.f32 %v366, %v384
  %v399 = vmul.f32 %v367, %v382
  %v400 = vpack.c.bf16 %v391, %v388
  %v401 = vpack.c.bf16 %v392, %v389
  %v402 = vpack.c.bf16 %v393, %v390
  %406 = vrot.lane.b32.xlu0 %v400, 30
  %v407 = vpop.permute.xlu0 %406
  %408 = vrot.lane.b32.xlu0 %v401, 30
  %v409 = vpop.permute.xlu0 %408
  %410 = vrot.lane.b32.xlu0 %v402, 30
  %v411 = vpop.permute.xlu0 %410
  %vm412 = vcmask 244736
  %v413 = vsel %vm412, %v407, %v409
  %v414 = vsel %vm412, %v409, %v411
  %417 = vst [vmem:[#allocation3 + $0x80] sm:$0xff] %v413
  %418 = vst [vmem:[#allocation3 + $0x88] sm:$0xff] %v414
  %v419 = vpack.c.bf16 %v397, %v394
  %v420 = vpack.c.bf16 %v398, %v395
  %v421 = vpack.c.bf16 %v399, %v396
  %425 = vrot.lane.b32.xlu0 %v419, 30
  %v426 = vpop.permute.xlu0 %425
  %427 = vrot.lane.b32.xlu0 %v420, 30
  %v428 = vpop.permute.xlu0 %427
  %429 = vrot.lane.b32.xlu0 %v421, 30
  %v430 = vpop.permute.xlu0 %429
  %v431 = vsel %vm412, %v426, %v428
  %v432 = vsel %vm412, %v428, %v430
  %435 = vst [vmem:[#allocation3 + $0x90] sm:$0xff] %v431
  %436 = vst [vmem:[#allocation3 + $0x98] sm:$0xff] %v432
  %v437 = vld [vmem:[#allocation2] sm:$0xff]
  %v438 = vld [vmem:[#allocation2 + $0x8] sm:$0xff]
  %v439 = vld [vmem:[#allocation2 + $0x10] sm:$0xff]
  %v440 = vld [vmem:[#allocation2 + $0x20] sm:$0xff]
  %v441 = vld [vmem:[#allocation2 + $0x28] sm:$0xff]
  %v442 = vld [vmem:[#allocation2 + $0x30] sm:$0xff]
  %v443 = vld [vmem:[#allocation2 + $0x40] sm:$0xff]
  %v444 = vld [vmem:[#allocation2 + $0x48] sm:$0xff]
  %v445 = vld [vmem:[#allocation2 + $0x50] sm:$0xff]
  %v446 = vld [vmem:[#allocation2 + $0x60] sm:$0xff]
  %v447 = vld [vmem:[#allocation2 + $0x68] sm:$0xff]
  %v448 = vld [vmem:[#allocation2 + $0x70] sm:$0xff]
  %s449 = scalar_lea.vmem %s1, 5
  %v450 = vld [vmem:[%s449] ss:$8 sm:$0x3]
  %v452 = vlaneseq
  %v453 = vshrl.u32 %v452, 7
  %v454 = vsub.s32 0, %v453
  %v455 = vrot.slane %v450, %v454
  %v456 = vlaneseq
  %v457 = vshrl.u32 %v456, 7
  %v458 = vsub.s32 1, %v457
  %v459 = vrot.slane %v450, %v458
  %460 = vrot.lane.b32.xlu0 %v455, 110
  %v461 = vpop.permute.xlu0 %460
  %462 = vrot.lane.b32.xlu0 %v459, 110
  %v463 = vpop.permute.xlu0 %462
  %vm464 = vcmask 900096
  %v465 = vsel %vm464, %v461, %v463
  %v469 = vmul.f32 %v437, %v461
  %v470 = vmul.f32 %v438, %v465
  %v471 = vmul.f32 %v439, %v463
  %v472 = vmul.f32 %v440, %v461
  %v473 = vmul.f32 %v441, %v465
  %v474 = vmul.f32 %v442, %v463
  %v475 = vmul.f32 %v443, %v461
  %v476 = vmul.f32 %v444, %v465
  %v477 = vmul.f32 %v445, %v463
  %v478 = vmul.f32 %v446, %v461
  %v479 = vmul.f32 %v447, %v465
  %v480 = vmul.f32 %v448, %v463
  %v481 = vpack.c.bf16 %v472, %v469
  %v482 = vpack.c.bf16 %v473, %v470
  %v483 = vpack.c.bf16 %v474, %v471
  %487 = vrot.lane.b32.xlu0 %v481, 18
  %v488 = vpop.permute.xlu0 %487
  %489 = vrot.lane.b32.xlu0 %v482, 18
  %v490 = vpop.permute.xlu0 %489
  %491 = vrot.lane.b32.xlu0 %v483, 18
  %v492 = vpop.permute.xlu0 %491
  %vm493 = vcmask 146432
  %v494 = vsel %vm493, %v488, %v490
  %v495 = vsel %vm493, %v490, %v492
  %498 = vst [vmem:[#allocation3 + $0xa0] sm:$0xff] %v494
  %499 = vst [vmem:[#allocation3 + $0xa8] sm:$0xff] %v495
  %v500 = vpack.c.bf16 %v478, %v475
  %v501 = vpack.c.bf16 %v479, %v476
  %v502 = vpack.c.bf16 %v480, %v477
  %506 = vrot.lane.b32.xlu0 %v500, 18
  %v507 = vpop.permute.xlu0 %506
  %508 = vrot.lane.b32.xlu0 %v501, 18
  %v509 = vpop.permute.xlu0 %508
  %510 = vrot.lane.b32.xlu0 %v502, 18
  %v511 = vpop.permute.xlu0 %510
  %v512 = vsel %vm493, %v507, %v509
  %v513 = vsel %vm493, %v509, %v511
  %516 = vst [vmem:[#allocation3 + $0xb0] sm:$0xff] %v512
  %517 = vst [vmem:[#allocation3 + $0xb8] sm:$0xff] %v513
  %v518 = vld [vmem:[#allocation2] sm:$0xff]
  %v519 = vld [vmem:[#allocation2 + $0x8] sm:$0xff]
  %v520 = vld [vmem:[#allocation2 + $0x10] sm:$0xff]
  %v521 = vld [vmem:[#allocation2 + $0x20] sm:$0xff]
  %v522 = vld [vmem:[#allocation2 + $0x28] sm:$0xff]
  %v523 = vld [vmem:[#allocation2 + $0x30] sm:$0xff]
  %v524 = vld [vmem:[#allocation2 + $0x40] sm:$0xff]
  %v525 = vld [vmem:[#allocation2 + $0x48] sm:$0xff]
  %v526 = vld [vmem:[#allocation2 + $0x50] sm:$0xff]
  %v527 = vld [vmem:[#allocation2 + $0x60] sm:$0xff]
  %v528 = vld [vmem:[#allocation2 + $0x68] sm:$0xff]
  %v529 = vld [vmem:[#allocation2 + $0x70] sm:$0xff]
  %s530 = scalar_lea.vmem %s1, 6
  %v531 = vld [vmem:[%s530] ss:$8 sm:$0x3]
  %v533 = vlaneseq
  %v534 = vshrl.u32 %v533, 7
  %v535 = vsub.s32 0, %v534
  %v536 = vrot.slane %v531, %v535
  %v537 = vlaneseq
  %v538 = vshrl.u32 %v537, 7
  %v539 = vsub.s32 1, %v538
  %v540 = vrot.slane %v531, %v539
  %541 = vrot.lane.b32.xlu0 %v536, 111
  %v542 = vpop.permute.xlu0 %541
  %543 = vrot.lane.b32.xlu0 %v540, 111
  %v544 = vpop.permute.xlu0 %543
  %vm545 = vcmask 908288
  %v546 = vsel %vm545, %v542, %v544
  %v550 = vmul.f32 %v518, %v542
  %v551 = vmul.f32 %v519, %v546
  %v552 = vmul.f32 %v520, %v544
  %v553 = vmul.f32 %v521, %v542
  %v554 = vmul.f32 %v522, %v546
  %v555 = vmul.f32 %v523, %v544
  %v556 = vmul.f32 %v524, %v542
  %v557 = vmul.f32 %v525, %v546
  %v558 = vmul.f32 %v526, %v544
  %v559 = vmul.f32 %v527, %v542
  %v560 = vmul.f32 %v528, %v546
  %v561 = vmul.f32 %v529, %v544
  %v562 = vpack.c.bf16 %v553, %v550
  %v563 = vpack.c.bf16 %v554, %v551
  %v564 = vpack.c.bf16 %v555, %v552
  %568 = vrot.lane.b32.xlu0 %v562, 17
  %v569 = vpop.permute.xlu0 %568
  %570 = vrot.lane.b32.xlu0 %v563, 17
  %v571 = vpop.permute.xlu0 %570
  %572 = vrot.lane.b32.xlu0 %v564, 17
  %v573 = vpop.permute.xlu0 %572
  %vm574 = vcmask 138240
  %v575 = vsel %vm574, %v569, %v571
  %v576 = vsel %vm574, %v571, %v573
  %579 = vst [vmem:[#allocation3 + $0xc0] sm:$0xff] %v575
  %580 = vst [vmem:[#allocation3 + $0xc8] sm:$0xff] %v576
  %v581 = vpack.c.bf16 %v559, %v556
  %v582 = vpack.c.bf16 %v560, %v557
  %v583 = vpack.c.bf16 %v561, %v558
  %587 = vrot.lane.b32.xlu0 %v581, 17
  %v588 = vpop.permute.xlu0 %587
  %589 = vrot.lane.b32.xlu0 %v582, 17
  %v590 = vpop.permute.xlu0 %589
  %591 = vrot.lane.b32.xlu0 %v583, 17
  %v592 = vpop.permute.xlu0 %591
  %v593 = vsel %vm574, %v588, %v590
  %v594 = vsel %vm574, %v590, %v592
  %597 = vst [vmem:[#allocation3 + $0xd0] sm:$0xff] %v593
  %598 = vst [vmem:[#allocation3 + $0xd8] sm:$0xff] %v594
  %v599 = vld [vmem:[#allocation2] sm:$0xff]
  %v600 = vld [vmem:[#allocation2 + $0x8] sm:$0xff]
  %v601 = vld [vmem:[#allocation2 + $0x10] sm:$0xff]
  %v602 = vld [vmem:[#allocation2 + $0x20] sm:$0xff]
  %v603 = vld [vmem:[#allocation2 + $0x28] sm:$0xff]
  %v604 = vld [vmem:[#allocation2 + $0x30] sm:$0xff]
  %v605 = vld [vmem:[#allocation2 + $0x40] sm:$0xff]
  %v606 = vld [vmem:[#allocation2 + $0x48] sm:$0xff]
  %v607 = vld [vmem:[#allocation2 + $0x50] sm:$0xff]
  %v608 = vld [vmem:[#allocation2 + $0x60] sm:$0xff]
  %v609 = vld [vmem:[#allocation2 + $0x68] sm:$0xff]
  %v610 = vld [vmem:[#allocation2 + $0x70] sm:$0xff]
  %v611 = vpack.c.bf16 %v602, %v599
  %v612 = vpack.c.bf16 %v603, %v600
  %v613 = vpack.c.bf16 %v604, %v601
  %617 = vrot.lane.b32.xlu0 %v611, 16
  %v618 = vpop.permute.xlu0 %617
  %619 = vrot.lane.b32.xlu0 %v612, 16
  %v620 = vpop.permute.xlu0 %619
  %621 = vrot.lane.b32.xlu0 %v613, 16
  %v622 = vpop.permute.xlu0 %621
  %vm623 = vcmask 130048
  %v624 = vsel %vm623, %v618, %v620
  %v625 = vsel %vm623, %v620, %v622
  %628 = vst [vmem:[#allocation3 + $0xe0] sm:$0xff] %v624
  %629 = vst [vmem:[#allocation3 + $0xe8] sm:$0xff] %v625
  %v630 = vpack.c.bf16 %v608, %v605
  %v631 = vpack.c.bf16 %v609, %v606
  %v632 = vpack.c.bf16 %v610, %v607
  %636 = vrot.lane.b32.xlu0 %v630, 16
  %v637 = vpop.permute.xlu0 %636
  %638 = vrot.lane.b32.xlu0 %v631, 16
  %v639 = vpop.permute.xlu0 %638
  %640 = vrot.lane.b32.xlu0 %v632, 16
  %v641 = vpop.permute.xlu0 %640
  %v642 = vsel %vm623, %v637, %v639
  %v643 = vsel %vm623, %v639, %v641
  %646 = vst [vmem:[#allocation3 + $0xf0] sm:$0xff] %v642
  %647 = vst [vmem:[#allocation3 + $0xf8] sm:$0xff] %v643
  %v648 = vld [vmem:[#allocation2] sm:$0xff]
  %v649 = vld [vmem:[#allocation2 + $0x8] sm:$0xff]
  %v650 = vld [vmem:[#allocation2 + $0x10] sm:$0xff]
  %v651 = vld [vmem:[#allocation2 + $0x20] sm:$0xff]
  %v652 = vld [vmem:[#allocation2 + $0x28] sm:$0xff]
  %v653 = vld [vmem:[#allocation2 + $0x30] sm:$0xff]
  %v654 = vld [vmem:[#allocation2 + $0x40] sm:$0xff]
  %v655 = vld [vmem:[#allocation2 + $0x48] sm:$0xff]
  %v656 = vld [vmem:[#allocation2 + $0x50] sm:$0xff]
  %v657 = vld [vmem:[#allocation2 + $0x60] sm:$0xff]
  %v658 = vld [vmem:[#allocation2 + $0x68] sm:$0xff]
  %v659 = vld [vmem:[#allocation2 + $0x70] sm:$0xff]
  %s660 = scalar_lea.vmem %s1, 16
  %v661 = vld [vmem:[%s660] ss:$8 sm:$0x3]
  %v663 = vlaneseq
  %v664 = vshrl.u32 %v663, 7
  %v665 = vsub.s32 0, %v664
  %v666 = vrot.slane %v661, %v665
  %v667 = vlaneseq
  %v668 = vshrl.u32 %v667, 7
  %v669 = vsub.s32 1, %v668
  %v670 = vrot.slane %v661, %v669
  %671 = vrot.lane.b32.xlu0 %v666, 113
  %v672 = vpop.permute.xlu0 %671
  %673 = vrot.lane.b32.xlu0 %v670, 113
  %v674 = vpop.permute.xlu0 %673
  %vm675 = vcmask 924672
  %v676 = vsel %vm675, %v672, %v674
  %v680 = vmul.f32 %v648, %v672
  %v681 = vmul.f32 %v649, %v676
  %v682 = vmul.f32 %v650, %v674
  %v683 = vmul.f32 %v651, %v672
  %v684 = vmul.f32 %v652, %v676
  %v685 = vmul.f32 %v653, %v674
  %v686 = vmul.f32 %v654, %v672
  %v687 = vmul.f32 %v655, %v676
  %v688 = vmul.f32 %v656, %v674
  %v689 = vmul.f32 %v657, %v672
  %v690 = vmul.f32 %v658, %v676
  %v691 = vmul.f32 %v659, %v674
  %v692 = vpack.c.bf16 %v683, %v680
  %v693 = vpack.c.bf16 %v684, %v681
  %v694 = vpack.c.bf16 %v685, %v682
  %698 = vrot.lane.b32.xlu0 %v692, 15
  %v699 = vpop.permute.xlu0 %698
  %700 = vrot.lane.b32.xlu0 %v693, 15
  %v701 = vpop.permute.xlu0 %700
  %702 = vrot.lane.b32.xlu0 %v694, 15
  %v703 = vpop.permute.xlu0 %702
  %vm704 = vcmask 121856
  %v705 = vsel %vm704, %v699, %v701
  %v706 = vsel %vm704, %v701, %v703
  %709 = vst [vmem:[#allocation3 + $0x100] sm:$0xff] %v705
  %710 = vst [vmem:[#allocation3 + $0x108] sm:$0xff] %v706
  %v711 = vpack.c.bf16 %v689, %v686
  %v712 = vpack.c.bf16 %v690, %v687
  %v713 = vpack.c.bf16 %v691, %v688
  %717 = vrot.lane.b32.xlu0 %v711, 15
  %v718 = vpop.permute.xlu0 %717
  %719 = vrot.lane.b32.xlu0 %v712, 15
  %v720 = vpop.permute.xlu0 %719
  %721 = vrot.lane.b32.xlu0 %v713, 15
  %v722 = vpop.permute.xlu0 %721
  %v723 = vsel %vm704, %v718, %v720
  %v724 = vsel %vm704, %v720, %v722
  %727 = vst [vmem:[#allocation3 + $0x110] sm:$0xff] %v723
  %728 = vst [vmem:[#allocation3 + $0x118] sm:$0xff] %v724
  %v729 = vld [vmem:[#allocation2] sm:$0xff]
  %v730 = vld [vmem:[#allocation2 + $0x8] sm:$0xff]
  %v731 = vld [vmem:[#allocation2 + $0x10] sm:$0xff]
  %v732 = vld [vmem:[#allocation2 + $0x20] sm:$0xff]
  %v733 = vld [vmem:[#allocation2 + $0x28] sm:$0xff]
  %v734 = vld [vmem:[#allocation2 + $0x30] sm:$0xff]
  %v735 = vld [vmem:[#allocation2 + $0x40] sm:$0xff]
  %v736 = vld [vmem:[#allocation2 + $0x48] sm:$0xff]
  %v737 = vld [vmem:[#allocation2 + $0x50] sm:$0xff]
  %v738 = vld [vmem:[#allocation2 + $0x60] sm:$0xff]
  %v739 = vld [vmem:[#allocation2 + $0x68] sm:$0xff]
  %v740 = vld [vmem:[#allocation2 + $0x70] sm:$0xff]
  %s741 = scalar_lea.vmem %s1, 17
  %v742 = vld [vmem:[%s741] ss:$8 sm:$0x3]
  %v744 = vlaneseq
  %v745 = vshrl.u32 %v744, 7
  %v746 = vsub.s32 0, %v745
  %v747 = vrot.slane %v742, %v746
  %v748 = vlaneseq
  %v749 = vshrl.u32 %v748, 7
  %v750 = vsub.s32 1, %v749
  %v751 = vrot.slane %v742, %v750
  %752 = vrot.lane.b32.xlu0 %v747, 114
  %v753 = vpop.permute.xlu0 %752
  %754 = vrot.lane.b32.xlu0 %v751, 114
  %v755 = vpop.permute.xlu0 %754
  %vm756 = vcmask 932864
  %v757 = vsel %vm756, %v753, %v755
  %v761 = vmul.f32 %v729, %v753
  %v762 = vmul.f32 %v730, %v757
  %v763 = vmul.f32 %v731, %v755
  %v764 = vmul.f32 %v732, %v753
  %v765 = vmul.f32 %v733, %v757
  %v766 = vmul.f32 %v734, %v755
  %v767 = vmul.f32 %v735, %v753
  %v768 = vmul.f32 %v736, %v757
  %v769 = vmul.f32 %v737, %v755
  %v770 = vmul.f32 %v738, %v753
  %v771 = vmul.f32 %v739, %v757
  %v772 = vmul.f32 %v740, %v755
  %v773 = vpack.c.bf16 %v764, %v761
  %v774 = vpack.c.bf16 %v765, %v762
  %v775 = vpack.c.bf16 %v766, %v763
  %779 = vrot.lane.b32.xlu0 %v773, 14
  %v780 = vpop.permute.xlu0 %779
  %781 = vrot.lane.b32.xlu0 %v774, 14
  %v782 = vpop.permute.xlu0 %781
  %783 = vrot.lane.b32.xlu0 %v775, 14
  %v784 = vpop.permute.xlu0 %783
  %vm785 = vcmask 113664
  %v786 = vsel %vm785, %v780, %v782
  %v787 = vsel %vm785, %v782, %v784
  %790 = vst [vmem:[#allocation3 + $0x120] sm:$0xff] %v786
  %791 = vst [vmem:[#allocation3 + $0x128] sm:$0xff] %v787
  %v792 = vpack.c.bf16 %v770, %v767
  %v793 = vpack.c.bf16 %v771, %v768
  %v794 = vpack.c.bf16 %v772, %v769
  %798 = vrot.lane.b32.xlu0 %v792, 14
  %v799 = vpop.permute.xlu0 %798
  %800 = vrot.lane.b32.xlu0 %v793, 14
  %v801 = vpop.permute.xlu0 %800
  %802 = vrot.lane.b32.xlu0 %v794, 14
  %v803 = vpop.permute.xlu0 %802
  %v804 = vsel %vm785, %v799, %v801
  %v805 = vsel %vm785, %v801, %v803
  %808 = vst [vmem:[#allocation3 + $0x130] sm:$0xff] %v804
  %809 = vst [vmem:[#allocation3 + $0x138] sm:$0xff] %v805
  %v810 = vld [vmem:[#allocation2] sm:$0xff]
  %v811 = vld [vmem:[#allocation2 + $0x8] sm:$0xff]
  %v812 = vld [vmem:[#allocation2 + $0x10] sm:$0xff]
  %v813 = vld [vmem:[#allocation2 + $0x20] sm:$0xff]
  %v814 = vld [vmem:[#allocation2 + $0x28] sm:$0xff]
  %v815 = vld [vmem:[#allocation2 + $0x30] sm:$0xff]
  %v816 = vld [vmem:[#allocation2 + $0x40] sm:$0xff]
  %v817 = vld [vmem:[#allocation2 + $0x48] sm:$0xff]
  %v818 = vld [vmem:[#allocation2 + $0x50] sm:$0xff]
  %v819 = vld [vmem:[#allocation2 + $0x60] sm:$0xff]
  %v820 = vld [vmem:[#allocation2 + $0x68] sm:$0xff]
  %v821 = vld [vmem:[#allocation2 + $0x70] sm:$0xff]
  %s822 = scalar_lea.vmem %s1, 18
  %v823 = vld [vmem:[%s822] ss:$8 sm:$0x3]
  %v825 = vlaneseq
  %v826 = vshrl.u32 %v825, 7
  %v827 = vsub.s32 0, %v826
  %v828 = vrot.slane %v823, %v827
  %v829 = vlaneseq
  %v830 = vshrl.u32 %v829, 7
  %v831 = vsub.s32 1, %v830
  %v832 = vrot.slane %v823, %v831
  %833 = vrot.lane.b32.xlu0 %v828, 126
  %v834 = vpop.permute.xlu0 %833
  %835 = vrot.lane.b32.xlu0 %v832, 126
  %v836 = vpop.permute.xlu0 %835
  %vm837 = vcmask 1031168
  %v838 = vsel %vm837, %v834, %v836
  %v842 = vmul.f32 %v810, %v834
  %v843 = vmul.f32 %v811, %v838
  %v844 = vmul.f32 %v812, %v836
  %v845 = vmul.f32 %v813, %v834
  %v846 = vmul.f32 %v814, %v838
  %v847 = vmul.f32 %v815, %v836
  %v848 = vmul.f32 %v816, %v834
  %v849 = vmul.f32 %v817, %v838
  %v850 = vmul.f32 %v818, %v836
  %v851 = vmul.f32 %v819, %v834
  %v852 = vmul.f32 %v820, %v838
  %v853 = vmul.f32 %v821, %v836
  %v854 = vpack.c.bf16 %v845, %v842
  %v855 = vpack.c.bf16 %v846, %v843
  %v856 = vpack.c.bf16 %v847, %v844
  %860 = vrot.lane.b32.xlu0 %v854, 2
  %v861 = vpop.permute.xlu0 %860
  %862 = vrot.lane.b32.xlu0 %v855, 2
  %v863 = vpop.permute.xlu0 %862
  %864 = vrot.lane.b32.xlu0 %v856, 2
  %v865 = vpop.permute.xlu0 %864
  %vm866 = vcmask 15360
  %v867 = vsel %vm866, %v861, %v863
  %v868 = vsel %vm866, %v863, %v865
  %871 = vst [vmem:[#allocation3 + $0x140] sm:$0xff] %v867
  %872 = vst [vmem:[#allocation3 + $0x148] sm:$0xff] %v868
  %v873 = vpack.c.bf16 %v851, %v848
  %v874 = vpack.c.bf16 %v852, %v849
  %v875 = vpack.c.bf16 %v853, %v850
  %879 = vrot.lane.b32.xlu0 %v873, 2
  %v880 = vpop.permute.xlu0 %879
  %881 = vrot.lane.b32.xlu0 %v874, 2
  %v882 = vpop.permute.xlu0 %881
  %883 = vrot.lane.b32.xlu0 %v875, 2
  %v884 = vpop.permute.xlu0 %883
  %v885 = vsel %vm866, %v880, %v882
  %v886 = vsel %vm866, %v882, %v884
  %889 = vst [vmem:[#allocation3 + $0x150] sm:$0xff] %v885
  %890 = vst [vmem:[#allocation3 + $0x158] sm:$0xff] %v886
  %v891 = vld [vmem:[#allocation2] sm:$0xff]
  %v892 = vld [vmem:[#allocation2 + $0x8] sm:$0xff]
  %v893 = vld [vmem:[#allocation2 + $0x10] sm:$0xff]
  %v894 = vld [vmem:[#allocation2 + $0x20] sm:$0xff]
  %v895 = vld [vmem:[#allocation2 + $0x28] sm:$0xff]
  %v896 = vld [vmem:[#allocation2 + $0x30] sm:$0xff]
  %v897 = vld [vmem:[#allocation2 + $0x40] sm:$0xff]
  %v898 = vld [vmem:[#allocation2 + $0x48] sm:$0xff]
  %v899 = vld [vmem:[#allocation2 + $0x50] sm:$0xff]
  %v900 = vld [vmem:[#allocation2 + $0x60] sm:$0xff]
  %v901 = vld [vmem:[#allocation2 + $0x68] sm:$0xff]
  %v902 = vld [vmem:[#allocation2 + $0x70] sm:$0xff]
  %s903 = scalar_lea.vmem %s1, 19
  %v904 = vld [vmem:[%s903] ss:$8 sm:$0x3]
  %v906 = vlaneseq
  %v907 = vshrl.u32 %v906, 7
  %v908 = vsub.s32 0, %v907
  %v909 = vrot.slane %v904, %v908
  %v910 = vlaneseq
  %v911 = vshrl.u32 %v910, 7
  %v912 = vsub.s32 1, %v911
  %v913 = vrot.slane %v904, %v912
  %914 = vrot.lane.b32.xlu0 %v909, 127
  %v915 = vpop.permute.xlu0 %914
  %916 = vrot.lane.b32.xlu0 %v913, 127
  %v917 = vpop.permute.xlu0 %916
  %vm918 = vcmask 1039360
  %v919 = vsel %vm918, %v915, %v917
  %v923 = vmul.f32 %v891, %v915
  %v924 = vmul.f32 %v892, %v919
  %v925 = vmul.f32 %v893, %v917
  %v926 = vmul.f32 %v894, %v915
  %v927 = vmul.f32 %v895, %v919
  %v928 = vmul.f32 %v896, %v917
  %v929 = vmul.f32 %v897, %v915
  %v930 = vmul.f32 %v898, %v919
  %v931 = vmul.f32 %v899, %v917
  %v932 = vmul.f32 %v900, %v915
  %v933 = vmul.f32 %v901, %v919
  %v934 = vmul.f32 %v902, %v917
  %v935 = vpack.c.bf16 %v926, %v923
  %v936 = vpack.c.bf16 %v927, %v924
  %v937 = vpack.c.bf16 %v928, %v925
  %941 = vrot.lane.b32.xlu0 %v935, 1
  %v942 = vpop.permute.xlu0 %941
  %943 = vrot.lane.b32.xlu0 %v936, 1
  %v944 = vpop.permute.xlu0 %943
  %945 = vrot.lane.b32.xlu0 %v937, 1
  %v946 = vpop.permute.xlu0 %945
  %vm947 = vcmask 7168
  %v948 = vsel %vm947, %v942, %v944
  %v949 = vsel %vm947, %v944, %v946
  %952 = vst [vmem:[#allocation3 + $0x160] sm:$0xff] %v948
  %953 = vst [vmem:[#allocation3 + $0x168] sm:$0xff] %v949
  %v954 = vpack.c.bf16 %v932, %v929
  %v955 = vpack.c.bf16 %v933, %v930
  %v956 = vpack.c.bf16 %v934, %v931
  %960 = vrot.lane.b32.xlu0 %v954, 1
  %v961 = vpop.permute.xlu0 %960
  %962 = vrot.lane.b32.xlu0 %v955, 1
  %v963 = vpop.permute.xlu0 %962
  %964 = vrot.lane.b32.xlu0 %v956, 1
  %v965 = vpop.permute.xlu0 %964
  %v966 = vsel %vm947, %v961, %v963
  %v967 = vsel %vm947, %v963, %v965
  %970 = vst [vmem:[#allocation3 + $0x170] sm:$0xff] %v966
  %971 = vst [vmem:[#allocation3 + $0x178] sm:$0xff] %v967
  %v972 = vld [vmem:[#allocation2 + $0x8] sm:$0xff]
  %v973 = vld [vmem:[#allocation2 + $0x10] sm:$0xff]
  %v974 = vld [vmem:[#allocation2 + $0x28] sm:$0xff]
  %v975 = vld [vmem:[#allocation2 + $0x30] sm:$0xff]
  %v976 = vld [vmem:[#allocation2 + $0x48] sm:$0xff]
  %v977 = vld [vmem:[#allocation2 + $0x50] sm:$0xff]
  %v978 = vld [vmem:[#allocation2 + $0x68] sm:$0xff]
  %v979 = vld [vmem:[#allocation2 + $0x70] sm:$0xff]
  %v980 = vpack.c.bf16 %v974, %v972
  %v981 = vpack.c.bf16 %v975, %v973
  %982 = vst [vmem:[#allocation3 + $0x180] sm:$0xff] %v980
  %983 = vst [vmem:[#allocation3 + $0x188] sm:$0xff] %v981
  %v984 = vpack.c.bf16 %v978, %v976
  %v985 = vpack.c.bf16 %v979, %v977
  %986 = vst [vmem:[#allocation3 + $0x190] sm:$0xff] %v984
  %987 = vst [vmem:[#allocation3 + $0x198] sm:$0xff] %v985
  %v988 = vld [vmem:[#allocation2 + $0x8] sm:$0xff]
  %v989 = vld [vmem:[#allocation2 + $0x10] sm:$0xff]
  %v990 = vld [vmem:[#allocation2 + $0x18] sm:$0xff]
  %v991 = vld [vmem:[#allocation2 + $0x28] sm:$0xff]
  %v992 = vld [vmem:[#allocation2 + $0x30] sm:$0xff]
  %v993 = vld [vmem:[#allocation2 + $0x38] sm:$0xff]
  %v994 = vld [vmem:[#allocation2 + $0x48] sm:$0xff]
  %v995 = vld [vmem:[#allocation2 + $0x50] sm:$0xff]
  %v996 = vld [vmem:[#allocation2 + $0x58] sm:$0xff]
  %v997 = vld [vmem:[#allocation2 + $0x68] sm:$0xff]
  %v998 = vld [vmem:[#allocation2 + $0x70] sm:$0xff]
  %v999 = vld [vmem:[#allocation2 + $0x78] sm:$0xff]
  %s1000 = scalar_lea.vmem %s1, 21
  %v1001 = vld [vmem:[%s1000] ss:$8 sm:$0x3]
  %v1003 = vlaneseq
  %v1004 = vshrl.u32 %v1003, 7
  %v1005 = vsub.s32 0, %v1004
  %v1006 = vrot.slane %v1001, %v1005
  %v1007 = vlaneseq
  %v1008 = vshrl.u32 %v1007, 7
  %v1009 = vsub.s32 1, %v1008
  %v1010 = vrot.slane %v1001, %v1009
  %1011 = vrot.lane.b32.xlu0 %v1006, 1
  %v1012 = vpop.permute.xlu0 %1011
  %1013 = vrot.lane.b32.xlu0 %v1010, 1
  %v1014 = vpop.permute.xlu0 %1013
  %vm1015 = vcmask 7168
  %v1016 = vsel %vm1015, %v1012, %v1014
  %v1020 = vmul.f32 %v988, %v1012
  %v1021 = vmul.f32 %v989, %v1016
  %v1022 = vmul.f32 %v990, %v1014
  %v1023 = vmul.f32 %v991, %v1012
  %v1024 = vmul.f32 %v992, %v1016
  %v1025 = vmul.f32 %v993, %v1014
  %v1026 = vmul.f32 %v994, %v1012
  %v1027 = vmul.f32 %v995, %v1016
  %v1028 = vmul.f32 %v996, %v1014
  %v1029 = vmul.f32 %v997, %v1012
  %v1030 = vmul.f32 %v998, %v1016
  %v1031 = vmul.f32 %v999, %v1014
  %v1032 = vpack.c.bf16 %v1023, %v1020
  %v1033 = vpack.c.bf16 %v1024, %v1021
  %v1034 = vpack.c.bf16 %v1025, %v1022
  %1038 = vrot.lane.b32.xlu0 %v1032, 127
  %v1039 = vpop.permute.xlu0 %1038
  %1040 = vrot.lane.b32.xlu0 %v1033, 127
  %v1041 = vpop.permute.xlu0 %1040
  %1042 = vrot.lane.b32.xlu0 %v1034, 127
  %v1043 = vpop.permute.xlu0 %1042
  %vm1044 = vcmask 1039360
  %v1045 = vsel %vm1044, %v1039, %v1041
  %v1046 = vsel %vm1044, %v1041, %v1043
  %1049 = vst [vmem:[#allocation3 + $0x1a0] sm:$0xff] %v1045
  %1050 = vst [vmem:[#allocation3 + $0x1a8] sm:$0xff] %v1046
  %v1051 = vpack.c.bf16 %v1029, %v1026
  %v1052 = vpack.c.bf16 %v1030, %v1027
  %v1053 = vpack.c.bf16 %v1031, %v1028
  %1057 = vrot.lane.b32.xlu0 %v1051, 127
  %v1058 = vpop.permute.xlu0 %1057
  %1059 = vrot.lane.b32.xlu0 %v1052, 127
  %v1060 = vpop.permute.xlu0 %1059
  %1061 = vrot.lane.b32.xlu0 %v1053, 127
  %v1062 = vpop.permute.xlu0 %1061
  %v1063 = vsel %vm1044, %v1058, %v1060
  %v1064 = vsel %vm1044, %v1060, %v1062
  %1067 = vst [vmem:[#allocation3 + $0x1b0] sm:$0xff] %v1063
  %1068 = vst [vmem:[#allocation3 + $0x1b8] sm:$0xff] %v1064
  %v1069 = vld [vmem:[#allocation2 + $0x8] sm:$0xff]
  %v1070 = vld [vmem:[#allocation2 + $0x10] sm:$0xff]
  %v1071 = vld [vmem:[#allocation2 + $0x18] sm:$0xff]
  %v1072 = vld [vmem:[#allocation2 + $0x28] sm:$0xff]
  %v1073 = vld [vmem:[#allocation2 + $0x30] sm:$0xff]
  %v1074 = vld [vmem:[#allocation2 + $0x38] sm:$0xff]
  %v1075 = vld [vmem:[#allocation2 + $0x48] sm:$0xff]
  %v1076 = vld [vmem:[#allocation2 + $0x50] sm:$0xff]
  %v1077 = vld [vmem:[#allocation2 + $0x58] sm:$0xff]
  %v1078 = vld [vmem:[#allocation2 + $0x68] sm:$0xff]
  %v1079 = vld [vmem:[#allocation2 + $0x70] sm:$0xff]
  %v1080 = vld [vmem:[#allocation2 + $0x78] sm:$0xff]
  %s1081 = scalar_lea.vmem %s1, 22
  %v1082 = vld [vmem:[%s1081] ss:$8 sm:$0x3]
  %v1084 = vlaneseq
  %v1085 = vshrl.u32 %v1084, 7
  %v1086 = vsub.s32 0, %v1085
  %v1087 = vrot.slane %v1082, %v1086
  %v1088 = vlaneseq
  %v1089 = vshrl.u32 %v1088, 7
  %v1090 = vsub.s32 1, %v1089
  %v1091 = vrot.slane %v1082, %v1090
  %1092 = vrot.lane.b32.xlu0 %v1087, 2
  %v1093 = vpop.permute.xlu0 %1092
  %1094 = vrot.lane.b32.xlu0 %v1091, 2
  %v1095 = vpop.permute.xlu0 %1094
  %vm1096 = vcmask 15360
  %v1097 = vsel %vm1096, %v1093, %v1095
  %v1101 = vmul.f32 %v1069, %v1093
  %v1102 = vmul.f32 %v1070, %v1097
  %v1103 = vmul.f32 %v1071, %v1095
  %v1104 = vmul.f32 %v1072, %v1093
  %v1105 = vmul.f32 %v1073, %v1097
  %v1106 = vmul.f32 %v1074, %v1095
  %v1107 = vmul.f32 %v1075, %v1093
  %v1108 = vmul.f32 %v1076, %v1097
  %v1109 = vmul.f32 %v1077, %v1095
  %v1110 = vmul.f32 %v1078, %v1093
  %v1111 = vmul.f32 %v1079, %v1097
  %v1112 = vmul.f32 %v1080, %v1095
  %v1113 = vpack.c.bf16 %v1104, %v1101
  %v1114 = vpack.c.bf16 %v1105, %v1102
  %v1115 = vpack.c.bf16 %v1106, %v1103
  %1119 = vrot.lane.b32.xlu0 %v1113, 126
  %v1120 = vpop.permute.xlu0 %1119
  %1121 = vrot.lane.b32.xlu0 %v1114, 126
  %v1122 = vpop.permute.xlu0 %1121
  %1123 = vrot.lane.b32.xlu0 %v1115, 126
  %v1124 = vpop.permute.xlu0 %1123
  %vm1125 = vcmask 1031168
  %v1126 = vsel %vm1125, %v1120, %v1122
  %v1127 = vsel %vm1125, %v1122, %v1124
  %1130 = vst [vmem:[#allocation3 + $0x1c0] sm:$0xff] %v1126
  %1131 = vst [vmem:[#allocation3 + $0x1c8] sm:$0xff] %v1127
  %v1132 = vpack.c.bf16 %v1110, %v1107
  %v1133 = vpack.c.bf16 %v1111, %v1108
  %v1134 = vpack.c.bf16 %v1112, %v1109
  %1138 = vrot.lane.b32.xlu0 %v1132, 126
  %v1139 = vpop.permute.xlu0 %1138
  %1140 = vrot.lane.b32.xlu0 %v1133, 126
  %v1141 = vpop.permute.xlu0 %1140
  %1142 = vrot.lane.b32.xlu0 %v1134, 126
  %v1143 = vpop.permute.xlu0 %1142
  %v1144 = vsel %vm1125, %v1139, %v1141
  %v1145 = vsel %vm1125, %v1141, %v1143
  %1148 = vst [vmem:[#allocation3 + $0x1d0] sm:$0xff] %v1144
  %1149 = vst [vmem:[#allocation3 + $0x1d8] sm:$0xff] %v1145
  %v1150 = vld [vmem:[#allocation2 + $0x8] sm:$0xff]
  %v1151 = vld [vmem:[#allocation2 + $0x10] sm:$0xff]
  %v1152 = vld [vmem:[#allocation2 + $0x18] sm:$0xff]
  %v1153 = vld [vmem:[#allocation2 + $0x28] sm:$0xff]
  %v1154 = vld [vmem:[#allocation2 + $0x30] sm:$0xff]
  %v1155 = vld [vmem:[#allocation2 + $0x38] sm:$0xff]
  %v1156 = vld [vmem:[#allocation2 + $0x48] sm:$0xff]
  %v1157 = vld [vmem:[#allocation2 + $0x50] sm:$0xff]
  %v1158 = vld [vmem:[#allocation2 + $0x58] sm:$0xff]
  %v1159 = vld [vmem:[#allocation2 + $0x68] sm:$0xff]
  %v1160 = vld [vmem:[#allocation2 + $0x70] sm:$0xff]
  %v1161 = vld [vmem:[#allocation2 + $0x78] sm:$0xff]
  %s1162 = scalar_lea.vmem %s1, 23
  %v1163 = vld [vmem:[%s1162] ss:$8 sm:$0x3]
  %v1165 = vlaneseq
  %v1166 = vshrl.u32 %v1165, 7
  %v1167 = vsub.s32 0, %v1166
  %v1168 = vrot.slane %v1163, %v1167
  %v1169 = vlaneseq
  %v1170 = vshrl.u32 %v1169, 7
  %v1171 = vsub.s32 1, %v1170
  %v1172 = vrot.slane %v1163, %v1171
  %1173 = vrot.lane.b32.xlu0 %v1168, 14
  %v1174 = vpop.permute.xlu0 %1173
  %1175 = vrot.lane.b32.xlu0 %v1172, 14
  %v1176 = vpop.permute.xlu0 %1175
  %vm1177 = vcmask 113664
  %v1178 = vsel %vm1177, %v1174, %v1176
  %v1182 = vmul.f32 %v1150, %v1174
  %v1183 = vmul.f32 %v1151, %v1178
  %v1184 = vmul.f32 %v1152, %v1176
  %v1185 = vmul.f32 %v1153, %v1174
  %v1186 = vmul.f32 %v1154, %v1178
  %v1187 = vmul.f32 %v1155, %v1176
  %v1188 = vmul.f32 %v1156, %v1174
  %v1189 = vmul.f32 %v1157, %v1178
  %v1190 = vmul.f32 %v1158, %v1176
  %v1191 = vmul.f32 %v1159, %v1174
  %v1192 = vmul.f32 %v1160, %v1178
  %v1193 = vmul.f32 %v1161, %v1176
  %v1194 = vpack.c.bf16 %v1185, %v1182
  %v1195 = vpack.c.bf16 %v1186, %v1183
  %v1196 = vpack.c.bf16 %v1187, %v1184
  %1200 = vrot.lane.b32.xlu0 %v1194, 114
  %v1201 = vpop.permute.xlu0 %1200
  %1202 = vrot.lane.b32.xlu0 %v1195, 114
  %v1203 = vpop.permute.xlu0 %1202
  %1204 = vrot.lane.b32.xlu0 %v1196, 114
  %v1205 = vpop.permute.xlu0 %1204
  %vm1206 = vcmask 932864
  %v1207 = vsel %vm1206, %v1201, %v1203
  %v1208 = vsel %vm1206, %v1203, %v1205
  %1211 = vst [vmem:[#allocation3 + $0x1e0] sm:$0xff] %v1207
  %1212 = vst [vmem:[#allocation3 + $0x1e8] sm:$0xff] %v1208
  %v1213 = vpack.c.bf16 %v1191, %v1188
  %v1214 = vpack.c.bf16 %v1192, %v1189
  %v1215 = vpack.c.bf16 %v1193, %v1190
  %1219 = vrot.lane.b32.xlu0 %v1213, 114
  %v1220 = vpop.permute.xlu0 %1219
  %1221 = vrot.lane.b32.xlu0 %v1214, 114
  %v1222 = vpop.permute.xlu0 %1221
  %1223 = vrot.lane.b32.xlu0 %v1215, 114
  %v1224 = vpop.permute.xlu0 %1223
  %v1225 = vsel %vm1206, %v1220, %v1222
  %v1226 = vsel %vm1206, %v1222, %v1224
  %1229 = vst [vmem:[#allocation3 + $0x1f0] sm:$0xff] %v1225
  %1230 = vst [vmem:[#allocation3 + $0x1f8] sm:$0xff] %v1226
  %v1231 = vld [vmem:[#allocation2 + $0x8] sm:$0xff]
  %v1232 = vld [vmem:[#allocation2 + $0x10] sm:$0xff]
  %v1233 = vld [vmem:[#allocation2 + $0x18] sm:$0xff]
  %v1234 = vld [vmem:[#allocation2 + $0x28] sm:$0xff]
  %v1235 = vld [vmem:[#allocation2 + $0x30] sm:$0xff]
  %v1236 = vld [vmem:[#allocation2 + $0x38] sm:$0xff]
  %v1237 = vld [vmem:[#allocation2 + $0x48] sm:$0xff]
  %v1238 = vld [vmem:[#allocation2 + $0x50] sm:$0xff]
  %v1239 = vld [vmem:[#allocation2 + $0x58] sm:$0xff]
  %v1240 = vld [vmem:[#allocation2 + $0x68] sm:$0xff]
  %v1241 = vld [vmem:[#allocation2 + $0x70] sm:$0xff]
  %v1242 = vld [vmem:[#allocation2 + $0x78] sm:$0xff]
  %s1243 = scalar_lea.vmem %s1, 32
  %v1244 = vld [vmem:[%s1243] ss:$8 sm:$0x3]
  %v1246 = vlaneseq
  %v1247 = vshrl.u32 %v1246, 7
  %v1248 = vsub.s32 0, %v1247
  %v1249 = vrot.slane %v1244, %v1248
  %v1250 = vlaneseq
  %v1251 = vshrl.u32 %v1250, 7
  %v1252 = vsub.s32 1, %v1251
  %v1253 = vrot.slane %v1244, %v1252
  %1254 = vrot.lane.b32.xlu0 %v1249, 15
  %v1255 = vpop.permute.xlu0 %1254
  %1256 = vrot.lane.b32.xlu0 %v1253, 15
  %v1257 = vpop.permute.xlu0 %1256
  %vm1258 = vcmask 121856
  %v1259 = vsel %vm1258, %v1255, %v1257
  %v1263 = vmul.f32 %v1231, %v1255
  %v1264 = vmul.f32 %v1232, %v1259
  %v1265 = vmul.f32 %v1233, %v1257
  %v1266 = vmul.f32 %v1234, %v1255
  %v1267 = vmul.f32 %v1235, %v1259
  %v1268 = vmul.f32 %v1236, %v1257
  %v1269 = vmul.f32 %v1237, %v1255
  %v1270 = vmul.f32 %v1238, %v1259
  %v1271 = vmul.f32 %v1239, %v1257
  %v1272 = vmul.f32 %v1240, %v1255
  %v1273 = vmul.f32 %v1241, %v1259
  %v1274 = vmul.f32 %v1242, %v1257
  %v1275 = vpack.c.bf16 %v1266, %v1263
  %v1276 = vpack.c.bf16 %v1267, %v1264
  %v1277 = vpack.c.bf16 %v1268, %v1265
  %1281 = vrot.lane.b32.xlu0 %v1275, 113
  %v1282 = vpop.permute.xlu0 %1281
  %1283 = vrot.lane.b32.xlu0 %v1276, 113
  %v1284 = vpop.permute.xlu0 %1283
  %1285 = vrot.lane.b32.xlu0 %v1277, 113
  %v1286 = vpop.permute.xlu0 %1285
  %vm1287 = vcmask 924672
  %v1288 = vsel %vm1287, %v1282, %v1284
  %v1289 = vsel %vm1287, %v1284, %v1286
  %1292 = vst [vmem:[#allocation3 + $0x200] sm:$0xff] %v1288
  %1293 = vst [vmem:[#allocation3 + $0x208] sm:$0xff] %v1289
  %v1294 = vpack.c.bf16 %v1272, %v1269
  %v1295 = vpack.c.bf16 %v1273, %v1270
  %v1296 = vpack.c.bf16 %v1274, %v1271
  %1300 = vrot.lane.b32.xlu0 %v1294, 113
  %v1301 = vpop.permute.xlu0 %1300
  %1302 = vrot.lane.b32.xlu0 %v1295, 113
  %v1303 = vpop.permute.xlu0 %1302
  %1304 = vrot.lane.b32.xlu0 %v1296, 113
  %v1305 = vpop.permute.xlu0 %1304
  %v1306 = vsel %vm1287, %v1301, %v1303
  %v1307 = vsel %vm1287, %v1303, %v1305
  %1310 = vst [vmem:[#allocation3 + $0x210] sm:$0xff] %v1306
  %1311 = vst [vmem:[#allocation3 + $0x218] sm:$0xff] %v1307
  %v1312 = vld [vmem:[#allocation2 + $0x8] sm:$0xff]
  %v1313 = vld [vmem:[#allocation2 + $0x10] sm:$0xff]
  %v1314 = vld [vmem:[#allocation2 + $0x18] sm:$0xff]
  %v1315 = vld [vmem:[#allocation2 + $0x28] sm:$0xff]
  %v1316 = vld [vmem:[#allocation2 + $0x30] sm:$0xff]
  %v1317 = vld [vmem:[#allocation2 + $0x38] sm:$0xff]
  %v1318 = vld [vmem:[#allocation2 + $0x48] sm:$0xff]
  %v1319 = vld [vmem:[#allocation2 + $0x50] sm:$0xff]
  %v1320 = vld [vmem:[#allocation2 + $0x58] sm:$0xff]
  %v1321 = vld [vmem:[#allocation2 + $0x68] sm:$0xff]
  %v1322 = vld [vmem:[#allocation2 + $0x70] sm:$0xff]
  %v1323 = vld [vmem:[#allocation2 + $0x78] sm:$0xff]
  %v1324 = vpack.c.bf16 %v1315, %v1312
  %v1325 = vpack.c.bf16 %v1316, %v1313
  %v1326 = vpack.c.bf16 %v1317, %v1314
  %1330 = vrot.lane.b32.xlu0 %v1324, 112
  %v1331 = vpop.permute.xlu0 %1330
  %1332 = vrot.lane.b32.xlu0 %v1325, 112
  %v1333 = vpop.permute.xlu0 %1332
  %1334 = vrot.lane.b32.xlu0 %v1326, 112
  %v1335 = vpop.permute.xlu0 %1334
  %vm1336 = vcmask 916480
  %v1337 = vsel %vm1336, %v1331, %v1333
  %v1338 = vsel %vm1336, %v1333, %v1335
  %1341 = vst [vmem:[#allocation3 + $0x220] sm:$0xff] %v1337
  %1342 = vst [vmem:[#allocation3 + $0x228] sm:$0xff] %v1338
  %v1343 = vpack.c.bf16 %v1321, %v1318
  %v1344 = vpack.c.bf16 %v1322, %v1319
  %v1345 = vpack.c.bf16 %v1323, %v1320
  %1349 = vrot.lane.b32.xlu0 %v1343, 112
  %v1350 = vpop.permute.xlu0 %1349
  %1351 = vrot.lane.b32.xlu0 %v1344, 112
  %v1352 = vpop.permute.xlu0 %1351
  %1353 = vrot.lane.b32.xlu0 %v1345, 112
  %v1354 = vpop.permute.xlu0 %1353
  %v1355 = vsel %vm1336, %v1350, %v1352
  %v1356 = vsel %vm1336, %v1352, %v1354
  %1359 = vst [vmem:[#allocation3 + $0x230] sm:$0xff] %v1355
  %1360 = vst [vmem:[#allocation3 + $0x238] sm:$0xff] %v1356
  %v1361 = vld [vmem:[#allocation2 + $0x8] sm:$0xff]
  %v1362 = vld [vmem:[#allocation2 + $0x10] sm:$0xff]
  %v1363 = vld [vmem:[#allocation2 + $0x18] sm:$0xff]
  %v1364 = vld [vmem:[#allocation2 + $0x28] sm:$0xff]
  %v1365 = vld [vmem:[#allocation2 + $0x30] sm:$0xff]
  %v1366 = vld [vmem:[#allocation2 + $0x38] sm:$0xff]
  %v1367 = vld [vmem:[#allocation2 + $0x48] sm:$0xff]
  %v1368 = vld [vmem:[#allocation2 + $0x50] sm:$0xff]
  %v1369 = vld [vmem:[#allocation2 + $0x58] sm:$0xff]
  %v1370 = vld [vmem:[#allocation2 + $0x68] sm:$0xff]
  %v1371 = vld [vmem:[#allocation2 + $0x70] sm:$0xff]
  %v1372 = vld [vmem:[#allocation2 + $0x78] sm:$0xff]
  %s1373 = scalar_lea.vmem %s1, 34
  %v1374 = vld [vmem:[%s1373] ss:$8 sm:$0x3]
  %v1376 = vlaneseq
  %v1377 = vshrl.u32 %v1376, 7
  %v1378 = vsub.s32 0, %v1377
  %v1379 = vrot.slane %v1374, %v1378
  %v1380 = vlaneseq
  %v1381 = vshrl.u32 %v1380, 7
  %v1382 = vsub.s32 1, %v1381
  %v1383 = vrot.slane %v1374, %v1382
  %1384 = vrot.lane.b32.xlu0 %v1379, 17
  %v1385 = vpop.permute.xlu0 %1384
  %1386 = vrot.lane.b32.xlu0 %v1383, 17
  %v1387 = vpop.permute.xlu0 %1386
  %vm1388 = vcmask 138240
  %v1389 = vsel %vm1388, %v1385, %v1387
  %v1393 = vmul.f32 %v1361, %v1385
  %v1394 = vmul.f32 %v1362, %v1389
  %v1395 = vmul.f32 %v1363, %v1387
  %v1396 = vmul.f32 %v1364, %v1385
  %v1397 = vmul.f32 %v1365, %v1389
  %v1398 = vmul.f32 %v1366, %v1387
  %v1399 = vmul.f32 %v1367, %v1385
  %v1400 = vmul.f32 %v1368, %v1389
  %v1401 = vmul.f32 %v1369, %v1387
  %v1402 = vmul.f32 %v1370, %v1385
  %v1403 = vmul.f32 %v1371, %v1389
  %v1404 = vmul.f32 %v1372, %v1387
  %v1405 = vpack.c.bf16 %v1396, %v1393
  %v1406 = vpack.c.bf16 %v1397, %v1394
  %v1407 = vpack.c.bf16 %v1398, %v1395
  %1411 = vrot.lane.b32.xlu0 %v1405, 111
  %v1412 = vpop.permute.xlu0 %1411
  %1413 = vrot.lane.b32.xlu0 %v1406, 111
  %v1414 = vpop.permute.xlu0 %1413
  %1415 = vrot.lane.b32.xlu0 %v1407, 111
  %v1416 = vpop.permute.xlu0 %1415
  %vm1417 = vcmask 908288
  %v1418 = vsel %vm1417, %v1412, %v1414
  %v1419 = vsel %vm1417, %v1414, %v1416
  %1422 = vst [vmem:[#allocation3 + $0x240] sm:$0xff] %v1418
  %1423 = vst [vmem:[#allocation3 + $0x248] sm:$0xff] %v1419
  %v1424 = vpack.c.bf16 %v1402, %v1399
  %v1425 = vpack.c.bf16 %v1403, %v1400
  %v1426 = vpack.c.bf16 %v1404, %v1401
  %1430 = vrot.lane.b32.xlu0 %v1424, 111
  %v1431 = vpop.permute.xlu0 %1430
  %1432 = vrot.lane.b32.xlu0 %v1425, 111
  %v1433 = vpop.permute.xlu0 %1432
  %1434 = vrot.lane.b32.xlu0 %v1426, 111
  %v1435 = vpop.permute.xlu0 %1434
  %v1436 = vsel %vm1417, %v1431, %v1433
  %v1437 = vsel %vm1417, %v1433, %v1435
  %1440 = vst [vmem:[#allocation3 + $0x250] sm:$0xff] %v1436
  %1441 = vst [vmem:[#allocation3 + $0x258] sm:$0xff] %v1437
  %v1442 = vld [vmem:[#allocation2 + $0x8] sm:$0xff]
  %v1443 = vld [vmem:[#allocation2 + $0x10] sm:$0xff]
  %v1444 = vld [vmem:[#allocation2 + $0x18] sm:$0xff]
  %v1445 = vld [vmem:[#allocation2 + $0x28] sm:$0xff]
  %v1446 = vld [vmem:[#allocation2 + $0x30] sm:$0xff]
  %v1447 = vld [vmem:[#allocation2 + $0x38] sm:$0xff]
  %v1448 = vld [vmem:[#allocation2 + $0x48] sm:$0xff]
  %v1449 = vld [vmem:[#allocation2 + $0x50] sm:$0xff]
  %v1450 = vld [vmem:[#allocation2 + $0x58] sm:$0xff]
  %v1451 = vld [vmem:[#allocation2 + $0x68] sm:$0xff]
  %v1452 = vld [vmem:[#allocation2 + $0x70] sm:$0xff]
  %v1453 = vld [vmem:[#allocation2 + $0x78] sm:$0xff]
  %s1454 = scalar_lea.vmem %s1, 35
  %v1455 = vld [vmem:[%s1454] ss:$8 sm:$0x3]
  %v1457 = vlaneseq
  %v1458 = vshrl.u32 %v1457, 7
  %v1459 = vsub.s32 0, %v1458
  %v1460 = vrot.slane %v1455, %v1459
  %v1461 = vlaneseq
  %v1462 = vshrl.u32 %v1461, 7
  %v1463 = vsub.s32 1, %v1462
  %v1464 = vrot.slane %v1455, %v1463
  %1465 = vrot.lane.b32.xlu0 %v1460, 18
  %v1466 = vpop.permute.xlu0 %1465
  %1467 = vrot.lane.b32.xlu0 %v1464, 18
  %v1468 = vpop.permute.xlu0 %1467
  %vm1469 = vcmask 146432
  %v1470 = vsel %vm1469, %v1466, %v1468
  %v1474 = vmul.f32 %v1442, %v1466
  %v1475 = vmul.f32 %v1443, %v1470
  %v1476 = vmul.f32 %v1444, %v1468
  %v1477 = vmul.f32 %v1445, %v1466
  %v1478 = vmul.f32 %v1446, %v1470
  %v1479 = vmul.f32 %v1447, %v1468
  %v1480 = vmul.f32 %v1448, %v1466
  %v1481 = vmul.f32 %v1449, %v1470
  %v1482 = vmul.f32 %v1450, %v1468
  %v1483 = vmul.f32 %v1451, %v1466
  %v1484 = vmul.f32 %v1452, %v1470
  %v1485 = vmul.f32 %v1453, %v1468
  %v1486 = vpack.c.bf16 %v1477, %v1474
  %v1487 = vpack.c.bf16 %v1478, %v1475
  %v1488 = vpack.c.bf16 %v1479, %v1476
  %1492 = vrot.lane.b32.xlu0 %v1486, 110
  %v1493 = vpop.permute.xlu0 %1492
  %1494 = vrot.lane.b32.xlu0 %v1487, 110
  %v1495 = vpop.permute.xlu0 %1494
  %1496 = vrot.lane.b32.xlu0 %v1488, 110
  %v1497 = vpop.permute.xlu0 %1496
  %vm1498 = vcmask 900096
  %v1499 = vsel %vm1498, %v1493, %v1495
  %v1500 = vsel %vm1498, %v1495, %v1497
  %1503 = vst [vmem:[#allocation3 + $0x260] sm:$0xff] %v1499
  %1504 = vst [vmem:[#allocation3 + $0x268] sm:$0xff] %v1500
  %v1505 = vpack.c.bf16 %v1483, %v1480
  %v1506 = vpack.c.bf16 %v1484, %v1481
  %v1507 = vpack.c.bf16 %v1485, %v1482
  %1511 = vrot.lane.b32.xlu0 %v1505, 110
  %v1512 = vpop.permute.xlu0 %1511
  %1513 = vrot.lane.b32.xlu0 %v1506, 110
  %v1514 = vpop.permute.xlu0 %1513
  %1515 = vrot.lane.b32.xlu0 %v1507, 110
  %v1516 = vpop.permute.xlu0 %1515
  %v1517 = vsel %vm1498, %v1512, %v1514
  %v1518 = vsel %vm1498, %v1514, %v1516
  %1521 = vst [vmem:[#allocation3 + $0x270] sm:$0xff] %v1517
  %1522 = vst [vmem:[#allocation3 + $0x278] sm:$0xff] %v1518
  %v1523 = vld [vmem:[#allocation2 + $0x8] sm:$0xff]
  %v1524 = vld [vmem:[#allocation2 + $0x10] sm:$0xff]
  %v1525 = vld [vmem:[#allocation2 + $0x18] sm:$0xff]
  %v1526 = vld [vmem:[#allocation2 + $0x28] sm:$0xff]
  %v1527 = vld [vmem:[#allocation2 + $0x30] sm:$0xff]
  %v1528 = vld [vmem:[#allocation2 + $0x38] sm:$0xff]
  %v1529 = vld [vmem:[#allocation2 + $0x48] sm:$0xff]
  %v1530 = vld [vmem:[#allocation2 + $0x50] sm:$0xff]
  %v1531 = vld [vmem:[#allocation2 + $0x58] sm:$0xff]
  %v1532 = vld [vmem:[#allocation2 + $0x68] sm:$0xff]
  %v1533 = vld [vmem:[#allocation2 + $0x70] sm:$0xff]
  %v1534 = vld [vmem:[#allocation2 + $0x78] sm:$0xff]
  %s1535 = scalar_lea.vmem %s1, 36
  %v1536 = vld [vmem:[%s1535] ss:$8 sm:$0x3]
  %v1538 = vlaneseq
  %v1539 = vshrl.u32 %v1538, 7
  %v1540 = vsub.s32 0, %v1539
  %v1541 = vrot.slane %v1536, %v1540
  %v1542 = vlaneseq
  %v1543 = vshrl.u32 %v1542, 7
  %v1544 = vsub.s32 1, %v1543
  %v1545 = vrot.slane %v1536, %v1544
  %1546 = vrot.lane.b32.xlu0 %v1541, 30
  %v1547 = vpop.permute.xlu0 %1546
  %1548 = vrot.lane.b32.xlu0 %v1545, 30
  %v1549 = vpop.permute.xlu0 %1548
  %vm1550 = vcmask 244736
  %v1551 = vsel %vm1550, %v1547, %v1549
  %v1555 = vmul.f32 %v1523, %v1547
  %v1556 = vmul.f32 %v1524, %v1551
  %v1557 = vmul.f32 %v1525, %v1549
  %v1558 = vmul.f32 %v1526, %v1547
  %v1559 = vmul.f32 %v1527, %v1551
  %v1560 = vmul.f32 %v1528, %v1549
  %v1561 = vmul.f32 %v1529, %v1547
  %v1562 = vmul.f32 %v1530, %v1551
  %v1563 = vmul.f32 %v1531, %v1549
  %v1564 = vmul.f32 %v1532, %v1547
  %v1565 = vmul.f32 %v1533, %v1551
  %v1566 = vmul.f32 %v1534, %v1549
  %v1567 = vpack.c.bf16 %v1558, %v1555
  %v1568 = vpack.c.bf16 %v1559, %v1556
  %v1569 = vpack.c.bf16 %v1560, %v1557
  %1573 = vrot.lane.b32.xlu0 %v1567, 98
  %v1574 = vpop.permute.xlu0 %1573
  %1575 = vrot.lane.b32.xlu0 %v1568, 98
  %v1576 = vpop.permute.xlu0 %1575
  %1577 = vrot.lane.b32.xlu0 %v1569, 98
  %v1578 = vpop.permute.xlu0 %1577
  %vm1579 = vcmask 801792
  %v1580 = vsel %vm1579, %v1574, %v1576
  %v1581 = vsel %vm1579, %v1576, %v1578
  %1584 = vst [vmem:[#allocation3 + $0x280] sm:$0xff] %v1580
  %1585 = vst [vmem:[#allocation3 + $0x288] sm:$0xff] %v1581
  %v1586 = vpack.c.bf16 %v1564, %v1561
  %v1587 = vpack.c.bf16 %v1565, %v1562
  %v1588 = vpack.c.bf16 %v1566, %v1563
  %1592 = vrot.lane.b32.xlu0 %v1586, 98
  %v1593 = vpop.permute.xlu0 %1592
  %1594 = vrot.lane.b32.xlu0 %v1587, 98
  %v1595 = vpop.permute.xlu0 %1594
  %1596 = vrot.lane.b32.xlu0 %v1588, 98
  %v1597 = vpop.permute.xlu0 %1596
  %v1598 = vsel %vm1579, %v1593, %v1595
  %v1599 = vsel %vm1579, %v1595, %v1597
  %1602 = vst [vmem:[#allocation3 + $0x290] sm:$0xff] %v1598
  %1603 = vst [vmem:[#allocation3 + $0x298] sm:$0xff] %v1599
  %v1604 = vld [vmem:[#allocation2 + $0x8] sm:$0xff]
  %v1605 = vld [vmem:[#allocation2 + $0x10] sm:$0xff]
  %v1606 = vld [vmem:[#allocation2 + $0x18] sm:$0xff]
  %v1607 = vld [vmem:[#allocation2 + $0x28] sm:$0xff]
  %v1608 = vld [vmem:[#allocation2 + $0x30] sm:$0xff]
  %v1609 = vld [vmem:[#allocation2 + $0x38] sm:$0xff]
  %v1610 = vld [vmem:[#allocation2 + $0x48] sm:$0xff]
  %v1611 = vld [vmem:[#allocation2 + $0x50] sm:$0xff]
  %v1612 = vld [vmem:[#allocation2 + $0x58] sm:$0xff]
  %v1613 = vld [vmem:[#allocation2 + $0x68] sm:$0xff]
  %v1614 = vld [vmem:[#allocation2 + $0x70] sm:$0xff]
  %v1615 = vld [vmem:[#allocation2 + $0x78] sm:$0xff]
  %s1616 = scalar_lea.vmem %s1, 37
  %v1617 = vld [vmem:[%s1616] ss:$8 sm:$0x3]
  %v1619 = vlaneseq
  %v1620 = vshrl.u32 %v1619, 7
  %v1621 = vsub.s32 0, %v1620
  %v1622 = vrot.slane %v1617, %v1621
  %v1623 = vlaneseq
  %v1624 = vshrl.u32 %v1623, 7
  %v1625 = vsub.s32 1, %v1624
  %v1626 = vrot.slane %v1617, %v1625
  %1627 = vrot.lane.b32.xlu0 %v1622, 31
  %v1628 = vpop.permute.xlu0 %1627
  %1629 = vrot.lane.b32.xlu0 %v1626, 31
  %v1630 = vpop.permute.xlu0 %1629
  %vm1631 = vcmask 252928
  %v1632 = vsel %vm1631, %v1628, %v1630
  %v1636 = vmul.f32 %v1604, %v1628
  %v1637 = vmul.f32 %v1605, %v1632
  %v1638 = vmul.f32 %v1606, %v1630
  %v1639 = vmul.f32 %v1607, %v1628
  %v1640 = vmul.f32 %v1608, %v1632
  %v1641 = vmul.f32 %v1609, %v1630
  %v1642 = vmul.f32 %v1610, %v1628
  %v1643 = vmul.f32 %v1611, %v1632
  %v1644 = vmul.f32 %v1612, %v1630
  %v1645 = vmul.f32 %v1613, %v1628
  %v1646 = vmul.f32 %v1614, %v1632
  %v1647 = vmul.f32 %v1615, %v1630
  %v1648 = vpack.c.bf16 %v1639, %v1636
  %v1649 = vpack.c.bf16 %v1640, %v1637
  %v1650 = vpack.c.bf16 %v1641, %v1638
  %1654 = vrot.lane.b32.xlu0 %v1648, 97
  %v1655 = vpop.permute.xlu0 %1654
  %1656 = vrot.lane.b32.xlu0 %v1649, 97
  %v1657 = vpop.permute.xlu0 %1656
  %1658 = vrot.lane.b32.xlu0 %v1650, 97
  %v1659 = vpop.permute.xlu0 %1658
  %vm1660 = vcmask 793600
  %v1661 = vsel %vm1660, %v1655, %v1657
  %v1662 = vsel %vm1660, %v1657, %v1659
  %1665 = vst [vmem:[#allocation3 + $0x2a0] sm:$0xff] %v1661
  %1666 = vst [vmem:[#allocation3 + $0x2a8] sm:$0xff] %v1662
  %v1667 = vpack.c.bf16 %v1645, %v1642
  %v1668 = vpack.c.bf16 %v1646, %v1643
  %v1669 = vpack.c.bf16 %v1647, %v1644
  %1673 = vrot.lane.b32.xlu0 %v1667, 97
  %v1674 = vpop.permute.xlu0 %1673
  %1675 = vrot.lane.b32.xlu0 %v1668, 97
  %v1676 = vpop.permute.xlu0 %1675
  %1677 = vrot.lane.b32.xlu0 %v1669, 97
  %v1678 = vpop.permute.xlu0 %1677
  %v1679 = vsel %vm1660, %v1674, %v1676
  %v1680 = vsel %vm1660, %v1676, %v1678
  %1683 = vst [vmem:[#allocation3 + $0x2b0] sm:$0xff] %v1679
  %1684 = vst [vmem:[#allocation3 + $0x2b8] sm:$0xff] %v1680
  %v1685 = vld [vmem:[#allocation2 + $0x8] sm:$0xff]
  %v1686 = vld [vmem:[#allocation2 + $0x10] sm:$0xff]
  %v1687 = vld [vmem:[#allocation2 + $0x18] sm:$0xff]
  %v1688 = vld [vmem:[#allocation2 + $0x28] sm:$0xff]
  %v1689 = vld [vmem:[#allocation2 + $0x30] sm:$0xff]
  %v1690 = vld [vmem:[#allocation2 + $0x38] sm:$0xff]
  %v1691 = vld [vmem:[#allocation2 + $0x48] sm:$0xff]
  %v1692 = vld [vmem:[#allocation2 + $0x50] sm:$0xff]
  %v1693 = vld [vmem:[#allocation2 + $0x58] sm:$0xff]
  %v1694 = vld [vmem:[#allocation2 + $0x68] sm:$0xff]
  %v1695 = vld [vmem:[#allocation2 + $0x70] sm:$0xff]
  %v1696 = vld [vmem:[#allocation2 + $0x78] sm:$0xff]
  %v1697 = vpack.c.bf16 %v1688, %v1685
  %v1698 = vpack.c.bf16 %v1689, %v1686
  %v1699 = vpack.c.bf16 %v1690, %v1687
  %1703 = vrot.lane.b32.xlu0 %v1697, 96
  %v1704 = vpop.permute.xlu0 %1703
  %1705 = vrot.lane.b32.xlu0 %v1698, 96
  %v1706 = vpop.permute.xlu0 %1705
  %1707 = vrot.lane.b32.xlu0 %v1699, 96
  %v1708 = vpop.permute.xlu0 %1707
  %vm1709 = vcmask 785408
  %v1710 = vsel %vm1709, %v1704, %v1706
  %v1711 = vsel %vm1709, %v1706, %v1708
  %1714 = vst [vmem:[#allocation3 + $0x2c0] sm:$0xff] %v1710
  %1715 = vst [vmem:[#allocation3 + $0x2c8] sm:$0xff] %v1711
  %v1716 = vpack.c.bf16 %v1694, %v1691
  %v1717 = vpack.c.bf16 %v1695, %v1692
  %v1718 = vpack.c.bf16 %v1696, %v1693
  %1722 = vrot.lane.b32.xlu0 %v1716, 96
  %v1723 = vpop.permute.xlu0 %1722
  %1724 = vrot.lane.b32.xlu0 %v1717, 96
  %v1725 = vpop.permute.xlu0 %1724
  %1726 = vrot.lane.b32.xlu0 %v1718, 96
  %v1727 = vpop.permute.xlu0 %1726
  %v1728 = vsel %vm1709, %v1723, %v1725
  %v1729 = vsel %vm1709, %v1725, %v1727
  %1732 = vst [vmem:[#allocation3 + $0x2d0] sm:$0xff] %v1728
  %1733 = vst [vmem:[#allocation3 + $0x2d8] sm:$0xff] %v1729
  %v1734 = vld [vmem:[#allocation2 + $0x8] sm:$0xff]
  %v1735 = vld [vmem:[#allocation2 + $0x10] sm:$0xff]
  %v1736 = vld [vmem:[#allocation2 + $0x18] sm:$0xff]
  %v1737 = vld [vmem:[#allocation2 + $0x28] sm:$0xff]
  %v1738 = vld [vmem:[#allocation2 + $0x30] sm:$0xff]
  %v1739 = vld [vmem:[#allocation2 + $0x38] sm:$0xff]
  %v1740 = vld [vmem:[#allocation2 + $0x48] sm:$0xff]
  %v1741 = vld [vmem:[#allocation2 + $0x50] sm:$0xff]
  %v1742 = vld [vmem:[#allocation2 + $0x58] sm:$0xff]
  %v1743 = vld [vmem:[#allocation2 + $0x68] sm:$0xff]
  %v1744 = vld [vmem:[#allocation2 + $0x70] sm:$0xff]
  %v1745 = vld [vmem:[#allocation2 + $0x78] sm:$0xff]
  %s1746 = scalar_lea.vmem %s1, 39
  %v1747 = vld [vmem:[%s1746] ss:$8 sm:$0x3]
  %v1749 = vlaneseq
  %v1750 = vshrl.u32 %v1749, 7
  %v1751 = vsub.s32 0, %v1750
  %v1752 = vrot.slane %v1747, %v1751
  %v1753 = vlaneseq
  %v1754 = vshrl.u32 %v1753, 7
  %v1755 = vsub.s32 1, %v1754
  %v1756 = vrot.slane %v1747, %v1755
  %1757 = vrot.lane.b32.xlu0 %v1752, 33
  %v1758 = vpop.permute.xlu0 %1757
  %1759 = vrot.lane.b32.xlu0 %v1756, 33
  %v1760 = vpop.permute.xlu0 %1759
  %vm1761 = vcmask 269312
  %v1762 = vsel %vm1761, %v1758, %v1760
  %v1766 = vmul.f32 %v1734, %v1758
  %v1767 = vmul.f32 %v1735, %v1762
  %v1768 = vmul.f32 %v1736, %v1760
  %v1769 = vmul.f32 %v1737, %v1758
  %v1770 = vmul.f32 %v1738, %v1762
  %v1771 = vmul.f32 %v1739, %v1760
  %v1772 = vmul.f32 %v1740, %v1758
  %v1773 = vmul.f32 %v1741, %v1762
  %v1774 = vmul.f32 %v1742, %v1760
  %v1775 = vmul.f32 %v1743, %v1758
  %v1776 = vmul.f32 %v1744, %v1762
  %v1777 = vmul.f32 %v1745, %v1760
  %v1778 = vpack.c.bf16 %v1769, %v1766
  %v1779 = vpack.c.bf16 %v1770, %v1767
  %v1780 = vpack.c.bf16 %v1771, %v1768
  %1784 = vrot.lane.b32.xlu0 %v1778, 95
  %v1785 = vpop.permute.xlu0 %1784
  %1786 = vrot.lane.b32.xlu0 %v1779, 95
  %v1787 = vpop.permute.xlu0 %1786
  %1788 = vrot.lane.b32.xlu0 %v1780, 95
  %v1789 = vpop.permute.xlu0 %1788
  %vm1790 = vcmask 777216
  %v1791 = vsel %vm1790, %v1785, %v1787
  %v1792 = vsel %vm1790, %v1787, %v1789
  %1795 = vst [vmem:[#allocation3 + $0x2e0] sm:$0xff] %v1791
  %1796 = vst [vmem:[#allocation3 + $0x2e8] sm:$0xff] %v1792
  %v1797 = vpack.c.bf16 %v1775, %v1772
  %v1798 = vpack.c.bf16 %v1776, %v1773
  %v1799 = vpack.c.bf16 %v1777, %v1774
  %1803 = vrot.lane.b32.xlu0 %v1797, 95
  %v1804 = vpop.permute.xlu0 %1803
  %1805 = vrot.lane.b32.xlu0 %v1798, 95
  %v1806 = vpop.permute.xlu0 %1805
  %1807 = vrot.lane.b32.xlu0 %v1799, 95
  %v1808 = vpop.permute.xlu0 %1807
  %v1809 = vsel %vm1790, %v1804, %v1806
  %v1810 = vsel %vm1790, %v1806, %v1808
  %1813 = vst [vmem:[#allocation3 + $0x2f0] sm:$0xff] %v1809
  %1814 = vst [vmem:[#allocation3 + $0x2f8] sm:$0xff] %v1810
  %v1815 = vld [vmem:[#allocation2 + $0x8] sm:$0xff]
  %v1816 = vld [vmem:[#allocation2 + $0x10] sm:$0xff]
  %v1817 = vld [vmem:[#allocation2 + $0x18] sm:$0xff]
  %v1818 = vld [vmem:[#allocation2 + $0x28] sm:$0xff]
  %v1819 = vld [vmem:[#allocation2 + $0x30] sm:$0xff]
  %v1820 = vld [vmem:[#allocation2 + $0x38] sm:$0xff]
  %v1821 = vld [vmem:[#allocation2 + $0x48] sm:$0xff]
  %v1822 = vld [vmem:[#allocation2 + $0x50] sm:$0xff]
  %v1823 = vld [vmem:[#allocation2 + $0x58] sm:$0xff]
  %v1824 = vld [vmem:[#allocation2 + $0x68] sm:$0xff]
  %v1825 = vld [vmem:[#allocation2 + $0x70] sm:$0xff]
  %v1826 = vld [vmem:[#allocation2 + $0x78] sm:$0xff]
  %s1827 = scalar_lea.vmem %s1, 48
  %v1828 = vld [vmem:[%s1827] ss:$8 sm:$0x3]
  %v1830 = vlaneseq
  %v1831 = vshrl.u32 %v1830, 7
  %v1832 = vsub.s32 0, %v1831
  %v1833 = vrot.slane %v1828, %v1832
  %v1834 = vlaneseq
  %v1835 = vshrl.u32 %v1834, 7
  %v1836 = vsub.s32 1, %v1835
  %v1837 = vrot.slane %v1828, %v1836
  %1838 = vrot.lane.b32.xlu0 %v1833, 34
  %v1839 = vpop.permute.xlu0 %1838
  %1840 = vrot.lane.b32.xlu0 %v1837, 34
  %v1841 = vpop.permute.xlu0 %1840
  %vm1842 = vcmask 277504
  %v1843 = vsel %vm1842, %v1839, %v1841
  %v1847 = vmul.f32 %v1815, %v1839
  %v1848 = vmul.f32 %v1816, %v1843
  %v1849 = vmul.f32 %v1817, %v1841
  %v1850 = vmul.f32 %v1818, %v1839
  %v1851 = vmul.f32 %v1819, %v1843
  %v1852 = vmul.f32 %v1820, %v1841
  %v1853 = vmul.f32 %v1821, %v1839
  %v1854 = vmul.f32 %v1822, %v1843
  %v1855 = vmul.f32 %v1823, %v1841
  %v1856 = vmul.f32 %v1824, %v1839
  %v1857 = vmul.f32 %v1825, %v1843
  %v1858 = vmul.f32 %v1826, %v1841
  %v1859 = vpack.c.bf16 %v1850, %v1847
  %v1860 = vpack.c.bf16 %v1851, %v1848
  %v1861 = vpack.c.bf16 %v1852, %v1849
  %1865 = vrot.lane.b32.xlu0 %v1859, 94
  %v1866 = vpop.permute.xlu0 %1865
  %1867 = vrot.lane.b32.xlu0 %v1860, 94
  %v1868 = vpop.permute.xlu0 %1867
  %1869 = vrot.lane.b32.xlu0 %v1861, 94
  %v1870 = vpop.permute.xlu0 %1869
  %vm1871 = vcmask 769024
  %v1872 = vsel %vm1871, %v1866, %v1868
  %v1873 = vsel %vm1871, %v1868, %v1870
  %1876 = vst [vmem:[#allocation3 + $0x300] sm:$0xff] %v1872
  %1877 = vst [vmem:[#allocation3 + $0x308] sm:$0xff] %v1873
  %v1878 = vpack.c.bf16 %v1856, %v1853
  %v1879 = vpack.c.bf16 %v1857, %v1854
  %v1880 = vpack.c.bf16 %v1858, %v1855
  %1884 = vrot.lane.b32.xlu0 %v1878, 94
  %v1885 = vpop.permute.xlu0 %1884
  %1886 = vrot.lane.b32.xlu0 %v1879, 94
  %v1887 = vpop.permute.xlu0 %1886
  %1888 = vrot.lane.b32.xlu0 %v1880, 94
  %v1889 = vpop.permute.xlu0 %1888
  %v1890 = vsel %vm1871, %v1885, %v1887
  %v1891 = vsel %vm1871, %v1887, %v1889
  %1894 = vst [vmem:[#allocation3 + $0x310] sm:$0xff] %v1890
  %1895 = vst [vmem:[#allocation3 + $0x318] sm:$0xff] %v1891
  %v1896 = vld [vmem:[%s2] sm:$0xff]
  %v1897 = vld [vmem:[%s2 + $0x8] sm:$0xff]
  %v1898 = vld [vmem:[#allocation3] sm:$0xff]
  %v1899 = vld [vmem:[#allocation3 + $0x8] sm:$0xff]
  %v1900 = vld [vmem:[#allocation3 + $0x10] sm:$0xff]
  %v1901 = vld [vmem:[#allocation3 + $0x18] sm:$0xff]
  %v1902 = vld [vmem:[#allocation3 + $0x20] sm:$0xff]
  %v1903 = vld [vmem:[#allocation3 + $0x28] sm:$0xff]
  %v1904 = vld [vmem:[#allocation3 + $0x30] sm:$0xff]
  %v1905 = vld [vmem:[#allocation3 + $0x38] sm:$0xff]
  %v1906 = vld [vmem:[#allocation3 + $0x40] sm:$0xff]
  %v1907 = vld [vmem:[#allocation3 + $0x48] sm:$0xff]
  %v1908 = vld [vmem:[#allocation3 + $0x50] sm:$0xff]
  %v1909 = vld [vmem:[#allocation3 + $0x58] sm:$0xff]
  %v1910 = vld [vmem:[#allocation3 + $0x60] sm:$0xff]
  %v1911 = vld [vmem:[#allocation3 + $0x68] sm:$0xff]
  %v1912 = vld [vmem:[#allocation3 + $0x70] sm:$0xff]
  %v1913 = vld [vmem:[#allocation3 + $0x78] sm:$0xff]
  %v1914 = vld [vmem:[#allocation3 + $0x80] sm:$0xff]
  %v1915 = vld [vmem:[#allocation3 + $0x88] sm:$0xff]
  %v1916 = vld [vmem:[#allocation3 + $0x90] sm:$0xff]
  %v1917 = vld [vmem:[#allocation3 + $0x98] sm:$0xff]
  %v1918 = vld [vmem:[#allocation3 + $0xa0] sm:$0xff]
  %v1919 = vld [vmem:[#allocation3 + $0xa8] sm:$0xff]
  %v1920 = vld [vmem:[#allocation3 + $0xb0] sm:$0xff]
  %v1921 = vld [vmem:[#allocation3 + $0xb8] sm:$0xff]
  %v1922 = vld [vmem:[#allocation3 + $0xc0] sm:$0xff]
  %v1923 = vld [vmem:[#allocation3 + $0xc8] sm:$0xff]
  %v1924 = vld [vmem:[#allocation3 + $0xd0] sm:$0xff]
  %v1925 = vld [vmem:[#allocation3 + $0xd8] sm:$0xff]
  %v1926 = vld [vmem:[#allocation3 + $0xe0] sm:$0xff]
  %v1927 = vld [vmem:[#allocation3 + $0xe8] sm:$0xff]
  %v1928 = vld [vmem:[#allocation3 + $0xf0] sm:$0xff]
  %v1929 = vld [vmem:[#allocation3 + $0xf8] sm:$0xff]
  %v1930 = vld [vmem:[#allocation3 + $0x100] sm:$0xff]
  %v1931 = vld [vmem:[#allocation3 + $0x108] sm:$0xff]
  %v1932 = vld [vmem:[#allocation3 + $0x110] sm:$0xff]
  %v1933 = vld [vmem:[#allocation3 + $0x118] sm:$0xff]
  %v1934 = vld [vmem:[#allocation3 + $0x120] sm:$0xff]
  %v1935 = vld [vmem:[#allocation3 + $0x128] sm:$0xff]
  %v1936 = vld [vmem:[#allocation3 + $0x130] sm:$0xff]
  %v1937 = vld [vmem:[#allocation3 + $0x138] sm:$0xff]
  %v1938 = vld [vmem:[#allocation3 + $0x140] sm:$0xff]
  %v1939 = vld [vmem:[#allocation3 + $0x148] sm:$0xff]
  %v1940 = vld [vmem:[#allocation3 + $0x150] sm:$0xff]
  %v1941 = vld [vmem:[#allocation3 + $0x158] sm:$0xff]
  %v1942 = vld [vmem:[#allocation3 + $0x160] sm:$0xff]
  %v1943 = vld [vmem:[#allocation3 + $0x168] sm:$0xff]
  %v1944 = vld [vmem:[#allocation3 + $0x170] sm:$0xff]
  %v1945 = vld [vmem:[#allocation3 + $0x178] sm:$0xff]
  %v1946 = vld [vmem:[#allocation3 + $0x180] sm:$0xff]
  %v1947 = vld [vmem:[#allocation3 + $0x188] sm:$0xff]
  %v1948 = vld [vmem:[#allocation3 + $0x190] sm:$0xff]
  %v1949 = vld [vmem:[#allocation3 + $0x198] sm:$0xff]
  %v1950 = vld [vmem:[#allocation3 + $0x1a0] sm:$0xff]
  %v1951 = vld [vmem:[#allocation3 + $0x1a8] sm:$0xff]
  %v1952 = vld [vmem:[#allocation3 + $0x1b0] sm:$0xff]
  %v1953 = vld [vmem:[#allocation3 + $0x1b8] sm:$0xff]
  %v1954 = vld [vmem:[#allocation3 + $0x1c0] sm:$0xff]
  %v1955 = vld [vmem:[#allocation3 + $0x1c8] sm:$0xff]
  %v1956 = vld [vmem:[#allocation3 + $0x1d0] sm:$0xff]
  %v1957 = vld [vmem:[#allocation3 + $0x1d8] sm:$0xff]
  %v1958 = vld [vmem:[#allocation3 + $0x1e0] sm:$0xff]
  %v1959 = vld [vmem:[#allocation3 + $0x1e8] sm:$0xff]
  %v1960 = vld [vmem:[#allocation3 + $0x1f0] sm:$0xff]
  %v1961 = vld [vmem:[#allocation3 + $0x1f8] sm:$0xff]
  %v1962 = vld [vmem:[#allocation3 + $0x200] sm:$0xff]
  %v1963 = vld [vmem:[#allocation3 + $0x208] sm:$0xff]
  %v1964 = vld [vmem:[#allocation3 + $0x210] sm:$0xff]
  %v1965 = vld [vmem:[#allocation3 + $0x218] sm:$0xff]
  %v1966 = vld [vmem:[#allocation3 + $0x220] sm:$0xff]
  %v1967 = vld [vmem:[#allocation3 + $0x228] sm:$0xff]
  %v1968 = vld [vmem:[#allocation3 + $0x230] sm:$0xff]
  %v1969 = vld [vmem:[#allocation3 + $0x238] sm:$0xff]
  %v1970 = vld [vmem:[#allocation3 + $0x240] sm:$0xff]
  %v1971 = vld [vmem:[#allocation3 + $0x248] sm:$0xff]
  %v1972 = vld [vmem:[#allocation3 + $0x250] sm:$0xff]
  %v1973 = vld [vmem:[#allocation3 + $0x258] sm:$0xff]
  %v1974 = vld [vmem:[#allocation3 + $0x260] sm:$0xff]
  %v1975 = vld [vmem:[#allocation3 + $0x268] sm:$0xff]
  %v1976 = vld [vmem:[#allocation3 + $0x270] sm:$0xff]
  %v1977 = vld [vmem:[#allocation3 + $0x278] sm:$0xff]
  %v1978 = vld [vmem:[#allocation3 + $0x280] sm:$0xff]
  %v1979 = vld [vmem:[#allocation3 + $0x288] sm:$0xff]
  %v1980 = vld [vmem:[#allocation3 + $0x290] sm:$0xff]
  %v1981 = vld [vmem:[#allocation3 + $0x298] sm:$0xff]
  %v1982 = vld [vmem:[#allocation3 + $0x2a0] sm:$0xff]
  %v1983 = vld [vmem:[#allocation3 + $0x2a8] sm:$0xff]
  %v1984 = vld [vmem:[#allocation3 + $0x2b0] sm:$0xff]
  %v1985 = vld [vmem:[#allocation3 + $0x2b8] sm:$0xff]
  %v1986 = vld [vmem:[#allocation3 + $0x2c0] sm:$0xff]
  %v1987 = vld [vmem:[#allocation3 + $0x2c8] sm:$0xff]
  %v1988 = vld [vmem:[#allocation3 + $0x2d0] sm:$0xff]
  %v1989 = vld [vmem:[#allocation3 + $0x2d8] sm:$0xff]
  %v1990 = vld [vmem:[#allocation3 + $0x2e0] sm:$0xff]
  %v1991 = vld [vmem:[#allocation3 + $0x2e8] sm:$0xff]
  %v1992 = vld [vmem:[#allocation3 + $0x2f0] sm:$0xff]
  %v1993 = vld [vmem:[#allocation3 + $0x2f8] sm:$0xff]
  %v1994 = vld [vmem:[#allocation3 + $0x300] sm:$0xff]
  %v1995 = vld [vmem:[#allocation3 + $0x308] sm:$0xff]
  %v1996 = vld [vmem:[#allocation3 + $0x310] sm:$0xff]
  %v1997 = vld [vmem:[#allocation3 + $0x318] sm:$0xff]
  %v2000 = vunpack.c.l.b16 %v1896
  %v2001 = vunpack.c.h.b16 %v1896
  %v2002 = vunpack.c.l.b16 %v1897
  %v2003 = vunpack.c.h.b16 %v1897
  %v2004 = vpack.c.b16 %v2000, %v2000
  %v2005 = vpack.c.b16 %v2001, %v2001
  %v2006 = vpack.c.b16 %v2002, %v2002
  %v2007 = vpack.c.b16 %v2003, %v2003
  %vm2011 = vcmask 130048
  %v2013 = vsel %vm2011, %v2007, 0
  %2015 = vmatprep.subr.bf16.mxu0 %v1899
  %2016 = vmatpush1.bf16.msra.mxu0 %v1898
  %2017 = vmatprep.subr.bf16.mxu0 %v1903
  %2018 = vmatpush1.bf16.msra.mxu0 %v1902
  %2019 = vmatprep.subr.bf16.mxu0 %v1907
  %2020 = vmatpush1.bf16.msra.mxu0 %v1906
  %2021 = vmatprep.subr.bf16.mxu0 %v1911
  %2022 = vmatpush1.bf16.msra.mxu0 %v1910
  %2023 = vmatprep.subr.bf16.mxu0 %v1915
  %2024 = vmatpush1.bf16.msra.mxu0 %v1914
  %2025 = vmatprep.subr.bf16.mxu0 %v1919
  %2026 = vmatpush1.bf16.msra.mxu0 %v1918
  %2027 = vmatprep.subr.bf16.mxu0 %v1923
  %2028 = vmatpush1.bf16.msra.mxu0 %v1922
  %2029 = vmatprep.subr.bf16.mxu0 %v1927
  %2030 = vmatpush1.bf16.msra.mxu0 %v1926
  %2031 = vmatprep.subr.bf16.mxu0 %v1931
  %2032 = vmatpush1.bf16.msra.mxu0 %v1930
  %2033 = vmatprep.subr.bf16.mxu0 %v1935
  %2034 = vmatpush1.bf16.msra.mxu0 %v1934
  %2035 = vmatprep.subr.bf16.mxu0 %v1939
  %2036 = vmatpush1.bf16.msra.mxu0 %v1938
  %2037 = vmatprep.subr.bf16.mxu0 %v1943
  %2038 = vmatpush1.bf16.msra.mxu0 %v1942
  %2039 = vmatprep.subr.bf16.mxu0 %v1947
  %2040 = vmatpush1.bf16.msra.mxu0 %v1946
  %2041 = vmatprep.subr.bf16.mxu0 %v1951
  %2042 = vmatpush1.bf16.msra.mxu0 %v1950
  %2043 = vmatprep.subr.bf16.mxu0 %v1955
  %2044 = vmatpush1.bf16.msra.mxu0 %v1954
  %2045 = vmatprep.subr.bf16.mxu0 %v1959
  %2046 = vmatpush1.bf16.msra.mxu0 %v1958
  %2047 = vmatprep.mubr.bf16.mxu0 %v2005
  %2048 = vmatmul.mubr.bf16.gmra.mrb[0].mxu0 %v2004
  %v2049 = vpop.f32.mrb[0].mxu0
  %v2050 = vadd.f32 0.0, %v2049
  %v2051 = vpop.f32.mrb[0].mxu0
  %v2052 = vadd.f32 0.0, %v2051
  %v2053 = vpop.f32.mrb[0].mxu0
  %v2054 = vpop.f32.mrb[0].mxu0
  %2055 = vdwg.mxu0
  %2056 = vmatprep.subr.bf16.mxu0 %v1963
  %2057 = vmatpush1.bf16.msra.mxu0 %v1962
  %2058 = vmatprep.subr.bf16.mxu0 %v1967
  %2059 = vmatpush1.bf16.msra.mxu0 %v1966
  %2060 = vmatprep.subr.bf16.mxu0 %v1971
  %2061 = vmatpush1.bf16.msra.mxu0 %v1970
  %2062 = vmatprep.subr.bf16.mxu0 %v1975
  %2063 = vmatpush1.bf16.msra.mxu0 %v1974
  %2064 = vmatprep.subr.bf16.mxu0 %v1979
  %2065 = vmatpush1.bf16.msra.mxu0 %v1978
  %2066 = vmatprep.subr.bf16.mxu0 %v1983
  %2067 = vmatpush1.bf16.msra.mxu0 %v1982
  %2068 = vmatprep.subr.bf16.mxu0 %v1987
  %2069 = vmatpush1.bf16.msra.mxu0 %v1986
  %2070 = vmatprep.subr.bf16.mxu0 %v1991
  %2071 = vmatpush1.bf16.msra.mxu0 %v1990
  %2072 = vmatprep.subr.bf16.mxu0 %v1995
  %2073 = vmatpush1.bf16.msra.mxu0 %v1994
  %2074 = vmatprep.subr.bf16.mxu0 0
  %2075 = vmatpush1.bf16.msra.mxu0 0
  %2076 = vmatprep.subr.bf16.mxu0 0
  %2077 = vmatpush1.bf16.msra.mxu0 0
  %2078 = vmatprep.subr.bf16.mxu0 0
  %2079 = vmatpush1.bf16.msra.mxu0 0
  %2080 = vmatprep.subr.bf16.mxu0 0
  %2081 = vmatpush1.bf16.msra.mxu0 0
  %2082 = vmatprep.subr.bf16.mxu0 0
  %2083 = vmatpush1.bf16.msra.mxu0 0
  %2084 = vmatprep.subr.bf16.mxu0 0
  %2085 = vmatpush1.bf16.msra.mxu0 0
  %2086 = vmatprep.subr.bf16.mxu0 0
  %2087 = vmatpush1.bf16.msra.mxu0 0
  %2088 = vmatprep.mubr.bf16.mxu0 %v2013
  %2089 = vmatmul.mubr.bf16.gmra.mrb[0].mxu0 %v2006
  %v2090 = vpop.f32.mrb[0].mxu0
  %v2091 = vadd.f32 %v2050, %v2090
  %v2092 = vpop.f32.mrb[0].mxu0
  %v2093 = vadd.f32 %v2052, %v2092
  %v2094 = vpop.f32.mrb[0].mxu0
  %v2095 = vpop.f32.mrb[0].mxu0
  %2096 = vdwg.mxu0
  %2097 = vmatprep.subr.bf16.mxu0 %v1901
  %2098 = vmatpush1.bf16.msra.mxu0 %v1900
  %2099 = vmatprep.subr.bf16.mxu0 %v1905
  %2100 = vmatpush1.bf16.msra.mxu0 %v1904
  %2101 = vmatprep.subr.bf16.mxu0 %v1909
  %2102 = vmatpush1.bf16.msra.mxu0 %v1908
  %2103 = vmatprep.subr.bf16.mxu0 %v1913
  %2104 = vmatpush1.bf16.msra.mxu0 %v1912
  %2105 = vmatprep.subr.bf16.mxu0 %v1917
  %2106 = vmatpush1.bf16.msra.mxu0 %v1916
  %2107 = vmatprep.subr.bf16.mxu0 %v1921
  %2108 = vmatpush1.bf16.msra.mxu0 %v1920
  %2109 = vmatprep.subr.bf16.mxu0 %v1925
  %2110 = vmatpush1.bf16.msra.mxu0 %v1924
  %2111 = vmatprep.subr.bf16.mxu0 %v1929
  %2112 = vmatpush1.bf16.msra.mxu0 %v1928
  %2113 = vmatprep.subr.bf16.mxu0 %v1933
  %2114 = vmatpush1.bf16.msra.mxu0 %v1932
  %2115 = vmatprep.subr.bf16.mxu0 %v1937
  %2116 = vmatpush1.bf16.msra.mxu0 %v1936
  %2117 = vmatprep.subr.bf16.mxu0 %v1941
  %2118 = vmatpush1.bf16.msra.mxu0 %v1940
  %2119 = vmatprep.subr.bf16.mxu0 %v1945
  %2120 = vmatpush1.bf16.msra.mxu0 %v1944
  %2121 = vmatprep.subr.bf16.mxu0 %v1949
  %2122 = vmatpush1.bf16.msra.mxu0 %v1948
  %2123 = vmatprep.subr.bf16.mxu0 %v1953
  %2124 = vmatpush1.bf16.msra.mxu0 %v1952
  %2125 = vmatprep.subr.bf16.mxu0 %v1957
  %2126 = vmatpush1.bf16.msra.mxu0 %v1956
  %2127 = vmatprep.subr.bf16.mxu0 %v1961
  %2128 = vmatpush1.bf16.msra.mxu0 %v1960
  %2129 = vmatprep.mubr.bf16.mxu0 %v2005
  %2130 = vmatmul.mubr.bf16.gmra.mrb[0].mxu0 %v2004
  %v2131 = vpop.f32.mrb[0].mxu0
  %v2132 = vadd.f32 0.0, %v2131
  %v2133 = vpop.f32.mrb[0].mxu0
  %v2134 = vadd.f32 0.0, %v2133
  %v2135 = vpop.f32.mrb[0].mxu0
  %v2136 = vpop.f32.mrb[0].mxu0
  %2137 = vdwg.mxu0
  %2138 = vmatprep.subr.bf16.mxu0 %v1965
  %2139 = vmatpush1.bf16.msra.mxu0 %v1964
  %2140 = vmatprep.subr.bf16.mxu0 %v1969
  %2141 = vmatpush1.bf16.msra.mxu0 %v1968
  %2142 = vmatprep.subr.bf16.mxu0 %v1973
  %2143 = vmatpush1.bf16.msra.mxu0 %v1972
  %2144 = vmatprep.subr.bf16.mxu0 %v1977
  %2145 = vmatpush1.bf16.msra.mxu0 %v1976
  %2146 = vmatprep.subr.bf16.mxu0 %v1981
  %2147 = vmatpush1.bf16.msra.mxu0 %v1980
  %2148 = vmatprep.subr.bf16.mxu0 %v1985
  %2149 = vmatpush1.bf16.msra.mxu0 %v1984
  %2150 = vmatprep.subr.bf16.mxu0 %v1989
  %2151 = vmatpush1.bf16.msra.mxu0 %v1988
  %2152 = vmatprep.subr.bf16.mxu0 %v1993
  %2153 = vmatpush1.bf16.msra.mxu0 %v1992
  %2154 = vmatprep.subr.bf16.mxu0 %v1997
  %2155 = vmatpush1.bf16.msra.mxu0 %v1996
  %2156 = vmatprep.subr.bf16.mxu0 0
  %2157 = vmatpush1.bf16.msra.mxu0 0
  %2158 = vmatprep.subr.bf16.mxu0 0
  %2159 = vmatpush1.bf16.msra.mxu0 0
  %2160 = vmatprep.subr.bf16.mxu0 0
  %2161 = vmatpush1.bf16.msra.mxu0 0
  %2162 = vmatprep.subr.bf16.mxu0 0
  %2163 = vmatpush1.bf16.msra.mxu0 0
  %2164 = vmatprep.subr.bf16.mxu0 0
  %2165 = vmatpush1.bf16.msra.mxu0 0
  %2166 = vmatprep.subr.bf16.mxu0 0
  %2167 = vmatpush1.bf16.msra.mxu0 0
  %2168 = vmatprep.subr.bf16.mxu0 0
  %2169 = vmatpush1.bf16.msra.mxu0 0
  %2170 = vmatprep.mubr.bf16.mxu0 %v2013
  %2171 = vmatmul.mubr.bf16.gmra.mrb[0].mxu0 %v2006
  %v2172 = vpop.f32.mrb[0].mxu0
  %v2173 = vadd.f32 %v2132, %v2172
  %v2174 = vpop.f32.mrb[0].mxu0
  %v2175 = vadd.f32 %v2134, %v2174
  %v2176 = vpop.f32.mrb[0].mxu0
  %v2177 = vpop.f32.mrb[0].mxu0
  %2178 = vdwg.mxu0
  %v2179 = vadd.f32 %v2091, %v2093
  %2180 = vadd.xlane.f32.xlu0 %v2179
  %v2181 = vpop.xlane.xlu0 %2180
  %v2182 = vrcp.pop 256.0
  %v2183 = vmul.f32 %v2181, %v2182
  %v2184 = vsub.f32 %v2091, %v2183
  %v2185 = vsub.f32 %v2093, %v2183
  %v2186 = vmul.f32 %v2184, %v2184
  %v2187 = vmul.f32 %v2185, %v2185
  %v2188 = vadd.f32 %v2186, %v2187
  %2189 = vadd.xlane.f32.xlu0 %v2188
  %v2190 = vpop.xlane.xlu0 %2189
  %v2191 = vmul.f32 %v2190, %v2182
  %v2192 = vld [vmem:[%s3] sm:$0xff]
  %v2193 = vadd.f32 %v2191, 1e-05
  %v2194 = vrsqrt.pop %v2193
  %v2195 = vmul.f32 %v2192, %v2194
  %2197 = vset.pattern.permute.xlu0 0
  %2198 = vperm.xlu0 %2197, %v2195
  %v2199 = vpop.permute.xlu0 %2198
  %v2201 = vmul.f32 %v2184, %v2199
  %v2202 = vmul.f32 %v2185, %v2199
  %v2203 = vld [vmem:[%s4] sm:$0xff]
  %2205 = vset.pattern.permute.xlu0 0
  %2206 = vperm.xlu0 %2205, %v2203
  %v2207 = vpop.permute.xlu0 %2206
  %v2209 = vadd.f32 %v2201, %v2207
  %v2210 = vadd.f32 %v2202, %v2207
  %v2211 = vmin.f32 %v2209, 20.0
  %v2212 = vmin.f32 %v2210, 20.0
  %v2213 = vmul.f32 %v2211, 1.442695
  %v2214 = vpow.pop %v2213
  %v2215 = vmul.f32 %v2212, 1.442695
  %v2216 = vpow.pop %v2215
  %v2217 = vadd.f32 %v2214, 2.0
  %v2218 = vadd.f32 %v2216, 2.0
  %v2219 = vmul.f32 %v2214, %v2217
  %v2220 = vmul.f32 %v2216, %v2218
  %v2221 = vadd.f32 %v2219, 2.0
  %v2222 = vadd.f32 %v2220, 2.0
  %v2223 = vrcp.pop %v2221
  %v2224 = vmul.f32 %v2219, %v2223
  %v2225 = vrcp.pop %v2222
  %v2226 = vmul.f32 %v2220, %v2225
  %v2227 = vmul.f32 %v2209, %v2224
  %v2228 = vmul.f32 %v2210, %v2226
  %v2229 = vadd.f32 %v2173, %v2175
  %2230 = vadd.xlane.f32.xlu0 %v2229
  %v2231 = vpop.xlane.xlu0 %2230
  %v2232 = vmul.f32 %v2231, %v2182
  %v2233 = vsub.f32 %v2173, %v2232
  %v2234 = vsub.f32 %v2175, %v2232
  %v2235 = vmul.f32 %v2233, %v2233
  %v2236 = vmul.f32 %v2234, %v2234
  %v2237 = vadd.f32 %v2235, %v2236
  %2238 = vadd.xlane.f32.xlu0 %v2237
  %v2239 = vpop.xlane.xlu0 %2238
  %v2240 = vmul.f32 %v2239, %v2182
  %v2241 = vadd.f32 %v2240, 1e-05
  %v2242 = vrsqrt.pop %v2241
  %v2243 = vmul.f32 %v2192, %v2242
  %2245 = vset.pattern.permute.xlu0 0
  %2246 = vperm.xlu0 %2245, %v2243
  %v2247 = vpop.permute.xlu0 %2246
  %v2249 = vmul.f32 %v2233, %v2247
  %v2250 = vmul.f32 %v2234, %v2247
  %v2251 = vadd.f32 %v2249, %v2207
  %v2252 = vadd.f32 %v2250, %v2207
  %v2253 = vmin.f32 %v2251, 20.0
  %v2254 = vmin.f32 %v2252, 20.0
  %v2255 = vmul.f32 %v2253, 1.442695
  %v2256 = vpow.pop %v2255
  %v2257 = vmul.f32 %v2254, 1.442695
  %v2258 = vpow.pop %v2257
  %v2259 = vadd.f32 %v2256, 2.0
  %v2260 = vadd.f32 %v2258, 2.0
  %v2261 = vmul.f32 %v2256, %v2259
  %v2262 = vmul.f32 %v2258, %v2260
  %v2263 = vadd.f32 %v2261, 2.0
  %v2264 = vadd.f32 %v2262, 2.0
  %v2265 = vrcp.pop %v2263
  %v2266 = vmul.f32 %v2261, %v2265
  %v2267 = vrcp.pop %v2264
  %v2268 = vmul.f32 %v2262, %v2267
  %v2269 = vmul.f32 %v2251, %v2266
  %v2270 = vmul.f32 %v2252, %v2268
  %2271 = vst [vmem:[#allocation2 + $0x8] sm:$0xff] %v2227
  %2272 = vst [vmem:[#allocation2 + $0x10] sm:$0xff] %v2228
  %2273 = vst [vmem:[#allocation2 + $0x28] sm:$0xff] 0.0
  %2274 = vst [vmem:[#allocation2 + $0x30] sm:$0xff] 0.0
  %2275 = vst [vmem:[#allocation2 + $0x48] sm:$0xff] %v2269
  %2276 = vst [vmem:[#allocation2 + $0x50] sm:$0xff] %v2270
  %2277 = vst [vmem:[#allocation2 + $0x68] sm:$0xff] 0.0
  %2278 = vst [vmem:[#allocation2 + $0x70] sm:$0xff] 0.0
  %v2279 = vld [vmem:[#allocation2] sm:$0xff]
  %v2280 = vld [vmem:[#allocation2 + $0x8] sm:$0xff]
  %v2281 = vld [vmem:[#allocation2 + $0x10] sm:$0xff]
  %v2282 = vld [vmem:[#allocation2 + $0x20] sm:$0xff]
  %v2283 = vld [vmem:[#allocation2 + $0x28] sm:$0xff]
  %v2284 = vld [vmem:[#allocation2 + $0x30] sm:$0xff]
  %v2285 = vld [vmem:[#allocation2 + $0x40] sm:$0xff]
  %v2286 = vld [vmem:[#allocation2 + $0x48] sm:$0xff]
  %v2287 = vld [vmem:[#allocation2 + $0x50] sm:$0xff]
  %v2288 = vld [vmem:[#allocation2 + $0x60] sm:$0xff]
  %v2289 = vld [vmem:[#allocation2 + $0x68] sm:$0xff]
  %v2290 = vld [vmem:[#allocation2 + $0x70] sm:$0xff]
  %v2291 = vld [vmem:[%s1] ss:$8 sm:$0x3]
  %v2293 = vlaneseq
  %v2294 = vshrl.u32 %v2293, 7
  %v2295 = vsub.s32 0, %v2294
  %v2296 = vrot.slane %v2291, %v2295
  %v2297 = vlaneseq
  %v2298 = vshrl.u32 %v2297, 7
  %v2299 = vsub.s32 1, %v2298
  %v2300 = vrot.slane %v2291, %v2299
  %2301 = vrot.lane.b32.xlu0 %v2296, 94
  %v2302 = vpop.permute.xlu0 %2301
  %2303 = vrot.lane.b32.xlu0 %v2300, 94
  %v2304 = vpop.permute.xlu0 %2303
  %v2305 = vsel %vm91, %v2302, %v2304
  %v2309 = vmul.f32 %v2279, %v2302
  %v2310 = vmul.f32 %v2280, %v2305
  %v2311 = vmul.f32 %v2281, %v2304
  %v2312 = vmul.f32 %v2282, %v2302
  %v2313 = vmul.f32 %v2283, %v2305
  %v2314 = vmul.f32 %v2284, %v2304
  %v2315 = vmul.f32 %v2285, %v2302
  %v2316 = vmul.f32 %v2286, %v2305
  %v2317 = vmul.f32 %v2287, %v2304
  %v2318 = vmul.f32 %v2288, %v2302
  %v2319 = vmul.f32 %v2289, %v2305
  %v2320 = vmul.f32 %v2290, %v2304
  %v2321 = vpack.c.bf16 %v2312, %v2309
  %v2322 = vpack.c.bf16 %v2313, %v2310
  %v2323 = vpack.c.bf16 %v2314, %v2311
  %2327 = vrot.lane.b32.xlu0 %v2321, 34
  %v2328 = vpop.permute.xlu0 %2327
  %2329 = vrot.lane.b32.xlu0 %v2322, 34
  %v2330 = vpop.permute.xlu0 %2329
  %2331 = vrot.lane.b32.xlu0 %v2323, 34
  %v2332 = vpop.permute.xlu0 %2331
  %v2333 = vsel %vm120, %v2328, %v2330
  %v2334 = vsel %vm120, %v2330, %v2332
  %2337 = vst [vmem:[#allocation3] sm:$0xff] %v2333
  %2338 = vst [vmem:[#allocation3 + $0x8] sm:$0xff] %v2334
  %v2339 = vpack.c.bf16 %v2318, %v2315
  %v2340 = vpack.c.bf16 %v2319, %v2316
  %v2341 = vpack.c.bf16 %v2320, %v2317
  %2345 = vrot.lane.b32.xlu0 %v2339, 34
  %v2346 = vpop.permute.xlu0 %2345
  %2347 = vrot.lane.b32.xlu0 %v2340, 34
  %v2348 = vpop.permute.xlu0 %2347
  %2349 = vrot.lane.b32.xlu0 %v2341, 34
  %v2350 = vpop.permute.xlu0 %2349
  %v2351 = vsel %vm120, %v2346, %v2348
  %v2352 = vsel %vm120, %v2348, %v2350
  %2355 = vst [vmem:[#allocation3 + $0x10] sm:$0xff] %v2351
  %2356 = vst [vmem:[#allocation3 + $0x18] sm:$0xff] %v2352
  %v2357 = vld [vmem:[#allocation2] sm:$0xff]
  %v2358 = vld [vmem:[#allocation2 + $0x8] sm:$0xff]
  %v2359 = vld [vmem:[#allocation2 + $0x10] sm:$0xff]
  %v2360 = vld [vmem:[#allocation2 + $0x20] sm:$0xff]
  %v2361 = vld [vmem:[#allocation2 + $0x28] sm:$0xff]
  %v2362 = vld [vmem:[#allocation2 + $0x30] sm:$0xff]
  %v2363 = vld [vmem:[#allocation2 + $0x40] sm:$0xff]
  %v2364 = vld [vmem:[#allocation2 + $0x48] sm:$0xff]
  %v2365 = vld [vmem:[#allocation2 + $0x50] sm:$0xff]
  %v2366 = vld [vmem:[#allocation2 + $0x60] sm:$0xff]
  %v2367 = vld [vmem:[#allocation2 + $0x68] sm:$0xff]
  %v2368 = vld [vmem:[#allocation2 + $0x70] sm:$0xff]
  %v2369 = vld [vmem:[%s157] ss:$8 sm:$0x3]
  %v2371 = vlaneseq
  %v2372 = vshrl.u32 %v2371, 7
  %v2373 = vsub.s32 0, %v2372
  %v2374 = vrot.slane %v2369, %v2373
  %v2375 = vlaneseq
  %v2376 = vshrl.u32 %v2375, 7
  %v2377 = vsub.s32 1, %v2376
  %v2378 = vrot.slane %v2369, %v2377
  %2379 = vrot.lane.b32.xlu0 %v2374, 95
  %v2380 = vpop.permute.xlu0 %2379
  %2381 = vrot.lane.b32.xlu0 %v2378, 95
  %v2382 = vpop.permute.xlu0 %2381
  %v2383 = vsel %vm172, %v2380, %v2382
  %v2387 = vmul.f32 %v2357, %v2380
  %v2388 = vmul.f32 %v2358, %v2383
  %v2389 = vmul.f32 %v2359, %v2382
  %v2390 = vmul.f32 %v2360, %v2380
  %v2391 = vmul.f32 %v2361, %v2383
  %v2392 = vmul.f32 %v2362, %v2382
  %v2393 = vmul.f32 %v2363, %v2380
  %v2394 = vmul.f32 %v2364, %v2383
  %v2395 = vmul.f32 %v2365, %v2382
  %v2396 = vmul.f32 %v2366, %v2380
  %v2397 = vmul.f32 %v2367, %v2383
  %v2398 = vmul.f32 %v2368, %v2382
  %v2399 = vpack.c.bf16 %v2390, %v2387
  %v2400 = vpack.c.bf16 %v2391, %v2388
  %v2401 = vpack.c.bf16 %v2392, %v2389
  %2405 = vrot.lane.b32.xlu0 %v2399, 33
  %v2406 = vpop.permute.xlu0 %2405
  %2407 = vrot.lane.b32.xlu0 %v2400, 33
  %v2408 = vpop.permute.xlu0 %2407
  %2409 = vrot.lane.b32.xlu0 %v2401, 33
  %v2410 = vpop.permute.xlu0 %2409
  %v2411 = vsel %vm201, %v2406, %v2408
  %v2412 = vsel %vm201, %v2408, %v2410
  %2415 = vst [vmem:[#allocation3 + $0x20] sm:$0xff] %v2411
  %2416 = vst [vmem:[#allocation3 + $0x28] sm:$0xff] %v2412
  %v2417 = vpack.c.bf16 %v2396, %v2393
  %v2418 = vpack.c.bf16 %v2397, %v2394
  %v2419 = vpack.c.bf16 %v2398, %v2395
  %2423 = vrot.lane.b32.xlu0 %v2417, 33
  %v2424 = vpop.permute.xlu0 %2423
  %2425 = vrot.lane.b32.xlu0 %v2418, 33
  %v2426 = vpop.permute.xlu0 %2425
  %2427 = vrot.lane.b32.xlu0 %v2419, 33
  %v2428 = vpop.permute.xlu0 %2427
  %v2429 = vsel %vm201, %v2424, %v2426
  %v2430 = vsel %vm201, %v2426, %v2428
  %2433 = vst [vmem:[#allocation3 + $0x30] sm:$0xff] %v2429
  %2434 = vst [vmem:[#allocation3 + $0x38] sm:$0xff] %v2430
  %v2435 = vld [vmem:[#allocation2] sm:$0xff]
  %v2436 = vld [vmem:[#allocation2 + $0x8] sm:$0xff]
  %v2437 = vld [vmem:[#allocation2 + $0x10] sm:$0xff]
  %v2438 = vld [vmem:[#allocation2 + $0x20] sm:$0xff]
  %v2439 = vld [vmem:[#allocation2 + $0x28] sm:$0xff]
  %v2440 = vld [vmem:[#allocation2 + $0x30] sm:$0xff]
  %v2441 = vld [vmem:[#allocation2 + $0x40] sm:$0xff]
  %v2442 = vld [vmem:[#allocation2 + $0x48] sm:$0xff]
  %v2443 = vld [vmem:[#allocation2 + $0x50] sm:$0xff]
  %v2444 = vld [vmem:[#allocation2 + $0x60] sm:$0xff]
  %v2445 = vld [vmem:[#allocation2 + $0x68] sm:$0xff]
  %v2446 = vld [vmem:[#allocation2 + $0x70] sm:$0xff]
  %v2447 = vpack.c.bf16 %v2438, %v2435
  %v2448 = vpack.c.bf16 %v2439, %v2436
  %v2449 = vpack.c.bf16 %v2440, %v2437
  %2453 = vrot.lane.b32.xlu0 %v2447, 32
  %v2454 = vpop.permute.xlu0 %2453
  %2455 = vrot.lane.b32.xlu0 %v2448, 32
  %v2456 = vpop.permute.xlu0 %2455
  %2457 = vrot.lane.b32.xlu0 %v2449, 32
  %v2458 = vpop.permute.xlu0 %2457
  %v2459 = vsel %vm250, %v2454, %v2456
  %v2460 = vsel %vm250, %v2456, %v2458
  %2463 = vst [vmem:[#allocation3 + $0x40] sm:$0xff] %v2459
  %2464 = vst [vmem:[#allocation3 + $0x48] sm:$0xff] %v2460
  %v2465 = vpack.c.bf16 %v2444, %v2441
  %v2466 = vpack.c.bf16 %v2445, %v2442
  %v2467 = vpack.c.bf16 %v2446, %v2443
  %2471 = vrot.lane.b32.xlu0 %v2465, 32
  %v2472 = vpop.permute.xlu0 %2471
  %2473 = vrot.lane.b32.xlu0 %v2466, 32
  %v2474 = vpop.permute.xlu0 %2473
  %2475 = vrot.lane.b32.xlu0 %v2467, 32
  %v2476 = vpop.permute.xlu0 %2475
  %v2477 = vsel %vm250, %v2472, %v2474
  %v2478 = vsel %vm250, %v2474, %v2476
  %2481 = vst [vmem:[#allocation3 + $0x50] sm:$0xff] %v2477
  %2482 = vst [vmem:[#allocation3 + $0x58] sm:$0xff] %v2478
  %v2483 = vld [vmem:[#allocation2] sm:$0xff]
  %v2484 = vld [vmem:[#allocation2 + $0x8] sm:$0xff]
  %v2485 = vld [vmem:[#allocation2 + $0x10] sm:$0xff]
  %v2486 = vld [vmem:[#allocation2 + $0x20] sm:$0xff]
  %v2487 = vld [vmem:[#allocation2 + $0x28] sm:$0xff]
  %v2488 = vld [vmem:[#allocation2 + $0x30] sm:$0xff]
  %v2489 = vld [vmem:[#allocation2 + $0x40] sm:$0xff]
  %v2490 = vld [vmem:[#allocation2 + $0x48] sm:$0xff]
  %v2491 = vld [vmem:[#allocation2 + $0x50] sm:$0xff]
  %v2492 = vld [vmem:[#allocation2 + $0x60] sm:$0xff]
  %v2493 = vld [vmem:[#allocation2 + $0x68] sm:$0xff]
  %v2494 = vld [vmem:[#allocation2 + $0x70] sm:$0xff]
  %v2495 = vld [vmem:[%s287] ss:$8 sm:$0x3]
  %v2497 = vlaneseq
  %v2498 = vshrl.u32 %v2497, 7
  %v2499 = vsub.s32 0, %v2498
  %v2500 = vrot.slane %v2495, %v2499
  %v2501 = vlaneseq
  %v2502 = vshrl.u32 %v2501, 7
  %v2503 = vsub.s32 1, %v2502
  %v2504 = vrot.slane %v2495, %v2503
  %2505 = vrot.lane.b32.xlu0 %v2500, 97
  %v2506 = vpop.permute.xlu0 %2505
  %2507 = vrot.lane.b32.xlu0 %v2504, 97
  %v2508 = vpop.permute.xlu0 %2507
  %v2509 = vsel %vm302, %v2506, %v2508
  %v2513 = vmul.f32 %v2483, %v2506
  %v2514 = vmul.f32 %v2484, %v2509
  %v2515 = vmul.f32 %v2485, %v2508
  %v2516 = vmul.f32 %v2486, %v2506
  %v2517 = vmul.f32 %v2487, %v2509
  %v2518 = vmul.f32 %v2488, %v2508
  %v2519 = vmul.f32 %v2489, %v2506
  %v2520 = vmul.f32 %v2490, %v2509
  %v2521 = vmul.f32 %v2491, %v2508
  %v2522 = vmul.f32 %v2492, %v2506
  %v2523 = vmul.f32 %v2493, %v2509
  %v2524 = vmul.f32 %v2494, %v2508
  %v2525 = vpack.c.bf16 %v2516, %v2513
  %v2526 = vpack.c.bf16 %v2517, %v2514
  %v2527 = vpack.c.bf16 %v2518, %v2515
  %2531 = vrot.lane.b32.xlu0 %v2525, 31
  %v2532 = vpop.permute.xlu0 %2531
  %2533 = vrot.lane.b32.xlu0 %v2526, 31
  %v2534 = vpop.permute.xlu0 %2533
  %2535 = vrot.lane.b32.xlu0 %v2527, 31
  %v2536 = vpop.permute.xlu0 %2535
  %v2537 = vsel %vm331, %v2532, %v2534
  %v2538 = vsel %vm331, %v2534, %v2536
  %2541 = vst [vmem:[#allocation3 + $0x60] sm:$0xff] %v2537
  %2542 = vst [vmem:[#allocation3 + $0x68] sm:$0xff] %v2538
  %v2543 = vpack.c.bf16 %v2522, %v2519
  %v2544 = vpack.c.bf16 %v2523, %v2520
  %v2545 = vpack.c.bf16 %v2524, %v2521
  %2549 = vrot.lane.b32.xlu0 %v2543, 31
  %v2550 = vpop.permute.xlu0 %2549
  %2551 = vrot.lane.b32.xlu0 %v2544, 31
  %v2552 = vpop.permute.xlu0 %2551
  %2553 = vrot.lane.b32.xlu0 %v2545, 31
  %v2554 = vpop.permute.xlu0 %2553
  %v2555 = vsel %vm331, %v2550, %v2552
  %v2556 = vsel %vm331, %v2552, %v2554
  %2559 = vst [vmem:[#allocation3 + $0x70] sm:$0xff] %v2555
  %2560 = vst [vmem:[#allocation3 + $0x78] sm:$0xff] %v2556
  %v2561 = vld [vmem:[#allocation2] sm:$0xff]
  %v2562 = vld [vmem:[#allocation2 + $0x8] sm:$0xff]
  %v2563 = vld [vmem:[#allocation2 + $0x10] sm:$0xff]
  %v2564 = vld [vmem:[#allocation2 + $0x20] sm:$0xff]
  %v2565 = vld [vmem:[#allocation2 + $0x28] sm:$0xff]
  %v2566 = vld [vmem:[#allocation2 + $0x30] sm:$0xff]
  %v2567 = vld [vmem:[#allocation2 + $0x40] sm:$0xff]
  %v2568 = vld [vmem:[#allocation2 + $0x48] sm:$0xff]
  %v2569 = vld [vmem:[#allocation2 + $0x50] sm:$0xff]
  %v2570 = vld [vmem:[#allocation2 + $0x60] sm:$0xff]
  %v2571 = vld [vmem:[#allocation2 + $0x68] sm:$0xff]
  %v2572 = vld [vmem:[#allocation2 + $0x70] sm:$0xff]
  %v2573 = vld [vmem:[%s368] ss:$8 sm:$0x3]
  %v2575 = vlaneseq
  %v2576 = vshrl.u32 %v2575, 7
  %v2577 = vsub.s32 0, %v2576
  %v2578 = vrot.slane %v2573, %v2577
  %v2579 = vlaneseq
  %v2580 = vshrl.u32 %v2579, 7
  %v2581 = vsub.s32 1, %v2580
  %v2582 = vrot.slane %v2573, %v2581
  %2583 = vrot.lane.b32.xlu0 %v2578, 98
  %v2584 = vpop.permute.xlu0 %2583
  %2585 = vrot.lane.b32.xlu0 %v2582, 98
  %v2586 = vpop.permute.xlu0 %2585
  %v2587 = vsel %vm383, %v2584, %v2586
  %v2591 = vmul.f32 %v2561, %v2584
  %v2592 = vmul.f32 %v2562, %v2587
  %v2593 = vmul.f32 %v2563, %v2586
  %v2594 = vmul.f32 %v2564, %v2584
  %v2595 = vmul.f32 %v2565, %v2587
  %v2596 = vmul.f32 %v2566, %v2586
  %v2597 = vmul.f32 %v2567, %v2584
  %v2598 = vmul.f32 %v2568, %v2587
  %v2599 = vmul.f32 %v2569, %v2586
  %v2600 = vmul.f32 %v2570, %v2584
  %v2601 = vmul.f32 %v2571, %v2587
  %v2602 = vmul.f32 %v2572, %v2586
  %v2603 = vpack.c.bf16 %v2594, %v2591
  %v2604 = vpack.c.bf16 %v2595, %v2592
  %v2605 = vpack.c.bf16 %v2596, %v2593
  %2609 = vrot.lane.b32.xlu0 %v2603, 30
  %v2610 = vpop.permute.xlu0 %2609
  %2611 = vrot.lane.b32.xlu0 %v2604, 30
  %v2612 = vpop.permute.xlu0 %2611
  %2613 = vrot.lane.b32.xlu0 %v2605, 30
  %v2614 = vpop.permute.xlu0 %2613
  %v2615 = vsel %vm412, %v2610, %v2612
  %v2616 = vsel %vm412, %v2612, %v2614
  %2619 = vst [vmem:[#allocation3 + $0x80] sm:$0xff] %v2615
  %2620 = vst [vmem:[#allocation3 + $0x88] sm:$0xff] %v2616
  %v2621 = vpack.c.bf16 %v2600, %v2597
  %v2622 = vpack.c.bf16 %v2601, %v2598
  %v2623 = vpack.c.bf16 %v2602, %v2599
  %2627 = vrot.lane.b32.xlu0 %v2621, 30
  %v2628 = vpop.permute.xlu0 %2627
  %2629 = vrot.lane.b32.xlu0 %v2622, 30
  %v2630 = vpop.permute.xlu0 %2629
  %2631 = vrot.lane.b32.xlu0 %v2623, 30
  %v2632 = vpop.permute.xlu0 %2631
  %v2633 = vsel %vm412, %v2628, %v2630
  %v2634 = vsel %vm412, %v2630, %v2632
  %2637 = vst [vmem:[#allocation3 + $0x90] sm:$0xff] %v2633
  %2638 = vst [vmem:[#allocation3 + $0x98] sm:$0xff] %v2634
  %v2639 = vld [vmem:[#allocation2] sm:$0xff]
  %v2640 = vld [vmem:[#allocation2 + $0x8] sm:$0xff]
  %v2641 = vld [vmem:[#allocation2 + $0x10] sm:$0xff]
  %v2642 = vld [vmem:[#allocation2 + $0x20] sm:$0xff]
  %v2643 = vld [vmem:[#allocation2 + $0x28] sm:$0xff]
  %v2644 = vld [vmem:[#allocation2 + $0x30] sm:$0xff]
  %v2645 = vld [vmem:[#allocation2 + $0x40] sm:$0xff]
  %v2646 = vld [vmem:[#allocation2 + $0x48] sm:$0xff]
  %v2647 = vld [vmem:[#allocation2 + $0x50] sm:$0xff]
  %v2648 = vld [vmem:[#allocation2 + $0x60] sm:$0xff]
  %v2649 = vld [vmem:[#allocation2 + $0x68] sm:$0xff]
  %v2650 = vld [vmem:[#allocation2 + $0x70] sm:$0xff]
  %v2651 = vld [vmem:[%s449] ss:$8 sm:$0x3]
  %v2653 = vlaneseq
  %v2654 = vshrl.u32 %v2653, 7
  %v2655 = vsub.s32 0, %v2654
  %v2656 = vrot.slane %v2651, %v2655
  %v2657 = vlaneseq
  %v2658 = vshrl.u32 %v2657, 7
  %v2659 = vsub.s32 1, %v2658
  %v2660 = vrot.slane %v2651, %v2659
  %2661 = vrot.lane.b32.xlu0 %v2656, 110
  %v2662 = vpop.permute.xlu0 %2661
  %2663 = vrot.lane.b32.xlu0 %v2660, 110
  %v2664 = vpop.permute.xlu0 %2663
  %v2665 = vsel %vm464, %v2662, %v2664
  %v2669 = vmul.f32 %v2639, %v2662
  %v2670 = vmul.f32 %v2640, %v2665
  %v2671 = vmul.f32 %v2641, %v2664
  %v2672 = vmul.f32 %v2642, %v2662
  %v2673 = vmul.f32 %v2643, %v2665
  %v2674 = vmul.f32 %v2644, %v2664
  %v2675 = vmul.f32 %v2645, %v2662
  %v2676 = vmul.f32 %v2646, %v2665
  %v2677 = vmul.f32 %v2647, %v2664
  %v2678 = vmul.f32 %v2648, %v2662
  %v2679 = vmul.f32 %v2649, %v2665
  %v2680 = vmul.f32 %v2650, %v2664
  %v2681 = vpack.c.bf16 %v2672, %v2669
  %v2682 = vpack.c.bf16 %v2673, %v2670
  %v2683 = vpack.c.bf16 %v2674, %v2671
  %2687 = vrot.lane.b32.xlu0 %v2681, 18
  %v2688 = vpop.permute.xlu0 %2687
  %2689 = vrot.lane.b32.xlu0 %v2682, 18
  %v2690 = vpop.permute.xlu0 %2689
  %2691 = vrot.lane.b32.xlu0 %v2683, 18
  %v2692 = vpop.permute.xlu0 %2691
  %v2693 = vsel %vm493, %v2688, %v2690
  %v2694 = vsel %vm493, %v2690, %v2692
  %2697 = vst [vmem:[#allocation3 + $0xa0] sm:$0xff] %v2693
  %2698 = vst [vmem:[#allocation3 + $0xa8] sm:$0xff] %v2694
  %v2699 = vpack.c.bf16 %v2678, %v2675
  %v2700 = vpack.c.bf16 %v2679, %v2676
  %v2701 = vpack.c.bf16 %v2680, %v2677
  %2705 = vrot.lane.b32.xlu0 %v2699, 18
  %v2706 = vpop.permute.xlu0 %2705
  %2707 = vrot.lane.b32.xlu0 %v2700, 18
  %v2708 = vpop.permute.xlu0 %2707
  %2709 = vrot.lane.b32.xlu0 %v2701, 18
  %v2710 = vpop.permute.xlu0 %2709
  %v2711 = vsel %vm493, %v2706, %v2708
  %v2712 = vsel %vm493, %v2708, %v2710
  %2715 = vst [vmem:[#allocation3 + $0xb0] sm:$0xff] %v2711
  %2716 = vst [vmem:[#allocation3 + $0xb8] sm:$0xff] %v2712
  %v2717 = vld [vmem:[#allocation2] sm:$0xff]
  %v2718 = vld [vmem:[#allocation2 + $0x8] sm:$0xff]
  %v2719 = vld [vmem:[#allocation2 + $0x10] sm:$0xff]
  %v2720 = vld [vmem:[#allocation2 + $0x20] sm:$0xff]
  %v2721 = vld [vmem:[#allocation2 + $0x28] sm:$0xff]
  %v2722 = vld [vmem:[#allocation2 + $0x30] sm:$0xff]
  %v2723 = vld [vmem:[#allocation2 + $0x40] sm:$0xff]
  %v2724 = vld [vmem:[#allocation2 + $0x48] sm:$0xff]
  %v2725 = vld [vmem:[#allocation2 + $0x50] sm:$0xff]
  %v2726 = vld [vmem:[#allocation2 + $0x60] sm:$0xff]
  %v2727 = vld [vmem:[#allocation2 + $0x68] sm:$0xff]
  %v2728 = vld [vmem:[#allocation2 + $0x70] sm:$0xff]
  %v2729 = vld [vmem:[%s530] ss:$8 sm:$0x3]
  %v2731 = vlaneseq
  %v2732 = vshrl.u32 %v2731, 7
  %v2733 = vsub.s32 0, %v2732
  %v2734 = vrot.slane %v2729, %v2733
  %v2735 = vlaneseq
  %v2736 = vshrl.u32 %v2735, 7
  %v2737 = vsub.s32 1, %v2736
  %v2738 = vrot.slane %v2729, %v2737
  %2739 = vrot.lane.b32.xlu0 %v2734, 111
  %v2740 = vpop.permute.xlu0 %2739
  %2741 = vrot.lane.b32.xlu0 %v2738, 111
  %v2742 = vpop.permute.xlu0 %2741
  %v2743 = vsel %vm545, %v2740, %v2742
  %v2747 = vmul.f32 %v2717, %v2740
  %v2748 = vmul.f32 %v2718, %v2743
  %v2749 = vmul.f32 %v2719, %v2742
  %v2750 = vmul.f32 %v2720, %v2740
  %v2751 = vmul.f32 %v2721, %v2743
  %v2752 = vmul.f32 %v2722, %v2742
  %v2753 = vmul.f32 %v2723, %v2740
  %v2754 = vmul.f32 %v2724, %v2743
  %v2755 = vmul.f32 %v2725, %v2742
  %v2756 = vmul.f32 %v2726, %v2740
  %v2757 = vmul.f32 %v2727, %v2743
  %v2758 = vmul.f32 %v2728, %v2742
  %v2759 = vpack.c.bf16 %v2750, %v2747
  %v2760 = vpack.c.bf16 %v2751, %v2748
  %v2761 = vpack.c.bf16 %v2752, %v2749
  %2765 = vrot.lane.b32.xlu0 %v2759, 17
  %v2766 = vpop.permute.xlu0 %2765
  %2767 = vrot.lane.b32.xlu0 %v2760, 17
  %v2768 = vpop.permute.xlu0 %2767
  %2769 = vrot.lane.b32.xlu0 %v2761, 17
  %v2770 = vpop.permute.xlu0 %2769
  %v2771 = vsel %vm574, %v2766, %v2768
  %v2772 = vsel %vm574, %v2768, %v2770
  %2775 = vst [vmem:[#allocation3 + $0xc0] sm:$0xff] %v2771
  %2776 = vst [vmem:[#allocation3 + $0xc8] sm:$0xff] %v2772
  %v2777 = vpack.c.bf16 %v2756, %v2753
  %v2778 = vpack.c.bf16 %v2757, %v2754
  %v2779 = vpack.c.bf16 %v2758, %v2755
  %2783 = vrot.lane.b32.xlu0 %v2777, 17
  %v2784 = vpop.permute.xlu0 %2783
  %2785 = vrot.lane.b32.xlu0 %v2778, 17
  %v2786 = vpop.permute.xlu0 %2785
  %2787 = vrot.lane.b32.xlu0 %v2779, 17
  %v2788 = vpop.permute.xlu0 %2787
  %v2789 = vsel %vm574, %v2784, %v2786
  %v2790 = vsel %vm574, %v2786, %v2788
  %2793 = vst [vmem:[#allocation3 + $0xd0] sm:$0xff] %v2789
  %2794 = vst [vmem:[#allocation3 + $0xd8] sm:$0xff] %v2790
  %v2795 = vld [vmem:[#allocation2] sm:$0xff]
  %v2796 = vld [vmem:[#allocation2 + $0x8] sm:$0xff]
  %v2797 = vld [vmem:[#allocation2 + $0x10] sm:$0xff]
  %v2798 = vld [vmem:[#allocation2 + $0x20] sm:$0xff]
  %v2799 = vld [vmem:[#allocation2 + $0x28] sm:$0xff]
  %v2800 = vld [vmem:[#allocation2 + $0x30] sm:$0xff]
  %v2801 = vld [vmem:[#allocation2 + $0x40] sm:$0xff]
  %v2802 = vld [vmem:[#allocation2 + $0x48] sm:$0xff]
  %v2803 = vld [vmem:[#allocation2 + $0x50] sm:$0xff]
  %v2804 = vld [vmem:[#allocation2 + $0x60] sm:$0xff]
  %v2805 = vld [vmem:[#allocation2 + $0x68] sm:$0xff]
  %v2806 = vld [vmem:[#allocation2 + $0x70] sm:$0xff]
  %v2807 = vpack.c.bf16 %v2798, %v2795
  %v2808 = vpack.c.bf16 %v2799, %v2796
  %v2809 = vpack.c.bf16 %v2800, %v2797
  %2813 = vrot.lane.b32.xlu0 %v2807, 16
  %v2814 = vpop.permute.xlu0 %2813
  %2815 = vrot.lane.b32.xlu0 %v2808, 16
  %v2816 = vpop.permute.xlu0 %2815
  %2817 = vrot.lane.b32.xlu0 %v2809, 16
  %v2818 = vpop.permute.xlu0 %2817
  %v2819 = vsel %vm623, %v2814, %v2816
  %v2820 = vsel %vm623, %v2816, %v2818
  %2823 = vst [vmem:[#allocation3 + $0xe0] sm:$0xff] %v2819
  %2824 = vst [vmem:[#allocation3 + $0xe8] sm:$0xff] %v2820
  %v2825 = vpack.c.bf16 %v2804, %v2801
  %v2826 = vpack.c.bf16 %v2805, %v2802
  %v2827 = vpack.c.bf16 %v2806, %v2803
  %2831 = vrot.lane.b32.xlu0 %v2825, 16
  %v2832 = vpop.permute.xlu0 %2831
  %2833 = vrot.lane.b32.xlu0 %v2826, 16
  %v2834 = vpop.permute.xlu0 %2833
  %2835 = vrot.lane.b32.xlu0 %v2827, 16
  %v2836 = vpop.permute.xlu0 %2835
  %v2837 = vsel %vm623, %v2832, %v2834
  %v2838 = vsel %vm623, %v2834, %v2836
  %2841 = vst [vmem:[#allocation3 + $0xf0] sm:$0xff] %v2837
  %2842 = vst [vmem:[#allocation3 + $0xf8] sm:$0xff] %v2838
  %v2843 = vld [vmem:[#allocation2] sm:$0xff]
  %v2844 = vld [vmem:[#allocation2 + $0x8] sm:$0xff]
  %v2845 = vld [vmem:[#allocation2 + $0x10] sm:$0xff]
  %v2846 = vld [vmem:[#allocation2 + $0x20] sm:$0xff]
  %v2847 = vld [vmem:[#allocation2 + $0x28] sm:$0xff]
  %v2848 = vld [vmem:[#allocation2 + $0x30] sm:$0xff]
  %v2849 = vld [vmem:[#allocation2 + $0x40] sm:$0xff]
  %v2850 = vld [vmem:[#allocation2 + $0x48] sm:$0xff]
  %v2851 = vld [vmem:[#allocation2 + $0x50] sm:$0xff]
  %v2852 = vld [vmem:[#allocation2 + $0x60] sm:$0xff]
  %v2853 = vld [vmem:[#allocation2 + $0x68] sm:$0xff]
  %v2854 = vld [vmem:[#allocation2 + $0x70] sm:$0xff]
  %v2855 = vld [vmem:[%s660] ss:$8 sm:$0x3]
  %v2857 = vlaneseq
  %v2858 = vshrl.u32 %v2857, 7
  %v2859 = vsub.s32 0, %v2858
  %v2860 = vrot.slane %v2855, %v2859
  %v2861 = vlaneseq
  %v2862 = vshrl.u32 %v2861, 7
  %v2863 = vsub.s32 1, %v2862
  %v2864 = vrot.slane %v2855, %v2863
  %2865 = vrot.lane.b32.xlu0 %v2860, 113
  %v2866 = vpop.permute.xlu0 %2865
  %2867 = vrot.lane.b32.xlu0 %v2864, 113
  %v2868 = vpop.permute.xlu0 %2867
  %v2869 = vsel %vm675, %v2866, %v2868
  %v2873 = vmul.f32 %v2843, %v2866
  %v2874 = vmul.f32 %v2844, %v2869
  %v2875 = vmul.f32 %v2845, %v2868
  %v2876 = vmul.f32 %v2846, %v2866
  %v2877 = vmul.f32 %v2847, %v2869
  %v2878 = vmul.f32 %v2848, %v2868
  %v2879 = vmul.f32 %v2849, %v2866
  %v2880 = vmul.f32 %v2850, %v2869
  %v2881 = vmul.f32 %v2851, %v2868
  %v2882 = vmul.f32 %v2852, %v2866
  %v2883 = vmul.f32 %v2853, %v2869
  %v2884 = vmul.f32 %v2854, %v2868
  %v2885 = vpack.c.bf16 %v2876, %v2873
  %v2886 = vpack.c.bf16 %v2877, %v2874
  %v2887 = vpack.c.bf16 %v2878, %v2875
  %2891 = vrot.lane.b32.xlu0 %v2885, 15
  %v2892 = vpop.permute.xlu0 %2891
  %2893 = vrot.lane.b32.xlu0 %v2886, 15
  %v2894 = vpop.permute.xlu0 %2893
  %2895 = vrot.lane.b32.xlu0 %v2887, 15
  %v2896 = vpop.permute.xlu0 %2895
  %v2897 = vsel %vm704, %v2892, %v2894
  %v2898 = vsel %vm704, %v2894, %v2896
  %2901 = vst [vmem:[#allocation3 + $0x100] sm:$0xff] %v2897
  %2902 = vst [vmem:[#allocation3 + $0x108] sm:$0xff] %v2898
  %v2903 = vpack.c.bf16 %v2882, %v2879
  %v2904 = vpack.c.bf16 %v2883, %v2880
  %v2905 = vpack.c.bf16 %v2884, %v2881
  %2909 = vrot.lane.b32.xlu0 %v2903, 15
  %v2910 = vpop.permute.xlu0 %2909
  %2911 = vrot.lane.b32.xlu0 %v2904, 15
  %v2912 = vpop.permute.xlu0 %2911
  %2913 = vrot.lane.b32.xlu0 %v2905, 15
  %v2914 = vpop.permute.xlu0 %2913
  %v2915 = vsel %vm704, %v2910, %v2912
  %v2916 = vsel %vm704, %v2912, %v2914
  %2919 = vst [vmem:[#allocation3 + $0x110] sm:$0xff] %v2915
  %2920 = vst [vmem:[#allocation3 + $0x118] sm:$0xff] %v2916
  %v2921 = vld [vmem:[#allocation2] sm:$0xff]
  %v2922 = vld [vmem:[#allocation2 + $0x8] sm:$0xff]
  %v2923 = vld [vmem:[#allocation2 + $0x10] sm:$0xff]
  %v2924 = vld [vmem:[#allocation2 + $0x20] sm:$0xff]
  %v2925 = vld [vmem:[#allocation2 + $0x28] sm:$0xff]
  %v2926 = vld [vmem:[#allocation2 + $0x30] sm:$0xff]
  %v2927 = vld [vmem:[#allocation2 + $0x40] sm:$0xff]
  %v2928 = vld [vmem:[#allocation2 + $0x48] sm:$0xff]
  %v2929 = vld [vmem:[#allocation2 + $0x50] sm:$0xff]
  %v2930 = vld [vmem:[#allocation2 + $0x60] sm:$0xff]
  %v2931 = vld [vmem:[#allocation2 + $0x68] sm:$0xff]
  %v2932 = vld [vmem:[#allocation2 + $0x70] sm:$0xff]
  %v2933 = vld [vmem:[%s741] ss:$8 sm:$0x3]
  %v2935 = vlaneseq
  %v2936 = vshrl.u32 %v2935, 7
  %v2937 = vsub.s32 0, %v2936
  %v2938 = vrot.slane %v2933, %v2937
  %v2939 = vlaneseq
  %v2940 = vshrl.u32 %v2939, 7
  %v2941 = vsub.s32 1, %v2940
  %v2942 = vrot.slane %v2933, %v2941
  %2943 = vrot.lane.b32.xlu0 %v2938, 114
  %v2944 = vpop.permute.xlu0 %2943
  %2945 = vrot.lane.b32.xlu0 %v2942, 114
  %v2946 = vpop.permute.xlu0 %2945
  %v2947 = vsel %vm756, %v2944, %v2946
  %v2951 = vmul.f32 %v2921, %v2944
  %v2952 = vmul.f32 %v2922, %v2947
  %v2953 = vmul.f32 %v2923, %v2946
  %v2954 = vmul.f32 %v2924, %v2944
  %v2955 = vmul.f32 %v2925, %v2947
  %v2956 = vmul.f32 %v2926, %v2946
  %v2957 = vmul.f32 %v2927, %v2944
  %v2958 = vmul.f32 %v2928, %v2947
  %v2959 = vmul.f32 %v2929, %v2946
  %v2960 = vmul.f32 %v2930, %v2944
  %v2961 = vmul.f32 %v2931, %v2947
  %v2962 = vmul.f32 %v2932, %v2946
  %v2963 = vpack.c.bf16 %v2954, %v2951
  %v2964 = vpack.c.bf16 %v2955, %v2952
  %v2965 = vpack.c.bf16 %v2956, %v2953
  %2969 = vrot.lane.b32.xlu0 %v2963, 14
  %v2970 = vpop.permute.xlu0 %2969
  %2971 = vrot.lane.b32.xlu0 %v2964, 14
  %v2972 = vpop.permute.xlu0 %2971
  %2973 = vrot.lane.b32.xlu0 %v2965, 14
  %v2974 = vpop.permute.xlu0 %2973
  %v2975 = vsel %vm785, %v2970, %v2972
  %v2976 = vsel %vm785, %v2972, %v2974
  %2979 = vst [vmem:[#allocation3 + $0x120] sm:$0xff] %v2975
  %2980 = vst [vmem:[#allocation3 + $0x128] sm:$0xff] %v2976
  %v2981 = vpack.c.bf16 %v2960, %v2957
  %v2982 = vpack.c.bf16 %v2961, %v2958
  %v2983 = vpack.c.bf16 %v2962, %v2959
  %2987 = vrot.lane.b32.xlu0 %v2981, 14
  %v2988 = vpop.permute.xlu0 %2987
  %2989 = vrot.lane.b32.xlu0 %v2982, 14
  %v2990 = vpop.permute.xlu0 %2989
  %2991 = vrot.lane.b32.xlu0 %v2983, 14
  %v2992 = vpop.permute.xlu0 %2991
  %v2993 = vsel %vm785, %v2988, %v2990
  %v2994 = vsel %vm785, %v2990, %v2992
  %2997 = vst [vmem:[#allocation3 + $0x130] sm:$0xff] %v2993
  %2998 = vst [vmem:[#allocation3 + $0x138] sm:$0xff] %v2994
  %v2999 = vld [vmem:[#allocation2] sm:$0xff]
  %v3000 = vld [vmem:[#allocation2 + $0x8] sm:$0xff]
  %v3001 = vld [vmem:[#allocation2 + $0x10] sm:$0xff]
  %v3002 = vld [vmem:[#allocation2 + $0x20] sm:$0xff]
  %v3003 = vld [vmem:[#allocation2 + $0x28] sm:$0xff]
  %v3004 = vld [vmem:[#allocation2 + $0x30] sm:$0xff]
  %v3005 = vld [vmem:[#allocation2 + $0x40] sm:$0xff]
  %v3006 = vld [vmem:[#allocation2 + $0x48] sm:$0xff]
  %v3007 = vld [vmem:[#allocation2 + $0x50] sm:$0xff]
  %v3008 = vld [vmem:[#allocation2 + $0x60] sm:$0xff]
  %v3009 = vld [vmem:[#allocation2 + $0x68] sm:$0xff]
  %v3010 = vld [vmem:[#allocation2 + $0x70] sm:$0xff]
  %v3011 = vld [vmem:[%s822] ss:$8 sm:$0x3]
  %v3013 = vlaneseq
  %v3014 = vshrl.u32 %v3013, 7
  %v3015 = vsub.s32 0, %v3014
  %v3016 = vrot.slane %v3011, %v3015
  %v3017 = vlaneseq
  %v3018 = vshrl.u32 %v3017, 7
  %v3019 = vsub.s32 1, %v3018
  %v3020 = vrot.slane %v3011, %v3019
  %3021 = vrot.lane.b32.xlu0 %v3016, 126
  %v3022 = vpop.permute.xlu0 %3021
  %3023 = vrot.lane.b32.xlu0 %v3020, 126
  %v3024 = vpop.permute.xlu0 %3023
  %v3025 = vsel %vm837, %v3022, %v3024
  %v3029 = vmul.f32 %v2999, %v3022
  %v3030 = vmul.f32 %v3000, %v3025
  %v3031 = vmul.f32 %v3001, %v3024
  %v3032 = vmul.f32 %v3002, %v3022
  %v3033 = vmul.f32 %v3003, %v3025
  %v3034 = vmul.f32 %v3004, %v3024
  %v3035 = vmul.f32 %v3005, %v3022
  %v3036 = vmul.f32 %v3006, %v3025
  %v3037 = vmul.f32 %v3007, %v3024
  %v3038 = vmul.f32 %v3008, %v3022
  %v3039 = vmul.f32 %v3009, %v3025
  %v3040 = vmul.f32 %v3010, %v3024
  %v3041 = vpack.c.bf16 %v3032, %v3029
  %v3042 = vpack.c.bf16 %v3033, %v3030
  %v3043 = vpack.c.bf16 %v3034, %v3031
  %3047 = vrot.lane.b32.xlu0 %v3041, 2
  %v3048 = vpop.permute.xlu0 %3047
  %3049 = vrot.lane.b32.xlu0 %v3042, 2
  %v3050 = vpop.permute.xlu0 %3049
  %3051 = vrot.lane.b32.xlu0 %v3043, 2
  %v3052 = vpop.permute.xlu0 %3051
  %v3053 = vsel %vm866, %v3048, %v3050
  %v3054 = vsel %vm866, %v3050, %v3052
  %3057 = vst [vmem:[#allocation3 + $0x140] sm:$0xff] %v3053
  %3058 = vst [vmem:[#allocation3 + $0x148] sm:$0xff] %v3054
  %v3059 = vpack.c.bf16 %v3038, %v3035
  %v3060 = vpack.c.bf16 %v3039, %v3036
  %v3061 = vpack.c.bf16 %v3040, %v3037
  %3065 = vrot.lane.b32.xlu0 %v3059, 2
  %v3066 = vpop.permute.xlu0 %3065
  %3067 = vrot.lane.b32.xlu0 %v3060, 2
  %v3068 = vpop.permute.xlu0 %3067
  %3069 = vrot.lane.b32.xlu0 %v3061, 2
  %v3070 = vpop.permute.xlu0 %3069
  %v3071 = vsel %vm866, %v3066, %v3068
  %v3072 = vsel %vm866, %v3068, %v3070
  %3075 = vst [vmem:[#allocation3 + $0x150] sm:$0xff] %v3071
  %3076 = vst [vmem:[#allocation3 + $0x158] sm:$0xff] %v3072
  %v3077 = vld [vmem:[#allocation2] sm:$0xff]
  %v3078 = vld [vmem:[#allocation2 + $0x8] sm:$0xff]
  %v3079 = vld [vmem:[#allocation2 + $0x10] sm:$0xff]
  %v3080 = vld [vmem:[#allocation2 + $0x20] sm:$0xff]
  %v3081 = vld [vmem:[#allocation2 + $0x28] sm:$0xff]
  %v3082 = vld [vmem:[#allocation2 + $0x30] sm:$0xff]
  %v3083 = vld [vmem:[#allocation2 + $0x40] sm:$0xff]
  %v3084 = vld [vmem:[#allocation2 + $0x48] sm:$0xff]
  %v3085 = vld [vmem:[#allocation2 + $0x50] sm:$0xff]
  %v3086 = vld [vmem:[#allocation2 + $0x60] sm:$0xff]
  %v3087 = vld [vmem:[#allocation2 + $0x68] sm:$0xff]
  %v3088 = vld [vmem:[#allocation2 + $0x70] sm:$0xff]
  %v3089 = vld [vmem:[%s903] ss:$8 sm:$0x3]
  %v3091 = vlaneseq
  %v3092 = vshrl.u32 %v3091, 7
  %v3093 = vsub.s32 0, %v3092
  %v3094 = vrot.slane %v3089, %v3093
  %v3095 = vlaneseq
  %v3096 = vshrl.u32 %v3095, 7
  %v3097 = vsub.s32 1, %v3096
  %v3098 = vrot.slane %v3089, %v3097
  %3099 = vrot.lane.b32.xlu0 %v3094, 127
  %v3100 = vpop.permute.xlu0 %3099
  %3101 = vrot.lane.b32.xlu0 %v3098, 127
  %v3102 = vpop.permute.xlu0 %3101
  %v3103 = vsel %vm918, %v3100, %v3102
  %v3107 = vmul.f32 %v3077, %v3100
  %v3108 = vmul.f32 %v3078, %v3103
  %v3109 = vmul.f32 %v3079, %v3102
  %v3110 = vmul.f32 %v3080, %v3100
  %v3111 = vmul.f32 %v3081, %v3103
  %v3112 = vmul.f32 %v3082, %v3102
  %v3113 = vmul.f32 %v3083, %v3100
  %v3114 = vmul.f32 %v3084, %v3103
  %v3115 = vmul.f32 %v3085, %v3102
  %v3116 = vmul.f32 %v3086, %v3100
  %v3117 = vmul.f32 %v3087, %v3103
  %v3118 = vmul.f32 %v3088, %v3102
  %v3119 = vpack.c.bf16 %v3110, %v3107
  %v3120 = vpack.c.bf16 %v3111, %v3108
  %v3121 = vpack.c.bf16 %v3112, %v3109
  %3125 = vrot.lane.b32.xlu0 %v3119, 1
  %v3126 = vpop.permute.xlu0 %3125
  %3127 = vrot.lane.b32.xlu0 %v3120, 1
  %v3128 = vpop.permute.xlu0 %3127
  %3129 = vrot.lane.b32.xlu0 %v3121, 1
  %v3130 = vpop.permute.xlu0 %3129
  %v3131 = vsel %vm947, %v3126, %v3128
  %v3132 = vsel %vm947, %v3128, %v3130
  %3135 = vst [vmem:[#allocation3 + $0x160] sm:$0xff] %v3131
  %3136 = vst [vmem:[#allocation3 + $0x168] sm:$0xff] %v3132
  %v3137 = vpack.c.bf16 %v3116, %v3113
  %v3138 = vpack.c.bf16 %v3117, %v3114
  %v3139 = vpack.c.bf16 %v3118, %v3115
  %3143 = vrot.lane.b32.xlu0 %v3137, 1
  %v3144 = vpop.permute.xlu0 %3143
  %3145 = vrot.lane.b32.xlu0 %v3138, 1
  %v3146 = vpop.permute.xlu0 %3145
  %3147 = vrot.lane.b32.xlu0 %v3139, 1
  %v3148 = vpop.permute.xlu0 %3147
  %v3149 = vsel %vm947, %v3144, %v3146
  %v3150 = vsel %vm947, %v3146, %v3148
  %3153 = vst [vmem:[#allocation3 + $0x170] sm:$0xff] %v3149
  %3154 = vst [vmem:[#allocation3 + $0x178] sm:$0xff] %v3150
  %v3155 = vld [vmem:[#allocation2 + $0x8] sm:$0xff]
  %v3156 = vld [vmem:[#allocation2 + $0x10] sm:$0xff]
  %v3157 = vld [vmem:[#allocation2 + $0x28] sm:$0xff]
  %v3158 = vld [vmem:[#allocation2 + $0x30] sm:$0xff]
  %v3159 = vld [vmem:[#allocation2 + $0x48] sm:$0xff]
  %v3160 = vld [vmem:[#allocation2 + $0x50] sm:$0xff]
  %v3161 = vld [vmem:[#allocation2 + $0x68] sm:$0xff]
  %v3162 = vld [vmem:[#allocation2 + $0x70] sm:$0xff]
  %v3163 = vpack.c.bf16 %v3157, %v3155
  %v3164 = vpack.c.bf16 %v3158, %v3156
  %3165 = vst [vmem:[#allocation3 + $0x180] sm:$0xff] %v3163
  %3166 = vst [vmem:[#allocation3 + $0x188] sm:$0xff] %v3164
  %v3167 = vpack.c.bf16 %v3161, %v3159
  %v3168 = vpack.c.bf16 %v3162, %v3160
  %3169 = vst [vmem:[#allocation3 + $0x190] sm:$0xff] %v3167
  %3170 = vst [vmem:[#allocation3 + $0x198] sm:$0xff] %v3168
  %v3171 = vld [vmem:[#allocation2 + $0x8] sm:$0xff]
  %v3172 = vld [vmem:[#allocation2 + $0x10] sm:$0xff]
  %v3173 = vld [vmem:[#allocation2 + $0x18] sm:$0xff]
  %v3174 = vld [vmem:[#allocation2 + $0x28] sm:$0xff]
  %v3175 = vld [vmem:[#allocation2 + $0x30] sm:$0xff]
  %v3176 = vld [vmem:[#allocation2 + $0x38] sm:$0xff]
  %v3177 = vld [vmem:[#allocation2 + $0x48] sm:$0xff]
  %v3178 = vld [vmem:[#allocation2 + $0x50] sm:$0xff]
  %v3179 = vld [vmem:[#allocation2 + $0x58] sm:$0xff]
  %v3180 = vld [vmem:[#allocation2 + $0x68] sm:$0xff]
  %v3181 = vld [vmem:[#allocation2 + $0x70] sm:$0xff]
  %v3182 = vld [vmem:[#allocation2 + $0x78] sm:$0xff]
  %v3183 = vld [vmem:[%s1000] ss:$8 sm:$0x3]
  %v3185 = vlaneseq
  %v3186 = vshrl.u32 %v3185, 7
  %v3187 = vsub.s32 0, %v3186
  %v3188 = vrot.slane %v3183, %v3187
  %v3189 = vlaneseq
  %v3190 = vshrl.u32 %v3189, 7
  %v3191 = vsub.s32 1, %v3190
  %v3192 = vrot.slane %v3183, %v3191
  %3193 = vrot.lane.b32.xlu0 %v3188, 1
  %v3194 = vpop.permute.xlu0 %3193
  %3195 = vrot.lane.b32.xlu0 %v3192, 1
  %v3196 = vpop.permute.xlu0 %3195
  %v3197 = vsel %vm1015, %v3194, %v3196
  %v3201 = vmul.f32 %v3171, %v3194
  %v3202 = vmul.f32 %v3172, %v3197
  %v3203 = vmul.f32 %v3173, %v3196
  %v3204 = vmul.f32 %v3174, %v3194
  %v3205 = vmul.f32 %v3175, %v3197
  %v3206 = vmul.f32 %v3176, %v3196
  %v3207 = vmul.f32 %v3177, %v3194
  %v3208 = vmul.f32 %v3178, %v3197
  %v3209 = vmul.f32 %v3179, %v3196
  %v3210 = vmul.f32 %v3180, %v3194
  %v3211 = vmul.f32 %v3181, %v3197
  %v3212 = vmul.f32 %v3182, %v3196
  %v3213 = vpack.c.bf16 %v3204, %v3201
  %v3214 = vpack.c.bf16 %v3205, %v3202
  %v3215 = vpack.c.bf16 %v3206, %v3203
  %3219 = vrot.lane.b32.xlu0 %v3213, 127
  %v3220 = vpop.permute.xlu0 %3219
  %3221 = vrot.lane.b32.xlu0 %v3214, 127
  %v3222 = vpop.permute.xlu0 %3221
  %3223 = vrot.lane.b32.xlu0 %v3215, 127
  %v3224 = vpop.permute.xlu0 %3223
  %v3225 = vsel %vm1044, %v3220, %v3222
  %v3226 = vsel %vm1044, %v3222, %v3224
  %3229 = vst [vmem:[#allocation3 + $0x1a0] sm:$0xff] %v3225
  %3230 = vst [vmem:[#allocation3 + $0x1a8] sm:$0xff] %v3226
  %v3231 = vpack.c.bf16 %v3210, %v3207
  %v3232 = vpack.c.bf16 %v3211, %v3208
  %v3233 = vpack.c.bf16 %v3212, %v3209
  %3237 = vrot.lane.b32.xlu0 %v3231, 127
  %v3238 = vpop.permute.xlu0 %3237
  %3239 = vrot.lane.b32.xlu0 %v3232, 127
  %v3240 = vpop.permute.xlu0 %3239
  %3241 = vrot.lane.b32.xlu0 %v3233, 127
  %v3242 = vpop.permute.xlu0 %3241
  %v3243 = vsel %vm1044, %v3238, %v3240
  %v3244 = vsel %vm1044, %v3240, %v3242
  %3247 = vst [vmem:[#allocation3 + $0x1b0] sm:$0xff] %v3243
  %3248 = vst [vmem:[#allocation3 + $0x1b8] sm:$0xff] %v3244
  %v3249 = vld [vmem:[#allocation2 + $0x8] sm:$0xff]
  %v3250 = vld [vmem:[#allocation2 + $0x10] sm:$0xff]
  %v3251 = vld [vmem:[#allocation2 + $0x18] sm:$0xff]
  %v3252 = vld [vmem:[#allocation2 + $0x28] sm:$0xff]
  %v3253 = vld [vmem:[#allocation2 + $0x30] sm:$0xff]
  %v3254 = vld [vmem:[#allocation2 + $0x38] sm:$0xff]
  %v3255 = vld [vmem:[#allocation2 + $0x48] sm:$0xff]
  %v3256 = vld [vmem:[#allocation2 + $0x50] sm:$0xff]
  %v3257 = vld [vmem:[#allocation2 + $0x58] sm:$0xff]
  %v3258 = vld [vmem:[#allocation2 + $0x68] sm:$0xff]
  %v3259 = vld [vmem:[#allocation2 + $0x70] sm:$0xff]
  %v3260 = vld [vmem:[#allocation2 + $0x78] sm:$0xff]
  %v3261 = vld [vmem:[%s1081] ss:$8 sm:$0x3]
  %v3263 = vlaneseq
  %v3264 = vshrl.u32 %v3263, 7
  %v3265 = vsub.s32 0, %v3264
  %v3266 = vrot.slane %v3261, %v3265
  %v3267 = vlaneseq
  %v3268 = vshrl.u32 %v3267, 7
  %v3269 = vsub.s32 1, %v3268
  %v3270 = vrot.slane %v3261, %v3269
  %3271 = vrot.lane.b32.xlu0 %v3266, 2
  %v3272 = vpop.permute.xlu0 %3271
  %3273 = vrot.lane.b32.xlu0 %v3270, 2
  %v3274 = vpop.permute.xlu0 %3273
  %v3275 = vsel %vm1096, %v3272, %v3274
  %v3279 = vmul.f32 %v3249, %v3272
  %v3280 = vmul.f32 %v3250, %v3275
  %v3281 = vmul.f32 %v3251, %v3274
  %v3282 = vmul.f32 %v3252, %v3272
  %v3283 = vmul.f32 %v3253, %v3275
  %v3284 = vmul.f32 %v3254, %v3274
  %v3285 = vmul.f32 %v3255, %v3272
  %v3286 = vmul.f32 %v3256, %v3275
  %v3287 = vmul.f32 %v3257, %v3274
  %v3288 = vmul.f32 %v3258, %v3272
  %v3289 = vmul.f32 %v3259, %v3275
  %v3290 = vmul.f32 %v3260, %v3274
  %v3291 = vpack.c.bf16 %v3282, %v3279
  %v3292 = vpack.c.bf16 %v3283, %v3280
  %v3293 = vpack.c.bf16 %v3284, %v3281
  %3297 = vrot.lane.b32.xlu0 %v3291, 126
  %v3298 = vpop.permute.xlu0 %3297
  %3299 = vrot.lane.b32.xlu0 %v3292, 126
  %v3300 = vpop.permute.xlu0 %3299
  %3301 = vrot.lane.b32.xlu0 %v3293, 126
  %v3302 = vpop.permute.xlu0 %3301
  %v3303 = vsel %vm1125, %v3298, %v3300
  %v3304 = vsel %vm1125, %v3300, %v3302
  %3307 = vst [vmem:[#allocation3 + $0x1c0] sm:$0xff] %v3303
  %3308 = vst [vmem:[#allocation3 + $0x1c8] sm:$0xff] %v3304
  %v3309 = vpack.c.bf16 %v3288, %v3285
  %v3310 = vpack.c.bf16 %v3289, %v3286
  %v3311 = vpack.c.bf16 %v3290, %v3287
  %3315 = vrot.lane.b32.xlu0 %v3309, 126
  %v3316 = vpop.permute.xlu0 %3315
  %3317 = vrot.lane.b32.xlu0 %v3310, 126
  %v3318 = vpop.permute.xlu0 %3317
  %3319 = vrot.lane.b32.xlu0 %v3311, 126
  %v3320 = vpop.permute.xlu0 %3319
  %v3321 = vsel %vm1125, %v3316, %v3318
  %v3322 = vsel %vm1125, %v3318, %v3320
  %3325 = vst [vmem:[#allocation3 + $0x1d0] sm:$0xff] %v3321
  %3326 = vst [vmem:[#allocation3 + $0x1d8] sm:$0xff] %v3322
  %v3327 = vld [vmem:[#allocation2 + $0x8] sm:$0xff]
  %v3328 = vld [vmem:[#allocation2 + $0x10] sm:$0xff]
  %v3329 = vld [vmem:[#allocation2 + $0x18] sm:$0xff]
  %v3330 = vld [vmem:[#allocation2 + $0x28] sm:$0xff]
  %v3331 = vld [vmem:[#allocation2 + $0x30] sm:$0xff]
  %v3332 = vld [vmem:[#allocation2 + $0x38] sm:$0xff]
  %v3333 = vld [vmem:[#allocation2 + $0x48] sm:$0xff]
  %v3334 = vld [vmem:[#allocation2 + $0x50] sm:$0xff]
  %v3335 = vld [vmem:[#allocation2 + $0x58] sm:$0xff]
  %v3336 = vld [vmem:[#allocation2 + $0x68] sm:$0xff]
  %v3337 = vld [vmem:[#allocation2 + $0x70] sm:$0xff]
  %v3338 = vld [vmem:[#allocation2 + $0x78] sm:$0xff]
  %v3339 = vld [vmem:[%s1162] ss:$8 sm:$0x3]
  %v3341 = vlaneseq
  %v3342 = vshrl.u32 %v3341, 7
  %v3343 = vsub.s32 0, %v3342
  %v3344 = vrot.slane %v3339, %v3343
  %v3345 = vlaneseq
  %v3346 = vshrl.u32 %v3345, 7
  %v3347 = vsub.s32 1, %v3346
  %v3348 = vrot.slane %v3339, %v3347
  %3349 = vrot.lane.b32.xlu0 %v3344, 14
  %v3350 = vpop.permute.xlu0 %3349
  %3351 = vrot.lane.b32.xlu0 %v3348, 14
  %v3352 = vpop.permute.xlu0 %3351
  %v3353 = vsel %vm1177, %v3350, %v3352
  %v3357 = vmul.f32 %v3327, %v3350
  %v3358 = vmul.f32 %v3328, %v3353
  %v3359 = vmul.f32 %v3329, %v3352
  %v3360 = vmul.f32 %v3330, %v3350
  %v3361 = vmul.f32 %v3331, %v3353
  %v3362 = vmul.f32 %v3332, %v3352
  %v3363 = vmul.f32 %v3333, %v3350
  %v3364 = vmul.f32 %v3334, %v3353
  %v3365 = vmul.f32 %v3335, %v3352
  %v3366 = vmul.f32 %v3336, %v3350
  %v3367 = vmul.f32 %v3337, %v3353
  %v3368 = vmul.f32 %v3338, %v3352
  %v3369 = vpack.c.bf16 %v3360, %v3357
  %v3370 = vpack.c.bf16 %v3361, %v3358
  %v3371 = vpack.c.bf16 %v3362, %v3359
  %3375 = vrot.lane.b32.xlu0 %v3369, 114
  %v3376 = vpop.permute.xlu0 %3375
  %3377 = vrot.lane.b32.xlu0 %v3370, 114
  %v3378 = vpop.permute.xlu0 %3377
  %3379 = vrot.lane.b32.xlu0 %v3371, 114
  %v3380 = vpop.permute.xlu0 %3379
  %v3381 = vsel %vm1206, %v3376, %v3378
  %v3382 = vsel %vm1206, %v3378, %v3380
  %3385 = vst [vmem:[#allocation3 + $0x1e0] sm:$0xff] %v3381
  %3386 = vst [vmem:[#allocation3 + $0x1e8] sm:$0xff] %v3382
  %v3387 = vpack.c.bf16 %v3366, %v3363
  %v3388 = vpack.c.bf16 %v3367, %v3364
  %v3389 = vpack.c.bf16 %v3368, %v3365
  %3393 = vrot.lane.b32.xlu0 %v3387, 114
  %v3394 = vpop.permute.xlu0 %3393
  %3395 = vrot.lane.b32.xlu0 %v3388, 114
  %v3396 = vpop.permute.xlu0 %3395
  %3397 = vrot.lane.b32.xlu0 %v3389, 114
  %v3398 = vpop.permute.xlu0 %3397
  %v3399 = vsel %vm1206, %v3394, %v3396
  %v3400 = vsel %vm1206, %v3396, %v3398
  %3403 = vst [vmem:[#allocation3 + $0x1f0] sm:$0xff] %v3399
  %3404 = vst [vmem:[#allocation3 + $0x1f8] sm:$0xff] %v3400
  %v3405 = vld [vmem:[#allocation2 + $0x8] sm:$0xff]
  %v3406 = vld [vmem:[#allocation2 + $0x10] sm:$0xff]
  %v3407 = vld [vmem:[#allocation2 + $0x18] sm:$0xff]
  %v3408 = vld [vmem:[#allocation2 + $0x28] sm:$0xff]
  %v3409 = vld [vmem:[#allocation2 + $0x30] sm:$0xff]
  %v3410 = vld [vmem:[#allocation2 + $0x38] sm:$0xff]
  %v3411 = vld [vmem:[#allocation2 + $0x48] sm:$0xff]
  %v3412 = vld [vmem:[#allocation2 + $0x50] sm:$0xff]
  %v3413 = vld [vmem:[#allocation2 + $0x58] sm:$0xff]
  %v3414 = vld [vmem:[#allocation2 + $0x68] sm:$0xff]
  %v3415 = vld [vmem:[#allocation2 + $0x70] sm:$0xff]
  %v3416 = vld [vmem:[#allocation2 + $0x78] sm:$0xff]
  %v3417 = vld [vmem:[%s1243] ss:$8 sm:$0x3]
  %v3419 = vlaneseq
  %v3420 = vshrl.u32 %v3419, 7
  %v3421 = vsub.s32 0, %v3420
  %v3422 = vrot.slane %v3417, %v3421
  %v3423 = vlaneseq
  %v3424 = vshrl.u32 %v3423, 7
  %v3425 = vsub.s32 1, %v3424
  %v3426 = vrot.slane %v3417, %v3425
  %3427 = vrot.lane.b32.xlu0 %v3422, 15
  %v3428 = vpop.permute.xlu0 %3427
  %3429 = vrot.lane.b32.xlu0 %v3426, 15
  %v3430 = vpop.permute.xlu0 %3429
  %v3431 = vsel %vm1258, %v3428, %v3430
  %v3435 = vmul.f32 %v3405, %v3428
  %v3436 = vmul.f32 %v3406, %v3431
  %v3437 = vmul.f32 %v3407, %v3430
  %v3438 = vmul.f32 %v3408, %v3428
  %v3439 = vmul.f32 %v3409, %v3431
  %v3440 = vmul.f32 %v3410, %v3430
  %v3441 = vmul.f32 %v3411, %v3428
  %v3442 = vmul.f32 %v3412, %v3431
  %v3443 = vmul.f32 %v3413, %v3430
  %v3444 = vmul.f32 %v3414, %v3428
  %v3445 = vmul.f32 %v3415, %v3431
  %v3446 = vmul.f32 %v3416, %v3430
  %v3447 = vpack.c.bf16 %v3438, %v3435
  %v3448 = vpack.c.bf16 %v3439, %v3436
  %v3449 = vpack.c.bf16 %v3440, %v3437
  %3453 = vrot.lane.b32.xlu0 %v3447, 113
  %v3454 = vpop.permute.xlu0 %3453
  %3455 = vrot.lane.b32.xlu0 %v3448, 113
  %v3456 = vpop.permute.xlu0 %3455
  %3457 = vrot.lane.b32.xlu0 %v3449, 113
  %v3458 = vpop.permute.xlu0 %3457
  %v3459 = vsel %vm1287, %v3454, %v3456
  %v3460 = vsel %vm1287, %v3456, %v3458
  %3463 = vst [vmem:[#allocation3 + $0x200] sm:$0xff] %v3459
  %3464 = vst [vmem:[#allocation3 + $0x208] sm:$0xff] %v3460
  %v3465 = vpack.c.bf16 %v3444, %v3441
  %v3466 = vpack.c.bf16 %v3445, %v3442
  %v3467 = vpack.c.bf16 %v3446, %v3443
  %3471 = vrot.lane.b32.xlu0 %v3465, 113
  %v3472 = vpop.permute.xlu0 %3471
  %3473 = vrot.lane.b32.xlu0 %v3466, 113
  %v3474 = vpop.permute.xlu0 %3473
  %3475 = vrot.lane.b32.xlu0 %v3467, 113
  %v3476 = vpop.permute.xlu0 %3475
  %v3477 = vsel %vm1287, %v3472, %v3474
  %v3478 = vsel %vm1287, %v3474, %v3476
  %3481 = vst [vmem:[#allocation3 + $0x210] sm:$0xff] %v3477
  %3482 = vst [vmem:[#allocation3 + $0x218] sm:$0xff] %v3478
  %v3483 = vld [vmem:[#allocation2 + $0x8] sm:$0xff]
  %v3484 = vld [vmem:[#allocation2 + $0x10] sm:$0xff]
  %v3485 = vld [vmem:[#allocation2 + $0x18] sm:$0xff]
  %v3486 = vld [vmem:[#allocation2 + $0x28] sm:$0xff]
  %v3487 = vld [vmem:[#allocation2 + $0x30] sm:$0xff]
  %v3488 = vld [vmem:[#allocation2 + $0x38] sm:$0xff]
  %v3489 = vld [vmem:[#allocation2 + $0x48] sm:$0xff]
  %v3490 = vld [vmem:[#allocation2 + $0x50] sm:$0xff]
  %v3491 = vld [vmem:[#allocation2 + $0x58] sm:$0xff]
  %v3492 = vld [vmem:[#allocation2 + $0x68] sm:$0xff]
  %v3493 = vld [vmem:[#allocation2 + $0x70] sm:$0xff]
  %v3494 = vld [vmem:[#allocation2 + $0x78] sm:$0xff]
  %v3495 = vpack.c.bf16 %v3486, %v3483
  %v3496 = vpack.c.bf16 %v3487, %v3484
  %v3497 = vpack.c.bf16 %v3488, %v3485
  %3501 = vrot.lane.b32.xlu0 %v3495, 112
  %v3502 = vpop.permute.xlu0 %3501
  %3503 = vrot.lane.b32.xlu0 %v3496, 112
  %v3504 = vpop.permute.xlu0 %3503
  %3505 = vrot.lane.b32.xlu0 %v3497, 112
  %v3506 = vpop.permute.xlu0 %3505
  %v3507 = vsel %vm1336, %v3502, %v3504
  %v3508 = vsel %vm1336, %v3504, %v3506
  %3511 = vst [vmem:[#allocation3 + $0x220] sm:$0xff] %v3507
  %3512 = vst [vmem:[#allocation3 + $0x228] sm:$0xff] %v3508
  %v3513 = vpack.c.bf16 %v3492, %v3489
  %v3514 = vpack.c.bf16 %v3493, %v3490
  %v3515 = vpack.c.bf16 %v3494, %v3491
  %3519 = vrot.lane.b32.xlu0 %v3513, 112
  %v3520 = vpop.permute.xlu0 %3519
  %3521 = vrot.lane.b32.xlu0 %v3514, 112
  %v3522 = vpop.permute.xlu0 %3521
  %3523 = vrot.lane.b32.xlu0 %v3515, 112
  %v3524 = vpop.permute.xlu0 %3523
  %v3525 = vsel %vm1336, %v3520, %v3522
  %v3526 = vsel %vm1336, %v3522, %v3524
  %3529 = vst [vmem:[#allocation3 + $0x230] sm:$0xff] %v3525
  %3530 = vst [vmem:[#allocation3 + $0x238] sm:$0xff] %v3526
  %v3531 = vld [vmem:[#allocation2 + $0x8] sm:$0xff]
  %v3532 = vld [vmem:[#allocation2 + $0x10] sm:$0xff]
  %v3533 = vld [vmem:[#allocation2 + $0x18] sm:$0xff]
  %v3534 = vld [vmem:[#allocation2 + $0x28] sm:$0xff]
  %v3535 = vld [vmem:[#allocation2 + $0x30] sm:$0xff]
  %v3536 = vld [vmem:[#allocation2 + $0x38] sm:$0xff]
  %v3537 = vld [vmem:[#allocation2 + $0x48] sm:$0xff]
  %v3538 = vld [vmem:[#allocation2 + $0x50] sm:$0xff]
  %v3539 = vld [vmem:[#allocation2 + $0x58] sm:$0xff]
  %v3540 = vld [vmem:[#allocation2 + $0x68] sm:$0xff]
  %v3541 = vld [vmem:[#allocation2 + $0x70] sm:$0xff]
  %v3542 = vld [vmem:[#allocation2 + $0x78] sm:$0xff]
  %v3543 = vld [vmem:[%s1373] ss:$8 sm:$0x3]
  %v3545 = vlaneseq
  %v3546 = vshrl.u32 %v3545, 7
  %v3547 = vsub.s32 0, %v3546
  %v3548 = vrot.slane %v3543, %v3547
  %v3549 = vlaneseq
  %v3550 = vshrl.u32 %v3549, 7
  %v3551 = vsub.s32 1, %v3550
  %v3552 = vrot.slane %v3543, %v3551
  %3553 = vrot.lane.b32.xlu0 %v3548, 17
  %v3554 = vpop.permute.xlu0 %3553
  %3555 = vrot.lane.b32.xlu0 %v3552, 17
  %v3556 = vpop.permute.xlu0 %3555
  %v3557 = vsel %vm1388, %v3554, %v3556
  %v3561 = vmul.f32 %v3531, %v3554
  %v3562 = vmul.f32 %v3532, %v3557
  %v3563 = vmul.f32 %v3533, %v3556
  %v3564 = vmul.f32 %v3534, %v3554
  %v3565 = vmul.f32 %v3535, %v3557
  %v3566 = vmul.f32 %v3536, %v3556
  %v3567 = vmul.f32 %v3537, %v3554
  %v3568 = vmul.f32 %v3538, %v3557
  %v3569 = vmul.f32 %v3539, %v3556
  %v3570 = vmul.f32 %v3540, %v3554
  %v3571 = vmul.f32 %v3541, %v3557
  %v3572 = vmul.f32 %v3542, %v3556
  %v3573 = vpack.c.bf16 %v3564, %v3561
  %v3574 = vpack.c.bf16 %v3565, %v3562
  %v3575 = vpack.c.bf16 %v3566, %v3563
  %3579 = vrot.lane.b32.xlu0 %v3573, 111
  %v3580 = vpop.permute.xlu0 %3579
  %3581 = vrot.lane.b32.xlu0 %v3574, 111
  %v3582 = vpop.permute.xlu0 %3581
  %3583 = vrot.lane.b32.xlu0 %v3575, 111
  %v3584 = vpop.permute.xlu0 %3583
  %v3585 = vsel %vm1417, %v3580, %v3582
  %v3586 = vsel %vm1417, %v3582, %v3584
  %3589 = vst [vmem:[#allocation3 + $0x240] sm:$0xff] %v3585
  %3590 = vst [vmem:[#allocation3 + $0x248] sm:$0xff] %v3586
  %v3591 = vpack.c.bf16 %v3570, %v3567
  %v3592 = vpack.c.bf16 %v3571, %v3568
  %v3593 = vpack.c.bf16 %v3572, %v3569
  %3597 = vrot.lane.b32.xlu0 %v3591, 111
  %v3598 = vpop.permute.xlu0 %3597
  %3599 = vrot.lane.b32.xlu0 %v3592, 111
  %v3600 = vpop.permute.xlu0 %3599
  %3601 = vrot.lane.b32.xlu0 %v3593, 111
  %v3602 = vpop.permute.xlu0 %3601
  %v3603 = vsel %vm1417, %v3598, %v3600
  %v3604 = vsel %vm1417, %v3600, %v3602
  %3607 = vst [vmem:[#allocation3 + $0x250] sm:$0xff] %v3603
  %3608 = vst [vmem:[#allocation3 + $0x258] sm:$0xff] %v3604
  %v3609 = vld [vmem:[#allocation2 + $0x8] sm:$0xff]
  %v3610 = vld [vmem:[#allocation2 + $0x10] sm:$0xff]
  %v3611 = vld [vmem:[#allocation2 + $0x18] sm:$0xff]
  %v3612 = vld [vmem:[#allocation2 + $0x28] sm:$0xff]
  %v3613 = vld [vmem:[#allocation2 + $0x30] sm:$0xff]
  %v3614 = vld [vmem:[#allocation2 + $0x38] sm:$0xff]
  %v3615 = vld [vmem:[#allocation2 + $0x48] sm:$0xff]
  %v3616 = vld [vmem:[#allocation2 + $0x50] sm:$0xff]
  %v3617 = vld [vmem:[#allocation2 + $0x58] sm:$0xff]
  %v3618 = vld [vmem:[#allocation2 + $0x68] sm:$0xff]
  %v3619 = vld [vmem:[#allocation2 + $0x70] sm:$0xff]
  %v3620 = vld [vmem:[#allocation2 + $0x78] sm:$0xff]
  %v3621 = vld [vmem:[%s1454] ss:$8 sm:$0x3]
  %v3623 = vlaneseq
  %v3624 = vshrl.u32 %v3623, 7
  %v3625 = vsub.s32 0, %v3624
  %v3626 = vrot.slane %v3621, %v3625
  %v3627 = vlaneseq
  %v3628 = vshrl.u32 %v3627, 7
  %v3629 = vsub.s32 1, %v3628
  %v3630 = vrot.slane %v3621, %v3629
  %3631 = vrot.lane.b32.xlu0 %v3626, 18
  %v3632 = vpop.permute.xlu0 %3631
  %3633 = vrot.lane.b32.xlu0 %v3630, 18
  %v3634 = vpop.permute.xlu0 %3633
  %v3635 = vsel %vm1469, %v3632, %v3634
  %v3639 = vmul.f32 %v3609, %v3632
  %v3640 = vmul.f32 %v3610, %v3635
  %v3641 = vmul.f32 %v3611, %v3634
  %v3642 = vmul.f32 %v3612, %v3632
  %v3643 = vmul.f32 %v3613, %v3635
  %v3644 = vmul.f32 %v3614, %v3634
  %v3645 = vmul.f32 %v3615, %v3632
  %v3646 = vmul.f32 %v3616, %v3635
  %v3647 = vmul.f32 %v3617, %v3634
  %v3648 = vmul.f32 %v3618, %v3632
  %v3649 = vmul.f32 %v3619, %v3635
  %v3650 = vmul.f32 %v3620, %v3634
  %v3651 = vpack.c.bf16 %v3642, %v3639
  %v3652 = vpack.c.bf16 %v3643, %v3640
  %v3653 = vpack.c.bf16 %v3644, %v3641
  %3657 = vrot.lane.b32.xlu0 %v3651, 110
  %v3658 = vpop.permute.xlu0 %3657
  %3659 = vrot.lane.b32.xlu0 %v3652, 110
  %v3660 = vpop.permute.xlu0 %3659
  %3661 = vrot.lane.b32.xlu0 %v3653, 110
  %v3662 = vpop.permute.xlu0 %3661
  %v3663 = vsel %vm1498, %v3658, %v3660
  %v3664 = vsel %vm1498, %v3660, %v3662
  %3667 = vst [vmem:[#allocation3 + $0x260] sm:$0xff] %v3663
  %3668 = vst [vmem:[#allocation3 + $0x268] sm:$0xff] %v3664
  %v3669 = vpack.c.bf16 %v3648, %v3645
  %v3670 = vpack.c.bf16 %v3649, %v3646
  %v3671 = vpack.c.bf16 %v3650, %v3647
  %3675 = vrot.lane.b32.xlu0 %v3669, 110
  %v3676 = vpop.permute.xlu0 %3675
  %3677 = vrot.lane.b32.xlu0 %v3670, 110
  %v3678 = vpop.permute.xlu0 %3677
  %3679 = vrot.lane.b32.xlu0 %v3671, 110
  %v3680 = vpop.permute.xlu0 %3679
  %v3681 = vsel %vm1498, %v3676, %v3678
  %v3682 = vsel %vm1498, %v3678, %v3680
  %3685 = vst [vmem:[#allocation3 + $0x270] sm:$0xff] %v3681
  %3686 = vst [vmem:[#allocation3 + $0x278] sm:$0xff] %v3682
  %v3687 = vld [vmem:[#allocation2 + $0x8] sm:$0xff]
  %v3688 = vld [vmem:[#allocation2 + $0x10] sm:$0xff]
  %v3689 = vld [vmem:[#allocation2 + $0x18] sm:$0xff]
  %v3690 = vld [vmem:[#allocation2 + $0x28] sm:$0xff]
  %v3691 = vld [vmem:[#allocation2 + $0x30] sm:$0xff]
  %v3692 = vld [vmem:[#allocation2 + $0x38] sm:$0xff]
  %v3693 = vld [vmem:[#allocation2 + $0x48] sm:$0xff]
  %v3694 = vld [vmem:[#allocation2 + $0x50] sm:$0xff]
  %v3695 = vld [vmem:[#allocation2 + $0x58] sm:$0xff]
  %v3696 = vld [vmem:[#allocation2 + $0x68] sm:$0xff]
  %v3697 = vld [vmem:[#allocation2 + $0x70] sm:$0xff]
  %v3698 = vld [vmem:[#allocation2 + $0x78] sm:$0xff]
  %v3699 = vld [vmem:[%s1535] ss:$8 sm:$0x3]
  %v3701 = vlaneseq
  %v3702 = vshrl.u32 %v3701, 7
  %v3703 = vsub.s32 0, %v3702
  %v3704 = vrot.slane %v3699, %v3703
  %v3705 = vlaneseq
  %v3706 = vshrl.u32 %v3705, 7
  %v3707 = vsub.s32 1, %v3706
  %v3708 = vrot.slane %v3699, %v3707
  %3709 = vrot.lane.b32.xlu0 %v3704, 30
  %v3710 = vpop.permute.xlu0 %3709
  %3711 = vrot.lane.b32.xlu0 %v3708, 30
  %v3712 = vpop.permute.xlu0 %3711
  %v3713 = vsel %vm1550, %v3710, %v3712
  %v3717 = vmul.f32 %v3687, %v3710
  %v3718 = vmul.f32 %v3688, %v3713
  %v3719 = vmul.f32 %v3689, %v3712
  %v3720 = vmul.f32 %v3690, %v3710
  %v3721 = vmul.f32 %v3691, %v3713
  %v3722 = vmul.f32 %v3692, %v3712
  %v3723 = vmul.f32 %v3693, %v3710
  %v3724 = vmul.f32 %v3694, %v3713
  %v3725 = vmul.f32 %v3695, %v3712
  %v3726 = vmul.f32 %v3696, %v3710
  %v3727 = vmul.f32 %v3697, %v3713
  %v3728 = vmul.f32 %v3698, %v3712
  %v3729 = vpack.c.bf16 %v3720, %v3717
  %v3730 = vpack.c.bf16 %v3721, %v3718
  %v3731 = vpack.c.bf16 %v3722, %v3719
  %3735 = vrot.lane.b32.xlu0 %v3729, 98
  %v3736 = vpop.permute.xlu0 %3735
  %3737 = vrot.lane.b32.xlu0 %v3730, 98
  %v3738 = vpop.permute.xlu0 %3737
  %3739 = vrot.lane.b32.xlu0 %v3731, 98
  %v3740 = vpop.permute.xlu0 %3739
  %v3741 = vsel %vm1579, %v3736, %v3738
  %v3742 = vsel %vm1579, %v3738, %v3740
  %3745 = vst [vmem:[#allocation3 + $0x280] sm:$0xff] %v3741
  %3746 = vst [vmem:[#allocation3 + $0x288] sm:$0xff] %v3742
  %v3747 = vpack.c.bf16 %v3726, %v3723
  %v3748 = vpack.c.bf16 %v3727, %v3724
  %v3749 = vpack.c.bf16 %v3728, %v3725
  %3753 = vrot.lane.b32.xlu0 %v3747, 98
  %v3754 = vpop.permute.xlu0 %3753
  %3755 = vrot.lane.b32.xlu0 %v3748, 98
  %v3756 = vpop.permute.xlu0 %3755
  %3757 = vrot.lane.b32.xlu0 %v3749, 98
  %v3758 = vpop.permute.xlu0 %3757
  %v3759 = vsel %vm1579, %v3754, %v3756
  %v3760 = vsel %vm1579, %v3756, %v3758
  %3763 = vst [vmem:[#allocation3 + $0x290] sm:$0xff] %v3759
  %3764 = vst [vmem:[#allocation3 + $0x298] sm:$0xff] %v3760
  %v3765 = vld [vmem:[#allocation2 + $0x8] sm:$0xff]
  %v3766 = vld [vmem:[#allocation2 + $0x10] sm:$0xff]
  %v3767 = vld [vmem:[#allocation2 + $0x18] sm:$0xff]
  %v3768 = vld [vmem:[#allocation2 + $0x28] sm:$0xff]
  %v3769 = vld [vmem:[#allocation2 + $0x30] sm:$0xff]
  %v3770 = vld [vmem:[#allocation2 + $0x38] sm:$0xff]
  %v3771 = vld [vmem:[#allocation2 + $0x48] sm:$0xff]
  %v3772 = vld [vmem:[#allocation2 + $0x50] sm:$0xff]
  %v3773 = vld [vmem:[#allocation2 + $0x58] sm:$0xff]
  %v3774 = vld [vmem:[#allocation2 + $0x68] sm:$0xff]
  %v3775 = vld [vmem:[#allocation2 + $0x70] sm:$0xff]
  %v3776 = vld [vmem:[#allocation2 + $0x78] sm:$0xff]
  %v3777 = vld [vmem:[%s1616] ss:$8 sm:$0x3]
  %v3779 = vlaneseq
  %v3780 = vshrl.u32 %v3779, 7
  %v3781 = vsub.s32 0, %v3780
  %v3782 = vrot.slane %v3777, %v3781
  %v3783 = vlaneseq
  %v3784 = vshrl.u32 %v3783, 7
  %v3785 = vsub.s32 1, %v3784
  %v3786 = vrot.slane %v3777, %v3785
  %3787 = vrot.lane.b32.xlu0 %v3782, 31
  %v3788 = vpop.permute.xlu0 %3787
  %3789 = vrot.lane.b32.xlu0 %v3786, 31
  %v3790 = vpop.permute.xlu0 %3789
  %v3791 = vsel %vm1631, %v3788, %v3790
  %v3795 = vmul.f32 %v3765, %v3788
  %v3796 = vmul.f32 %v3766, %v3791
  %v3797 = vmul.f32 %v3767, %v3790
  %v3798 = vmul.f32 %v3768, %v3788
  %v3799 = vmul.f32 %v3769, %v3791
  %v3800 = vmul.f32 %v3770, %v3790
  %v3801 = vmul.f32 %v3771, %v3788
  %v3802 = vmul.f32 %v3772, %v3791
  %v3803 = vmul.f32 %v3773, %v3790
  %v3804 = vmul.f32 %v3774, %v3788
  %v3805 = vmul.f32 %v3775, %v3791
  %v3806 = vmul.f32 %v3776, %v3790
  %v3807 = vpack.c.bf16 %v3798, %v3795
  %v3808 = vpack.c.bf16 %v3799, %v3796
  %v3809 = vpack.c.bf16 %v3800, %v3797
  %3813 = vrot.lane.b32.xlu0 %v3807, 97
  %v3814 = vpop.permute.xlu0 %3813
  %3815 = vrot.lane.b32.xlu0 %v3808, 97
  %v3816 = vpop.permute.xlu0 %3815
  %3817 = vrot.lane.b32.xlu0 %v3809, 97
  %v3818 = vpop.permute.xlu0 %3817
  %v3819 = vsel %vm1660, %v3814, %v3816
  %v3820 = vsel %vm1660, %v3816, %v3818
  %3823 = vst [vmem:[#allocation3 + $0x2a0] sm:$0xff] %v3819
  %3824 = vst [vmem:[#allocation3 + $0x2a8] sm:$0xff] %v3820
  %v3825 = vpack.c.bf16 %v3804, %v3801
  %v3826 = vpack.c.bf16 %v3805, %v3802
  %v3827 = vpack.c.bf16 %v3806, %v3803
  %3831 = vrot.lane.b32.xlu0 %v3825, 97
  %v3832 = vpop.permute.xlu0 %3831
  %3833 = vrot.lane.b32.xlu0 %v3826, 97
  %v3834 = vpop.permute.xlu0 %3833
  %3835 = vrot.lane.b32.xlu0 %v3827, 97
  %v3836 = vpop.permute.xlu0 %3835
  %v3837 = vsel %vm1660, %v3832, %v3834
  %v3838 = vsel %vm1660, %v3834, %v3836
  %3841 = vst [vmem:[#allocation3 + $0x2b0] sm:$0xff] %v3837
  %3842 = vst [vmem:[#allocation3 + $0x2b8] sm:$0xff] %v3838
  %v3843 = vld [vmem:[#allocation2 + $0x8] sm:$0xff]
  %v3844 = vld [vmem:[#allocation2 + $0x10] sm:$0xff]
  %v3845 = vld [vmem:[#allocation2 + $0x18] sm:$0xff]
  %v3846 = vld [vmem:[#allocation2 + $0x28] sm:$0xff]
  %v3847 = vld [vmem:[#allocation2 + $0x30] sm:$0xff]
  %v3848 = vld [vmem:[#allocation2 + $0x38] sm:$0xff]
  %v3849 = vld [vmem:[#allocation2 + $0x48] sm:$0xff]
  %v3850 = vld [vmem:[#allocation2 + $0x50] sm:$0xff]
  %v3851 = vld [vmem:[#allocation2 + $0x58] sm:$0xff]
  %v3852 = vld [vmem:[#allocation2 + $0x68] sm:$0xff]
  %v3853 = vld [vmem:[#allocation2 + $0x70] sm:$0xff]
  %v3854 = vld [vmem:[#allocation2 + $0x78] sm:$0xff]
  %v3855 = vpack.c.bf16 %v3846, %v3843
  %v3856 = vpack.c.bf16 %v3847, %v3844
  %v3857 = vpack.c.bf16 %v3848, %v3845
  %3861 = vrot.lane.b32.xlu0 %v3855, 96
  %v3862 = vpop.permute.xlu0 %3861
  %3863 = vrot.lane.b32.xlu0 %v3856, 96
  %v3864 = vpop.permute.xlu0 %3863
  %3865 = vrot.lane.b32.xlu0 %v3857, 96
  %v3866 = vpop.permute.xlu0 %3865
  %v3867 = vsel %vm1709, %v3862, %v3864
  %v3868 = vsel %vm1709, %v3864, %v3866
  %3871 = vst [vmem:[#allocation3 + $0x2c0] sm:$0xff] %v3867
  %3872 = vst [vmem:[#allocation3 + $0x2c8] sm:$0xff] %v3868
  %v3873 = vpack.c.bf16 %v3852, %v3849
  %v3874 = vpack.c.bf16 %v3853, %v3850
  %v3875 = vpack.c.bf16 %v3854, %v3851
  %3879 = vrot.lane.b32.xlu0 %v3873, 96
  %v3880 = vpop.permute.xlu0 %3879
  %3881 = vrot.lane.b32.xlu0 %v3874, 96
  %v3882 = vpop.permute.xlu0 %3881
  %3883 = vrot.lane.b32.xlu0 %v3875, 96
  %v3884 = vpop.permute.xlu0 %3883
  %v3885 = vsel %vm1709, %v3880, %v3882
  %v3886 = vsel %vm1709, %v3882, %v3884
  %3889 = vst [vmem:[#allocation3 + $0x2d0] sm:$0xff] %v3885
  %3890 = vst [vmem:[#allocation3 + $0x2d8] sm:$0xff] %v3886
  %v3891 = vld [vmem:[#allocation2 + $0x8] sm:$0xff]
  %v3892 = vld [vmem:[#allocation2 + $0x10] sm:$0xff]
  %v3893 = vld [vmem:[#allocation2 + $0x18] sm:$0xff]
  %v3894 = vld [vmem:[#allocation2 + $0x28] sm:$0xff]
  %v3895 = vld [vmem:[#allocation2 + $0x30] sm:$0xff]
  %v3896 = vld [vmem:[#allocation2 + $0x38] sm:$0xff]
  %v3897 = vld [vmem:[#allocation2 + $0x48] sm:$0xff]
  %v3898 = vld [vmem:[#allocation2 + $0x50] sm:$0xff]
  %v3899 = vld [vmem:[#allocation2 + $0x58] sm:$0xff]
  %v3900 = vld [vmem:[#allocation2 + $0x68] sm:$0xff]
  %v3901 = vld [vmem:[#allocation2 + $0x70] sm:$0xff]
  %v3902 = vld [vmem:[#allocation2 + $0x78] sm:$0xff]
  %v3903 = vld [vmem:[%s1746] ss:$8 sm:$0x3]
  %v3905 = vlaneseq
  %v3906 = vshrl.u32 %v3905, 7
  %v3907 = vsub.s32 0, %v3906
  %v3908 = vrot.slane %v3903, %v3907
  %v3909 = vlaneseq
  %v3910 = vshrl.u32 %v3909, 7
  %v3911 = vsub.s32 1, %v3910
  %v3912 = vrot.slane %v3903, %v3911
  %3913 = vrot.lane.b32.xlu0 %v3908, 33
  %v3914 = vpop.permute.xlu0 %3913
  %3915 = vrot.lane.b32.xlu0 %v3912, 33
  %v3916 = vpop.permute.xlu0 %3915
  %v3917 = vsel %vm1761, %v3914, %v3916
  %v3921 = vmul.f32 %v3891, %v3914
  %v3922 = vmul.f32 %v3892, %v3917
  %v3923 = vmul.f32 %v3893, %v3916
  %v3924 = vmul.f32 %v3894, %v3914
  %v3925 = vmul.f32 %v3895, %v3917
  %v3926 = vmul.f32 %v3896, %v3916
  %v3927 = vmul.f32 %v3897, %v3914
  %v3928 = vmul.f32 %v3898, %v3917
  %v3929 = vmul.f32 %v3899, %v3916
  %v3930 = vmul.f32 %v3900, %v3914
  %v3931 = vmul.f32 %v3901, %v3917
  %v3932 = vmul.f32 %v3902, %v3916
  %v3933 = vpack.c.bf16 %v3924, %v3921
  %v3934 = vpack.c.bf16 %v3925, %v3922
  %v3935 = vpack.c.bf16 %v3926, %v3923
  %3939 = vrot.lane.b32.xlu0 %v3933, 95
  %v3940 = vpop.permute.xlu0 %3939
  %3941 = vrot.lane.b32.xlu0 %v3934, 95
  %v3942 = vpop.permute.xlu0 %3941
  %3943 = vrot.lane.b32.xlu0 %v3935, 95
  %v3944 = vpop.permute.xlu0 %3943
  %v3945 = vsel %vm1790, %v3940, %v3942
  %v3946 = vsel %vm1790, %v3942, %v3944
  %3949 = vst [vmem:[#allocation3 + $0x2e0] sm:$0xff] %v3945
  %3950 = vst [vmem:[#allocation3 + $0x2e8] sm:$0xff] %v3946
  %v3951 = vpack.c.bf16 %v3930, %v3927
  %v3952 = vpack.c.bf16 %v3931, %v3928
  %v3953 = vpack.c.bf16 %v3932, %v3929
  %3957 = vrot.lane.b32.xlu0 %v3951, 95
  %v3958 = vpop.permute.xlu0 %3957
  %3959 = vrot.lane.b32.xlu0 %v3952, 95
  %v3960 = vpop.permute.xlu0 %3959
  %3961 = vrot.lane.b32.xlu0 %v3953, 95
  %v3962 = vpop.permute.xlu0 %3961
  %v3963 = vsel %vm1790, %v3958, %v3960
  %v3964 = vsel %vm1790, %v3960, %v3962
  %3967 = vst [vmem:[#allocation3 + $0x2f0] sm:$0xff] %v3963
  %3968 = vst [vmem:[#allocation3 + $0x2f8] sm:$0xff] %v3964
  %v3969 = vld [vmem:[#allocation2 + $0x8] sm:$0xff]
  %v3970 = vld [vmem:[#allocation2 + $0x10] sm:$0xff]
  %v3971 = vld [vmem:[#allocation2 + $0x18] sm:$0xff]
  %v3972 = vld [vmem:[#allocation2 + $0x28] sm:$0xff]
  %v3973 = vld [vmem:[#allocation2 + $0x30] sm:$0xff]
  %v3974 = vld [vmem:[#allocation2 + $0x38] sm:$0xff]
  %v3975 = vld [vmem:[#allocation2 + $0x48] sm:$0xff]
  %v3976 = vld [vmem:[#allocation2 + $0x50] sm:$0xff]
  %v3977 = vld [vmem:[#allocation2 + $0x58] sm:$0xff]
  %v3978 = vld [vmem:[#allocation2 + $0x68] sm:$0xff]
  %v3979 = vld [vmem:[#allocation2 + $0x70] sm:$0xff]
  %v3980 = vld [vmem:[#allocation2 + $0x78] sm:$0xff]
  %v3981 = vld [vmem:[%s1827] ss:$8 sm:$0x3]
  %v3983 = vlaneseq
  %v3984 = vshrl.u32 %v3983, 7
  %v3985 = vsub.s32 0, %v3984
  %v3986 = vrot.slane %v3981, %v3985
  %v3987 = vlaneseq
  %v3988 = vshrl.u32 %v3987, 7
  %v3989 = vsub.s32 1, %v3988
  %v3990 = vrot.slane %v3981, %v3989
  %3991 = vrot.lane.b32.xlu0 %v3986, 34
  %v3992 = vpop.permute.xlu0 %3991
  %3993 = vrot.lane.b32.xlu0 %v3990, 34
  %v3994 = vpop.permute.xlu0 %3993
  %v3995 = vsel %vm1842, %v3992, %v3994
  %v3999 = vmul.f32 %v3969, %v3992
  %v4000 = vmul.f32 %v3970, %v3995
  %v4001 = vmul.f32 %v3971, %v3994
  %v4002 = vmul.f32 %v3972, %v3992
  %v4003 = vmul.f32 %v3973, %v3995
  %v4004 = vmul.f32 %v3974, %v3994
  %v4005 = vmul.f32 %v3975, %v3992
  %v4006 = vmul.f32 %v3976, %v3995
  %v4007 = vmul.f32 %v3977, %v3994
  %v4008 = vmul.f32 %v3978, %v3992
  %v4009 = vmul.f32 %v3979, %v3995
  %v4010 = vmul.f32 %v3980, %v3994
  %v4011 = vpack.c.bf16 %v4002, %v3999
  %v4012 = vpack.c.bf16 %v4003, %v4000
  %v4013 = vpack.c.bf16 %v4004, %v4001
  %4017 = vrot.lane.b32.xlu0 %v4011, 94
  %v4018 = vpop.permute.xlu0 %4017
  %4019 = vrot.lane.b32.xlu0 %v4012, 94
  %v4020 = vpop.permute.xlu0 %4019
  %4021 = vrot.lane.b32.xlu0 %v4013, 94
  %v4022 = vpop.permute.xlu0 %4021
  %v4023 = vsel %vm1871, %v4018, %v4020
  %v4024 = vsel %vm1871, %v4020, %v4022
  %4027 = vst [vmem:[#allocation3 + $0x300] sm:$0xff] %v4023
  %4028 = vst [vmem:[#allocation3 + $0x308] sm:$0xff] %v4024
  %v4029 = vpack.c.bf16 %v4008, %v4005
  %v4030 = vpack.c.bf16 %v4009, %v4006
  %v4031 = vpack.c.bf16 %v4010, %v4007
  %4035 = vrot.lane.b32.xlu0 %v4029, 94
  %v4036 = vpop.permute.xlu0 %4035
  %4037 = vrot.lane.b32.xlu0 %v4030, 94
  %v4038 = vpop.permute.xlu0 %4037
  %4039 = vrot.lane.b32.xlu0 %v4031, 94
  %v4040 = vpop.permute.xlu0 %4039
  %v4041 = vsel %vm1871, %v4036, %v4038
  %v4042 = vsel %vm1871, %v4038, %v4040
  %4045 = vst [vmem:[#allocation3 + $0x310] sm:$0xff] %v4041
  %4046 = vst [vmem:[#allocation3 + $0x318] sm:$0xff] %v4042
  %v4047 = vld [vmem:[%s5] sm:$0xff]
  %v4048 = vld [vmem:[%s5 + $0x8] sm:$0xff]
  %v4049 = vld [vmem:[#allocation3] sm:$0xff]
  %v4050 = vld [vmem:[#allocation3 + $0x8] sm:$0xff]
  %v4051 = vld [vmem:[#allocation3 + $0x10] sm:$0xff]
  %v4052 = vld [vmem:[#allocation3 + $0x18] sm:$0xff]
  %v4053 = vld [vmem:[#allocation3 + $0x20] sm:$0xff]
  %v4054 = vld [vmem:[#allocation3 + $0x28] sm:$0xff]
  %v4055 = vld [vmem:[#allocation3 + $0x30] sm:$0xff]
  %v4056 = vld [vmem:[#allocation3 + $0x38] sm:$0xff]
  %v4057 = vld [vmem:[#allocation3 + $0x40] sm:$0xff]
  %v4058 = vld [vmem:[#allocation3 + $0x48] sm:$0xff]
  %v4059 = vld [vmem:[#allocation3 + $0x50] sm:$0xff]
  %v4060 = vld [vmem:[#allocation3 + $0x58] sm:$0xff]
  %v4061 = vld [vmem:[#allocation3 + $0x60] sm:$0xff]
  %v4062 = vld [vmem:[#allocation3 + $0x68] sm:$0xff]
  %v4063 = vld [vmem:[#allocation3 + $0x70] sm:$0xff]
  %v4064 = vld [vmem:[#allocation3 + $0x78] sm:$0xff]
  %v4065 = vld [vmem:[#allocation3 + $0x80] sm:$0xff]
  %v4066 = vld [vmem:[#allocation3 + $0x88] sm:$0xff]
  %v4067 = vld [vmem:[#allocation3 + $0x90] sm:$0xff]
  %v4068 = vld [vmem:[#allocation3 + $0x98] sm:$0xff]
  %v4069 = vld [vmem:[#allocation3 + $0xa0] sm:$0xff]
  %v4070 = vld [vmem:[#allocation3 + $0xa8] sm:$0xff]
  %v4071 = vld [vmem:[#allocation3 + $0xb0] sm:$0xff]
  %v4072 = vld [vmem:[#allocation3 + $0xb8] sm:$0xff]
  %v4073 = vld [vmem:[#allocation3 + $0xc0] sm:$0xff]
  %v4074 = vld [vmem:[#allocation3 + $0xc8] sm:$0xff]
  %v4075 = vld [vmem:[#allocation3 + $0xd0] sm:$0xff]
  %v4076 = vld [vmem:[#allocation3 + $0xd8] sm:$0xff]
  %v4077 = vld [vmem:[#allocation3 + $0xe0] sm:$0xff]
  %v4078 = vld [vmem:[#allocation3 + $0xe8] sm:$0xff]
  %v4079 = vld [vmem:[#allocation3 + $0xf0] sm:$0xff]
  %v4080 = vld [vmem:[#allocation3 + $0xf8] sm:$0xff]
  %v4081 = vld [vmem:[#allocation3 + $0x100] sm:$0xff]
  %v4082 = vld [vmem:[#allocation3 + $0x108] sm:$0xff]
  %v4083 = vld [vmem:[#allocation3 + $0x110] sm:$0xff]
  %v4084 = vld [vmem:[#allocation3 + $0x118] sm:$0xff]
  %v4085 = vld [vmem:[#allocation3 + $0x120] sm:$0xff]
  %v4086 = vld [vmem:[#allocation3 + $0x128] sm:$0xff]
  %v4087 = vld [vmem:[#allocation3 + $0x130] sm:$0xff]
  %v4088 = vld [vmem:[#allocation3 + $0x138] sm:$0xff]
  %v4089 = vld [vmem:[#allocation3 + $0x140] sm:$0xff]
  %v4090 = vld [vmem:[#allocation3 + $0x148] sm:$0xff]
  %v4091 = vld [vmem:[#allocation3 + $0x150] sm:$0xff]
  %v4092 = vld [vmem:[#allocation3 + $0x158] sm:$0xff]
  %v4093 = vld [vmem:[#allocation3 + $0x160] sm:$0xff]
  %v4094 = vld [vmem:[#allocation3 + $0x168] sm:$0xff]
  %v4095 = vld [vmem:[#allocation3 + $0x170] sm:$0xff]
  %v4096 = vld [vmem:[#allocation3 + $0x178] sm:$0xff]
  %v4097 = vld [vmem:[#allocation3 + $0x180] sm:$0xff]
  %v4098 = vld [vmem:[#allocation3 + $0x188] sm:$0xff]
  %v4099 = vld [vmem:[#allocation3 + $0x190] sm:$0xff]
  %v4100 = vld [vmem:[#allocation3 + $0x198] sm:$0xff]
  %v4101 = vld [vmem:[#allocation3 + $0x1a0] sm:$0xff]
  %v4102 = vld [vmem:[#allocation3 + $0x1a8] sm:$0xff]
  %v4103 = vld [vmem:[#allocation3 + $0x1b0] sm:$0xff]
  %v4104 = vld [vmem:[#allocation3 + $0x1b8] sm:$0xff]
  %v4105 = vld [vmem:[#allocation3 + $0x1c0] sm:$0xff]
  %v4106 = vld [vmem:[#allocation3 + $0x1c8] sm:$0xff]
  %v4107 = vld [vmem:[#allocation3 + $0x1d0] sm:$0xff]
  %v4108 = vld [vmem:[#allocation3 + $0x1d8] sm:$0xff]
  %v4109 = vld [vmem:[#allocation3 + $0x1e0] sm:$0xff]
  %v4110 = vld [vmem:[#allocation3 + $0x1e8] sm:$0xff]
  %v4111 = vld [vmem:[#allocation3 + $0x1f0] sm:$0xff]
  %v4112 = vld [vmem:[#allocation3 + $0x1f8] sm:$0xff]
  %v4113 = vld [vmem:[#allocation3 + $0x200] sm:$0xff]
  %v4114 = vld [vmem:[#allocation3 + $0x208] sm:$0xff]
  %v4115 = vld [vmem:[#allocation3 + $0x210] sm:$0xff]
  %v4116 = vld [vmem:[#allocation3 + $0x218] sm:$0xff]
  %v4117 = vld [vmem:[#allocation3 + $0x220] sm:$0xff]
  %v4118 = vld [vmem:[#allocation3 + $0x228] sm:$0xff]
  %v4119 = vld [vmem:[#allocation3 + $0x230] sm:$0xff]
  %v4120 = vld [vmem:[#allocation3 + $0x238] sm:$0xff]
  %v4121 = vld [vmem:[#allocation3 + $0x240] sm:$0xff]
  %v4122 = vld [vmem:[#allocation3 + $0x248] sm:$0xff]
  %v4123 = vld [vmem:[#allocation3 + $0x250] sm:$0xff]
  %v4124 = vld [vmem:[#allocation3 + $0x258] sm:$0xff]
  %v4125 = vld [vmem:[#allocation3 + $0x260] sm:$0xff]
  %v4126 = vld [vmem:[#allocation3 + $0x268] sm:$0xff]
  %v4127 = vld [vmem:[#allocation3 + $0x270] sm:$0xff]
  %v4128 = vld [vmem:[#allocation3 + $0x278] sm:$0xff]
  %v4129 = vld [vmem:[#allocation3 + $0x280] sm:$0xff]
  %v4130 = vld [vmem:[#allocation3 + $0x288] sm:$0xff]
  %v4131 = vld [vmem:[#allocation3 + $0x290] sm:$0xff]
  %v4132 = vld [vmem:[#allocation3 + $0x298] sm:$0xff]
  %v4133 = vld [vmem:[#allocation3 + $0x2a0] sm:$0xff]
  %v4134 = vld [vmem:[#allocation3 + $0x2a8] sm:$0xff]
  %v4135 = vld [vmem:[#allocation3 + $0x2b0] sm:$0xff]
  %v4136 = vld [vmem:[#allocation3 + $0x2b8] sm:$0xff]
  %v4137 = vld [vmem:[#allocation3 + $0x2c0] sm:$0xff]
  %v4138 = vld [vmem:[#allocation3 + $0x2c8] sm:$0xff]
  %v4139 = vld [vmem:[#allocation3 + $0x2d0] sm:$0xff]
  %v4140 = vld [vmem:[#allocation3 + $0x2d8] sm:$0xff]
  %v4141 = vld [vmem:[#allocation3 + $0x2e0] sm:$0xff]
  %v4142 = vld [vmem:[#allocation3 + $0x2e8] sm:$0xff]
  %v4143 = vld [vmem:[#allocation3 + $0x2f0] sm:$0xff]
  %v4144 = vld [vmem:[#allocation3 + $0x2f8] sm:$0xff]
  %v4145 = vld [vmem:[#allocation3 + $0x300] sm:$0xff]
  %v4146 = vld [vmem:[#allocation3 + $0x308] sm:$0xff]
  %v4147 = vld [vmem:[#allocation3 + $0x310] sm:$0xff]
  %v4148 = vld [vmem:[#allocation3 + $0x318] sm:$0xff]
  %v4151 = vunpack.c.l.b16 %v4047
  %v4152 = vunpack.c.h.b16 %v4047
  %v4153 = vunpack.c.l.b16 %v4048
  %v4154 = vunpack.c.h.b16 %v4048
  %v4155 = vpack.c.b16 %v4151, %v4151
  %v4156 = vpack.c.b16 %v4152, %v4152
  %v4157 = vpack.c.b16 %v4153, %v4153
  %v4158 = vpack.c.b16 %v4154, %v4154
  %v4163 = vsel %vm2011, %v4158, 0
  %4165 = vmatprep.subr.bf16.mxu0 %v4050
  %4166 = vmatpush1.bf16.msra.mxu0 %v4049
  %4167 = vmatprep.subr.bf16.mxu0 %v4054
  %4168 = vmatpush1.bf16.msra.mxu0 %v4053
  %4169 = vmatprep.subr.bf16.mxu0 %v4058
  %4170 = vmatpush1.bf16.msra.mxu0 %v4057
  %4171 = vmatprep.subr.bf16.mxu0 %v4062
  %4172 = vmatpush1.bf16.msra.mxu0 %v4061
  %4173 = vmatprep.subr.bf16.mxu0 %v4066
  %4174 = vmatpush1.bf16.msra.mxu0 %v4065
  %4175 = vmatprep.subr.bf16.mxu0 %v4070
  %4176 = vmatpush1.bf16.msra.mxu0 %v4069
  %4177 = vmatprep.subr.bf16.mxu0 %v4074
  %4178 = vmatpush1.bf16.msra.mxu0 %v4073
  %4179 = vmatprep.subr.bf16.mxu0 %v4078
  %4180 = vmatpush1.bf16.msra.mxu0 %v4077
  %4181 = vmatprep.subr.bf16.mxu0 %v4082
  %4182 = vmatpush1.bf16.msra.mxu0 %v4081
  %4183 = vmatprep.subr.bf16.mxu0 %v4086
  %4184 = vmatpush1.bf16.msra.mxu0 %v4085
  %4185 = vmatprep.subr.bf16.mxu0 %v4090
  %4186 = vmatpush1.bf16.msra.mxu0 %v4089
  %4187 = vmatprep.subr.bf16.mxu0 %v4094
  %4188 = vmatpush1.bf16.msra.mxu0 %v4093
  %4189 = vmatprep.subr.bf16.mxu0 %v4098
  %4190 = vmatpush1.bf16.msra.mxu0 %v4097
  %4191 = vmatprep.subr.bf16.mxu0 %v4102
  %4192 = vmatpush1.bf16.msra.mxu0 %v4101
  %4193 = vmatprep.subr.bf16.mxu0 %v4106
  %4194 = vmatpush1.bf16.msra.mxu0 %v4105
  %4195 = vmatprep.subr.bf16.mxu0 %v4110
  %4196 = vmatpush1.bf16.msra.mxu0 %v4109
  %4197 = vmatprep.mubr.bf16.mxu0 %v4156
  %4198 = vmatmul.mubr.bf16.gmra.mrb[0].mxu0 %v4155
  %v4199 = vpop.f32.mrb[0].mxu0
  %v4200 = vadd.f32 0.0, %v4199
  %v4201 = vpop.f32.mrb[0].mxu0
  %v4202 = vadd.f32 0.0, %v4201
  %v4203 = vpop.f32.mrb[0].mxu0
  %v4204 = vpop.f32.mrb[0].mxu0
  %4205 = vdwg.mxu0
  %4206 = vmatprep.subr.bf16.mxu0 %v4114
  %4207 = vmatpush1.bf16.msra.mxu0 %v4113
  %4208 = vmatprep.subr.bf16.mxu0 %v4118
  %4209 = vmatpush1.bf16.msra.mxu0 %v4117
  %4210 = vmatprep.subr.bf16.mxu0 %v4122
  %4211 = vmatpush1.bf16.msra.mxu0 %v4121
  %4212 = vmatprep.subr.bf16.mxu0 %v4126
  %4213 = vmatpush1.bf16.msra.mxu0 %v4125
  %4214 = vmatprep.subr.bf16.mxu0 %v4130
  %4215 = vmatpush1.bf16.msra.mxu0 %v4129
  %4216 = vmatprep.subr.bf16.mxu0 %v4134
  %4217 = vmatpush1.bf16.msra.mxu0 %v4133
  %4218 = vmatprep.subr.bf16.mxu0 %v4138
  %4219 = vmatpush1.bf16.msra.mxu0 %v4137
  %4220 = vmatprep.subr.bf16.mxu0 %v4142
  %4221 = vmatpush1.bf16.msra.mxu0 %v4141
  %4222 = vmatprep.subr.bf16.mxu0 %v4146
  %4223 = vmatpush1.bf16.msra.mxu0 %v4145
  %4224 = vmatprep.subr.bf16.mxu0 0
  %4225 = vmatpush1.bf16.msra.mxu0 0
  %4226 = vmatprep.subr.bf16.mxu0 0
  %4227 = vmatpush1.bf16.msra.mxu0 0
  %4228 = vmatprep.subr.bf16.mxu0 0
  %4229 = vmatpush1.bf16.msra.mxu0 0
  %4230 = vmatprep.subr.bf16.mxu0 0
  %4231 = vmatpush1.bf16.msra.mxu0 0
  %4232 = vmatprep.subr.bf16.mxu0 0
  %4233 = vmatpush1.bf16.msra.mxu0 0
  %4234 = vmatprep.subr.bf16.mxu0 0
  %4235 = vmatpush1.bf16.msra.mxu0 0
  %4236 = vmatprep.subr.bf16.mxu0 0
  %4237 = vmatpush1.bf16.msra.mxu0 0
  %4238 = vmatprep.mubr.bf16.mxu0 %v4163
  %4239 = vmatmul.mubr.bf16.gmra.mrb[0].mxu0 %v4157
  %v4240 = vpop.f32.mrb[0].mxu0
  %v4241 = vadd.f32 %v4200, %v4240
  %v4242 = vpop.f32.mrb[0].mxu0
  %v4243 = vadd.f32 %v4202, %v4242
  %v4244 = vpop.f32.mrb[0].mxu0
  %v4245 = vpop.f32.mrb[0].mxu0
  %4246 = vdwg.mxu0
  %4247 = vmatprep.subr.bf16.mxu0 %v4052
  %4248 = vmatpush1.bf16.msra.mxu0 %v4051
  %4249 = vmatprep.subr.bf16.mxu0 %v4056
  %4250 = vmatpush1.bf16.msra.mxu0 %v4055
  %4251 = vmatprep.subr.bf16.mxu0 %v4060
  %4252 = vmatpush1.bf16.msra.mxu0 %v4059
  %4253 = vmatprep.subr.bf16.mxu0 %v4064
  %4254 = vmatpush1.bf16.msra.mxu0 %v4063
  %4255 = vmatprep.subr.bf16.mxu0 %v4068
  %4256 = vmatpush1.bf16.msra.mxu0 %v4067
  %4257 = vmatprep.subr.bf16.mxu0 %v4072
  %4258 = vmatpush1.bf16.msra.mxu0 %v4071
  %4259 = vmatprep.subr.bf16.mxu0 %v4076
  %4260 = vmatpush1.bf16.msra.mxu0 %v4075
  %4261 = vmatprep.subr.bf16.mxu0 %v4080
  %4262 = vmatpush1.bf16.msra.mxu0 %v4079
  %4263 = vmatprep.subr.bf16.mxu0 %v4084
  %4264 = vmatpush1.bf16.msra.mxu0 %v4083
  %4265 = vmatprep.subr.bf16.mxu0 %v4088
  %4266 = vmatpush1.bf16.msra.mxu0 %v4087
  %4267 = vmatprep.subr.bf16.mxu0 %v4092
  %4268 = vmatpush1.bf16.msra.mxu0 %v4091
  %4269 = vmatprep.subr.bf16.mxu0 %v4096
  %4270 = vmatpush1.bf16.msra.mxu0 %v4095
  %4271 = vmatprep.subr.bf16.mxu0 %v4100
  %4272 = vmatpush1.bf16.msra.mxu0 %v4099
  %4273 = vmatprep.subr.bf16.mxu0 %v4104
  %4274 = vmatpush1.bf16.msra.mxu0 %v4103
  %4275 = vmatprep.subr.bf16.mxu0 %v4108
  %4276 = vmatpush1.bf16.msra.mxu0 %v4107
  %4277 = vmatprep.subr.bf16.mxu0 %v4112
  %4278 = vmatpush1.bf16.msra.mxu0 %v4111
  %4279 = vmatprep.mubr.bf16.mxu0 %v4156
  %4280 = vmatmul.mubr.bf16.gmra.mrb[0].mxu0 %v4155
  %v4281 = vpop.f32.mrb[0].mxu0
  %v4282 = vadd.f32 0.0, %v4281
  %v4283 = vpop.f32.mrb[0].mxu0
  %v4284 = vadd.f32 0.0, %v4283
  %v4285 = vpop.f32.mrb[0].mxu0
  %v4286 = vpop.f32.mrb[0].mxu0
  %4287 = vdwg.mxu0
  %4288 = vmatprep.subr.bf16.mxu0 %v4116
  %4289 = vmatpush1.bf16.msra.mxu0 %v4115
  %4290 = vmatprep.subr.bf16.mxu0 %v4120
  %4291 = vmatpush1.bf16.msra.mxu0 %v4119
  %4292 = vmatprep.subr.bf16.mxu0 %v4124
  %4293 = vmatpush1.bf16.msra.mxu0 %v4123
  %4294 = vmatprep.subr.bf16.mxu0 %v4128
  %4295 = vmatpush1.bf16.msra.mxu0 %v4127
  %4296 = vmatprep.subr.bf16.mxu0 %v4132
  %4297 = vmatpush1.bf16.msra.mxu0 %v4131
  %4298 = vmatprep.subr.bf16.mxu0 %v4136
  %4299 = vmatpush1.bf16.msra.mxu0 %v4135
  %4300 = vmatprep.subr.bf16.mxu0 %v4140
  %4301 = vmatpush1.bf16.msra.mxu0 %v4139
  %4302 = vmatprep.subr.bf16.mxu0 %v4144
  %4303 = vmatpush1.bf16.msra.mxu0 %v4143
  %4304 = vmatprep.subr.bf16.mxu0 %v4148
  %4305 = vmatpush1.bf16.msra.mxu0 %v4147
  %4306 = vmatprep.subr.bf16.mxu0 0
  %4307 = vmatpush1.bf16.msra.mxu0 0
  %4308 = vmatprep.subr.bf16.mxu0 0
  %4309 = vmatpush1.bf16.msra.mxu0 0
  %4310 = vmatprep.subr.bf16.mxu0 0
  %4311 = vmatpush1.bf16.msra.mxu0 0
  %4312 = vmatprep.subr.bf16.mxu0 0
  %4313 = vmatpush1.bf16.msra.mxu0 0
  %4314 = vmatprep.subr.bf16.mxu0 0
  %4315 = vmatpush1.bf16.msra.mxu0 0
  %4316 = vmatprep.subr.bf16.mxu0 0
  %4317 = vmatpush1.bf16.msra.mxu0 0
  %4318 = vmatprep.subr.bf16.mxu0 0
  %4319 = vmatpush1.bf16.msra.mxu0 0
  %4320 = vmatprep.mubr.bf16.mxu0 %v4163
  %4321 = vmatmul.mubr.bf16.gmra.mrb[0].mxu0 %v4157
  %v4322 = vpop.f32.mrb[0].mxu0
  %v4323 = vadd.f32 %v4282, %v4322
  %v4324 = vpop.f32.mrb[0].mxu0
  %v4325 = vadd.f32 %v4284, %v4324
  %v4326 = vpop.f32.mrb[0].mxu0
  %v4327 = vpop.f32.mrb[0].mxu0
  %4328 = vdwg.mxu0
  %v4329 = vadd.f32 %v4241, %v4243
  %4330 = vadd.xlane.f32.xlu0 %v4329
  %v4331 = vpop.xlane.xlu0 %4330
  %v4332 = vmul.f32 %v4331, %v2182
  %v4333 = vsub.f32 %v4241, %v4332
  %v4334 = vsub.f32 %v4243, %v4332
  %v4335 = vmul.f32 %v4333, %v4333
  %v4336 = vmul.f32 %v4334, %v4334
  %v4337 = vadd.f32 %v4335, %v4336
  %4338 = vadd.xlane.f32.xlu0 %v4337
  %v4339 = vpop.xlane.xlu0 %4338
  %v4340 = vmul.f32 %v4339, %v2182
  %v4341 = vld [vmem:[%s6] sm:$0xff]
  %v4342 = vadd.f32 %v4340, 1e-05
  %v4343 = vrsqrt.pop %v4342
  %v4344 = vmul.f32 %v4341, %v4343
  %4346 = vset.pattern.permute.xlu0 0
  %4347 = vperm.xlu0 %4346, %v4344
  %v4348 = vpop.permute.xlu0 %4347
  %v4350 = vmul.f32 %v4333, %v4348
  %v4351 = vmul.f32 %v4334, %v4348
  %v4352 = vld [vmem:[%s7] sm:$0xff]
  %4354 = vset.pattern.permute.xlu0 0
  %4355 = vperm.xlu0 %4354, %v4352
  %v4356 = vpop.permute.xlu0 %4355
  %v4358 = vadd.f32 %v4350, %v4356
  %v4359 = vadd.f32 %v4351, %v4356
  %v4360 = vmin.f32 %v4358, 20.0
  %v4361 = vmin.f32 %v4359, 20.0
  %v4362 = vmul.f32 %v4360, 1.442695
  %v4363 = vpow.pop %v4362
  %v4364 = vmul.f32 %v4361, 1.442695
  %v4365 = vpow.pop %v4364
  %v4366 = vadd.f32 %v4363, 2.0
  %v4367 = vadd.f32 %v4365, 2.0
  %v4368 = vmul.f32 %v4363, %v4366
  %v4369 = vmul.f32 %v4365, %v4367
  %v4370 = vadd.f32 %v4368, 2.0
  %v4371 = vadd.f32 %v4369, 2.0
  %v4372 = vrcp.pop %v4370
  %v4373 = vmul.f32 %v4368, %v4372
  %v4374 = vrcp.pop %v4371
  %v4375 = vmul.f32 %v4369, %v4374
  %v4376 = vmul.f32 %v4358, %v4373
  %v4377 = vmul.f32 %v4359, %v4375
  %v4378 = vadd.f32 %v4323, %v4325
  %4379 = vadd.xlane.f32.xlu0 %v4378
  %v4380 = vpop.xlane.xlu0 %4379
  %v4381 = vmul.f32 %v4380, %v2182
  %v4382 = vsub.f32 %v4323, %v4381
  %v4383 = vsub.f32 %v4325, %v4381
  %v4384 = vmul.f32 %v4382, %v4382
  %v4385 = vmul.f32 %v4383, %v4383
  %v4386 = vadd.f32 %v4384, %v4385
  %4387 = vadd.xlane.f32.xlu0 %v4386
  %v4388 = vpop.xlane.xlu0 %4387
  %v4389 = vmul.f32 %v4388, %v2182
  %v4390 = vadd.f32 %v4389, 1e-05
  %v4391 = vrsqrt.pop %v4390
  %v4392 = vmul.f32 %v4341, %v4391
  %4394 = vset.pattern.permute.xlu0 0
  %4395 = vperm.xlu0 %4394, %v4392
  %v4396 = vpop.permute.xlu0 %4395
  %v4398 = vmul.f32 %v4382, %v4396
  %v4399 = vmul.f32 %v4383, %v4396
  %v4400 = vadd.f32 %v4398, %v4356
  %v4401 = vadd.f32 %v4399, %v4356
  %v4402 = vmin.f32 %v4400, 20.0
  %v4403 = vmin.f32 %v4401, 20.0
  %v4404 = vmul.f32 %v4402, 1.442695
  %v4405 = vpow.pop %v4404
  %v4406 = vmul.f32 %v4403, 1.442695
  %v4407 = vpow.pop %v4406
  %v4408 = vadd.f32 %v4405, 2.0
  %v4409 = vadd.f32 %v4407, 2.0
  %v4410 = vmul.f32 %v4405, %v4408
  %v4411 = vmul.f32 %v4407, %v4409
  %v4412 = vadd.f32 %v4410, 2.0
  %v4413 = vadd.f32 %v4411, 2.0
  %v4414 = vrcp.pop %v4412
  %v4415 = vmul.f32 %v4410, %v4414
  %v4416 = vrcp.pop %v4413
  %v4417 = vmul.f32 %v4411, %v4416
  %v4418 = vmul.f32 %v4400, %v4415
  %v4419 = vmul.f32 %v4401, %v4417
  %4420 = vst [vmem:[%s11] sm:$0xff] %v4376
  %4421 = vst [vmem:[%s11 + $0x8] sm:$0xff] %v4377
  %4422 = vst [vmem:[%s11 + $0x10] sm:$0xff] %v4418
  %4423 = vst [vmem:[%s11 + $0x18] sm:$0xff] %v4419
  %v4424 = vpack.c.bf16 %v4376, %v4376
  %v4425 = vpack.c.bf16 %v4377, %v4377
  %v4426 = vld [vmem:[%s10] sm:$0xff]
  %v4427 = vld [vmem:[%s10 + $0x8] sm:$0xff]
  %v4428 = vld [vmem:[%s10 + $0x10] sm:$0xff]
  %v4429 = vld [vmem:[%s10 + $0x18] sm:$0xff]
  %v4430 = vld [vmem:[%s10 + $0x20] sm:$0xff]
  %v4431 = vld [vmem:[%s10 + $0x28] sm:$0xff]
  %v4432 = vld [vmem:[%s10 + $0x30] sm:$0xff]
  %v4433 = vld [vmem:[%s10 + $0x38] sm:$0xff]
  %v4434 = vld [vmem:[%s10 + $0x40] sm:$0xff]
  %v4435 = vld [vmem:[%s10 + $0x48] sm:$0xff]
  %v4436 = vld [vmem:[%s10 + $0x50] sm:$0xff]
  %v4437 = vld [vmem:[%s10 + $0x58] sm:$0xff]
  %v4438 = vld [vmem:[%s10 + $0x60] sm:$0xff]
  %v4439 = vld [vmem:[%s10 + $0x68] sm:$0xff]
  %v4440 = vld [vmem:[%s10 + $0x70] sm:$0xff]
  %v4441 = vld [vmem:[%s10 + $0x78] sm:$0xff]
  %v4442 = vld [vmem:[%s10 + $0x80] sm:$0xff]
  %v4443 = vld [vmem:[%s10 + $0x88] sm:$0xff]
  %v4444 = vld [vmem:[%s10 + $0x90] sm:$0xff]
  %v4445 = vld [vmem:[%s10 + $0x98] sm:$0xff]
  %v4446 = vld [vmem:[%s10 + $0xa0] sm:$0xff]
  %v4447 = vld [vmem:[%s10 + $0xa8] sm:$0xff]
  %v4448 = vld [vmem:[%s10 + $0xb0] sm:$0xff]
  %v4449 = vld [vmem:[%s10 + $0xb8] sm:$0xff]
  %v4450 = vld [vmem:[%s10 + $0xc0] sm:$0xff]
  %v4451 = vld [vmem:[%s10 + $0xc8] sm:$0xff]
  %v4452 = vld [vmem:[%s10 + $0xd0] sm:$0xff]
  %v4453 = vld [vmem:[%s10 + $0xd8] sm:$0xff]
  %v4454 = vld [vmem:[%s10 + $0xe0] sm:$0xff]
  %v4455 = vld [vmem:[%s10 + $0xe8] sm:$0xff]
  %v4456 = vld [vmem:[%s10 + $0xf0] sm:$0xff]
  %v4457 = vld [vmem:[%s10 + $0xf8] sm:$0xff]
  %v4490 = vunpack.c.l.b16 %v4426
  %v4491 = vunpack.c.h.b16 %v4426
  %v4492 = vunpack.c.l.b16 %v4427
  %v4493 = vunpack.c.h.b16 %v4427
  %v4494 = vunpack.c.l.b16 %v4428
  %v4495 = vunpack.c.h.b16 %v4428
  %v4496 = vunpack.c.l.b16 %v4429
  %v4497 = vunpack.c.h.b16 %v4429
  %v4498 = vunpack.c.l.b16 %v4430
  %v4499 = vunpack.c.h.b16 %v4430
  %v4500 = vunpack.c.l.b16 %v4431
  %v4501 = vunpack.c.h.b16 %v4431
  %v4502 = vunpack.c.l.b16 %v4432
  %v4503 = vunpack.c.h.b16 %v4432
  %v4504 = vunpack.c.l.b16 %v4433
  %v4505 = vunpack.c.h.b16 %v4433
  %v4506 = vunpack.c.l.b16 %v4434
  %v4507 = vunpack.c.h.b16 %v4434
  %v4508 = vunpack.c.l.b16 %v4435
  %v4509 = vunpack.c.h.b16 %v4435
  %v4510 = vunpack.c.l.b16 %v4436
  %v4511 = vunpack.c.h.b16 %v4436
  %v4512 = vunpack.c.l.b16 %v4437
  %v4513 = vunpack.c.h.b16 %v4437
  %v4514 = vunpack.c.l.b16 %v4438
  %v4515 = vunpack.c.h.b16 %v4438
  %v4516 = vunpack.c.l.b16 %v4439
  %v4517 = vunpack.c.h.b16 %v4439
  %v4518 = vunpack.c.l.b16 %v4440
  %v4519 = vunpack.c.h.b16 %v4440
  %v4520 = vunpack.c.l.b16 %v4441
  %v4521 = vunpack.c.h.b16 %v4441
  %v4522 = vunpack.c.l.b16 %v4442
  %v4523 = vunpack.c.h.b16 %v4442
  %v4524 = vunpack.c.l.b16 %v4443
  %v4525 = vunpack.c.h.b16 %v4443
  %v4526 = vunpack.c.l.b16 %v4444
  %v4527 = vunpack.c.h.b16 %v4444
  %v4528 = vunpack.c.l.b16 %v4445
  %v4529 = vunpack.c.h.b16 %v4445
  %v4530 = vunpack.c.l.b16 %v4446
  %v4531 = vunpack.c.h.b16 %v4446
  %v4532 = vunpack.c.l.b16 %v4447
  %v4533 = vunpack.c.h.b16 %v4447
  %v4534 = vunpack.c.l.b16 %v4448
  %v4535 = vunpack.c.h.b16 %v4448
  %v4536 = vunpack.c.l.b16 %v4449
  %v4537 = vunpack.c.h.b16 %v4449
  %v4538 = vunpack.c.l.b16 %v4450
  %v4539 = vunpack.c.h.b16 %v4450
  %v4540 = vunpack.c.l.b16 %v4451
  %v4541 = vunpack.c.h.b16 %v4451
  %v4542 = vunpack.c.l.b16 %v4452
  %v4543 = vunpack.c.h.b16 %v4452
  %v4544 = vunpack.c.l.b16 %v4453
  %v4545 = vunpack.c.h.b16 %v4453
  %v4546 = vunpack.c.l.b16 %v4454
  %v4547 = vunpack.c.h.b16 %v4454
  %v4548 = vunpack.c.l.b16 %v4455
  %v4549 = vunpack.c.h.b16 %v4455
  %v4550 = vunpack.c.l.b16 %v4456
  %v4551 = vunpack.c.h.b16 %v4456
  %v4552 = vunpack.c.l.b16 %v4457
  %v4553 = vunpack.c.h.b16 %v4457
  %v4554 = vpack.c.b16 %v4492, %v4490
  %v4555 = vpack.c.b16 %v4493, %v4491
  %v4556 = vpack.c.b16 %v4496, %v4494
  %v4557 = vpack.c.b16 %v4497, %v4495
  %v4558 = vpack.c.b16 %v4500, %v4498
  %v4559 = vpack.c.b16 %v4501, %v4499
  %v4560 = vpack.c.b16 %v4504, %v4502
  %v4561 = vpack.c.b16 %v4505, %v4503
  %v4562 = vpack.c.b16 %v4508, %v4506
  %v4563 = vpack.c.b16 %v4509, %v4507
  %v4564 = vpack.c.b16 %v4512, %v4510
  %v4565 = vpack.c.b16 %v4513, %v4511
  %v4566 = vpack.c.b16 %v4516, %v4514
  %v4567 = vpack.c.b16 %v4517, %v4515
  %v4568 = vpack.c.b16 %v4520, %v4518
  %v4569 = vpack.c.b16 %v4521, %v4519
  %v4570 = vpack.c.b16 %v4524, %v4522
  %v4571 = vpack.c.b16 %v4525, %v4523
  %v4572 = vpack.c.b16 %v4528, %v4526
  %v4573 = vpack.c.b16 %v4529, %v4527
  %v4574 = vpack.c.b16 %v4532, %v4530
  %v4575 = vpack.c.b16 %v4533, %v4531
  %v4576 = vpack.c.b16 %v4536, %v4534
  %v4577 = vpack.c.b16 %v4537, %v4535
  %v4578 = vpack.c.b16 %v4540, %v4538
  %v4579 = vpack.c.b16 %v4541, %v4539
  %v4580 = vpack.c.b16 %v4544, %v4542
  %v4581 = vpack.c.b16 %v4545, %v4543
  %v4582 = vpack.c.b16 %v4548, %v4546
  %v4583 = vpack.c.b16 %v4549, %v4547
  %v4584 = vpack.c.b16 %v4552, %v4550
  %v4585 = vpack.c.b16 %v4553, %v4551
  %4618 = vmatprep.subr.bf16.mxu0 %v4555
  %4619 = vmatpush1.bf16.msra.mxu0 %v4554
  %4620 = vmatprep.subr.bf16.mxu0 %v4557
  %4621 = vmatpush1.bf16.msra.mxu0 %v4556
  %4622 = vmatprep.subr.bf16.mxu0 %v4559
  %4623 = vmatpush1.bf16.msra.mxu0 %v4558
  %4624 = vmatprep.subr.bf16.mxu0 %v4561
  %4625 = vmatpush1.bf16.msra.mxu0 %v4560
  %4626 = vmatprep.subr.bf16.mxu0 %v4563
  %4627 = vmatpush1.bf16.msra.mxu0 %v4562
  %4628 = vmatprep.subr.bf16.mxu0 %v4565
  %4629 = vmatpush1.bf16.msra.mxu0 %v4564
  %4630 = vmatprep.subr.bf16.mxu0 %v4567
  %4631 = vmatpush1.bf16.msra.mxu0 %v4566
  %4632 = vmatprep.subr.bf16.mxu0 %v4569
  %4633 = vmatpush1.bf16.msra.mxu0 %v4568
  %4634 = vmatprep.subr.bf16.mxu0 %v4571
  %4635 = vmatpush1.bf16.msra.mxu0 %v4570
  %4636 = vmatprep.subr.bf16.mxu0 %v4573
  %4637 = vmatpush1.bf16.msra.mxu0 %v4572
  %4638 = vmatprep.subr.bf16.mxu0 %v4575
  %4639 = vmatpush1.bf16.msra.mxu0 %v4574
  %4640 = vmatprep.subr.bf16.mxu0 %v4577
  %4641 = vmatpush1.bf16.msra.mxu0 %v4576
  %4642 = vmatprep.subr.bf16.mxu0 %v4579
  %4643 = vmatpush1.bf16.msra.mxu0 %v4578
  %4644 = vmatprep.subr.bf16.mxu0 %v4581
  %4645 = vmatpush1.bf16.msra.mxu0 %v4580
  %4646 = vmatprep.subr.bf16.mxu0 %v4583
  %4647 = vmatpush1.bf16.msra.mxu0 %v4582
  %4648 = vmatprep.subr.bf16.mxu0 %v4585
  %4649 = vmatpush1.bf16.msra.mxu0 %v4584
  %4650 = vmatprep.mubr.bf16.mxu0 %v4425
  %4651 = vmatmul.mubr.bf16.gmra.mrb[0].mxu0 %v4424
  %v4652 = vpop.f32.mrb[0].mxu0
  %v4653 = vadd.f32 0.0, %v4652
  %v4654 = vpop.f32.mrb[0].mxu0
  %v4655 = vadd.f32 0.0, %v4654
  %v4656 = vpop.f32.mrb[0].mxu0
  %v4657 = vpop.f32.mrb[0].mxu0
  %4658 = vdwg.mxu0
  %v4659 = vld [vmem:[%s8] sm:$0xf]
  %v4660 = vpack.c.bf16 %v4653, %v4653
  %s4661 = scalar_lea.vmem %s8, 4
  %v4662 = vld [vmem:[%s4661] sm:$0xf]
  %4664 = vrot.lane.b32.xlu0 %v4660, 64
  %v4665 = vpop.permute.xlu0 %4664
  %vm4666 = vcmask 64512
  %v4668 = vsel %vm4666, %v4662, 0
  %vm4670 = vcmask 1043456
  %v4672 = vsel %vm4670, %v4665, 0
  %4674 = vmatprep.subr.bf16.mxu0 0
  %4675 = vmatpush1.bf16.msra.mxu0 %v4672
  %4676 = vmatprep.subr.bf16.mxu0 0
  %4677 = vmatpush1.bf16.msra.mxu0 0
  %4678 = vmatprep.subr.bf16.mxu0 0
  %4679 = vmatpush1.bf16.msra.mxu0 0
  %4680 = vmatprep.subr.bf16.mxu0 0
  %4681 = vmatpush1.bf16.msra.mxu0 0
  %4682 = vmatprep.subr.bf16.mxu0 0
  %4683 = vmatpush1.bf16.msra.mxu0 0
  %4684 = vmatprep.subr.bf16.mxu0 0
  %4685 = vmatpush1.bf16.msra.mxu0 0
  %4686 = vmatprep.subr.bf16.mxu0 0
  %4687 = vmatpush1.bf16.msra.mxu0 0
  %4688 = vmatprep.subr.bf16.mxu0 0
  %4689 = vmatpush1.bf16.msra.mxu0 0
  %4690 = vmatprep.subr.bf16.mxu0 0
  %4691 = vmatpush1.bf16.msra.mxu0 0
  %4692 = vmatprep.subr.bf16.mxu0 0
  %4693 = vmatpush1.bf16.msra.mxu0 0
  %4694 = vmatprep.subr.bf16.mxu0 0
  %4695 = vmatpush1.bf16.msra.mxu0 0
  %4696 = vmatprep.subr.bf16.mxu0 0
  %4697 = vmatpush1.bf16.msra.mxu0 0
  %4698 = vmatprep.subr.bf16.mxu0 0
  %4699 = vmatpush1.bf16.msra.mxu0 0
  %4700 = vmatprep.subr.bf16.mxu0 0
  %4701 = vmatpush1.bf16.msra.mxu0 0
  %4702 = vmatprep.subr.bf16.mxu0 0
  %4703 = vmatpush1.bf16.msra.mxu0 0
  %4704 = vmatprep.subr.bf16.mxu0 0
  %4705 = vmatpush1.bf16.msra.mxu0 0
  %4706 = vmatprep.mubr.bf16.mxu0 0
  %4707 = vmatmul.mubr.bf16.gmra.mrb[0].mxu0 %v4668
  %v4708 = vpop.f32.mrb[0].mxu0
  %v4709 = vadd.f32 0.0, %v4708
  %v4710 = vpop.f32.mrb[0].mxu0
  %v4711 = vpop.f32.mrb[0].mxu0
  %v4712 = vpop.f32.mrb[0].mxu0
  %4713 = vdwg.mxu0
  %v4715 = vsel %vm4666, %v4659, 0
  %v4718 = vsel %vm4670, %v4660, 0
  %4720 = vmatprep.subr.bf16.mxu0 0
  %4721 = vmatpush1.bf16.msra.mxu0 %v4718
  %4722 = vmatprep.subr.bf16.mxu0 0
  %4723 = vmatpush1.bf16.msra.mxu0 0
  %4724 = vmatprep.subr.bf16.mxu0 0
  %4725 = vmatpush1.bf16.msra.mxu0 0
  %4726 = vmatprep.subr.bf16.mxu0 0
  %4727 = vmatpush1.bf16.msra.mxu0 0
  %4728 = vmatprep.subr.bf16.mxu0 0
  %4729 = vmatpush1.bf16.msra.mxu0 0
  %4730 = vmatprep.subr.bf16.mxu0 0
  %4731 = vmatpush1.bf16.msra.mxu0 0
  %4732 = vmatprep.subr.bf16.mxu0 0
  %4733 = vmatpush1.bf16.msra.mxu0 0
  %4734 = vmatprep.subr.bf16.mxu0 0
  %4735 = vmatpush1.bf16.msra.mxu0 0
  %4736 = vmatprep.subr.bf16.mxu0 0
  %4737 = vmatpush1.bf16.msra.mxu0 0
  %4738 = vmatprep.subr.bf16.mxu0 0
  %4739 = vmatpush1.bf16.msra.mxu0 0
  %4740 = vmatprep.subr.bf16.mxu0 0
  %4741 = vmatpush1.bf16.msra.mxu0 0
  %4742 = vmatprep.subr.bf16.mxu0 0
  %4743 = vmatpush1.bf16.msra.mxu0 0
  %4744 = vmatprep.subr.bf16.mxu0 0
  %4745 = vmatpush1.bf16.msra.mxu0 0
  %4746 = vmatprep.subr.bf16.mxu0 0
  %4747 = vmatpush1.bf16.msra.mxu0 0
  %4748 = vmatprep.subr.bf16.mxu0 0
  %4749 = vmatpush1.bf16.msra.mxu0 0
  %4750 = vmatprep.subr.bf16.mxu0 0
  %4751 = vmatpush1.bf16.msra.mxu0 0
  %4752 = vmatprep.mubr.bf16.mxu0 0
  %4753 = vmatmul.mubr.bf16.gmra.mrb[0].mxu0 %v4715
  %v4754 = vpop.f32.mrb[0].mxu0
  %v4755 = vadd.f32 %v4709, %v4754
  %v4756 = vpop.f32.mrb[0].mxu0
  %v4757 = vpop.f32.mrb[0].mxu0
  %v4758 = vpop.f32.mrb[0].mxu0
  %4759 = vdwg.mxu0
  %s4760 = scalar_lea.vmem %s8, 8
  %v4761 = vld [vmem:[%s4760] sm:$0xf]
  %v4762 = vpack.c.bf16 %v4655, %v4655
  %v4764 = vsel %vm4666, %v4761, 0
  %v4767 = vsel %vm4670, %v4762, 0
  %4769 = vmatprep.subr.bf16.mxu0 0
  %4770 = vmatpush1.bf16.msra.mxu0 %v4767
  %4771 = vmatprep.subr.bf16.mxu0 0
  %4772 = vmatpush1.bf16.msra.mxu0 0
  %4773 = vmatprep.subr.bf16.mxu0 0
  %4774 = vmatpush1.bf16.msra.mxu0 0
  %4775 = vmatprep.subr.bf16.mxu0 0
  %4776 = vmatpush1.bf16.msra.mxu0 0
  %4777 = vmatprep.subr.bf16.mxu0 0
  %4778 = vmatpush1.bf16.msra.mxu0 0
  %4779 = vmatprep.subr.bf16.mxu0 0
  %4780 = vmatpush1.bf16.msra.mxu0 0
  %4781 = vmatprep.subr.bf16.mxu0 0
  %4782 = vmatpush1.bf16.msra.mxu0 0
  %4783 = vmatprep.subr.bf16.mxu0 0
  %4784 = vmatpush1.bf16.msra.mxu0 0
  %4785 = vmatprep.subr.bf16.mxu0 0
  %4786 = vmatpush1.bf16.msra.mxu0 0
  %4787 = vmatprep.subr.bf16.mxu0 0
  %4788 = vmatpush1.bf16.msra.mxu0 0
  %4789 = vmatprep.subr.bf16.mxu0 0
  %4790 = vmatpush1.bf16.msra.mxu0 0
  %4791 = vmatprep.subr.bf16.mxu0 0
  %4792 = vmatpush1.bf16.msra.mxu0 0
  %4793 = vmatprep.subr.bf16.mxu0 0
  %4794 = vmatpush1.bf16.msra.mxu0 0
  %4795 = vmatprep.subr.bf16.mxu0 0
  %4796 = vmatpush1.bf16.msra.mxu0 0
  %4797 = vmatprep.subr.bf16.mxu0 0
  %4798 = vmatpush1.bf16.msra.mxu0 0
  %4799 = vmatprep.subr.bf16.mxu0 0
  %4800 = vmatpush1.bf16.msra.mxu0 0
  %4801 = vmatprep.mubr.bf16.mxu0 0
  %4802 = vmatmul.mubr.bf16.gmra.mrb[0].mxu0 %v4764
  %v4803 = vpop.f32.mrb[0].mxu0
  %v4804 = vadd.f32 0.0, %v4803
  %v4805 = vpop.f32.mrb[0].mxu0
  %v4806 = vpop.f32.mrb[0].mxu0
  %v4807 = vpop.f32.mrb[0].mxu0
  %4808 = vdwg.mxu0
  %v4809 = vadd.f32 %v4755, %v4804
  %s4810 = scalar_lea.vmem %s8, 12
  %v4811 = vld [vmem:[%s4810] sm:$0xf]
  %4813 = vrot.lane.b32.xlu0 %v4762, 64
  %v4814 = vpop.permute.xlu0 %4813
  %v4816 = vsel %vm4666, %v4811, 0
  %v4819 = vsel %vm4670, %v4814, 0
  %4821 = vmatprep.subr.bf16.mxu0 0
  %4822 = vmatpush1.bf16.msra.mxu0 %v4819
  %4823 = vmatprep.subr.bf16.mxu0 0
  %4824 = vmatpush1.bf16.msra.mxu0 0
  %4825 = vmatprep.subr.bf16.mxu0 0
  %4826 = vmatpush1.bf16.msra.mxu0 0
  %4827 = vmatprep.subr.bf16.mxu0 0
  %4828 = vmatpush1.bf16.msra.mxu0 0
  %4829 = vmatprep.subr.bf16.mxu0 0
  %4830 = vmatpush1.bf16.msra.mxu0 0
  %4831 = vmatprep.subr.bf16.mxu0 0
  %4832 = vmatpush1.bf16.msra.mxu0 0
  %4833 = vmatprep.subr.bf16.mxu0 0
  %4834 = vmatpush1.bf16.msra.mxu0 0
  %4835 = vmatprep.subr.bf16.mxu0 0
  %4836 = vmatpush1.bf16.msra.mxu0 0
  %4837 = vmatprep.subr.bf16.mxu0 0
  %4838 = vmatpush1.bf16.msra.mxu0 0
  %4839 = vmatprep.subr.bf16.mxu0 0
  %4840 = vmatpush1.bf16.msra.mxu0 0
  %4841 = vmatprep.subr.bf16.mxu0 0
  %4842 = vmatpush1.bf16.msra.mxu0 0
  %4843 = vmatprep.subr.bf16.mxu0 0
  %4844 = vmatpush1.bf16.msra.mxu0 0
  %4845 = vmatprep.subr.bf16.mxu0 0
  %4846 = vmatpush1.bf16.msra.mxu0 0
  %4847 = vmatprep.subr.bf16.mxu0 0
  %4848 = vmatpush1.bf16.msra.mxu0 0
  %4849 = vmatprep.subr.bf16.mxu0 0
  %4850 = vmatpush1.bf16.msra.mxu0 0
  %4851 = vmatprep.subr.bf16.mxu0 0
  %4852 = vmatpush1.bf16.msra.mxu0 0
  %4853 = vmatprep.mubr.bf16.mxu0 0
  %4854 = vmatmul.mubr.bf16.gmra.mrb[0].mxu0 %v4816
  %v4855 = vpop.f32.mrb[0].mxu0
  %v4856 = vadd.f32 0.0, %v4855
  %v4857 = vpop.f32.mrb[0].mxu0
  %v4858 = vpop.f32.mrb[0].mxu0
  %v4859 = vpop.f32.mrb[0].mxu0
  %4860 = vdwg.mxu0
  %v4861 = vadd.f32 %v4809, %v4856
  %v4862 = vld [vmem:[%s9] sm:$0xff]
  %4864 = vset.pattern.permute.xlu0 0
  %4865 = vperm.xlu0 %4864, %v4862
  %v4866 = vpop.permute.xlu0 %4865
  %v4868 = vadd.f32 %v4861, %v4866
  %v4869 = vmin.f32 %v4868, 20.0
  %v4870 = vmul.f32 %v4869, 1.442695
  %v4871 = vpow.pop %v4870
  %v4872 = vadd.f32 %v4871, 2.0
  %v4873 = vmul.f32 %v4871, %v4872
  %v4874 = vadd.f32 %v4873, 2.0
  %v4875 = vrcp.pop %v4874
  %v4876 = vmul.f32 %v4873, %v4875
  %v4877 = vmul.f32 %v4868, %v4876
  %v4878 = vpack.c.bf16 %v4418, %v4418
  %v4879 = vpack.c.bf16 %v4419, %v4419
  %4880 = vmatprep.subr.bf16.mxu0 %v4555
  %4881 = vmatpush1.bf16.msra.mxu0 %v4554
  %4882 = vmatprep.subr.bf16.mxu0 %v4557
  %4883 = vmatpush1.bf16.msra.mxu0 %v4556
  %4884 = vmatprep.subr.bf16.mxu0 %v4559
  %4885 = vmatpush1.bf16.msra.mxu0 %v4558
  %4886 = vmatprep.subr.bf16.mxu0 %v4561
  %4887 = vmatpush1.bf16.msra.mxu0 %v4560
  %4888 = vmatprep.subr.bf16.mxu0 %v4563
  %4889 = vmatpush1.bf16.msra.mxu0 %v4562
  %4890 = vmatprep.subr.bf16.mxu0 %v4565
  %4891 = vmatpush1.bf16.msra.mxu0 %v4564
  %4892 = vmatprep.subr.bf16.mxu0 %v4567
  %4893 = vmatpush1.bf16.msra.mxu0 %v4566
  %4894 = vmatprep.subr.bf16.mxu0 %v4569
  %4895 = vmatpush1.bf16.msra.mxu0 %v4568
  %4896 = vmatprep.subr.bf16.mxu0 %v4571
  %4897 = vmatpush1.bf16.msra.mxu0 %v4570
  %4898 = vmatprep.subr.bf16.mxu0 %v4573
  %4899 = vmatpush1.bf16.msra.mxu0 %v4572
  %4900 = vmatprep.subr.bf16.mxu0 %v4575
  %4901 = vmatpush1.bf16.msra.mxu0 %v4574
  %4902 = vmatprep.subr.bf16.mxu0 %v4577
  %4903 = vmatpush1.bf16.msra.mxu0 %v4576
  %4904 = vmatprep.subr.bf16.mxu0 %v4579
  %4905 = vmatpush1.bf16.msra.mxu0 %v4578
  %4906 = vmatprep.subr.bf16.mxu0 %v4581
  %4907 = vmatpush1.bf16.msra.mxu0 %v4580
  %4908 = vmatprep.subr.bf16.mxu0 %v4583
  %4909 = vmatpush1.bf16.msra.mxu0 %v4582
  %4910 = vmatprep.subr.bf16.mxu0 %v4585
  %4911 = vmatpush1.bf16.msra.mxu0 %v4584
  %4912 = vmatprep.mubr.bf16.mxu0 %v4879
  %4913 = vmatmul.mubr.bf16.gmra.mrb[0].mxu0 %v4878
  %v4914 = vpop.f32.mrb[0].mxu0
  %v4915 = vadd.f32 0.0, %v4914
  %v4916 = vpop.f32.mrb[0].mxu0
  %v4917 = vadd.f32 0.0, %v4916
  %v4918 = vpop.f32.mrb[0].mxu0
  %v4919 = vpop.f32.mrb[0].mxu0
  %4920 = vdwg.mxu0
  %v4921 = vpack.c.bf16 %v4915, %v4915
  %4923 = vrot.lane.b32.xlu0 %v4921, 64
  %v4924 = vpop.permute.xlu0 %4923
  %v4926 = vsel %vm4670, %v4924, 0
  %4928 = vmatprep.subr.bf16.mxu0 0
  %4929 = vmatpush1.bf16.msra.mxu0 %v4926
  %4930 = vmatprep.subr.bf16.mxu0 0
  %4931 = vmatpush1.bf16.msra.mxu0 0
  %4932 = vmatprep.subr.bf16.mxu0 0
  %4933 = vmatpush1.bf16.msra.mxu0 0
  %4934 = vmatprep.subr.bf16.mxu0 0
  %4935 = vmatpush1.bf16.msra.mxu0 0
  %4936 = vmatprep.subr.bf16.mxu0 0
  %4937 = vmatpush1.bf16.msra.mxu0 0
  %4938 = vmatprep.subr.bf16.mxu0 0
  %4939 = vmatpush1.bf16.msra.mxu0 0
  %4940 = vmatprep.subr.bf16.mxu0 0
  %4941 = vmatpush1.bf16.msra.mxu0 0
  %4942 = vmatprep.subr.bf16.mxu0 0
  %4943 = vmatpush1.bf16.msra.mxu0 0
  %4944 = vmatprep.subr.bf16.mxu0 0
  %4945 = vmatpush1.bf16.msra.mxu0 0
  %4946 = vmatprep.subr.bf16.mxu0 0
  %4947 = vmatpush1.bf16.msra.mxu0 0
  %4948 = vmatprep.subr.bf16.mxu0 0
  %4949 = vmatpush1.bf16.msra.mxu0 0
  %4950 = vmatprep.subr.bf16.mxu0 0
  %4951 = vmatpush1.bf16.msra.mxu0 0
  %4952 = vmatprep.subr.bf16.mxu0 0
  %4953 = vmatpush1.bf16.msra.mxu0 0
  %4954 = vmatprep.subr.bf16.mxu0 0
  %4955 = vmatpush1.bf16.msra.mxu0 0
  %4956 = vmatprep.subr.bf16.mxu0 0
  %4957 = vmatpush1.bf16.msra.mxu0 0
  %4958 = vmatprep.subr.bf16.mxu0 0
  %4959 = vmatpush1.bf16.msra.mxu0 0
  %4960 = vmatprep.mubr.bf16.mxu0 0
  %4961 = vmatmul.mubr.bf16.gmra.mrb[0].mxu0 %v4668
  %v4962 = vpop.f32.mrb[0].mxu0
  %v4963 = vadd.f32 0.0, %v4962
  %v4964 = vpop.f32.mrb[0].mxu0
  %v4965 = vpop.f32.mrb[0].mxu0
  %v4966 = vpop.f32.mrb[0].mxu0
  %4967 = vdwg.mxu0
  %v4969 = vsel %vm4670, %v4921, 0
  %4971 = vmatprep.subr.bf16.mxu0 0
  %4972 = vmatpush1.bf16.msra.mxu0 %v4969
  %4973 = vmatprep.subr.bf16.mxu0 0
  %4974 = vmatpush1.bf16.msra.mxu0 0
  %4975 = vmatprep.subr.bf16.mxu0 0
  %4976 = vmatpush1.bf16.msra.mxu0 0
  %4977 = vmatprep.subr.bf16.mxu0 0
  %4978 = vmatpush1.bf16.msra.mxu0 0
  %4979 = vmatprep.subr.bf16.mxu0 0
  %4980 = vmatpush1.bf16.msra.mxu0 0
  %4981 = vmatprep.subr.bf16.mxu0 0
  %4982 = vmatpush1.bf16.msra.mxu0 0
  %4983 = vmatprep.subr.bf16.mxu0 0
  %4984 = vmatpush1.bf16.msra.mxu0 0
  %4985 = vmatprep.subr.bf16.mxu0 0
  %4986 = vmatpush1.bf16.msra.mxu0 0
  %4987 = vmatprep.subr.bf16.mxu0 0
  %4988 = vmatpush1.bf16.msra.mxu0 0
  %4989 = vmatprep.subr.bf16.mxu0 0
  %4990 = vmatpush1.bf16.msra.mxu0 0
  %4991 = vmatprep.subr.bf16.mxu0 0
  %4992 = vmatpush1.bf16.msra.mxu0 0
  %4993 = vmatprep.subr.bf16.mxu0 0
  %4994 = vmatpush1.bf16.msra.mxu0 0
  %4995 = vmatprep.subr.bf16.mxu0 0
  %4996 = vmatpush1.bf16.msra.mxu0 0
  %4997 = vmatprep.subr.bf16.mxu0 0
  %4998 = vmatpush1.bf16.msra.mxu0 0
  %4999 = vmatprep.subr.bf16.mxu0 0
  %5000 = vmatpush1.bf16.msra.mxu0 0
  %5001 = vmatprep.subr.bf16.mxu0 0
  %5002 = vmatpush1.bf16.msra.mxu0 0
  %5003 = vmatprep.mubr.bf16.mxu0 0
  %5004 = vmatmul.mubr.bf16.gmra.mrb[0].mxu0 %v4715
  %v5005 = vpop.f32.mrb[0].mxu0
  %v5006 = vadd.f32 %v4963, %v5005
  %v5007 = vpop.f32.mrb[0].mxu0
  %v5008 = vpop.f32.mrb[0].mxu0
  %v5009 = vpop.f32.mrb[0].mxu0
  %5010 = vdwg.mxu0
  %v5011 = vpack.c.bf16 %v4917, %v4917
  %v5013 = vsel %vm4670, %v5011, 0
  %5015 = vmatprep.subr.bf16.mxu0 0
  %5016 = vmatpush1.bf16.msra.mxu0 %v5013
  %5017 = vmatprep.subr.bf16.mxu0 0
  %5018 = vmatpush1.bf16.msra.mxu0 0
  %5019 = vmatprep.subr.bf16.mxu0 0
  %5020 = vmatpush1.bf16.msra.mxu0 0
  %5021 = vmatprep.subr.bf16.mxu0 0
  %5022 = vmatpush1.bf16.msra.mxu0 0
  %5023 = vmatprep.subr.bf16.mxu0 0
  %5024 = vmatpush1.bf16.msra.mxu0 0
  %5025 = vmatprep.subr.bf16.mxu0 0
  %5026 = vmatpush1.bf16.msra.mxu0 0
  %5027 = vmatprep.subr.bf16.mxu0 0
  %5028 = vmatpush1.bf16.msra.mxu0 0
  %5029 = vmatprep.subr.bf16.mxu0 0
  %5030 = vmatpush1.bf16.msra.mxu0 0
  %5031 = vmatprep.subr.bf16.mxu0 0
  %5032 = vmatpush1.bf16.msra.mxu0 0
  %5033 = vmatprep.subr.bf16.mxu0 0
  %5034 = vmatpush1.bf16.msra.mxu0 0
  %5035 = vmatprep.subr.bf16.mxu0 0
  %5036 = vmatpush1.bf16.msra.mxu0 0
  %5037 = vmatprep.subr.bf16.mxu0 0
  %5038 = vmatpush1.bf16.msra.mxu0 0
  %5039 = vmatprep.subr.bf16.mxu0 0
  %5040 = vmatpush1.bf16.msra.mxu0 0
  %5041 = vmatprep.subr.bf16.mxu0 0
  %5042 = vmatpush1.bf16.msra.mxu0 0
  %5043 = vmatprep.subr.bf16.mxu0 0
  %5044 = vmatpush1.bf16.msra.mxu0 0
  %5045 = vmatprep.subr.bf16.mxu0 0
  %5046 = vmatpush1.bf16.msra.mxu0 0
  %5047 = vmatprep.mubr.bf16.mxu0 0
  %5048 = vmatmul.mubr.bf16.gmra.mrb[0].mxu0 %v4764
  %v5049 = vpop.f32.mrb[0].mxu0
  %v5050 = vadd.f32 0.0, %v5049
  %v5051 = vpop.f32.mrb[0].mxu0
  %v5052 = vpop.f32.mrb[0].mxu0
  %v5053 = vpop.f32.mrb[0].mxu0
  %5054 = vdwg.mxu0
  %v5055 = vadd.f32 %v5006, %v5050
  %5057 = vrot.lane.b32.xlu0 %v5011, 64
  %v5058 = vpop.permute.xlu0 %5057
  %v5060 = vsel %vm4670, %v5058, 0
  %5062 = vmatprep.subr.bf16.mxu0 0
  %5063 = vmatpush1.bf16.msra.mxu0 %v5060
  %5064 = vmatprep.subr.bf16.mxu0 0
  %5065 = vmatpush1.bf16.msra.mxu0 0
  %5066 = vmatprep.subr.bf16.mxu0 0
  %5067 = vmatpush1.bf16.msra.mxu0 0
  %5068 = vmatprep.subr.bf16.mxu0 0
  %5069 = vmatpush1.bf16.msra.mxu0 0
  %5070 = vmatprep.subr.bf16.mxu0 0
  %5071 = vmatpush1.bf16.msra.mxu0 0
  %5072 = vmatprep.subr.bf16.mxu0 0
  %5073 = vmatpush1.bf16.msra.mxu0 0
  %5074 = vmatprep.subr.bf16.mxu0 0
  %5075 = vmatpush1.bf16.msra.mxu0 0
  %5076 = vmatprep.subr.bf16.mxu0 0
  %5077 = vmatpush1.bf16.msra.mxu0 0
  %5078 = vmatprep.subr.bf16.mxu0 0
  %5079 = vmatpush1.bf16.msra.mxu0 0
  %5080 = vmatprep.subr.bf16.mxu0 0
  %5081 = vmatpush1.bf16.msra.mxu0 0
  %5082 = vmatprep.subr.bf16.mxu0 0
  %5083 = vmatpush1.bf16.msra.mxu0 0
  %5084 = vmatprep.subr.bf16.mxu0 0
  %5085 = vmatpush1.bf16.msra.mxu0 0
  %5086 = vmatprep.subr.bf16.mxu0 0
  %5087 = vmatpush1.bf16.msra.mxu0 0
  %5088 = vmatprep.subr.bf16.mxu0 0
  %5089 = vmatpush1.bf16.msra.mxu0 0
  %5090 = vmatprep.subr.bf16.mxu0 0
  %5091 = vmatpush1.bf16.msra.mxu0 0
  %5092 = vmatprep.subr.bf16.mxu0 0
  %5093 = vmatpush1.bf16.msra.mxu0 0
  %5094 = vmatprep.mubr.bf16.mxu0 0
  %5095 = vmatmul.mubr.bf16.gmra.mrb[0].mxu0 %v4816
  %v5096 = vpop.f32.mrb[0].mxu0
  %v5097 = vadd.f32 0.0, %v5096
  %v5098 = vpop.f32.mrb[0].mxu0
  %v5099 = vpop.f32.mrb[0].mxu0
  %v5100 = vpop.f32.mrb[0].mxu0
  %5101 = vdwg.mxu0
  %v5102 = vadd.f32 %v5055, %v5097
  %v5103 = vadd.f32 %v5102, %v4866
  %v5104 = vmin.f32 %v5103, 20.0
  %v5105 = vmul.f32 %v5104, 1.442695
  %v5106 = vpow.pop %v5105
  %v5107 = vadd.f32 %v5106, 2.0
  %v5108 = vmul.f32 %v5106, %v5107
  %v5109 = vadd.f32 %v5108, 2.0
  %v5110 = vrcp.pop %v5109
  %v5111 = vmul.f32 %v5108, %v5110
  %v5112 = vmul.f32 %v5103, %v5111
  %5114 = vrot.lane.b32.xlu0 %v5112, 64
  %v5115 = vpop.permute.xlu0 %5114
  %vm5117 = vcmask 523264
  %v5118 = vsel %vm5117, %v4877, %v5115
  %5119 = vst [vmem:[%s12] sm:$0xff] %v5118
  // Predicated region
  $region46: #{mode_encoder_block.1} parent=0 // pred_check
    _
  $region47: #{mode_encoder_block.1} parent=0 // pred_check_branch
    %5121 = sbr.rel (0) target = $region49
  $region48: #{mode_encoder_block.1} parent=0 // pred_region
    _
  $region49: #{mode_encoder_block.1} parent=0 // pred_fallthru
    _
  // Predicated region
  $region50: #{mode_encoder_block.1} parent=0 // pred_check
    _
  $region51: #{mode_encoder_block.1} parent=0 // pred_check_branch
    %5123 = sbr.rel (0) target = $region53
  $region52: #{mode_encoder_block.1} parent=0 // pred_region
    _
  $region53: #{mode_encoder_block.1} parent=0 // pred_fallthru
    _
  // Predicated region
  $region54: #{mode_encoder_block.1} parent=0 // pred_check
    _
  $region55: #{mode_encoder_block.1} parent=0 // pred_check_branch
    %5125 = sbr.rel (0) target = $region57
  $region56: #{mode_encoder_block.1} parent=0 // pred_region
    _
  $region57: #{mode_encoder_block.1} parent=0 // pred_fallthru
    _
  // Predicated region
  $region58: #{mode_encoder_block.1} parent=0 // pred_check
    _
  $region59: #{mode_encoder_block.1} parent=0 // pred_check_branch
    %5127 = sbr.rel (0) target = $region61
  $region60: #{mode_encoder_block.1} parent=0 // pred_region
    _
  $region61: #{mode_encoder_block.1} parent=0 // pred_fallthru
    _

</llo_original>
